<compile_context>
chip_gen: v7x
topology: tpu7x:2x2x1
jax: 0.10.0
libtpu: 0.0.40
codegen_flags: <defaults>
</compile_context>

<pallas_src>
import math

import jax
import jax.numpy as jnp
from jax.experimental import pallas as pl
from jax.experimental.pallas import tpu as pltpu

# ---- model / test configuration (small, consistent with the module) ----
B, S = 2, 8          # batch, sequence length
VOCAB = 50           # vocab_size
D = 32               # hidden_dim
H = 4                # num_heads
HD = D // H          # head_dim
L = 2                # num_layers
FF = 2048            # nn.TransformerEncoderLayer default dim_feedforward
OUT = 5              # output_dim
EPS = 1e-5           # LayerNorm default eps


def _layer_norm(x, g, b):
    # Fused single-pass statistics: E[x] and E[x^2] together, var = E[x^2]-mu^2
    # (halves the cross-lane XLU reduction pushes vs. two passes).
    mu = jnp.mean(x, axis=-1, keepdims=True)
    msq = jnp.mean(x * x, axis=-1, keepdims=True)
    var = msq - mu * mu
    return (x - mu) * jax.lax.rsqrt(var + EPS) * g + b


def transformer_kernel(x_ref,
                       wqkv_ref, bqkv_ref, wo_ref, bo_ref,
                       ln1g_ref, ln1b_ref, ln2g_ref, ln2b_ref,
                       w1_ref, b1_ref, w2_ref, b2_ref,
                       wh_ref, bh_ref, out_ref):
    """Whole encoder stack + classifier head, everything resident in VMEM."""
    x = x_ref[...]                         # (B, S, D) f32, post-RoPE embeddings
    scale = 1.0 / math.sqrt(HD)

    for l in range(L):                     # static unroll over layers
        # ---- multi-head self attention ----
        # Fused QKV: a single lane-dense (D, 3D) matmul; per-head q/k/v are
        # static lane slices (no extra MXU passes, no relayout transposes).
        xf = x.reshape(B * S, D)
        qkv = (jnp.dot(xf, wqkv_ref[l], preferred_element_type=jnp.float32)
               + bqkv_ref[l])                                   # (B*S, 3D)

        attn = jnp.zeros((B * S, D), jnp.float32)
        for h in range(H):                 # static unroll over heads
            qh = qkv[:, h * HD:(h + 1) * HD].reshape(B, S, HD)
            kh = qkv[:, D + h * HD:D + (h + 1) * HD].reshape(B, S, HD)
            vh = qkv[:, 2 * D + h * HD:2 * D + (h + 1) * HD].reshape(B, S, HD)
            s = jnp.einsum('bsd,btd->bst', qh, kh,
                           preferred_element_type=jnp.float32) * scale
            s = s - jnp.max(s, axis=-1, keepdims=True)
            p = jnp.exp(s)
            # divide -> EUP reciprocal (idle slot) instead of VPU divide chain
            p = p * pl.reciprocal(jnp.sum(p, axis=-1, keepdims=True), approx=True)
            ctx = jnp.einsum('bst,btd->bsd', p, vh,
                             preferred_element_type=jnp.float32)
            # per-head out-projection summed: no lane concatenate of heads
            attn = attn + jnp.dot(ctx.reshape(B * S, HD), wo_ref[l, h],
                                  preferred_element_type=jnp.float32)
        attn = attn + bo_ref[l]

        # residual + LayerNorm (post-norm, norm_first=False)
        x = _layer_norm(x + attn.reshape(B, S, D), ln1g_ref[l], ln1b_ref[l])

        # ---- feed-forward (ReLU); bf16 weights/activations, f32 accumulate ----
        xf16 = x.reshape(B * S, D).astype(jnp.bfloat16)
        hmid = jnp.maximum(
            jnp.dot(xf16, w1_ref[l], preferred_element_type=jnp.float32)
            + b1_ref[l], 0.0)                                   # (B*S, FF) f32
        ff = (jnp.dot(hmid.astype(jnp.bfloat16), w2_ref[l],
                      preferred_element_type=jnp.float32) + b2_ref[l])
        x = _layer_norm(x + ff.reshape(B, S, D), ln2g_ref[l], ln2b_ref[l])

    # ---- classifier head on token 0 ----
    cls = x[:, 0:1, :].reshape(B, D)                 # transformer_output[:, 0, :]
    out_ref[...] = (jnp.dot(cls, wh_ref[...],
                            preferred_element_type=jnp.float32) + bh_ref[...])


def apply_rope(x):
    """torchtune-style RoPE on (B, S, H, HD); interleaved pairs, base=10000.

    Applied to the embeddings before the encoder, exactly as the PyTorch module
    does (pos_encoder runs on `embedded` reshaped per head, before transformer).
    """
    b, s, nh, hd = x.shape
    theta = 1.0 / (10000.0 ** (jnp.arange(0, hd, 2, dtype=jnp.float32) / hd))
    freqs = jnp.outer(jnp.arange(s, dtype=jnp.float32), theta)   # (S, hd//2)
    cos = jnp.cos(freqs)[None, :, None, :]
    sin = jnp.sin(freqs)[None, :, None, :]
    xr = x.reshape(b, s, nh, hd // 2, 2)
    x1, x2 = xr[..., 0], xr[..., 1]
    out = jnp.stack([x1 * cos - x2 * sin, x2 * cos + x1 * sin], axis=-1)
    return out.reshape(b, s, nh, hd)


@jax.jit
def transformer_forward(input_ids, params):
    # glue: embedding gather + rotary positional embedding (host-side JAX,
    # fused into the same XLA program as the pallas_call under jit)
    emb = jnp.take(params['emb'], input_ids, axis=0)             # (B, S, D)
    emb = apply_rope(emb.reshape(B, S, H, HD)).reshape(B, S, D).astype(jnp.float32)

    # ---- host-side weight re-layout (pure indexing, done once under jit) ----
    bqkv = params['bqkv'].reshape(L, 1, 3 * D)                    # fused in_proj bias
    # out_proj.weight.T (L, D, D): split input rows by head -> (L, H, HD, D)
    wo_h = params['wo_t'].reshape(L, H, HD, D)

    # FF weights in bf16: halves the dominant HBM->VMEM DMA and MXU passes.
    w1_bf = params['w1_t'].astype(jnp.bfloat16)
    w2_bf = params['w2_t'].astype(jnp.bfloat16)

    vmem = pl.BlockSpec(memory_space=pltpu.MemorySpace.VMEM)
    args = (emb,
            params['wqkv_t'], bqkv, wo_h, params['bo'],
            params['ln1g'], params['ln1b'], params['ln2g'], params['ln2b'],
            w1_bf, params['b1'], w2_bf, params['b2'],
            params['wh_t'], params['bh'])

    return pl.pallas_call(
        transformer_kernel,
        out_shape=jax.ShapeDtypeStruct((B, OUT), jnp.float32),
        in_specs=[vmem] * len(args),
        out_specs=vmem,
        # total footprint is ~1.5 MiB; leave headroom, still tiny vs 64 MiB (v7x)
        compiler_params=pltpu.CompilerParams(vmem_limit_bytes=16 << 20),
    )(*args)


def init_params(key):
    ks = jax.random.split(key, 11)

    def nrm(k, shape, scale=0.02):
        return (scale * jax.random.normal(k, shape)).astype(jnp.float32)

    p = {}
    p['emb'] = nrm(ks[0], (VOCAB, D), 1.0)          # nn.Embedding ~ N(0, 1)
    # per-layer weights, stacked along a leading layer axis, pre-transposed (in, out)
    p['wqkv_t'] = nrm(ks[1], (L, D, 3 * D))          # in_proj_weight.T
    p['bqkv'] = nrm(ks[2], (L, 3 * D))
    p['wo_t'] = nrm(ks[3], (L, D, D))                # out_proj.weight.T
    p['bo'] = nrm(ks[4], (L, 1, D))
    p['ln1g'] = jnp.ones((L, 1, D), jnp.float32)
    p['ln1b'] = jnp.zeros((L, 1, D), jnp.float32)
    p['ln2g'] = jnp.ones((L, 1, D), jnp.float32)
    p['ln2b'] = jnp.zeros((L, 1, D), jnp.float32)
    p['w1_t'] = nrm(ks[5], (L, D, FF))               # linear1.weight.T
    p['b1'] = nrm(ks[6], (L, 1, FF))
    p['w2_t'] = nrm(ks[7], (L, FF, D))               # linear2.weight.T
    p['b2'] = nrm(ks[8], (L, 1, D))
    p['wh_t'] = nrm(ks[9], (D, OUT))                 # final linear.weight.T
    p['bh'] = nrm(ks[10], (1, OUT))
    return p


if __name__ == "__main__":
    key = jax.random.PRNGKey(0)
    pkey, ikey = jax.random.split(key)
    params = init_params(pkey)
    input_ids = jax.random.randint(ikey, (B, S), 0, VOCAB, dtype=jnp.int32)

    out = transformer_forward(input_ids, params)
    out = jax.block_until_ready(out)
    assert out.shape == (B, OUT) and out.dtype == jnp.float32
    print("KERNEL_OK")
</pallas_src>

<mosaic_0001>
module attributes {stable_mosaic.version = 11 : i64} {
  func.func @transformer_kernel(%arg0: memref<2x8x32xf32, #tpu.memory_space<vmem>>, %arg1: memref<2x32x96xf32, #tpu.memory_space<vmem>>, %arg2: memref<2x1x96xf32, #tpu.memory_space<vmem>>, %arg3: memref<2x4x8x32xf32, #tpu.memory_space<vmem>>, %arg4: memref<2x1x32xf32, #tpu.memory_space<vmem>>, %arg5: memref<2x1x32xf32, #tpu.memory_space<vmem>>, %arg6: memref<2x1x32xf32, #tpu.memory_space<vmem>>, %arg7: memref<2x1x32xf32, #tpu.memory_space<vmem>>, %arg8: memref<2x1x32xf32, #tpu.memory_space<vmem>>, %arg9: memref<2x32x2048xbf16, #tpu.memory_space<vmem>>, %arg10: memref<2x1x2048xf32, #tpu.memory_space<vmem>>, %arg11: memref<2x2048x32xbf16, #tpu.memory_space<vmem>>, %arg12: memref<2x1x32xf32, #tpu.memory_space<vmem>>, %arg13: memref<32x5xf32, #tpu.memory_space<vmem>>, %arg14: memref<1x5xf32, #tpu.memory_space<vmem>>, %arg15: memref<2x5xf32, #tpu.memory_space<vmem>>) attributes {dimension_semantics = [], scalar_prefetch = 0 : i64, scratch_operands = 0 : i64, tpu.core_type = #tpu.core_type<tc>} {
    %c0 = arith.constant 0 : index
    %c0_0 = arith.constant 0 : index
    %c0_1 = arith.constant 0 : index
    %0 = vector.load %arg0[%c0, %c0_0, %c0_1] : memref<2x8x32xf32, #tpu.memory_space<vmem>>, vector<2x8x32xf32>
    %1 = vector.shape_cast %0 : vector<2x8x32xf32> to vector<16x32xf32>
    %c0_2 = arith.constant 0 : index
    %c0_3 = arith.constant 0 : index
    %c0_4 = arith.constant 0 : index
    %2 = vector.load %arg1[%c0_2, %c0_3, %c0_4] : memref<2x32x96xf32, #tpu.memory_space<vmem>>, vector<1x32x96xf32>
    %3 = vector.shape_cast %2 : vector<1x32x96xf32> to vector<32x96xf32>
    %cst = arith.constant dense<0.000000e+00> : vector<16x96xf32>
    %4 = tpu.matmul %1, %3, %cst {dimension_numbers = #tpu.dot_dimension_numbers<[1], [0], [0], [1], [0, 0, 1, 1], [], []>} : vector<16x32xf32>, vector<32x96xf32>, vector<16x96xf32> -> vector<16x96xf32>
    %c0_5 = arith.constant 0 : index
    %c0_6 = arith.constant 0 : index
    %c0_7 = arith.constant 0 : index
    %5 = vector.load %arg2[%c0_5, %c0_6, %c0_7] : memref<2x1x96xf32, #tpu.memory_space<vmem>>, vector<1x1x96xf32>
    %6 = vector.shape_cast %5 : vector<1x1x96xf32> to vector<1x96xf32>
    %7 = vector.broadcast %6 : vector<1x96xf32> to vector<16x96xf32>
    %8 = arith.addf %4, %7 : vector<16x96xf32>
    %cst_8 = arith.constant 0.000000e+00 : f32
    %9 = vector.broadcast %cst_8 : f32 to vector<16x32xf32>
    %10 = vector.extract_strided_slice %8 {offsets = [0, 0], sizes = [16, 8], strides = [1, 1]} : vector<16x96xf32> to vector<16x8xf32>
    %11 = vector.shape_cast %10 : vector<16x8xf32> to vector<2x8x8xf32>
    %12 = vector.extract_strided_slice %8 {offsets = [0, 32], sizes = [16, 8], strides = [1, 1]} : vector<16x96xf32> to vector<16x8xf32>
    %13 = vector.shape_cast %12 : vector<16x8xf32> to vector<2x8x8xf32>
    %14 = vector.extract_strided_slice %8 {offsets = [0, 64], sizes = [16, 8], strides = [1, 1]} : vector<16x96xf32> to vector<16x8xf32>
    %15 = vector.shape_cast %14 : vector<16x8xf32> to vector<2x8x8xf32>
    "tpu.trace_start"() <{level = 10 : i32, message = "bsd,btd->bst"}> : () -> ()
    %cst_9 = arith.constant dense<0.000000e+00> : vector<2x8x8xf32>
    %16 = tpu.matmul %11, %13, %cst_9 {dimension_numbers = #tpu.dot_dimension_numbers<[2], [2], [1], [1], [0, 0, 0, 1, 1, 1], [0], [0]>} : vector<2x8x8xf32>, vector<2x8x8xf32>, vector<2x8x8xf32> -> vector<2x8x8xf32>
    "tpu.trace_stop"() : () -> ()
    %cst_10 = arith.constant 0.353553385 : f32
    %17 = vector.broadcast %cst_10 : f32 to vector<2x8x8xf32>
    %18 = arith.mulf %16, %17 : vector<2x8x8xf32>
    %cst_11 = arith.constant dense<0xFF800000> : vector<2x8xf32>
    %19 = vector.multi_reduction <maximumf>, %18, %cst_11 [2] : vector<2x8x8xf32> to vector<2x8xf32>
    %20 = vector.shape_cast %19 : vector<2x8xf32> to vector<2x8x1xf32>
    %21 = vector.broadcast %20 : vector<2x8x1xf32> to vector<2x8x8xf32>
    %22 = arith.subf %18, %21 : vector<2x8x8xf32>
    %23 = math.exp %22 : vector<2x8x8xf32>
    %cst_12 = arith.constant dense<0.000000e+00> : vector<2x8xf32>
    %24 = vector.multi_reduction <add>, %23, %cst_12 [2] : vector<2x8x8xf32> to vector<2x8xf32>
    %25 = vector.shape_cast %24 : vector<2x8xf32> to vector<2x8x1xf32>
    %26 = tpu.reciprocal %25 {approx = true} : vector<2x8x1xf32> -> vector<2x8x1xf32>
    %27 = vector.broadcast %26 : vector<2x8x1xf32> to vector<2x8x8xf32>
    %28 = arith.mulf %23, %27 : vector<2x8x8xf32>
    "tpu.trace_start"() <{level = 10 : i32, message = "bst,btd->bsd"}> : () -> ()
    %cst_13 = arith.constant dense<0.000000e+00> : vector<2x8x8xf32>
    %29 = tpu.matmul %28, %15, %cst_13 {dimension_numbers = #tpu.dot_dimension_numbers<[2], [1], [1], [2], [0, 0, 0, 1, 1, 2], [0], [0]>} : vector<2x8x8xf32>, vector<2x8x8xf32>, vector<2x8x8xf32> -> vector<2x8x8xf32>
    "tpu.trace_stop"() : () -> ()
    %30 = vector.shape_cast %29 : vector<2x8x8xf32> to vector<16x8xf32>
    %c0_14 = arith.constant 0 : index
    %c0_15 = arith.constant 0 : index
    %c0_16 = arith.constant 0 : index
    %c0_17 = arith.constant 0 : index
    %31 = vector.load %arg3[%c0_14, %c0_15, %c0_16, %c0_17] : memref<2x4x8x32xf32, #tpu.memory_space<vmem>>, vector<1x1x8x32xf32>
    %32 = vector.shape_cast %31 : vector<1x1x8x32xf32> to vector<8x32xf32>
    %cst_18 = arith.constant dense<0.000000e+00> : vector<16x32xf32>
    %33 = tpu.matmul %30, %32, %cst_18 {dimension_numbers = #tpu.dot_dimension_numbers<[1], [0], [0], [1], [0, 0, 1, 1], [], []>} : vector<16x8xf32>, vector<8x32xf32>, vector<16x32xf32> -> vector<16x32xf32>
    %34 = arith.addf %9, %33 : vector<16x32xf32>
    %35 = vector.extract_strided_slice %8 {offsets = [0, 8], sizes = [16, 8], strides = [1, 1]} : vector<16x96xf32> to vector<16x8xf32>
    %36 = vector.shape_cast %35 : vector<16x8xf32> to vector<2x8x8xf32>
    %37 = vector.extract_strided_slice %8 {offsets = [0, 40], sizes = [16, 8], strides = [1, 1]} : vector<16x96xf32> to vector<16x8xf32>
    %38 = vector.shape_cast %37 : vector<16x8xf32> to vector<2x8x8xf32>
    %39 = vector.extract_strided_slice %8 {offsets = [0, 72], sizes = [16, 8], strides = [1, 1]} : vector<16x96xf32> to vector<16x8xf32>
    %40 = vector.shape_cast %39 : vector<16x8xf32> to vector<2x8x8xf32>
    "tpu.trace_start"() <{level = 10 : i32, message = "bsd,btd->bst"}> : () -> ()
    %cst_19 = arith.constant dense<0.000000e+00> : vector<2x8x8xf32>
    %41 = tpu.matmul %36, %38, %cst_19 {dimension_numbers = #tpu.dot_dimension_numbers<[2], [2], [1], [1], [0, 0, 0, 1, 1, 1], [0], [0]>} : vector<2x8x8xf32>, vector<2x8x8xf32>, vector<2x8x8xf32> -> vector<2x8x8xf32>
    "tpu.trace_stop"() : () -> ()
    %cst_20 = arith.constant 0.353553385 : f32
    %42 = vector.broadcast %cst_20 : f32 to vector<2x8x8xf32>
    %43 = arith.mulf %41, %42 : vector<2x8x8xf32>
    %cst_21 = arith.constant dense<0xFF800000> : vector<2x8xf32>
    %44 = vector.multi_reduction <maximumf>, %43, %cst_21 [2] : vector<2x8x8xf32> to vector<2x8xf32>
    %45 = vector.shape_cast %44 : vector<2x8xf32> to vector<2x8x1xf32>
    %46 = vector.broadcast %45 : vector<2x8x1xf32> to vector<2x8x8xf32>
    %47 = arith.subf %43, %46 : vector<2x8x8xf32>
    %48 = math.exp %47 : vector<2x8x8xf32>
    %cst_22 = arith.constant dense<0.000000e+00> : vector<2x8xf32>
    %49 = vector.multi_reduction <add>, %48, %cst_22 [2] : vector<2x8x8xf32> to vector<2x8xf32>
    %50 = vector.shape_cast %49 : vector<2x8xf32> to vector<2x8x1xf32>
    %51 = tpu.reciprocal %50 {approx = true} : vector<2x8x1xf32> -> vector<2x8x1xf32>
    %52 = vector.broadcast %51 : vector<2x8x1xf32> to vector<2x8x8xf32>
    %53 = arith.mulf %48, %52 : vector<2x8x8xf32>
    "tpu.trace_start"() <{level = 10 : i32, message = "bst,btd->bsd"}> : () -> ()
    %cst_23 = arith.constant dense<0.000000e+00> : vector<2x8x8xf32>
    %54 = tpu.matmul %53, %40, %cst_23 {dimension_numbers = #tpu.dot_dimension_numbers<[2], [1], [1], [2], [0, 0, 0, 1, 1, 2], [0], [0]>} : vector<2x8x8xf32>, vector<2x8x8xf32>, vector<2x8x8xf32> -> vector<2x8x8xf32>
    "tpu.trace_stop"() : () -> ()
    %55 = vector.shape_cast %54 : vector<2x8x8xf32> to vector<16x8xf32>
    %c0_24 = arith.constant 0 : index
    %c1 = arith.constant 1 : index
    %c0_25 = arith.constant 0 : index
    %c0_26 = arith.constant 0 : index
    %56 = vector.load %arg3[%c0_24, %c1, %c0_25, %c0_26] : memref<2x4x8x32xf32, #tpu.memory_space<vmem>>, vector<1x1x8x32xf32>
    %57 = vector.shape_cast %56 : vector<1x1x8x32xf32> to vector<8x32xf32>
    %cst_27 = arith.constant dense<0.000000e+00> : vector<16x32xf32>
    %58 = tpu.matmul %55, %57, %cst_27 {dimension_numbers = #tpu.dot_dimension_numbers<[1], [0], [0], [1], [0, 0, 1, 1], [], []>} : vector<16x8xf32>, vector<8x32xf32>, vector<16x32xf32> -> vector<16x32xf32>
    %59 = arith.addf %34, %58 : vector<16x32xf32>
    %60 = vector.extract_strided_slice %8 {offsets = [0, 16], sizes = [16, 8], strides = [1, 1]} : vector<16x96xf32> to vector<16x8xf32>
    %61 = vector.shape_cast %60 : vector<16x8xf32> to vector<2x8x8xf32>
    %62 = vector.extract_strided_slice %8 {offsets = [0, 48], sizes = [16, 8], strides = [1, 1]} : vector<16x96xf32> to vector<16x8xf32>
    %63 = vector.shape_cast %62 : vector<16x8xf32> to vector<2x8x8xf32>
    %64 = vector.extract_strided_slice %8 {offsets = [0, 80], sizes = [16, 8], strides = [1, 1]} : vector<16x96xf32> to vector<16x8xf32>
    %65 = vector.shape_cast %64 : vector<16x8xf32> to vector<2x8x8xf32>
    "tpu.trace_start"() <{level = 10 : i32, message = "bsd,btd->bst"}> : () -> ()
    %cst_28 = arith.constant dense<0.000000e+00> : vector<2x8x8xf32>
    %66 = tpu.matmul %61, %63, %cst_28 {dimension_numbers = #tpu.dot_dimension_numbers<[2], [2], [1], [1], [0, 0, 0, 1, 1, 1], [0], [0]>} : vector<2x8x8xf32>, vector<2x8x8xf32>, vector<2x8x8xf32> -> vector<2x8x8xf32>
    "tpu.trace_stop"() : () -> ()
    %cst_29 = arith.constant 0.353553385 : f32
    %67 = vector.broadcast %cst_29 : f32 to vector<2x8x8xf32>
    %68 = arith.mulf %66, %67 : vector<2x8x8xf32>
    %cst_30 = arith.constant dense<0xFF800000> : vector<2x8xf32>
    %69 = vector.multi_reduction <maximumf>, %68, %cst_30 [2] : vector<2x8x8xf32> to vector<2x8xf32>
    %70 = vector.shape_cast %69 : vector<2x8xf32> to vector<2x8x1xf32>
    %71 = vector.broadcast %70 : vector<2x8x1xf32> to vector<2x8x8xf32>
    %72 = arith.subf %68, %71 : vector<2x8x8xf32>
    %73 = math.exp %72 : vector<2x8x8xf32>
    %cst_31 = arith.constant dense<0.000000e+00> : vector<2x8xf32>
    %74 = vector.multi_reduction <add>, %73, %cst_31 [2] : vector<2x8x8xf32> to vector<2x8xf32>
    %75 = vector.shape_cast %74 : vector<2x8xf32> to vector<2x8x1xf32>
    %76 = tpu.reciprocal %75 {approx = true} : vector<2x8x1xf32> -> vector<2x8x1xf32>
    %77 = vector.broadcast %76 : vector<2x8x1xf32> to vector<2x8x8xf32>
    %78 = arith.mulf %73, %77 : vector<2x8x8xf32>
    "tpu.trace_start"() <{level = 10 : i32, message = "bst,btd->bsd"}> : () -> ()
    %cst_32 = arith.constant dense<0.000000e+00> : vector<2x8x8xf32>
    %79 = tpu.matmul %78, %65, %cst_32 {dimension_numbers = #tpu.dot_dimension_numbers<[2], [1], [1], [2], [0, 0, 0, 1, 1, 2], [0], [0]>} : vector<2x8x8xf32>, vector<2x8x8xf32>, vector<2x8x8xf32> -> vector<2x8x8xf32>
    "tpu.trace_stop"() : () -> ()
    %80 = vector.shape_cast %79 : vector<2x8x8xf32> to vector<16x8xf32>
    %c0_33 = arith.constant 0 : index
    %c2 = arith.constant 2 : index
    %c0_34 = arith.constant 0 : index
    %c0_35 = arith.constant 0 : index
    %81 = vector.load %arg3[%c0_33, %c2, %c0_34, %c0_35] : memref<2x4x8x32xf32, #tpu.memory_space<vmem>>, vector<1x1x8x32xf32>
    %82 = vector.shape_cast %81 : vector<1x1x8x32xf32> to vector<8x32xf32>
    %cst_36 = arith.constant dense<0.000000e+00> : vector<16x32xf32>
    %83 = tpu.matmul %80, %82, %cst_36 {dimension_numbers = #tpu.dot_dimension_numbers<[1], [0], [0], [1], [0, 0, 1, 1], [], []>} : vector<16x8xf32>, vector<8x32xf32>, vector<16x32xf32> -> vector<16x32xf32>
    %84 = arith.addf %59, %83 : vector<16x32xf32>
    %85 = vector.extract_strided_slice %8 {offsets = [0, 24], sizes = [16, 8], strides = [1, 1]} : vector<16x96xf32> to vector<16x8xf32>
    %86 = vector.shape_cast %85 : vector<16x8xf32> to vector<2x8x8xf32>
    %87 = vector.extract_strided_slice %8 {offsets = [0, 56], sizes = [16, 8], strides = [1, 1]} : vector<16x96xf32> to vector<16x8xf32>
    %88 = vector.shape_cast %87 : vector<16x8xf32> to vector<2x8x8xf32>
    %89 = vector.extract_strided_slice %8 {offsets = [0, 88], sizes = [16, 8], strides = [1, 1]} : vector<16x96xf32> to vector<16x8xf32>
    %90 = vector.shape_cast %89 : vector<16x8xf32> to vector<2x8x8xf32>
    "tpu.trace_start"() <{level = 10 : i32, message = "bsd,btd->bst"}> : () -> ()
    %cst_37 = arith.constant dense<0.000000e+00> : vector<2x8x8xf32>
    %91 = tpu.matmul %86, %88, %cst_37 {dimension_numbers = #tpu.dot_dimension_numbers<[2], [2], [1], [1], [0, 0, 0, 1, 1, 1], [0], [0]>} : vector<2x8x8xf32>, vector<2x8x8xf32>, vector<2x8x8xf32> -> vector<2x8x8xf32>
    "tpu.trace_stop"() : () -> ()
    %cst_38 = arith.constant 0.353553385 : f32
    %92 = vector.broadcast %cst_38 : f32 to vector<2x8x8xf32>
    %93 = arith.mulf %91, %92 : vector<2x8x8xf32>
    %cst_39 = arith.constant dense<0xFF800000> : vector<2x8xf32>
    %94 = vector.multi_reduction <maximumf>, %93, %cst_39 [2] : vector<2x8x8xf32> to vector<2x8xf32>
    %95 = vector.shape_cast %94 : vector<2x8xf32> to vector<2x8x1xf32>
    %96 = vector.broadcast %95 : vector<2x8x1xf32> to vector<2x8x8xf32>
    %97 = arith.subf %93, %96 : vector<2x8x8xf32>
    %98 = math.exp %97 : vector<2x8x8xf32>
    %cst_40 = arith.constant dense<0.000000e+00> : vector<2x8xf32>
    %99 = vector.multi_reduction <add>, %98, %cst_40 [2] : vector<2x8x8xf32> to vector<2x8xf32>
    %100 = vector.shape_cast %99 : vector<2x8xf32> to vector<2x8x1xf32>
    %101 = tpu.reciprocal %100 {approx = true} : vector<2x8x1xf32> -> vector<2x8x1xf32>
    %102 = vector.broadcast %101 : vector<2x8x1xf32> to vector<2x8x8xf32>
    %103 = arith.mulf %98, %102 : vector<2x8x8xf32>
    "tpu.trace_start"() <{level = 10 : i32, message = "bst,btd->bsd"}> : () -> ()
    %cst_41 = arith.constant dense<0.000000e+00> : vector<2x8x8xf32>
    %104 = tpu.matmul %103, %90, %cst_41 {dimension_numbers = #tpu.dot_dimension_numbers<[2], [1], [1], [2], [0, 0, 0, 1, 1, 2], [0], [0]>} : vector<2x8x8xf32>, vector<2x8x8xf32>, vector<2x8x8xf32> -> vector<2x8x8xf32>
    "tpu.trace_stop"() : () -> ()
    %105 = vector.shape_cast %104 : vector<2x8x8xf32> to vector<16x8xf32>
    %c0_42 = arith.constant 0 : index
    %c3 = arith.constant 3 : index
    %c0_43 = arith.constant 0 : index
    %c0_44 = arith.constant 0 : index
    %106 = vector.load %arg3[%c0_42, %c3, %c0_43, %c0_44] : memref<2x4x8x32xf32, #tpu.memory_space<vmem>>, vector<1x1x8x32xf32>
    %107 = vector.shape_cast %106 : vector<1x1x8x32xf32> to vector<8x32xf32>
    %cst_45 = arith.constant dense<0.000000e+00> : vector<16x32xf32>
    %108 = tpu.matmul %105, %107, %cst_45 {dimension_numbers = #tpu.dot_dimension_numbers<[1], [0], [0], [1], [0, 0, 1, 1], [], []>} : vector<16x8xf32>, vector<8x32xf32>, vector<16x32xf32> -> vector<16x32xf32>
    %109 = arith.addf %84, %108 : vector<16x32xf32>
    %c0_46 = arith.constant 0 : index
    %c0_47 = arith.constant 0 : index
    %c0_48 = arith.constant 0 : index
    %110 = vector.load %arg4[%c0_46, %c0_47, %c0_48] : memref<2x1x32xf32, #tpu.memory_space<vmem>>, vector<1x1x32xf32>
    %111 = vector.shape_cast %110 : vector<1x1x32xf32> to vector<1x32xf32>
    %112 = vector.broadcast %111 : vector<1x32xf32> to vector<16x32xf32>
    %113 = arith.addf %109, %112 : vector<16x32xf32>
    %114 = vector.shape_cast %113 : vector<16x32xf32> to vector<2x8x32xf32>
    %115 = arith.addf %0, %114 : vector<2x8x32xf32>
    %c0_49 = arith.constant 0 : index
    %c0_50 = arith.constant 0 : index
    %c0_51 = arith.constant 0 : index
    %116 = vector.load %arg5[%c0_49, %c0_50, %c0_51] : memref<2x1x32xf32, #tpu.memory_space<vmem>>, vector<1x1x32xf32>
    %117 = vector.shape_cast %116 : vector<1x1x32xf32> to vector<1x32xf32>
    %c0_52 = arith.constant 0 : index
    %c0_53 = arith.constant 0 : index
    %c0_54 = arith.constant 0 : index
    %118 = vector.load %arg6[%c0_52, %c0_53, %c0_54] : memref<2x1x32xf32, #tpu.memory_space<vmem>>, vector<1x1x32xf32>
    %119 = vector.shape_cast %118 : vector<1x1x32xf32> to vector<1x32xf32>
    %cst_55 = arith.constant dense<0.000000e+00> : vector<2x8xf32>
    %120 = vector.multi_reduction <add>, %115, %cst_55 [2] : vector<2x8x32xf32> to vector<2x8xf32>
    %121 = vector.shape_cast %120 : vector<2x8xf32> to vector<2x8x1xf32>
    %cst_56 = arith.constant 3.200000e+01 : f32
    %122 = vector.broadcast %cst_56 : f32 to vector<2x8x1xf32>
    %123 = arith.divf %121, %122 : vector<2x8x1xf32>
    %124 = arith.mulf %115, %115 : vector<2x8x32xf32>
    %cst_57 = arith.constant dense<0.000000e+00> : vector<2x8xf32>
    %125 = vector.multi_reduction <add>, %124, %cst_57 [2] : vector<2x8x32xf32> to vector<2x8xf32>
    %126 = vector.shape_cast %125 : vector<2x8xf32> to vector<2x8x1xf32>
    %cst_58 = arith.constant 3.200000e+01 : f32
    %127 = vector.broadcast %cst_58 : f32 to vector<2x8x1xf32>
    %128 = arith.divf %126, %127 : vector<2x8x1xf32>
    %129 = arith.mulf %123, %123 : vector<2x8x1xf32>
    %130 = arith.subf %128, %129 : vector<2x8x1xf32>
    %131 = vector.broadcast %123 : vector<2x8x1xf32> to vector<2x8x32xf32>
    %132 = arith.subf %115, %131 : vector<2x8x32xf32>
    %cst_59 = arith.constant 9.99999974E-6 : f32
    %133 = vector.broadcast %cst_59 : f32 to vector<2x8x1xf32>
    %134 = arith.addf %130, %133 : vector<2x8x1xf32>
    %135 = math.rsqrt %134 : vector<2x8x1xf32>
    %136 = vector.broadcast %135 : vector<2x8x1xf32> to vector<2x8x32xf32>
    %137 = arith.mulf %132, %136 : vector<2x8x32xf32>
    %138 = vector.shape_cast %117 : vector<1x32xf32> to vector<1x1x32xf32>
    %139 = vector.broadcast %138 : vector<1x1x32xf32> to vector<2x8x32xf32>
    %140 = arith.mulf %137, %139 : vector<2x8x32xf32>
    %141 = vector.shape_cast %119 : vector<1x32xf32> to vector<1x1x32xf32>
    %142 = vector.broadcast %141 : vector<1x1x32xf32> to vector<2x8x32xf32>
    %143 = arith.addf %140, %142 : vector<2x8x32xf32>
    %144 = vector.shape_cast %143 : vector<2x8x32xf32> to vector<16x32xf32>
    %145 = arith.truncf %144 : vector<16x32xf32> to vector<16x32xbf16>
    %c0_60 = arith.constant 0 : index
    %c0_61 = arith.constant 0 : index
    %c0_62 = arith.constant 0 : index
    %146 = vector.load %arg9[%c0_60, %c0_61, %c0_62] : memref<2x32x2048xbf16, #tpu.memory_space<vmem>>, vector<1x32x2048xbf16>
    %147 = vector.shape_cast %146 : vector<1x32x2048xbf16> to vector<32x2048xbf16>
    %cst_63 = arith.constant dense<0.000000e+00> : vector<16x2048xf32>
    %148 = tpu.matmul %145, %147, %cst_63 {dimension_numbers = #tpu.dot_dimension_numbers<[1], [0], [0], [1], [0, 0, 1, 1], [], []>} : vector<16x32xbf16>, vector<32x2048xbf16>, vector<16x2048xf32> -> vector<16x2048xf32>
    %c0_64 = arith.constant 0 : index
    %c0_65 = arith.constant 0 : index
    %c0_66 = arith.constant 0 : index
    %149 = vector.load %arg10[%c0_64, %c0_65, %c0_66] : memref<2x1x2048xf32, #tpu.memory_space<vmem>>, vector<1x1x2048xf32>
    %150 = vector.shape_cast %149 : vector<1x1x2048xf32> to vector<1x2048xf32>
    %151 = vector.broadcast %150 : vector<1x2048xf32> to vector<16x2048xf32>
    %152 = arith.addf %148, %151 : vector<16x2048xf32>
    %cst_67 = arith.constant 0.000000e+00 : f32
    %153 = vector.broadcast %cst_67 : f32 to vector<16x2048xf32>
    %154 = arith.maximumf %152, %153 : vector<16x2048xf32>
    %155 = arith.truncf %154 : vector<16x2048xf32> to vector<16x2048xbf16>
    %c0_68 = arith.constant 0 : index
    %c0_69 = arith.constant 0 : index
    %c0_70 = arith.constant 0 : index
    %156 = vector.load %arg11[%c0_68, %c0_69, %c0_70] : memref<2x2048x32xbf16, #tpu.memory_space<vmem>>, vector<1x2048x32xbf16>
    %157 = vector.shape_cast %156 : vector<1x2048x32xbf16> to vector<2048x32xbf16>
    %cst_71 = arith.constant dense<0.000000e+00> : vector<16x32xf32>
    %158 = tpu.matmul %155, %157, %cst_71 {dimension_numbers = #tpu.dot_dimension_numbers<[1], [0], [0], [1], [0, 0, 1, 1], [], []>} : vector<16x2048xbf16>, vector<2048x32xbf16>, vector<16x32xf32> -> vector<16x32xf32>
    %c0_72 = arith.constant 0 : index
    %c0_73 = arith.constant 0 : index
    %c0_74 = arith.constant 0 : index
    %159 = vector.load %arg12[%c0_72, %c0_73, %c0_74] : memref<2x1x32xf32, #tpu.memory_space<vmem>>, vector<1x1x32xf32>
    %160 = vector.shape_cast %159 : vector<1x1x32xf32> to vector<1x32xf32>
    %161 = vector.broadcast %160 : vector<1x32xf32> to vector<16x32xf32>
    %162 = arith.addf %158, %161 : vector<16x32xf32>
    %163 = vector.shape_cast %162 : vector<16x32xf32> to vector<2x8x32xf32>
    %164 = arith.addf %143, %163 : vector<2x8x32xf32>
    %c0_75 = arith.constant 0 : index
    %c0_76 = arith.constant 0 : index
    %c0_77 = arith.constant 0 : index
    %165 = vector.load %arg7[%c0_75, %c0_76, %c0_77] : memref<2x1x32xf32, #tpu.memory_space<vmem>>, vector<1x1x32xf32>
    %166 = vector.shape_cast %165 : vector<1x1x32xf32> to vector<1x32xf32>
    %c0_78 = arith.constant 0 : index
    %c0_79 = arith.constant 0 : index
    %c0_80 = arith.constant 0 : index
    %167 = vector.load %arg8[%c0_78, %c0_79, %c0_80] : memref<2x1x32xf32, #tpu.memory_space<vmem>>, vector<1x1x32xf32>
    %168 = vector.shape_cast %167 : vector<1x1x32xf32> to vector<1x32xf32>
    %cst_81 = arith.constant dense<0.000000e+00> : vector<2x8xf32>
    %169 = vector.multi_reduction <add>, %164, %cst_81 [2] : vector<2x8x32xf32> to vector<2x8xf32>
    %170 = vector.shape_cast %169 : vector<2x8xf32> to vector<2x8x1xf32>
    %cst_82 = arith.constant 3.200000e+01 : f32
    %171 = vector.broadcast %cst_82 : f32 to vector<2x8x1xf32>
    %172 = arith.divf %170, %171 : vector<2x8x1xf32>
    %173 = arith.mulf %164, %164 : vector<2x8x32xf32>
    %cst_83 = arith.constant dense<0.000000e+00> : vector<2x8xf32>
    %174 = vector.multi_reduction <add>, %173, %cst_83 [2] : vector<2x8x32xf32> to vector<2x8xf32>
    %175 = vector.shape_cast %174 : vector<2x8xf32> to vector<2x8x1xf32>
    %cst_84 = arith.constant 3.200000e+01 : f32
    %176 = vector.broadcast %cst_84 : f32 to vector<2x8x1xf32>
    %177 = arith.divf %175, %176 : vector<2x8x1xf32>
    %178 = arith.mulf %172, %172 : vector<2x8x1xf32>
    %179 = arith.subf %177, %178 : vector<2x8x1xf32>
    %180 = vector.broadcast %172 : vector<2x8x1xf32> to vector<2x8x32xf32>
    %181 = arith.subf %164, %180 : vector<2x8x32xf32>
    %cst_85 = arith.constant 9.99999974E-6 : f32
    %182 = vector.broadcast %cst_85 : f32 to vector<2x8x1xf32>
    %183 = arith.addf %179, %182 : vector<2x8x1xf32>
    %184 = math.rsqrt %183 : vector<2x8x1xf32>
    %185 = vector.broadcast %184 : vector<2x8x1xf32> to vector<2x8x32xf32>
    %186 = arith.mulf %181, %185 : vector<2x8x32xf32>
    %187 = vector.shape_cast %166 : vector<1x32xf32> to vector<1x1x32xf32>
    %188 = vector.broadcast %187 : vector<1x1x32xf32> to vector<2x8x32xf32>
    %189 = arith.mulf %186, %188 : vector<2x8x32xf32>
    %190 = vector.shape_cast %168 : vector<1x32xf32> to vector<1x1x32xf32>
    %191 = vector.broadcast %190 : vector<1x1x32xf32> to vector<2x8x32xf32>
    %192 = arith.addf %189, %191 : vector<2x8x32xf32>
    %193 = vector.shape_cast %192 : vector<2x8x32xf32> to vector<16x32xf32>
    %c1_86 = arith.constant 1 : index
    %c0_87 = arith.constant 0 : index
    %c0_88 = arith.constant 0 : index
    %194 = vector.load %arg1[%c1_86, %c0_87, %c0_88] : memref<2x32x96xf32, #tpu.memory_space<vmem>>, vector<1x32x96xf32>
    %195 = vector.shape_cast %194 : vector<1x32x96xf32> to vector<32x96xf32>
    %cst_89 = arith.constant dense<0.000000e+00> : vector<16x96xf32>
    %196 = tpu.matmul %193, %195, %cst_89 {dimension_numbers = #tpu.dot_dimension_numbers<[1], [0], [0], [1], [0, 0, 1, 1], [], []>} : vector<16x32xf32>, vector<32x96xf32>, vector<16x96xf32> -> vector<16x96xf32>
    %c1_90 = arith.constant 1 : index
    %c0_91 = arith.constant 0 : index
    %c0_92 = arith.constant 0 : index
    %197 = vector.load %arg2[%c1_90, %c0_91, %c0_92] : memref<2x1x96xf32, #tpu.memory_space<vmem>>, vector<1x1x96xf32>
    %198 = vector.shape_cast %197 : vector<1x1x96xf32> to vector<1x96xf32>
    %199 = vector.broadcast %198 : vector<1x96xf32> to vector<16x96xf32>
    %200 = arith.addf %196, %199 : vector<16x96xf32>
    %cst_93 = arith.constant 0.000000e+00 : f32
    %201 = vector.broadcast %cst_93 : f32 to vector<16x32xf32>
    %202 = vector.extract_strided_slice %200 {offsets = [0, 0], sizes = [16, 8], strides = [1, 1]} : vector<16x96xf32> to vector<16x8xf32>
    %203 = vector.shape_cast %202 : vector<16x8xf32> to vector<2x8x8xf32>
    %204 = vector.extract_strided_slice %200 {offsets = [0, 32], sizes = [16, 8], strides = [1, 1]} : vector<16x96xf32> to vector<16x8xf32>
    %205 = vector.shape_cast %204 : vector<16x8xf32> to vector<2x8x8xf32>
    %206 = vector.extract_strided_slice %200 {offsets = [0, 64], sizes = [16, 8], strides = [1, 1]} : vector<16x96xf32> to vector<16x8xf32>
    %207 = vector.shape_cast %206 : vector<16x8xf32> to vector<2x8x8xf32>
    "tpu.trace_start"() <{level = 10 : i32, message = "bsd,btd->bst"}> : () -> ()
    %cst_94 = arith.constant dense<0.000000e+00> : vector<2x8x8xf32>
    %208 = tpu.matmul %203, %205, %cst_94 {dimension_numbers = #tpu.dot_dimension_numbers<[2], [2], [1], [1], [0, 0, 0, 1, 1, 1], [0], [0]>} : vector<2x8x8xf32>, vector<2x8x8xf32>, vector<2x8x8xf32> -> vector<2x8x8xf32>
    "tpu.trace_stop"() : () -> ()
    %cst_95 = arith.constant 0.353553385 : f32
    %209 = vector.broadcast %cst_95 : f32 to vector<2x8x8xf32>
    %210 = arith.mulf %208, %209 : vector<2x8x8xf32>
    %cst_96 = arith.constant dense<0xFF800000> : vector<2x8xf32>
    %211 = vector.multi_reduction <maximumf>, %210, %cst_96 [2] : vector<2x8x8xf32> to vector<2x8xf32>
    %212 = vector.shape_cast %211 : vector<2x8xf32> to vector<2x8x1xf32>
    %213 = vector.broadcast %212 : vector<2x8x1xf32> to vector<2x8x8xf32>
    %214 = arith.subf %210, %213 : vector<2x8x8xf32>
    %215 = math.exp %214 : vector<2x8x8xf32>
    %cst_97 = arith.constant dense<0.000000e+00> : vector<2x8xf32>
    %216 = vector.multi_reduction <add>, %215, %cst_97 [2] : vector<2x8x8xf32> to vector<2x8xf32>
    %217 = vector.shape_cast %216 : vector<2x8xf32> to vector<2x8x1xf32>
    %218 = tpu.reciprocal %217 {approx = true} : vector<2x8x1xf32> -> vector<2x8x1xf32>
    %219 = vector.broadcast %218 : vector<2x8x1xf32> to vector<2x8x8xf32>
    %220 = arith.mulf %215, %219 : vector<2x8x8xf32>
    "tpu.trace_start"() <{level = 10 : i32, message = "bst,btd->bsd"}> : () -> ()
    %cst_98 = arith.constant dense<0.000000e+00> : vector<2x8x8xf32>
    %221 = tpu.matmul %220, %207, %cst_98 {dimension_numbers = #tpu.dot_dimension_numbers<[2], [1], [1], [2], [0, 0, 0, 1, 1, 2], [0], [0]>} : vector<2x8x8xf32>, vector<2x8x8xf32>, vector<2x8x8xf32> -> vector<2x8x8xf32>
    "tpu.trace_stop"() : () -> ()
    %222 = vector.shape_cast %221 : vector<2x8x8xf32> to vector<16x8xf32>
    %c1_99 = arith.constant 1 : index
    %c0_100 = arith.constant 0 : index
    %c0_101 = arith.constant 0 : index
    %c0_102 = arith.constant 0 : index
    %223 = vector.load %arg3[%c1_99, %c0_100, %c0_101, %c0_102] : memref<2x4x8x32xf32, #tpu.memory_space<vmem>>, vector<1x1x8x32xf32>
    %224 = vector.shape_cast %223 : vector<1x1x8x32xf32> to vector<8x32xf32>
    %cst_103 = arith.constant dense<0.000000e+00> : vector<16x32xf32>
    %225 = tpu.matmul %222, %224, %cst_103 {dimension_numbers = #tpu.dot_dimension_numbers<[1], [0], [0], [1], [0, 0, 1, 1], [], []>} : vector<16x8xf32>, vector<8x32xf32>, vector<16x32xf32> -> vector<16x32xf32>
    %226 = arith.addf %201, %225 : vector<16x32xf32>
    %227 = vector.extract_strided_slice %200 {offsets = [0, 8], sizes = [16, 8], strides = [1, 1]} : vector<16x96xf32> to vector<16x8xf32>
    %228 = vector.shape_cast %227 : vector<16x8xf32> to vector<2x8x8xf32>
    %229 = vector.extract_strided_slice %200 {offsets = [0, 40], sizes = [16, 8], strides = [1, 1]} : vector<16x96xf32> to vector<16x8xf32>
    %230 = vector.shape_cast %229 : vector<16x8xf32> to vector<2x8x8xf32>
    %231 = vector.extract_strided_slice %200 {offsets = [0, 72], sizes = [16, 8], strides = [1, 1]} : vector<16x96xf32> to vector<16x8xf32>
    %232 = vector.shape_cast %231 : vector<16x8xf32> to vector<2x8x8xf32>
    "tpu.trace_start"() <{level = 10 : i32, message = "bsd,btd->bst"}> : () -> ()
    %cst_104 = arith.constant dense<0.000000e+00> : vector<2x8x8xf32>
    %233 = tpu.matmul %228, %230, %cst_104 {dimension_numbers = #tpu.dot_dimension_numbers<[2], [2], [1], [1], [0, 0, 0, 1, 1, 1], [0], [0]>} : vector<2x8x8xf32>, vector<2x8x8xf32>, vector<2x8x8xf32> -> vector<2x8x8xf32>
    "tpu.trace_stop"() : () -> ()
    %cst_105 = arith.constant 0.353553385 : f32
    %234 = vector.broadcast %cst_105 : f32 to vector<2x8x8xf32>
    %235 = arith.mulf %233, %234 : vector<2x8x8xf32>
    %cst_106 = arith.constant dense<0xFF800000> : vector<2x8xf32>
    %236 = vector.multi_reduction <maximumf>, %235, %cst_106 [2] : vector<2x8x8xf32> to vector<2x8xf32>
    %237 = vector.shape_cast %236 : vector<2x8xf32> to vector<2x8x1xf32>
    %238 = vector.broadcast %237 : vector<2x8x1xf32> to vector<2x8x8xf32>
    %239 = arith.subf %235, %238 : vector<2x8x8xf32>
    %240 = math.exp %239 : vector<2x8x8xf32>
    %cst_107 = arith.constant dense<0.000000e+00> : vector<2x8xf32>
    %241 = vector.multi_reduction <add>, %240, %cst_107 [2] : vector<2x8x8xf32> to vector<2x8xf32>
    %242 = vector.shape_cast %241 : vector<2x8xf32> to vector<2x8x1xf32>
    %243 = tpu.reciprocal %242 {approx = true} : vector<2x8x1xf32> -> vector<2x8x1xf32>
    %244 = vector.broadcast %243 : vector<2x8x1xf32> to vector<2x8x8xf32>
    %245 = arith.mulf %240, %244 : vector<2x8x8xf32>
    "tpu.trace_start"() <{level = 10 : i32, message = "bst,btd->bsd"}> : () -> ()
    %cst_108 = arith.constant dense<0.000000e+00> : vector<2x8x8xf32>
    %246 = tpu.matmul %245, %232, %cst_108 {dimension_numbers = #tpu.dot_dimension_numbers<[2], [1], [1], [2], [0, 0, 0, 1, 1, 2], [0], [0]>} : vector<2x8x8xf32>, vector<2x8x8xf32>, vector<2x8x8xf32> -> vector<2x8x8xf32>
    "tpu.trace_stop"() : () -> ()
    %247 = vector.shape_cast %246 : vector<2x8x8xf32> to vector<16x8xf32>
    %c1_109 = arith.constant 1 : index
    %c1_110 = arith.constant 1 : index
    %c0_111 = arith.constant 0 : index
    %c0_112 = arith.constant 0 : index
    %248 = vector.load %arg3[%c1_109, %c1_110, %c0_111, %c0_112] : memref<2x4x8x32xf32, #tpu.memory_space<vmem>>, vector<1x1x8x32xf32>
    %249 = vector.shape_cast %248 : vector<1x1x8x32xf32> to vector<8x32xf32>
    %cst_113 = arith.constant dense<0.000000e+00> : vector<16x32xf32>
    %250 = tpu.matmul %247, %249, %cst_113 {dimension_numbers = #tpu.dot_dimension_numbers<[1], [0], [0], [1], [0, 0, 1, 1], [], []>} : vector<16x8xf32>, vector<8x32xf32>, vector<16x32xf32> -> vector<16x32xf32>
    %251 = arith.addf %226, %250 : vector<16x32xf32>
    %252 = vector.extract_strided_slice %200 {offsets = [0, 16], sizes = [16, 8], strides = [1, 1]} : vector<16x96xf32> to vector<16x8xf32>
    %253 = vector.shape_cast %252 : vector<16x8xf32> to vector<2x8x8xf32>
    %254 = vector.extract_strided_slice %200 {offsets = [0, 48], sizes = [16, 8], strides = [1, 1]} : vector<16x96xf32> to vector<16x8xf32>
    %255 = vector.shape_cast %254 : vector<16x8xf32> to vector<2x8x8xf32>
    %256 = vector.extract_strided_slice %200 {offsets = [0, 80], sizes = [16, 8], strides = [1, 1]} : vector<16x96xf32> to vector<16x8xf32>
    %257 = vector.shape_cast %256 : vector<16x8xf32> to vector<2x8x8xf32>
    "tpu.trace_start"() <{level = 10 : i32, message = "bsd,btd->bst"}> : () -> ()
    %cst_114 = arith.constant dense<0.000000e+00> : vector<2x8x8xf32>
    %258 = tpu.matmul %253, %255, %cst_114 {dimension_numbers = #tpu.dot_dimension_numbers<[2], [2], [1], [1], [0, 0, 0, 1, 1, 1], [0], [0]>} : vector<2x8x8xf32>, vector<2x8x8xf32>, vector<2x8x8xf32> -> vector<2x8x8xf32>
    "tpu.trace_stop"() : () -> ()
    %cst_115 = arith.constant 0.353553385 : f32
    %259 = vector.broadcast %cst_115 : f32 to vector<2x8x8xf32>
    %260 = arith.mulf %258, %259 : vector<2x8x8xf32>
    %cst_116 = arith.constant dense<0xFF800000> : vector<2x8xf32>
    %261 = vector.multi_reduction <maximumf>, %260, %cst_116 [2] : vector<2x8x8xf32> to vector<2x8xf32>
    %262 = vector.shape_cast %261 : vector<2x8xf32> to vector<2x8x1xf32>
    %263 = vector.broadcast %262 : vector<2x8x1xf32> to vector<2x8x8xf32>
    %264 = arith.subf %260, %263 : vector<2x8x8xf32>
    %265 = math.exp %264 : vector<2x8x8xf32>
    %cst_117 = arith.constant dense<0.000000e+00> : vector<2x8xf32>
    %266 = vector.multi_reduction <add>, %265, %cst_117 [2] : vector<2x8x8xf32> to vector<2x8xf32>
    %267 = vector.shape_cast %266 : vector<2x8xf32> to vector<2x8x1xf32>
    %268 = tpu.reciprocal %267 {approx = true} : vector<2x8x1xf32> -> vector<2x8x1xf32>
    %269 = vector.broadcast %268 : vector<2x8x1xf32> to vector<2x8x8xf32>
    %270 = arith.mulf %265, %269 : vector<2x8x8xf32>
    "tpu.trace_start"() <{level = 10 : i32, message = "bst,btd->bsd"}> : () -> ()
    %cst_118 = arith.constant dense<0.000000e+00> : vector<2x8x8xf32>
    %271 = tpu.matmul %270, %257, %cst_118 {dimension_numbers = #tpu.dot_dimension_numbers<[2], [1], [1], [2], [0, 0, 0, 1, 1, 2], [0], [0]>} : vector<2x8x8xf32>, vector<2x8x8xf32>, vector<2x8x8xf32> -> vector<2x8x8xf32>
    "tpu.trace_stop"() : () -> ()
    %272 = vector.shape_cast %271 : vector<2x8x8xf32> to vector<16x8xf32>
    %c1_119 = arith.constant 1 : index
    %c2_120 = arith.constant 2 : index
    %c0_121 = arith.constant 0 : index
    %c0_122 = arith.constant 0 : index
    %273 = vector.load %arg3[%c1_119, %c2_120, %c0_121, %c0_122] : memref<2x4x8x32xf32, #tpu.memory_space<vmem>>, vector<1x1x8x32xf32>
    %274 = vector.shape_cast %273 : vector<1x1x8x32xf32> to vector<8x32xf32>
    %cst_123 = arith.constant dense<0.000000e+00> : vector<16x32xf32>
    %275 = tpu.matmul %272, %274, %cst_123 {dimension_numbers = #tpu.dot_dimension_numbers<[1], [0], [0], [1], [0, 0, 1, 1], [], []>} : vector<16x8xf32>, vector<8x32xf32>, vector<16x32xf32> -> vector<16x32xf32>
    %276 = arith.addf %251, %275 : vector<16x32xf32>
    %277 = vector.extract_strided_slice %200 {offsets = [0, 24], sizes = [16, 8], strides = [1, 1]} : vector<16x96xf32> to vector<16x8xf32>
    %278 = vector.shape_cast %277 : vector<16x8xf32> to vector<2x8x8xf32>
    %279 = vector.extract_strided_slice %200 {offsets = [0, 56], sizes = [16, 8], strides = [1, 1]} : vector<16x96xf32> to vector<16x8xf32>
    %280 = vector.shape_cast %279 : vector<16x8xf32> to vector<2x8x8xf32>
    %281 = vector.extract_strided_slice %200 {offsets = [0, 88], sizes = [16, 8], strides = [1, 1]} : vector<16x96xf32> to vector<16x8xf32>
    %282 = vector.shape_cast %281 : vector<16x8xf32> to vector<2x8x8xf32>
    "tpu.trace_start"() <{level = 10 : i32, message = "bsd,btd->bst"}> : () -> ()
    %cst_124 = arith.constant dense<0.000000e+00> : vector<2x8x8xf32>
    %283 = tpu.matmul %278, %280, %cst_124 {dimension_numbers = #tpu.dot_dimension_numbers<[2], [2], [1], [1], [0, 0, 0, 1, 1, 1], [0], [0]>} : vector<2x8x8xf32>, vector<2x8x8xf32>, vector<2x8x8xf32> -> vector<2x8x8xf32>
    "tpu.trace_stop"() : () -> ()
    %cst_125 = arith.constant 0.353553385 : f32
    %284 = vector.broadcast %cst_125 : f32 to vector<2x8x8xf32>
    %285 = arith.mulf %283, %284 : vector<2x8x8xf32>
    %cst_126 = arith.constant dense<0xFF800000> : vector<2x8xf32>
    %286 = vector.multi_reduction <maximumf>, %285, %cst_126 [2] : vector<2x8x8xf32> to vector<2x8xf32>
    %287 = vector.shape_cast %286 : vector<2x8xf32> to vector<2x8x1xf32>
    %288 = vector.broadcast %287 : vector<2x8x1xf32> to vector<2x8x8xf32>
    %289 = arith.subf %285, %288 : vector<2x8x8xf32>
    %290 = math.exp %289 : vector<2x8x8xf32>
    %cst_127 = arith.constant dense<0.000000e+00> : vector<2x8xf32>
    %291 = vector.multi_reduction <add>, %290, %cst_127 [2] : vector<2x8x8xf32> to vector<2x8xf32>
    %292 = vector.shape_cast %291 : vector<2x8xf32> to vector<2x8x1xf32>
    %293 = tpu.reciprocal %292 {approx = true} : vector<2x8x1xf32> -> vector<2x8x1xf32>
    %294 = vector.broadcast %293 : vector<2x8x1xf32> to vector<2x8x8xf32>
    %295 = arith.mulf %290, %294 : vector<2x8x8xf32>
    "tpu.trace_start"() <{level = 10 : i32, message = "bst,btd->bsd"}> : () -> ()
    %cst_128 = arith.constant dense<0.000000e+00> : vector<2x8x8xf32>
    %296 = tpu.matmul %295, %282, %cst_128 {dimension_numbers = #tpu.dot_dimension_numbers<[2], [1], [1], [2], [0, 0, 0, 1, 1, 2], [0], [0]>} : vector<2x8x8xf32>, vector<2x8x8xf32>, vector<2x8x8xf32> -> vector<2x8x8xf32>
    "tpu.trace_stop"() : () -> ()
    %297 = vector.shape_cast %296 : vector<2x8x8xf32> to vector<16x8xf32>
    %c1_129 = arith.constant 1 : index
    %c3_130 = arith.constant 3 : index
    %c0_131 = arith.constant 0 : index
    %c0_132 = arith.constant 0 : index
    %298 = vector.load %arg3[%c1_129, %c3_130, %c0_131, %c0_132] : memref<2x4x8x32xf32, #tpu.memory_space<vmem>>, vector<1x1x8x32xf32>
    %299 = vector.shape_cast %298 : vector<1x1x8x32xf32> to vector<8x32xf32>
    %cst_133 = arith.constant dense<0.000000e+00> : vector<16x32xf32>
    %300 = tpu.matmul %297, %299, %cst_133 {dimension_numbers = #tpu.dot_dimension_numbers<[1], [0], [0], [1], [0, 0, 1, 1], [], []>} : vector<16x8xf32>, vector<8x32xf32>, vector<16x32xf32> -> vector<16x32xf32>
    %301 = arith.addf %276, %300 : vector<16x32xf32>
    %c1_134 = arith.constant 1 : index
    %c0_135 = arith.constant 0 : index
    %c0_136 = arith.constant 0 : index
    %302 = vector.load %arg4[%c1_134, %c0_135, %c0_136] : memref<2x1x32xf32, #tpu.memory_space<vmem>>, vector<1x1x32xf32>
    %303 = vector.shape_cast %302 : vector<1x1x32xf32> to vector<1x32xf32>
    %304 = vector.broadcast %303 : vector<1x32xf32> to vector<16x32xf32>
    %305 = arith.addf %301, %304 : vector<16x32xf32>
    %306 = vector.shape_cast %305 : vector<16x32xf32> to vector<2x8x32xf32>
    %307 = arith.addf %192, %306 : vector<2x8x32xf32>
    %c1_137 = arith.constant 1 : index
    %c0_138 = arith.constant 0 : index
    %c0_139 = arith.constant 0 : index
    %308 = vector.load %arg5[%c1_137, %c0_138, %c0_139] : memref<2x1x32xf32, #tpu.memory_space<vmem>>, vector<1x1x32xf32>
    %309 = vector.shape_cast %308 : vector<1x1x32xf32> to vector<1x32xf32>
    %c1_140 = arith.constant 1 : index
    %c0_141 = arith.constant 0 : index
    %c0_142 = arith.constant 0 : index
    %310 = vector.load %arg6[%c1_140, %c0_141, %c0_142] : memref<2x1x32xf32, #tpu.memory_space<vmem>>, vector<1x1x32xf32>
    %311 = vector.shape_cast %310 : vector<1x1x32xf32> to vector<1x32xf32>
    %cst_143 = arith.constant dense<0.000000e+00> : vector<2x8xf32>
    %312 = vector.multi_reduction <add>, %307, %cst_143 [2] : vector<2x8x32xf32> to vector<2x8xf32>
    %313 = vector.shape_cast %312 : vector<2x8xf32> to vector<2x8x1xf32>
    %cst_144 = arith.constant 3.200000e+01 : f32
    %314 = vector.broadcast %cst_144 : f32 to vector<2x8x1xf32>
    %315 = arith.divf %313, %314 : vector<2x8x1xf32>
    %316 = arith.mulf %307, %307 : vector<2x8x32xf32>
    %cst_145 = arith.constant dense<0.000000e+00> : vector<2x8xf32>
    %317 = vector.multi_reduction <add>, %316, %cst_145 [2] : vector<2x8x32xf32> to vector<2x8xf32>
    %318 = vector.shape_cast %317 : vector<2x8xf32> to vector<2x8x1xf32>
    %cst_146 = arith.constant 3.200000e+01 : f32
    %319 = vector.broadcast %cst_146 : f32 to vector<2x8x1xf32>
    %320 = arith.divf %318, %319 : vector<2x8x1xf32>
    %321 = arith.mulf %315, %315 : vector<2x8x1xf32>
    %322 = arith.subf %320, %321 : vector<2x8x1xf32>
    %323 = vector.broadcast %315 : vector<2x8x1xf32> to vector<2x8x32xf32>
    %324 = arith.subf %307, %323 : vector<2x8x32xf32>
    %cst_147 = arith.constant 9.99999974E-6 : f32
    %325 = vector.broadcast %cst_147 : f32 to vector<2x8x1xf32>
    %326 = arith.addf %322, %325 : vector<2x8x1xf32>
    %327 = math.rsqrt %326 : vector<2x8x1xf32>
    %328 = vector.broadcast %327 : vector<2x8x1xf32> to vector<2x8x32xf32>
    %329 = arith.mulf %324, %328 : vector<2x8x32xf32>
    %330 = vector.shape_cast %309 : vector<1x32xf32> to vector<1x1x32xf32>
    %331 = vector.broadcast %330 : vector<1x1x32xf32> to vector<2x8x32xf32>
    %332 = arith.mulf %329, %331 : vector<2x8x32xf32>
    %333 = vector.shape_cast %311 : vector<1x32xf32> to vector<1x1x32xf32>
    %334 = vector.broadcast %333 : vector<1x1x32xf32> to vector<2x8x32xf32>
    %335 = arith.addf %332, %334 : vector<2x8x32xf32>
    %336 = vector.shape_cast %335 : vector<2x8x32xf32> to vector<16x32xf32>
    %337 = arith.truncf %336 : vector<16x32xf32> to vector<16x32xbf16>
    %c1_148 = arith.constant 1 : index
    %c0_149 = arith.constant 0 : index
    %c0_150 = arith.constant 0 : index
    %338 = vector.load %arg9[%c1_148, %c0_149, %c0_150] : memref<2x32x2048xbf16, #tpu.memory_space<vmem>>, vector<1x32x2048xbf16>
    %339 = vector.shape_cast %338 : vector<1x32x2048xbf16> to vector<32x2048xbf16>
    %cst_151 = arith.constant dense<0.000000e+00> : vector<16x2048xf32>
    %340 = tpu.matmul %337, %339, %cst_151 {dimension_numbers = #tpu.dot_dimension_numbers<[1], [0], [0], [1], [0, 0, 1, 1], [], []>} : vector<16x32xbf16>, vector<32x2048xbf16>, vector<16x2048xf32> -> vector<16x2048xf32>
    %c1_152 = arith.constant 1 : index
    %c0_153 = arith.constant 0 : index
    %c0_154 = arith.constant 0 : index
    %341 = vector.load %arg10[%c1_152, %c0_153, %c0_154] : memref<2x1x2048xf32, #tpu.memory_space<vmem>>, vector<1x1x2048xf32>
    %342 = vector.shape_cast %341 : vector<1x1x2048xf32> to vector<1x2048xf32>
    %343 = vector.broadcast %342 : vector<1x2048xf32> to vector<16x2048xf32>
    %344 = arith.addf %340, %343 : vector<16x2048xf32>
    %cst_155 = arith.constant 0.000000e+00 : f32
    %345 = vector.broadcast %cst_155 : f32 to vector<16x2048xf32>
    %346 = arith.maximumf %344, %345 : vector<16x2048xf32>
    %347 = arith.truncf %346 : vector<16x2048xf32> to vector<16x2048xbf16>
    %c1_156 = arith.constant 1 : index
    %c0_157 = arith.constant 0 : index
    %c0_158 = arith.constant 0 : index
    %348 = vector.load %arg11[%c1_156, %c0_157, %c0_158] : memref<2x2048x32xbf16, #tpu.memory_space<vmem>>, vector<1x2048x32xbf16>
    %349 = vector.shape_cast %348 : vector<1x2048x32xbf16> to vector<2048x32xbf16>
    %cst_159 = arith.constant dense<0.000000e+00> : vector<16x32xf32>
    %350 = tpu.matmul %347, %349, %cst_159 {dimension_numbers = #tpu.dot_dimension_numbers<[1], [0], [0], [1], [0, 0, 1, 1], [], []>} : vector<16x2048xbf16>, vector<2048x32xbf16>, vector<16x32xf32> -> vector<16x32xf32>
    %c1_160 = arith.constant 1 : index
    %c0_161 = arith.constant 0 : index
    %c0_162 = arith.constant 0 : index
    %351 = vector.load %arg12[%c1_160, %c0_161, %c0_162] : memref<2x1x32xf32, #tpu.memory_space<vmem>>, vector<1x1x32xf32>
    %352 = vector.shape_cast %351 : vector<1x1x32xf32> to vector<1x32xf32>
    %353 = vector.broadcast %352 : vector<1x32xf32> to vector<16x32xf32>
    %354 = arith.addf %350, %353 : vector<16x32xf32>
    %355 = vector.shape_cast %354 : vector<16x32xf32> to vector<2x8x32xf32>
    %356 = arith.addf %335, %355 : vector<2x8x32xf32>
    %c1_163 = arith.constant 1 : index
    %c0_164 = arith.constant 0 : index
    %c0_165 = arith.constant 0 : index
    %357 = vector.load %arg7[%c1_163, %c0_164, %c0_165] : memref<2x1x32xf32, #tpu.memory_space<vmem>>, vector<1x1x32xf32>
    %358 = vector.shape_cast %357 : vector<1x1x32xf32> to vector<1x32xf32>
    %c1_166 = arith.constant 1 : index
    %c0_167 = arith.constant 0 : index
    %c0_168 = arith.constant 0 : index
    %359 = vector.load %arg8[%c1_166, %c0_167, %c0_168] : memref<2x1x32xf32, #tpu.memory_space<vmem>>, vector<1x1x32xf32>
    %360 = vector.shape_cast %359 : vector<1x1x32xf32> to vector<1x32xf32>
    %cst_169 = arith.constant dense<0.000000e+00> : vector<2x8xf32>
    %361 = vector.multi_reduction <add>, %356, %cst_169 [2] : vector<2x8x32xf32> to vector<2x8xf32>
    %362 = vector.shape_cast %361 : vector<2x8xf32> to vector<2x8x1xf32>
    %cst_170 = arith.constant 3.200000e+01 : f32
    %363 = vector.broadcast %cst_170 : f32 to vector<2x8x1xf32>
    %364 = arith.divf %362, %363 : vector<2x8x1xf32>
    %365 = arith.mulf %356, %356 : vector<2x8x32xf32>
    %cst_171 = arith.constant dense<0.000000e+00> : vector<2x8xf32>
    %366 = vector.multi_reduction <add>, %365, %cst_171 [2] : vector<2x8x32xf32> to vector<2x8xf32>
    %367 = vector.shape_cast %366 : vector<2x8xf32> to vector<2x8x1xf32>
    %cst_172 = arith.constant 3.200000e+01 : f32
    %368 = vector.broadcast %cst_172 : f32 to vector<2x8x1xf32>
    %369 = arith.divf %367, %368 : vector<2x8x1xf32>
    %370 = arith.mulf %364, %364 : vector<2x8x1xf32>
    %371 = arith.subf %369, %370 : vector<2x8x1xf32>
    %372 = vector.broadcast %364 : vector<2x8x1xf32> to vector<2x8x32xf32>
    %373 = arith.subf %356, %372 : vector<2x8x32xf32>
    %cst_173 = arith.constant 9.99999974E-6 : f32
    %374 = vector.broadcast %cst_173 : f32 to vector<2x8x1xf32>
    %375 = arith.addf %371, %374 : vector<2x8x1xf32>
    %376 = math.rsqrt %375 : vector<2x8x1xf32>
    %377 = vector.broadcast %376 : vector<2x8x1xf32> to vector<2x8x32xf32>
    %378 = arith.mulf %373, %377 : vector<2x8x32xf32>
    %379 = vector.shape_cast %358 : vector<1x32xf32> to vector<1x1x32xf32>
    %380 = vector.broadcast %379 : vector<1x1x32xf32> to vector<2x8x32xf32>
    %381 = arith.mulf %378, %380 : vector<2x8x32xf32>
    %382 = vector.shape_cast %360 : vector<1x32xf32> to vector<1x1x32xf32>
    %383 = vector.broadcast %382 : vector<1x1x32xf32> to vector<2x8x32xf32>
    %384 = arith.addf %381, %383 : vector<2x8x32xf32>
    %385 = vector.extract_strided_slice %384 {offsets = [0, 0, 0], sizes = [2, 1, 32], strides = [1, 1, 1]} : vector<2x8x32xf32> to vector<2x1x32xf32>
    %386 = vector.shape_cast %385 : vector<2x1x32xf32> to vector<2x32xf32>
    %c0_174 = arith.constant 0 : index
    %c0_175 = arith.constant 0 : index
    %387 = vector.load %arg13[%c0_174, %c0_175] : memref<32x5xf32, #tpu.memory_space<vmem>>, vector<32x5xf32>
    %cst_176 = arith.constant dense<0.000000e+00> : vector<2x5xf32>
    %388 = tpu.matmul %386, %387, %cst_176 {dimension_numbers = #tpu.dot_dimension_numbers<[1], [0], [0], [1], [0, 0, 1, 1], [], []>} : vector<2x32xf32>, vector<32x5xf32>, vector<2x5xf32> -> vector<2x5xf32>
    %c0_177 = arith.constant 0 : index
    %c0_178 = arith.constant 0 : index
    %389 = vector.load %arg14[%c0_177, %c0_178] : memref<1x5xf32, #tpu.memory_space<vmem>>, vector<1x5xf32>
    %390 = vector.broadcast %389 : vector<1x5xf32> to vector<2x5xf32>
    %391 = arith.addf %388, %390 : vector<2x5xf32>
    %c0_179 = arith.constant 0 : index
    %c0_180 = arith.constant 0 : index
    %392 = vector.load %arg15[%c0_179, %c0_180] : memref<2x5xf32, #tpu.memory_space<vmem>>, vector<2x5xf32>
    tpu.vector_store %arg15[%c0_179, %c0_180], %391 {strides = array<i32>} : memref<2x5xf32, #tpu.memory_space<vmem>>, vector<2x5xf32>,
    return
  }
}

</mosaic_0001>

<llo_original>
// kernel: transformer_forward.1
$region0: #{transformer_forward.1}
  #allocation0 [shape = 'u32[]', space=smem, size = 0x4, offset = 0x4, fixed_abs, tag = 'smem constant byte address 0x4 - core index']
  #allocation1 [shape = 'u32[144,128]{1,0:T(1,128)}', space=vmem, size = 0x12000, scoped, tag = 'internal scratch']
  %s0 = inlined_call_operand.vmem [shape: f32[2,8,32], index: 0, kind: input, shape index: {}]
  %s1 = inlined_call_operand.vmem [shape: f32[2,32,96], index: 1, kind: input, shape index: {}]
  %s2 = inlined_call_operand.vmem [shape: f32[2,1,96], index: 2, kind: input, shape index: {}]
  %s3 = inlined_call_operand.vmem [shape: f32[2,4,8,32], index: 3, kind: input, shape index: {}]
  %s4 = inlined_call_operand.vmem [shape: f32[2,1,32], index: 4, kind: input, shape index: {}]
  %s5 = inlined_call_operand.vmem [shape: f32[2,1,32], index: 5, kind: input, shape index: {}]
  %s6 = inlined_call_operand.vmem [shape: f32[2,1,32], index: 6, kind: input, shape index: {}]
  %s7 = inlined_call_operand.vmem [shape: f32[2,1,32], index: 7, kind: input, shape index: {}]
  %s8 = inlined_call_operand.vmem [shape: f32[2,1,32], index: 8, kind: input, shape index: {}]
  %s9 = inlined_call_operand.vmem [shape: bf16[2,32,2048], index: 9, kind: input, shape index: {}]
  %s10 = inlined_call_operand.vmem [shape: f32[2,1,2048], index: 10, kind: input, shape index: {}]
  %s11 = inlined_call_operand.vmem [shape: bf16[2,2048,32], index: 11, kind: input, shape index: {}]
  %s12 = inlined_call_operand.vmem [shape: f32[2,1,32], index: 12, kind: input, shape index: {}]
  %s13 = inlined_call_operand.vmem [shape: f32[32,5], index: 13, kind: input, shape index: {}]
  %s14 = inlined_call_operand.vmem [shape: f32[1,5], index: 14, kind: input, shape index: {}]
  %s15 = inlined_call_operand.hbm [shape: f32[2,5], index: 15, kind: output, shape index: {}]
  %s16 = sld [smem:[#allocation0]]
  $region70: #{transformer_forward.1} parent=0
    _
  %s18 = ssub.s32 1, %s16
  %s19 = scalar_select 0, %s18, %s16
  $region1: #{transformer_forward.1} parent=0
    #allocation2 [shape = 'u8[1024]{0}', space=vmem, size = 0x400, scoped, tag = 'output window, operand 0, single buffered']
    #allocation3 [shape = 's32[1]{0}', space=sflag, size = 0x4, scoped, tag = 'scoped memory for transformer_forward.1']
    %20 = vsyncpa [#allocation3], 0
    // Predicated region
    $region2: #{transformer_forward.1} parent=1 // pred_check
      _
    $region3: #{transformer_forward.1} parent=1 // pred_check_branch
      %22 = sbr.rel (0) target = $region5
    $region4: #{transformer_forward.1} parent=1 // pred_region
      _
    $region5: #{transformer_forward.1} parent=1 // pred_fallthru
      _
    // Predicated region
    $region6: #{transformer_forward.1} parent=1 // pred_check
      _
    $region7: #{transformer_forward.1} parent=1 // pred_check_branch
      %24 = sbr.rel (0) target = $region9
    $region8: #{transformer_forward.1} parent=1 // pred_region
      _
    $region9: #{transformer_forward.1} parent=1 // pred_fallthru
      _
    // Predicated region
    $region10: #{transformer_forward.1} parent=1 // pred_check
      _
    $region11: #{transformer_forward.1} parent=1 // pred_check_branch
      %26 = sbr.rel (0) target = $region13
    $region12: #{transformer_forward.1} parent=1 // pred_region
      _
    $region13: #{transformer_forward.1} parent=1 // pred_fallthru
      _
    // Predicated region
    $region14: #{transformer_forward.1} parent=1 // pred_check
      _
    $region15: #{transformer_forward.1} parent=1 // pred_check_branch
      %28 = sbr.rel (0) target = $region17
    $region16: #{transformer_forward.1} parent=1 // pred_region
      _
    $region17: #{transformer_forward.1} parent=1 // pred_fallthru
      _
    // Predicated region
    $region18: #{transformer_forward.1} parent=1 // pred_check
      _
    $region19: #{transformer_forward.1} parent=1 // pred_check_branch
      %30 = sbr.rel (0) target = $region21
    $region20: #{transformer_forward.1} parent=1 // pred_region
      _
    $region21: #{transformer_forward.1} parent=1 // pred_fallthru
      _
    // Predicated region
    $region22: #{transformer_forward.1} parent=1 // pred_check
      _
    $region23: #{transformer_forward.1} parent=1 // pred_check_branch
      %32 = sbr.rel (0) target = $region25
    $region24: #{transformer_forward.1} parent=1 // pred_region
      _
    $region25: #{transformer_forward.1} parent=1 // pred_fallthru
      _
    // Predicated region
    $region26: #{transformer_forward.1} parent=1 // pred_check
      _
    $region27: #{transformer_forward.1} parent=1 // pred_check_branch
      %34 = sbr.rel (0) target = $region29
    $region28: #{transformer_forward.1} parent=1 // pred_region
      _
    $region29: #{transformer_forward.1} parent=1 // pred_fallthru
      _
    // Predicated region
    $region30: #{transformer_forward.1} parent=1 // pred_check
      _
    $region31: #{transformer_forward.1} parent=1 // pred_check_branch
      %36 = sbr.rel (0) target = $region33
    $region32: #{transformer_forward.1} parent=1 // pred_region
      _
    $region33: #{transformer_forward.1} parent=1 // pred_fallthru
      _
    // Predicated region
    $region34: #{transformer_forward.1} parent=1 // pred_check
      _
    $region35: #{transformer_forward.1} parent=1 // pred_check_branch
      %38 = sbr.rel (0) target = $region37
    $region36: #{transformer_forward.1} parent=1 // pred_region
      _
    $region37: #{transformer_forward.1} parent=1 // pred_fallthru
      _
    // Predicated region
    $region38: #{transformer_forward.1} parent=1 // pred_check
      _
    $region39: #{transformer_forward.1} parent=1 // pred_check_branch
      %40 = sbr.rel (0) target = $region41
    $region40: #{transformer_forward.1} parent=1 // pred_region
      _
    $region41: #{transformer_forward.1} parent=1 // pred_fallthru
      _
    // Predicated region
    $region42: #{transformer_forward.1} parent=1 // pred_check
      _
    $region43: #{transformer_forward.1} parent=1 // pred_check_branch
      %42 = sbr.rel (0) target = $region45
    $region44: #{transformer_forward.1} parent=1 // pred_region
      _
    $region45: #{transformer_forward.1} parent=1 // pred_fallthru
      _
    // Predicated region
    $region46: #{transformer_forward.1} parent=1 // pred_check
      _
    $region47: #{transformer_forward.1} parent=1 // pred_check_branch
      %44 = sbr.rel (0) target = $region49
    $region48: #{transformer_forward.1} parent=1 // pred_region
      _
    $region49: #{transformer_forward.1} parent=1 // pred_fallthru
      _
    // Predicated region
    $region50: #{transformer_forward.1} parent=1 // pred_check
      _
    $region51: #{transformer_forward.1} parent=1 // pred_check_branch
      %46 = sbr.rel (0) target = $region53
    $region52: #{transformer_forward.1} parent=1 // pred_region
      _
    $region53: #{transformer_forward.1} parent=1 // pred_fallthru
      _
    // Predicated region
    $region54: #{transformer_forward.1} parent=1 // pred_check
      _
    $region55: #{transformer_forward.1} parent=1 // pred_check_branch
      %48 = sbr.rel (0) target = $region57
    $region56: #{transformer_forward.1} parent=1 // pred_region
      _
    $region57: #{transformer_forward.1} parent=1 // pred_fallthru
      _
    // Predicated region
    $region58: #{transformer_forward.1} parent=1 // pred_check
      _
    $region59: #{transformer_forward.1} parent=1 // pred_check_branch
      %50 = sbr.rel (0) target = $region61
    $region60: #{transformer_forward.1} parent=1 // pred_region
      _
    $region61: #{transformer_forward.1} parent=1 // pred_fallthru
      _
    %v52 = vld [vmem:[%s0] sm:$0xff]
    %v53 = vld [vmem:[%s0 + $0x8] sm:$0xff]
    %v54 = vld [vmem:[%s1] sm:$0xff]
    %v55 = vld [vmem:[%s1 + $0x8] sm:$0xff]
    %v56 = vld [vmem:[%s1 + $0x10] sm:$0xff]
    %v57 = vld [vmem:[%s1 + $0x18] sm:$0xff]
    %v58 = vld [vmem:[%s2] sm:$0x1]
    %v60 = vlaneseq
    %v61 = vshrl.u32 %v60, 7
    %v62 = vsub.s32 0, %v61
    %v63 = vrot.slane %v58, %v62
    %vm65 = vcmask 261120
    %v67 = vsel %vm65, %v52, 0
    %v70 = vsel %vm65, %v53, 0
    %72 = vmatprep.subr.mxu0 0.0
    %73 = vmatpush1.msra.mxu0 %v54
    %74 = vmatprep.subr.mxu0 0.0
    %75 = vmatpush1.msra.mxu0 %v55
    %76 = vmatprep.subr.mxu0 0.0
    %77 = vmatpush1.msra.mxu0 %v56
    %78 = vmatprep.subr.mxu0 0.0
    %79 = vmatpush1.msra.mxu0 %v57
    %80 = vmatprep.subr.mxu0 0.0
    %81 = vmatpush1.msra.mxu0 0.0
    %82 = vmatprep.subr.mxu0 0.0
    %83 = vmatpush1.msra.mxu0 0.0
    %84 = vmatprep.subr.mxu0 0.0
    %85 = vmatpush1.msra.mxu0 0.0
    %86 = vmatprep.subr.mxu0 0.0
    %87 = vmatpush1.msra.mxu0 0.0
    %88 = vmatprep.subr.mxu0 0.0
    %89 = vmatpush1.msra.mxu0 0.0
    %90 = vmatprep.subr.mxu0 0.0
    %91 = vmatpush1.msra.mxu0 0.0
    %92 = vmatprep.subr.mxu0 0.0
    %93 = vmatpush1.msra.mxu0 0.0
    %94 = vmatprep.subr.mxu0 0.0
    %95 = vmatpush1.msra.mxu0 0.0
    %96 = vmatprep.subr.mxu0 0.0
    %97 = vmatpush1.msra.mxu0 0.0
    %98 = vmatprep.subr.mxu0 0.0
    %99 = vmatpush1.msra.mxu0 0.0
    %100 = vmatprep.subr.mxu0 0.0
    %101 = vmatpush1.msra.mxu0 0.0
    %102 = vmatprep.subr.mxu0 0.0
    %103 = vmatpush1.msra.mxu0 0.0
    %104 = vmatprep.subr.mxu0 0.0
    %105 = vmatpush1.msra.mxu0 0.0
    %106 = vmatprep.subr.mxu0 0.0
    %107 = vmatpush1.msra.mxu0 0.0
    %108 = vmatprep.subr.mxu0 0.0
    %109 = vmatpush1.msra.mxu0 0.0
    %110 = vmatprep.subr.mxu0 0.0
    %111 = vmatpush1.msra.mxu0 0.0
    %112 = vmatprep.subr.mxu0 0.0
    %113 = vmatpush1.msra.mxu0 0.0
    %114 = vmatprep.subr.mxu0 0.0
    %115 = vmatpush1.msra.mxu0 0.0
    %116 = vmatprep.subr.mxu0 0.0
    %117 = vmatpush1.msra.mxu0 0.0
    %118 = vmatprep.subr.mxu0 0.0
    %119 = vmatpush1.msra.mxu0 0.0
    %120 = vmatprep.subr.mxu0 0.0
    %121 = vmatpush1.msra.mxu0 0.0
    %122 = vmatprep.subr.mxu0 0.0
    %123 = vmatpush1.msra.mxu0 0.0
    %124 = vmatprep.subr.mxu0 0.0
    %125 = vmatpush1.msra.mxu0 0.0
    %126 = vmatprep.subr.mxu0 0.0
    %127 = vmatpush1.msra.mxu0 0.0
    %128 = vmatprep.subr.mxu0 0.0
    %129 = vmatpush1.msra.mxu0 0.0
    %130 = vmatprep.subr.mxu0 0.0
    %131 = vmatpush1.msra.mxu0 0.0
    %132 = vmatprep.subr.mxu0 0.0
    %133 = vmatpush1.msra.mxu0 0.0
    %134 = vmatprep.subr.mxu0 0.0
    %135 = vmatpush1.msra.mxu0 0.0
    %136 = vmatprep.mubr.f32.mxu0 0.0
    %137 = vmatmul.mubr.f32.gmra.mrb[0].mxu0 %v67
    %v138 = vpop.f32.mrb[0].mxu0
    %v139 = vadd.f32 %v63, %v138
    %v140 = vpop.f32.mrb[0].mxu0
    %141 = vmatprep.mubr.f32.mxu0 0.0
    %142 = vmatmul.mubr.f32.gmra.mrb[0].mxu0 %v70
    %v143 = vpop.f32.mrb[0].mxu0
    %v144 = vadd.f32 %v63, %v143
    %v145 = vpop.f32.mrb[0].mxu0
    %146 = vdwg.mxu0
    %148 = vrot.lane.b32.xlu0 %v139, 96
    %v149 = vpop.permute.xlu0 %148
    %vm150 = vcmask 64512
    %v151 = vsel %vm150, %v139, 0
    %v153 = vsel %vm150, %v149, 0
    %155 = vmatprep.subr.mxu0 0.0
    %156 = vmatpush1.xpose.msra.mxu0 %v153
    %157 = vmatprep.subr.mxu0 0.0
    %158 = vmatpush1.xpose.msra.mxu0 0.0
    %159 = vmatprep.subr.mxu0 0.0
    %160 = vmatpush1.xpose.msra.mxu0 0.0
    %161 = vmatprep.subr.mxu0 0.0
    %162 = vmatpush1.xpose.msra.mxu0 0.0
    %163 = vmatprep.subr.mxu0 0.0
    %164 = vmatpush1.xpose.msra.mxu0 0.0
    %165 = vmatprep.subr.mxu0 0.0
    %166 = vmatpush1.xpose.msra.mxu0 0.0
    %167 = vmatprep.subr.mxu0 0.0
    %168 = vmatpush1.xpose.msra.mxu0 0.0
    %169 = vmatprep.subr.mxu0 0.0
    %170 = vmatpush1.xpose.msra.mxu0 0.0
    %171 = vmatprep.subr.mxu0 0.0
    %172 = vmatpush1.xpose.msra.mxu0 0.0
    %173 = vmatprep.subr.mxu0 0.0
    %174 = vmatpush1.xpose.msra.mxu0 0.0
    %175 = vmatprep.subr.mxu0 0.0
    %176 = vmatpush1.xpose.msra.mxu0 0.0
    %177 = vmatprep.subr.mxu0 0.0
    %178 = vmatpush1.xpose.msra.mxu0 0.0
    %179 = vmatprep.subr.mxu0 0.0
    %180 = vmatpush1.xpose.msra.mxu0 0.0
    %181 = vmatprep.subr.mxu0 0.0
    %182 = vmatpush1.xpose.msra.mxu0 0.0
    %183 = vmatprep.subr.mxu0 0.0
    %184 = vmatpush1.xpose.msra.mxu0 0.0
    %185 = vmatprep.subr.mxu0 0.0
    %186 = vmatpush1.xpose.msra.mxu0 0.0
    %187 = vmatprep.subr.mxu0 0.0
    %188 = vmatpush1.xpose.msra.mxu0 0.0
    %189 = vmatprep.subr.mxu0 0.0
    %190 = vmatpush1.xpose.msra.mxu0 0.0
    %191 = vmatprep.subr.mxu0 0.0
    %192 = vmatpush1.xpose.msra.mxu0 0.0
    %193 = vmatprep.subr.mxu0 0.0
    %194 = vmatpush1.xpose.msra.mxu0 0.0
    %195 = vmatprep.subr.mxu0 0.0
    %196 = vmatpush1.xpose.msra.mxu0 0.0
    %197 = vmatprep.subr.mxu0 0.0
    %198 = vmatpush1.xpose.msra.mxu0 0.0
    %199 = vmatprep.subr.mxu0 0.0
    %200 = vmatpush1.xpose.msra.mxu0 0.0
    %201 = vmatprep.subr.mxu0 0.0
    %202 = vmatpush1.xpose.msra.mxu0 0.0
    %203 = vmatprep.subr.mxu0 0.0
    %204 = vmatpush1.xpose.msra.mxu0 0.0
    %205 = vmatprep.subr.mxu0 0.0
    %206 = vmatpush1.xpose.msra.mxu0 0.0
    %207 = vmatprep.subr.mxu0 0.0
    %208 = vmatpush1.xpose.msra.mxu0 0.0
    %209 = vmatprep.subr.mxu0 0.0
    %210 = vmatpush1.xpose.msra.mxu0 0.0
    %211 = vmatprep.subr.mxu0 0.0
    %212 = vmatpush1.xpose.msra.mxu0 0.0
    %213 = vmatprep.subr.mxu0 0.0
    %214 = vmatpush1.xpose.msra.mxu0 0.0
    %215 = vmatprep.subr.mxu0 0.0
    %216 = vmatpush1.xpose.msra.mxu0 0.0
    %217 = vmatprep.subr.mxu0 0.0
    %218 = vmatpush1.xpose.msra.mxu0 0.0
    %219 = vmatprep.mubr.f32.mxu0 0.0
    %220 = vmatmul.mubr.f32.gmra.mrb[0].mxu0 %v151
    %v221 = vpop.f32.mrb[0].mxu0
    %v222 = vadd.f32 0.0, %v221
    %v223 = vpop.f32.mrb[0].mxu0
    %224 = vdwg.mxu0
    %226 = vrot.lane.b32.xlu0 %v144, 96
    %v227 = vpop.permute.xlu0 %226
    %v228 = vsel %vm150, %v144, 0
    %v230 = vsel %vm150, %v227, 0
    %232 = vmatprep.subr.mxu0 0.0
    %233 = vmatpush1.xpose.msra.mxu0 %v230
    %234 = vmatprep.subr.mxu0 0.0
    %235 = vmatpush1.xpose.msra.mxu0 0.0
    %236 = vmatprep.subr.mxu0 0.0
    %237 = vmatpush1.xpose.msra.mxu0 0.0
    %238 = vmatprep.subr.mxu0 0.0
    %239 = vmatpush1.xpose.msra.mxu0 0.0
    %240 = vmatprep.subr.mxu0 0.0
    %241 = vmatpush1.xpose.msra.mxu0 0.0
    %242 = vmatprep.subr.mxu0 0.0
    %243 = vmatpush1.xpose.msra.mxu0 0.0
    %244 = vmatprep.subr.mxu0 0.0
    %245 = vmatpush1.xpose.msra.mxu0 0.0
    %246 = vmatprep.subr.mxu0 0.0
    %247 = vmatpush1.xpose.msra.mxu0 0.0
    %248 = vmatprep.subr.mxu0 0.0
    %249 = vmatpush1.xpose.msra.mxu0 0.0
    %250 = vmatprep.subr.mxu0 0.0
    %251 = vmatpush1.xpose.msra.mxu0 0.0
    %252 = vmatprep.subr.mxu0 0.0
    %253 = vmatpush1.xpose.msra.mxu0 0.0
    %254 = vmatprep.subr.mxu0 0.0
    %255 = vmatpush1.xpose.msra.mxu0 0.0
    %256 = vmatprep.subr.mxu0 0.0
    %257 = vmatpush1.xpose.msra.mxu0 0.0
    %258 = vmatprep.subr.mxu0 0.0
    %259 = vmatpush1.xpose.msra.mxu0 0.0
    %260 = vmatprep.subr.mxu0 0.0
    %261 = vmatpush1.xpose.msra.mxu0 0.0
    %262 = vmatprep.subr.mxu0 0.0
    %263 = vmatpush1.xpose.msra.mxu0 0.0
    %264 = vmatprep.subr.mxu0 0.0
    %265 = vmatpush1.xpose.msra.mxu0 0.0
    %266 = vmatprep.subr.mxu0 0.0
    %267 = vmatpush1.xpose.msra.mxu0 0.0
    %268 = vmatprep.subr.mxu0 0.0
    %269 = vmatpush1.xpose.msra.mxu0 0.0
    %270 = vmatprep.subr.mxu0 0.0
    %271 = vmatpush1.xpose.msra.mxu0 0.0
    %272 = vmatprep.subr.mxu0 0.0
    %273 = vmatpush1.xpose.msra.mxu0 0.0
    %274 = vmatprep.subr.mxu0 0.0
    %275 = vmatpush1.xpose.msra.mxu0 0.0
    %276 = vmatprep.subr.mxu0 0.0
    %277 = vmatpush1.xpose.msra.mxu0 0.0
    %278 = vmatprep.subr.mxu0 0.0
    %279 = vmatpush1.xpose.msra.mxu0 0.0
    %280 = vmatprep.subr.mxu0 0.0
    %281 = vmatpush1.xpose.msra.mxu0 0.0
    %282 = vmatprep.subr.mxu0 0.0
    %283 = vmatpush1.xpose.msra.mxu0 0.0
    %284 = vmatprep.subr.mxu0 0.0
    %285 = vmatpush1.xpose.msra.mxu0 0.0
    %286 = vmatprep.subr.mxu0 0.0
    %287 = vmatpush1.xpose.msra.mxu0 0.0
    %288 = vmatprep.subr.mxu0 0.0
    %289 = vmatpush1.xpose.msra.mxu0 0.0
    %290 = vmatprep.subr.mxu0 0.0
    %291 = vmatpush1.xpose.msra.mxu0 0.0
    %292 = vmatprep.subr.mxu0 0.0
    %293 = vmatpush1.xpose.msra.mxu0 0.0
    %294 = vmatprep.subr.mxu0 0.0
    %295 = vmatpush1.xpose.msra.mxu0 0.0
    %296 = vmatprep.mubr.f32.mxu0 0.0
    %297 = vmatmul.mubr.f32.gmra.mrb[0].mxu0 %v228
    %v298 = vpop.f32.mrb[0].mxu0
    %v299 = vadd.f32 0.0, %v298
    %v300 = vpop.f32.mrb[0].mxu0
    %301 = vdwg.mxu0
    %v302 = vmul.f32 %v222, 0.35355338
    %v303 = vmul.f32 %v299, 0.35355338
    %v304 = vsel %vm150, %v302, -inf
    %305 = vmax.xlane.f32.xlu0 %v304
    %v306 = vpop.xlane.xlu0 %305
    %v307 = vsel %vm150, %v303, -inf
    %308 = vmax.xlane.f32.xlu0 %v307
    %v309 = vpop.xlane.xlu0 %308
    %v310 = vsub.f32 %v302, %v306
    %v311 = vsub.f32 %v303, %v309
    %v312 = vmul.f32 %v310, 1.442695
    %v313 = vpow.pop %v312
    %v314 = vmul.f32 %v311, 1.442695
    %v315 = vpow.pop %v314
    %v316 = vsel %vm150, %v313, 0.0
    %317 = vadd.xlane.f32.xlu0 %v316
    %v318 = vpop.xlane.xlu0 %317
    %v319 = vsel %vm150, %v315, 0.0
    %320 = vadd.xlane.f32.xlu0 %v319
    %v321 = vpop.xlane.xlu0 %320
    %v322 = vrcp.pop %v318
    %v323 = vrcp.pop %v321
    %v324 = vmul.f32 %v313, %v322
    %v325 = vmul.f32 %v315, %v323
    %326 = vrot.lane.b32.xlu0 %v139, 64
    %v327 = vpop.permute.xlu0 %326
    %v330 = vsel %vm150, %v324, 0
    %332 = vmatprep.subr.mxu0 0.0
    %333 = vmatpush1.msra.mxu0 %v327
    %334 = vmatprep.subr.mxu0 0.0
    %335 = vmatpush1.msra.mxu0 0.0
    %336 = vmatprep.subr.mxu0 0.0
    %337 = vmatpush1.msra.mxu0 0.0
    %338 = vmatprep.subr.mxu0 0.0
    %339 = vmatpush1.msra.mxu0 0.0
    %340 = vmatprep.subr.mxu0 0.0
    %341 = vmatpush1.msra.mxu0 0.0
    %342 = vmatprep.subr.mxu0 0.0
    %343 = vmatpush1.msra.mxu0 0.0
    %344 = vmatprep.subr.mxu0 0.0
    %345 = vmatpush1.msra.mxu0 0.0
    %346 = vmatprep.subr.mxu0 0.0
    %347 = vmatpush1.msra.mxu0 0.0
    %348 = vmatprep.subr.mxu0 0.0
    %349 = vmatpush1.msra.mxu0 0.0
    %350 = vmatprep.subr.mxu0 0.0
    %351 = vmatpush1.msra.mxu0 0.0
    %352 = vmatprep.subr.mxu0 0.0
    %353 = vmatpush1.msra.mxu0 0.0
    %354 = vmatprep.subr.mxu0 0.0
    %355 = vmatpush1.msra.mxu0 0.0
    %356 = vmatprep.subr.mxu0 0.0
    %357 = vmatpush1.msra.mxu0 0.0
    %358 = vmatprep.subr.mxu0 0.0
    %359 = vmatpush1.msra.mxu0 0.0
    %360 = vmatprep.subr.mxu0 0.0
    %361 = vmatpush1.msra.mxu0 0.0
    %362 = vmatprep.subr.mxu0 0.0
    %363 = vmatpush1.msra.mxu0 0.0
    %364 = vmatprep.subr.mxu0 0.0
    %365 = vmatpush1.msra.mxu0 0.0
    %366 = vmatprep.subr.mxu0 0.0
    %367 = vmatpush1.msra.mxu0 0.0
    %368 = vmatprep.subr.mxu0 0.0
    %369 = vmatpush1.msra.mxu0 0.0
    %370 = vmatprep.subr.mxu0 0.0
    %371 = vmatpush1.msra.mxu0 0.0
    %372 = vmatprep.subr.mxu0 0.0
    %373 = vmatpush1.msra.mxu0 0.0
    %374 = vmatprep.subr.mxu0 0.0
    %375 = vmatpush1.msra.mxu0 0.0
    %376 = vmatprep.subr.mxu0 0.0
    %377 = vmatpush1.msra.mxu0 0.0
    %378 = vmatprep.subr.mxu0 0.0
    %379 = vmatpush1.msra.mxu0 0.0
    %380 = vmatprep.subr.mxu0 0.0
    %381 = vmatpush1.msra.mxu0 0.0
    %382 = vmatprep.subr.mxu0 0.0
    %383 = vmatpush1.msra.mxu0 0.0
    %384 = vmatprep.subr.mxu0 0.0
    %385 = vmatpush1.msra.mxu0 0.0
    %386 = vmatprep.subr.mxu0 0.0
    %387 = vmatpush1.msra.mxu0 0.0
    %388 = vmatprep.subr.mxu0 0.0
    %389 = vmatpush1.msra.mxu0 0.0
    %390 = vmatprep.subr.mxu0 0.0
    %391 = vmatpush1.msra.mxu0 0.0
    %392 = vmatprep.subr.mxu0 0.0
    %393 = vmatpush1.msra.mxu0 0.0
    %394 = vmatprep.subr.mxu0 0.0
    %395 = vmatpush1.msra.mxu0 0.0
    %396 = vmatprep.mubr.f32.mxu0 0.0
    %397 = vmatmul.mubr.f32.gmra.mrb[0].mxu0 %v330
    %v398 = vpop.f32.mrb[0].mxu0
    %v399 = vadd.f32 0.0, %v398
    %v400 = vpop.f32.mrb[0].mxu0
    %401 = vdwg.mxu0
    %402 = vrot.lane.b32.xlu0 %v144, 64
    %v403 = vpop.permute.xlu0 %402
    %v406 = vsel %vm150, %v325, 0
    %408 = vmatprep.subr.mxu0 0.0
    %409 = vmatpush1.msra.mxu0 %v403
    %410 = vmatprep.subr.mxu0 0.0
    %411 = vmatpush1.msra.mxu0 0.0
    %412 = vmatprep.subr.mxu0 0.0
    %413 = vmatpush1.msra.mxu0 0.0
    %414 = vmatprep.subr.mxu0 0.0
    %415 = vmatpush1.msra.mxu0 0.0
    %416 = vmatprep.subr.mxu0 0.0
    %417 = vmatpush1.msra.mxu0 0.0
    %418 = vmatprep.subr.mxu0 0.0
    %419 = vmatpush1.msra.mxu0 0.0
    %420 = vmatprep.subr.mxu0 0.0
    %421 = vmatpush1.msra.mxu0 0.0
    %422 = vmatprep.subr.mxu0 0.0
    %423 = vmatpush1.msra.mxu0 0.0
    %424 = vmatprep.subr.mxu0 0.0
    %425 = vmatpush1.msra.mxu0 0.0
    %426 = vmatprep.subr.mxu0 0.0
    %427 = vmatpush1.msra.mxu0 0.0
    %428 = vmatprep.subr.mxu0 0.0
    %429 = vmatpush1.msra.mxu0 0.0
    %430 = vmatprep.subr.mxu0 0.0
    %431 = vmatpush1.msra.mxu0 0.0
    %432 = vmatprep.subr.mxu0 0.0
    %433 = vmatpush1.msra.mxu0 0.0
    %434 = vmatprep.subr.mxu0 0.0
    %435 = vmatpush1.msra.mxu0 0.0
    %436 = vmatprep.subr.mxu0 0.0
    %437 = vmatpush1.msra.mxu0 0.0
    %438 = vmatprep.subr.mxu0 0.0
    %439 = vmatpush1.msra.mxu0 0.0
    %440 = vmatprep.subr.mxu0 0.0
    %441 = vmatpush1.msra.mxu0 0.0
    %442 = vmatprep.subr.mxu0 0.0
    %443 = vmatpush1.msra.mxu0 0.0
    %444 = vmatprep.subr.mxu0 0.0
    %445 = vmatpush1.msra.mxu0 0.0
    %446 = vmatprep.subr.mxu0 0.0
    %447 = vmatpush1.msra.mxu0 0.0
    %448 = vmatprep.subr.mxu0 0.0
    %449 = vmatpush1.msra.mxu0 0.0
    %450 = vmatprep.subr.mxu0 0.0
    %451 = vmatpush1.msra.mxu0 0.0
    %452 = vmatprep.subr.mxu0 0.0
    %453 = vmatpush1.msra.mxu0 0.0
    %454 = vmatprep.subr.mxu0 0.0
    %455 = vmatpush1.msra.mxu0 0.0
    %456 = vmatprep.subr.mxu0 0.0
    %457 = vmatpush1.msra.mxu0 0.0
    %458 = vmatprep.subr.mxu0 0.0
    %459 = vmatpush1.msra.mxu0 0.0
    %460 = vmatprep.subr.mxu0 0.0
    %461 = vmatpush1.msra.mxu0 0.0
    %462 = vmatprep.subr.mxu0 0.0
    %463 = vmatpush1.msra.mxu0 0.0
    %464 = vmatprep.subr.mxu0 0.0
    %465 = vmatpush1.msra.mxu0 0.0
    %466 = vmatprep.subr.mxu0 0.0
    %467 = vmatpush1.msra.mxu0 0.0
    %468 = vmatprep.subr.mxu0 0.0
    %469 = vmatpush1.msra.mxu0 0.0
    %470 = vmatprep.subr.mxu0 0.0
    %471 = vmatpush1.msra.mxu0 0.0
    %472 = vmatprep.mubr.f32.mxu0 0.0
    %473 = vmatmul.mubr.f32.gmra.mrb[0].mxu0 %v406
    %v474 = vpop.f32.mrb[0].mxu0
    %v475 = vadd.f32 0.0, %v474
    %v476 = vpop.f32.mrb[0].mxu0
    %477 = vdwg.mxu0
    %v478 = vld [vmem:[%s3] sm:$0xff]
    %479 = vrot.lane.b32.xlu0 %v139, 120
    %v480 = vpop.permute.xlu0 %479
    %481 = vrot.lane.b32.xlu0 %v139, 88
    %v482 = vpop.permute.xlu0 %481
    %v483 = vsel %vm150, %v480, 0
    %v485 = vsel %vm150, %v482, 0
    %487 = vmatprep.subr.mxu0 0.0
    %488 = vmatpush1.xpose.msra.mxu0 %v485
    %489 = vmatprep.subr.mxu0 0.0
    %490 = vmatpush1.xpose.msra.mxu0 0.0
    %491 = vmatprep.subr.mxu0 0.0
    %492 = vmatpush1.xpose.msra.mxu0 0.0
    %493 = vmatprep.subr.mxu0 0.0
    %494 = vmatpush1.xpose.msra.mxu0 0.0
    %495 = vmatprep.subr.mxu0 0.0
    %496 = vmatpush1.xpose.msra.mxu0 0.0
    %497 = vmatprep.subr.mxu0 0.0
    %498 = vmatpush1.xpose.msra.mxu0 0.0
    %499 = vmatprep.subr.mxu0 0.0
    %500 = vmatpush1.xpose.msra.mxu0 0.0
    %501 = vmatprep.subr.mxu0 0.0
    %502 = vmatpush1.xpose.msra.mxu0 0.0
    %503 = vmatprep.subr.mxu0 0.0
    %504 = vmatpush1.xpose.msra.mxu0 0.0
    %505 = vmatprep.subr.mxu0 0.0
    %506 = vmatpush1.xpose.msra.mxu0 0.0
    %507 = vmatprep.subr.mxu0 0.0
    %508 = vmatpush1.xpose.msra.mxu0 0.0
    %509 = vmatprep.subr.mxu0 0.0
    %510 = vmatpush1.xpose.msra.mxu0 0.0
    %511 = vmatprep.subr.mxu0 0.0
    %512 = vmatpush1.xpose.msra.mxu0 0.0
    %513 = vmatprep.subr.mxu0 0.0
    %514 = vmatpush1.xpose.msra.mxu0 0.0
    %515 = vmatprep.subr.mxu0 0.0
    %516 = vmatpush1.xpose.msra.mxu0 0.0
    %517 = vmatprep.subr.mxu0 0.0
    %518 = vmatpush1.xpose.msra.mxu0 0.0
    %519 = vmatprep.subr.mxu0 0.0
    %520 = vmatpush1.xpose.msra.mxu0 0.0
    %521 = vmatprep.subr.mxu0 0.0
    %522 = vmatpush1.xpose.msra.mxu0 0.0
    %523 = vmatprep.subr.mxu0 0.0
    %524 = vmatpush1.xpose.msra.mxu0 0.0
    %525 = vmatprep.subr.mxu0 0.0
    %526 = vmatpush1.xpose.msra.mxu0 0.0
    %527 = vmatprep.subr.mxu0 0.0
    %528 = vmatpush1.xpose.msra.mxu0 0.0
    %529 = vmatprep.subr.mxu0 0.0
    %530 = vmatpush1.xpose.msra.mxu0 0.0
    %531 = vmatprep.subr.mxu0 0.0
    %532 = vmatpush1.xpose.msra.mxu0 0.0
    %533 = vmatprep.subr.mxu0 0.0
    %534 = vmatpush1.xpose.msra.mxu0 0.0
    %535 = vmatprep.subr.mxu0 0.0
    %536 = vmatpush1.xpose.msra.mxu0 0.0
    %537 = vmatprep.subr.mxu0 0.0
    %538 = vmatpush1.xpose.msra.mxu0 0.0
    %539 = vmatprep.subr.mxu0 0.0
    %540 = vmatpush1.xpose.msra.mxu0 0.0
    %541 = vmatprep.subr.mxu0 0.0
    %542 = vmatpush1.xpose.msra.mxu0 0.0
    %543 = vmatprep.subr.mxu0 0.0
    %544 = vmatpush1.xpose.msra.mxu0 0.0
    %545 = vmatprep.subr.mxu0 0.0
    %546 = vmatpush1.xpose.msra.mxu0 0.0
    %547 = vmatprep.subr.mxu0 0.0
    %548 = vmatpush1.xpose.msra.mxu0 0.0
    %549 = vmatprep.subr.mxu0 0.0
    %550 = vmatpush1.xpose.msra.mxu0 0.0
    %551 = vmatprep.mubr.f32.mxu0 0.0
    %552 = vmatmul.mubr.f32.gmra.mrb[0].mxu0 %v483
    %v553 = vpop.f32.mrb[0].mxu0
    %v554 = vadd.f32 0.0, %v553
    %v555 = vpop.f32.mrb[0].mxu0
    %556 = vdwg.mxu0
    %557 = vrot.lane.b32.xlu0 %v144, 120
    %v558 = vpop.permute.xlu0 %557
    %559 = vrot.lane.b32.xlu0 %v144, 88
    %v560 = vpop.permute.xlu0 %559
    %v561 = vsel %vm150, %v558, 0
    %v563 = vsel %vm150, %v560, 0
    %565 = vmatprep.subr.mxu0 0.0
    %566 = vmatpush1.xpose.msra.mxu0 %v563
    %567 = vmatprep.subr.mxu0 0.0
    %568 = vmatpush1.xpose.msra.mxu0 0.0
    %569 = vmatprep.subr.mxu0 0.0
    %570 = vmatpush1.xpose.msra.mxu0 0.0
    %571 = vmatprep.subr.mxu0 0.0
    %572 = vmatpush1.xpose.msra.mxu0 0.0
    %573 = vmatprep.subr.mxu0 0.0
    %574 = vmatpush1.xpose.msra.mxu0 0.0
    %575 = vmatprep.subr.mxu0 0.0
    %576 = vmatpush1.xpose.msra.mxu0 0.0
    %577 = vmatprep.subr.mxu0 0.0
    %578 = vmatpush1.xpose.msra.mxu0 0.0
    %579 = vmatprep.subr.mxu0 0.0
    %580 = vmatpush1.xpose.msra.mxu0 0.0
    %581 = vmatprep.subr.mxu0 0.0
    %582 = vmatpush1.xpose.msra.mxu0 0.0
    %583 = vmatprep.subr.mxu0 0.0
    %584 = vmatpush1.xpose.msra.mxu0 0.0
    %585 = vmatprep.subr.mxu0 0.0
    %586 = vmatpush1.xpose.msra.mxu0 0.0
    %587 = vmatprep.subr.mxu0 0.0
    %588 = vmatpush1.xpose.msra.mxu0 0.0
    %589 = vmatprep.subr.mxu0 0.0
    %590 = vmatpush1.xpose.msra.mxu0 0.0
    %591 = vmatprep.subr.mxu0 0.0
    %592 = vmatpush1.xpose.msra.mxu0 0.0
    %593 = vmatprep.subr.mxu0 0.0
    %594 = vmatpush1.xpose.msra.mxu0 0.0
    %595 = vmatprep.subr.mxu0 0.0
    %596 = vmatpush1.xpose.msra.mxu0 0.0
    %597 = vmatprep.subr.mxu0 0.0
    %598 = vmatpush1.xpose.msra.mxu0 0.0
    %599 = vmatprep.subr.mxu0 0.0
    %600 = vmatpush1.xpose.msra.mxu0 0.0
    %601 = vmatprep.subr.mxu0 0.0
    %602 = vmatpush1.xpose.msra.mxu0 0.0
    %603 = vmatprep.subr.mxu0 0.0
    %604 = vmatpush1.xpose.msra.mxu0 0.0
    %605 = vmatprep.subr.mxu0 0.0
    %606 = vmatpush1.xpose.msra.mxu0 0.0
    %607 = vmatprep.subr.mxu0 0.0
    %608 = vmatpush1.xpose.msra.mxu0 0.0
    %609 = vmatprep.subr.mxu0 0.0
    %610 = vmatpush1.xpose.msra.mxu0 0.0
    %611 = vmatprep.subr.mxu0 0.0
    %612 = vmatpush1.xpose.msra.mxu0 0.0
    %613 = vmatprep.subr.mxu0 0.0
    %614 = vmatpush1.xpose.msra.mxu0 0.0
    %615 = vmatprep.subr.mxu0 0.0
    %616 = vmatpush1.xpose.msra.mxu0 0.0
    %617 = vmatprep.subr.mxu0 0.0
    %618 = vmatpush1.xpose.msra.mxu0 0.0
    %619 = vmatprep.subr.mxu0 0.0
    %620 = vmatpush1.xpose.msra.mxu0 0.0
    %621 = vmatprep.subr.mxu0 0.0
    %622 = vmatpush1.xpose.msra.mxu0 0.0
    %623 = vmatprep.subr.mxu0 0.0
    %624 = vmatpush1.xpose.msra.mxu0 0.0
    %625 = vmatprep.subr.mxu0 0.0
    %626 = vmatpush1.xpose.msra.mxu0 0.0
    %627 = vmatprep.subr.mxu0 0.0
    %628 = vmatpush1.xpose.msra.mxu0 0.0
    %629 = vmatprep.mubr.f32.mxu0 0.0
    %630 = vmatmul.mubr.f32.gmra.mrb[0].mxu0 %v561
    %v631 = vpop.f32.mrb[0].mxu0
    %v632 = vadd.f32 0.0, %v631
    %v633 = vpop.f32.mrb[0].mxu0
    %634 = vdwg.mxu0
    %v635 = vmul.f32 %v554, 0.35355338
    %v636 = vmul.f32 %v632, 0.35355338
    %v637 = vsel %vm150, %v635, -inf
    %638 = vmax.xlane.f32.xlu0 %v637
    %v639 = vpop.xlane.xlu0 %638
    %v640 = vsel %vm150, %v636, -inf
    %641 = vmax.xlane.f32.xlu0 %v640
    %v642 = vpop.xlane.xlu0 %641
    %v643 = vsub.f32 %v635, %v639
    %v644 = vsub.f32 %v636, %v642
    %v645 = vmul.f32 %v643, 1.442695
    %v646 = vpow.pop %v645
    %v647 = vmul.f32 %v644, 1.442695
    %v648 = vpow.pop %v647
    %v649 = vsel %vm150, %v646, 0.0
    %650 = vadd.xlane.f32.xlu0 %v649
    %v651 = vpop.xlane.xlu0 %650
    %v652 = vsel %vm150, %v648, 0.0
    %653 = vadd.xlane.f32.xlu0 %v652
    %v654 = vpop.xlane.xlu0 %653
    %v655 = vrcp.pop %v651
    %v656 = vrcp.pop %v654
    %v657 = vmul.f32 %v646, %v655
    %v658 = vmul.f32 %v648, %v656
    %659 = vrot.lane.b32.xlu0 %v139, 56
    %v660 = vpop.permute.xlu0 %659
    %v663 = vsel %vm150, %v657, 0
    %665 = vmatprep.subr.mxu0 0.0
    %666 = vmatpush1.msra.mxu0 %v660
    %667 = vmatprep.subr.mxu0 0.0
    %668 = vmatpush1.msra.mxu0 0.0
    %669 = vmatprep.subr.mxu0 0.0
    %670 = vmatpush1.msra.mxu0 0.0
    %671 = vmatprep.subr.mxu0 0.0
    %672 = vmatpush1.msra.mxu0 0.0
    %673 = vmatprep.subr.mxu0 0.0
    %674 = vmatpush1.msra.mxu0 0.0
    %675 = vmatprep.subr.mxu0 0.0
    %676 = vmatpush1.msra.mxu0 0.0
    %677 = vmatprep.subr.mxu0 0.0
    %678 = vmatpush1.msra.mxu0 0.0
    %679 = vmatprep.subr.mxu0 0.0
    %680 = vmatpush1.msra.mxu0 0.0
    %681 = vmatprep.subr.mxu0 0.0
    %682 = vmatpush1.msra.mxu0 0.0
    %683 = vmatprep.subr.mxu0 0.0
    %684 = vmatpush1.msra.mxu0 0.0
    %685 = vmatprep.subr.mxu0 0.0
    %686 = vmatpush1.msra.mxu0 0.0
    %687 = vmatprep.subr.mxu0 0.0
    %688 = vmatpush1.msra.mxu0 0.0
    %689 = vmatprep.subr.mxu0 0.0
    %690 = vmatpush1.msra.mxu0 0.0
    %691 = vmatprep.subr.mxu0 0.0
    %692 = vmatpush1.msra.mxu0 0.0
    %693 = vmatprep.subr.mxu0 0.0
    %694 = vmatpush1.msra.mxu0 0.0
    %695 = vmatprep.subr.mxu0 0.0
    %696 = vmatpush1.msra.mxu0 0.0
    %697 = vmatprep.subr.mxu0 0.0
    %698 = vmatpush1.msra.mxu0 0.0
    %699 = vmatprep.subr.mxu0 0.0
    %700 = vmatpush1.msra.mxu0 0.0
    %701 = vmatprep.subr.mxu0 0.0
    %702 = vmatpush1.msra.mxu0 0.0
    %703 = vmatprep.subr.mxu0 0.0
    %704 = vmatpush1.msra.mxu0 0.0
    %705 = vmatprep.subr.mxu0 0.0
    %706 = vmatpush1.msra.mxu0 0.0
    %707 = vmatprep.subr.mxu0 0.0
    %708 = vmatpush1.msra.mxu0 0.0
    %709 = vmatprep.subr.mxu0 0.0
    %710 = vmatpush1.msra.mxu0 0.0
    %711 = vmatprep.subr.mxu0 0.0
    %712 = vmatpush1.msra.mxu0 0.0
    %713 = vmatprep.subr.mxu0 0.0
    %714 = vmatpush1.msra.mxu0 0.0
    %715 = vmatprep.subr.mxu0 0.0
    %716 = vmatpush1.msra.mxu0 0.0
    %717 = vmatprep.subr.mxu0 0.0
    %718 = vmatpush1.msra.mxu0 0.0
    %719 = vmatprep.subr.mxu0 0.0
    %720 = vmatpush1.msra.mxu0 0.0
    %721 = vmatprep.subr.mxu0 0.0
    %722 = vmatpush1.msra.mxu0 0.0
    %723 = vmatprep.subr.mxu0 0.0
    %724 = vmatpush1.msra.mxu0 0.0
    %725 = vmatprep.subr.mxu0 0.0
    %726 = vmatpush1.msra.mxu0 0.0
    %727 = vmatprep.subr.mxu0 0.0
    %728 = vmatpush1.msra.mxu0 0.0
    %729 = vmatprep.mubr.f32.mxu0 0.0
    %730 = vmatmul.mubr.f32.gmra.mrb[0].mxu0 %v663
    %v731 = vpop.f32.mrb[0].mxu0
    %v732 = vadd.f32 0.0, %v731
    %v733 = vpop.f32.mrb[0].mxu0
    %734 = vdwg.mxu0
    %735 = vrot.lane.b32.xlu0 %v144, 56
    %v736 = vpop.permute.xlu0 %735
    %v739 = vsel %vm150, %v658, 0
    %741 = vmatprep.subr.mxu0 0.0
    %742 = vmatpush1.msra.mxu0 %v736
    %743 = vmatprep.subr.mxu0 0.0
    %744 = vmatpush1.msra.mxu0 0.0
    %745 = vmatprep.subr.mxu0 0.0
    %746 = vmatpush1.msra.mxu0 0.0
    %747 = vmatprep.subr.mxu0 0.0
    %748 = vmatpush1.msra.mxu0 0.0
    %749 = vmatprep.subr.mxu0 0.0
    %750 = vmatpush1.msra.mxu0 0.0
    %751 = vmatprep.subr.mxu0 0.0
    %752 = vmatpush1.msra.mxu0 0.0
    %753 = vmatprep.subr.mxu0 0.0
    %754 = vmatpush1.msra.mxu0 0.0
    %755 = vmatprep.subr.mxu0 0.0
    %756 = vmatpush1.msra.mxu0 0.0
    %757 = vmatprep.subr.mxu0 0.0
    %758 = vmatpush1.msra.mxu0 0.0
    %759 = vmatprep.subr.mxu0 0.0
    %760 = vmatpush1.msra.mxu0 0.0
    %761 = vmatprep.subr.mxu0 0.0
    %762 = vmatpush1.msra.mxu0 0.0
    %763 = vmatprep.subr.mxu0 0.0
    %764 = vmatpush1.msra.mxu0 0.0
    %765 = vmatprep.subr.mxu0 0.0
    %766 = vmatpush1.msra.mxu0 0.0
    %767 = vmatprep.subr.mxu0 0.0
    %768 = vmatpush1.msra.mxu0 0.0
    %769 = vmatprep.subr.mxu0 0.0
    %770 = vmatpush1.msra.mxu0 0.0
    %771 = vmatprep.subr.mxu0 0.0
    %772 = vmatpush1.msra.mxu0 0.0
    %773 = vmatprep.subr.mxu0 0.0
    %774 = vmatpush1.msra.mxu0 0.0
    %775 = vmatprep.subr.mxu0 0.0
    %776 = vmatpush1.msra.mxu0 0.0
    %777 = vmatprep.subr.mxu0 0.0
    %778 = vmatpush1.msra.mxu0 0.0
    %779 = vmatprep.subr.mxu0 0.0
    %780 = vmatpush1.msra.mxu0 0.0
    %781 = vmatprep.subr.mxu0 0.0
    %782 = vmatpush1.msra.mxu0 0.0
    %783 = vmatprep.subr.mxu0 0.0
    %784 = vmatpush1.msra.mxu0 0.0
    %785 = vmatprep.subr.mxu0 0.0
    %786 = vmatpush1.msra.mxu0 0.0
    %787 = vmatprep.subr.mxu0 0.0
    %788 = vmatpush1.msra.mxu0 0.0
    %789 = vmatprep.subr.mxu0 0.0
    %790 = vmatpush1.msra.mxu0 0.0
    %791 = vmatprep.subr.mxu0 0.0
    %792 = vmatpush1.msra.mxu0 0.0
    %793 = vmatprep.subr.mxu0 0.0
    %794 = vmatpush1.msra.mxu0 0.0
    %795 = vmatprep.subr.mxu0 0.0
    %796 = vmatpush1.msra.mxu0 0.0
    %797 = vmatprep.subr.mxu0 0.0
    %798 = vmatpush1.msra.mxu0 0.0
    %799 = vmatprep.subr.mxu0 0.0
    %800 = vmatpush1.msra.mxu0 0.0
    %801 = vmatprep.subr.mxu0 0.0
    %802 = vmatpush1.msra.mxu0 0.0
    %803 = vmatprep.subr.mxu0 0.0
    %804 = vmatpush1.msra.mxu0 0.0
    %805 = vmatprep.mubr.f32.mxu0 0.0
    %806 = vmatmul.mubr.f32.gmra.mrb[0].mxu0 %v739
    %v807 = vpop.f32.mrb[0].mxu0
    %v808 = vadd.f32 0.0, %v807
    %v809 = vpop.f32.mrb[0].mxu0
    %810 = vdwg.mxu0
    %s811 = scalar_lea.vmem %s3, 8
    %v812 = vld [vmem:[%s811] sm:$0xff]
    %v814 = vsel %vm150, %v732, 0
    %v817 = vsel %vm150, %v808, 0
    %819 = vmatprep.subr.mxu0 0.0
    %820 = vmatpush1.msra.mxu0 %v812
    %821 = vmatprep.subr.mxu0 0.0
    %822 = vmatpush1.msra.mxu0 0.0
    %823 = vmatprep.subr.mxu0 0.0
    %824 = vmatpush1.msra.mxu0 0.0
    %825 = vmatprep.subr.mxu0 0.0
    %826 = vmatpush1.msra.mxu0 0.0
    %827 = vmatprep.subr.mxu0 0.0
    %828 = vmatpush1.msra.mxu0 0.0
    %829 = vmatprep.subr.mxu0 0.0
    %830 = vmatpush1.msra.mxu0 0.0
    %831 = vmatprep.subr.mxu0 0.0
    %832 = vmatpush1.msra.mxu0 0.0
    %833 = vmatprep.subr.mxu0 0.0
    %834 = vmatpush1.msra.mxu0 0.0
    %835 = vmatprep.subr.mxu0 0.0
    %836 = vmatpush1.msra.mxu0 0.0
    %837 = vmatprep.subr.mxu0 0.0
    %838 = vmatpush1.msra.mxu0 0.0
    %839 = vmatprep.subr.mxu0 0.0
    %840 = vmatpush1.msra.mxu0 0.0
    %841 = vmatprep.subr.mxu0 0.0
    %842 = vmatpush1.msra.mxu0 0.0
    %843 = vmatprep.subr.mxu0 0.0
    %844 = vmatpush1.msra.mxu0 0.0
    %845 = vmatprep.subr.mxu0 0.0
    %846 = vmatpush1.msra.mxu0 0.0
    %847 = vmatprep.subr.mxu0 0.0
    %848 = vmatpush1.msra.mxu0 0.0
    %849 = vmatprep.subr.mxu0 0.0
    %850 = vmatpush1.msra.mxu0 0.0
    %851 = vmatprep.subr.mxu0 0.0
    %852 = vmatpush1.msra.mxu0 0.0
    %853 = vmatprep.subr.mxu0 0.0
    %854 = vmatpush1.msra.mxu0 0.0
    %855 = vmatprep.subr.mxu0 0.0
    %856 = vmatpush1.msra.mxu0 0.0
    %857 = vmatprep.subr.mxu0 0.0
    %858 = vmatpush1.msra.mxu0 0.0
    %859 = vmatprep.subr.mxu0 0.0
    %860 = vmatpush1.msra.mxu0 0.0
    %861 = vmatprep.subr.mxu0 0.0
    %862 = vmatpush1.msra.mxu0 0.0
    %863 = vmatprep.subr.mxu0 0.0
    %864 = vmatpush1.msra.mxu0 0.0
    %865 = vmatprep.subr.mxu0 0.0
    %866 = vmatpush1.msra.mxu0 0.0
    %867 = vmatprep.subr.mxu0 0.0
    %868 = vmatpush1.msra.mxu0 0.0
    %869 = vmatprep.subr.mxu0 0.0
    %870 = vmatpush1.msra.mxu0 0.0
    %871 = vmatprep.subr.mxu0 0.0
    %872 = vmatpush1.msra.mxu0 0.0
    %873 = vmatprep.subr.mxu0 0.0
    %874 = vmatpush1.msra.mxu0 0.0
    %875 = vmatprep.subr.mxu0 0.0
    %876 = vmatpush1.msra.mxu0 0.0
    %877 = vmatprep.subr.mxu0 0.0
    %878 = vmatpush1.msra.mxu0 0.0
    %879 = vmatprep.subr.mxu0 0.0
    %880 = vmatpush1.msra.mxu0 0.0
    %881 = vmatprep.subr.mxu0 0.0
    %882 = vmatpush1.msra.mxu0 0.0
    %883 = vmatprep.mubr.f32.mxu0 0.0
    %884 = vmatmul.mubr.f32.gmra.mrb[0].mxu0 %v814
    %v885 = vpop.f32.mrb[0].mxu0
    %v886 = vadd.f32 0.0, %v885
    %v887 = vpop.f32.mrb[0].mxu0
    %888 = vmatprep.mubr.f32.mxu0 0.0
    %889 = vmatmul.mubr.f32.gmra.mrb[0].mxu0 %v817
    %v890 = vpop.f32.mrb[0].mxu0
    %v891 = vadd.f32 0.0, %v890
    %v892 = vpop.f32.mrb[0].mxu0
    %893 = vdwg.mxu0
    %v895 = vsel %vm150, %v399, 0
    %v898 = vsel %vm150, %v475, 0
    %900 = vmatprep.subr.mxu0 0.0
    %901 = vmatpush1.msra.mxu0 %v478
    %902 = vmatprep.subr.mxu0 0.0
    %903 = vmatpush1.msra.mxu0 0.0
    %904 = vmatprep.subr.mxu0 0.0
    %905 = vmatpush1.msra.mxu0 0.0
    %906 = vmatprep.subr.mxu0 0.0
    %907 = vmatpush1.msra.mxu0 0.0
    %908 = vmatprep.subr.mxu0 0.0
    %909 = vmatpush1.msra.mxu0 0.0
    %910 = vmatprep.subr.mxu0 0.0
    %911 = vmatpush1.msra.mxu0 0.0
    %912 = vmatprep.subr.mxu0 0.0
    %913 = vmatpush1.msra.mxu0 0.0
    %914 = vmatprep.subr.mxu0 0.0
    %915 = vmatpush1.msra.mxu0 0.0
    %916 = vmatprep.subr.mxu0 0.0
    %917 = vmatpush1.msra.mxu0 0.0
    %918 = vmatprep.subr.mxu0 0.0
    %919 = vmatpush1.msra.mxu0 0.0
    %920 = vmatprep.subr.mxu0 0.0
    %921 = vmatpush1.msra.mxu0 0.0
    %922 = vmatprep.subr.mxu0 0.0
    %923 = vmatpush1.msra.mxu0 0.0
    %924 = vmatprep.subr.mxu0 0.0
    %925 = vmatpush1.msra.mxu0 0.0
    %926 = vmatprep.subr.mxu0 0.0
    %927 = vmatpush1.msra.mxu0 0.0
    %928 = vmatprep.subr.mxu0 0.0
    %929 = vmatpush1.msra.mxu0 0.0
    %930 = vmatprep.subr.mxu0 0.0
    %931 = vmatpush1.msra.mxu0 0.0
    %932 = vmatprep.subr.mxu0 0.0
    %933 = vmatpush1.msra.mxu0 0.0
    %934 = vmatprep.subr.mxu0 0.0
    %935 = vmatpush1.msra.mxu0 0.0
    %936 = vmatprep.subr.mxu0 0.0
    %937 = vmatpush1.msra.mxu0 0.0
    %938 = vmatprep.subr.mxu0 0.0
    %939 = vmatpush1.msra.mxu0 0.0
    %940 = vmatprep.subr.mxu0 0.0
    %941 = vmatpush1.msra.mxu0 0.0
    %942 = vmatprep.subr.mxu0 0.0
    %943 = vmatpush1.msra.mxu0 0.0
    %944 = vmatprep.subr.mxu0 0.0
    %945 = vmatpush1.msra.mxu0 0.0
    %946 = vmatprep.subr.mxu0 0.0
    %947 = vmatpush1.msra.mxu0 0.0
    %948 = vmatprep.subr.mxu0 0.0
    %949 = vmatpush1.msra.mxu0 0.0
    %950 = vmatprep.subr.mxu0 0.0
    %951 = vmatpush1.msra.mxu0 0.0
    %952 = vmatprep.subr.mxu0 0.0
    %953 = vmatpush1.msra.mxu0 0.0
    %954 = vmatprep.subr.mxu0 0.0
    %955 = vmatpush1.msra.mxu0 0.0
    %956 = vmatprep.subr.mxu0 0.0
    %957 = vmatpush1.msra.mxu0 0.0
    %958 = vmatprep.subr.mxu0 0.0
    %959 = vmatpush1.msra.mxu0 0.0
    %960 = vmatprep.subr.mxu0 0.0
    %961 = vmatpush1.msra.mxu0 0.0
    %962 = vmatprep.subr.mxu0 0.0
    %963 = vmatpush1.msra.mxu0 0.0
    %964 = vmatprep.mubr.f32.mxu0 0.0
    %965 = vmatmul.mubr.f32.gmra.mrb[0].mxu0 %v895
    %v966 = vpop.f32.mrb[0].mxu0
    %v967 = vadd.f32 %v886, %v966
    %v968 = vpop.f32.mrb[0].mxu0
    %969 = vmatprep.mubr.f32.mxu0 0.0
    %970 = vmatmul.mubr.f32.gmra.mrb[0].mxu0 %v898
    %v971 = vpop.f32.mrb[0].mxu0
    %v972 = vadd.f32 %v891, %v971
    %v973 = vpop.f32.mrb[0].mxu0
    %974 = vdwg.mxu0
    %975 = vrot.lane.b32.xlu0 %v139, 112
    %v976 = vpop.permute.xlu0 %975
    %977 = vrot.lane.b32.xlu0 %v139, 80
    %v978 = vpop.permute.xlu0 %977
    %v979 = vsel %vm150, %v976, 0
    %v981 = vsel %vm150, %v978, 0
    %983 = vmatprep.subr.mxu0 0.0
    %984 = vmatpush1.xpose.msra.mxu0 %v981
    %985 = vmatprep.subr.mxu0 0.0
    %986 = vmatpush1.xpose.msra.mxu0 0.0
    %987 = vmatprep.subr.mxu0 0.0
    %988 = vmatpush1.xpose.msra.mxu0 0.0
    %989 = vmatprep.subr.mxu0 0.0
    %990 = vmatpush1.xpose.msra.mxu0 0.0
    %991 = vmatprep.subr.mxu0 0.0
    %992 = vmatpush1.xpose.msra.mxu0 0.0
    %993 = vmatprep.subr.mxu0 0.0
    %994 = vmatpush1.xpose.msra.mxu0 0.0
    %995 = vmatprep.subr.mxu0 0.0
    %996 = vmatpush1.xpose.msra.mxu0 0.0
    %997 = vmatprep.subr.mxu0 0.0
    %998 = vmatpush1.xpose.msra.mxu0 0.0
    %999 = vmatprep.subr.mxu0 0.0
    %1000 = vmatpush1.xpose.msra.mxu0 0.0
    %1001 = vmatprep.subr.mxu0 0.0
    %1002 = vmatpush1.xpose.msra.mxu0 0.0
    %1003 = vmatprep.subr.mxu0 0.0
    %1004 = vmatpush1.xpose.msra.mxu0 0.0
    %1005 = vmatprep.subr.mxu0 0.0
    %1006 = vmatpush1.xpose.msra.mxu0 0.0
    %1007 = vmatprep.subr.mxu0 0.0
    %1008 = vmatpush1.xpose.msra.mxu0 0.0
    %1009 = vmatprep.subr.mxu0 0.0
    %1010 = vmatpush1.xpose.msra.mxu0 0.0
    %1011 = vmatprep.subr.mxu0 0.0
    %1012 = vmatpush1.xpose.msra.mxu0 0.0
    %1013 = vmatprep.subr.mxu0 0.0
    %1014 = vmatpush1.xpose.msra.mxu0 0.0
    %1015 = vmatprep.subr.mxu0 0.0
    %1016 = vmatpush1.xpose.msra.mxu0 0.0
    %1017 = vmatprep.subr.mxu0 0.0
    %1018 = vmatpush1.xpose.msra.mxu0 0.0
    %1019 = vmatprep.subr.mxu0 0.0
    %1020 = vmatpush1.xpose.msra.mxu0 0.0
    %1021 = vmatprep.subr.mxu0 0.0
    %1022 = vmatpush1.xpose.msra.mxu0 0.0
    %1023 = vmatprep.subr.mxu0 0.0
    %1024 = vmatpush1.xpose.msra.mxu0 0.0
    %1025 = vmatprep.subr.mxu0 0.0
    %1026 = vmatpush1.xpose.msra.mxu0 0.0
    %1027 = vmatprep.subr.mxu0 0.0
    %1028 = vmatpush1.xpose.msra.mxu0 0.0
    %1029 = vmatprep.subr.mxu0 0.0
    %1030 = vmatpush1.xpose.msra.mxu0 0.0
    %1031 = vmatprep.subr.mxu0 0.0
    %1032 = vmatpush1.xpose.msra.mxu0 0.0
    %1033 = vmatprep.subr.mxu0 0.0
    %1034 = vmatpush1.xpose.msra.mxu0 0.0
    %1035 = vmatprep.subr.mxu0 0.0
    %1036 = vmatpush1.xpose.msra.mxu0 0.0
    %1037 = vmatprep.subr.mxu0 0.0
    %1038 = vmatpush1.xpose.msra.mxu0 0.0
    %1039 = vmatprep.subr.mxu0 0.0
    %1040 = vmatpush1.xpose.msra.mxu0 0.0
    %1041 = vmatprep.subr.mxu0 0.0
    %1042 = vmatpush1.xpose.msra.mxu0 0.0
    %1043 = vmatprep.subr.mxu0 0.0
    %1044 = vmatpush1.xpose.msra.mxu0 0.0
    %1045 = vmatprep.subr.mxu0 0.0
    %1046 = vmatpush1.xpose.msra.mxu0 0.0
    %1047 = vmatprep.mubr.f32.mxu0 0.0
    %1048 = vmatmul.mubr.f32.gmra.mrb[0].mxu0 %v979
    %v1049 = vpop.f32.mrb[0].mxu0
    %v1050 = vadd.f32 0.0, %v1049
    %v1051 = vpop.f32.mrb[0].mxu0
    %1052 = vdwg.mxu0
    %1053 = vrot.lane.b32.xlu0 %v144, 112
    %v1054 = vpop.permute.xlu0 %1053
    %1055 = vrot.lane.b32.xlu0 %v144, 80
    %v1056 = vpop.permute.xlu0 %1055
    %v1057 = vsel %vm150, %v1054, 0
    %v1059 = vsel %vm150, %v1056, 0
    %1061 = vmatprep.subr.mxu0 0.0
    %1062 = vmatpush1.xpose.msra.mxu0 %v1059
    %1063 = vmatprep.subr.mxu0 0.0
    %1064 = vmatpush1.xpose.msra.mxu0 0.0
    %1065 = vmatprep.subr.mxu0 0.0
    %1066 = vmatpush1.xpose.msra.mxu0 0.0
    %1067 = vmatprep.subr.mxu0 0.0
    %1068 = vmatpush1.xpose.msra.mxu0 0.0
    %1069 = vmatprep.subr.mxu0 0.0
    %1070 = vmatpush1.xpose.msra.mxu0 0.0
    %1071 = vmatprep.subr.mxu0 0.0
    %1072 = vmatpush1.xpose.msra.mxu0 0.0
    %1073 = vmatprep.subr.mxu0 0.0
    %1074 = vmatpush1.xpose.msra.mxu0 0.0
    %1075 = vmatprep.subr.mxu0 0.0
    %1076 = vmatpush1.xpose.msra.mxu0 0.0
    %1077 = vmatprep.subr.mxu0 0.0
    %1078 = vmatpush1.xpose.msra.mxu0 0.0
    %1079 = vmatprep.subr.mxu0 0.0
    %1080 = vmatpush1.xpose.msra.mxu0 0.0
    %1081 = vmatprep.subr.mxu0 0.0
    %1082 = vmatpush1.xpose.msra.mxu0 0.0
    %1083 = vmatprep.subr.mxu0 0.0
    %1084 = vmatpush1.xpose.msra.mxu0 0.0
    %1085 = vmatprep.subr.mxu0 0.0
    %1086 = vmatpush1.xpose.msra.mxu0 0.0
    %1087 = vmatprep.subr.mxu0 0.0
    %1088 = vmatpush1.xpose.msra.mxu0 0.0
    %1089 = vmatprep.subr.mxu0 0.0
    %1090 = vmatpush1.xpose.msra.mxu0 0.0
    %1091 = vmatprep.subr.mxu0 0.0
    %1092 = vmatpush1.xpose.msra.mxu0 0.0
    %1093 = vmatprep.subr.mxu0 0.0
    %1094 = vmatpush1.xpose.msra.mxu0 0.0
    %1095 = vmatprep.subr.mxu0 0.0
    %1096 = vmatpush1.xpose.msra.mxu0 0.0
    %1097 = vmatprep.subr.mxu0 0.0
    %1098 = vmatpush1.xpose.msra.mxu0 0.0
    %1099 = vmatprep.subr.mxu0 0.0
    %1100 = vmatpush1.xpose.msra.mxu0 0.0
    %1101 = vmatprep.subr.mxu0 0.0
    %1102 = vmatpush1.xpose.msra.mxu0 0.0
    %1103 = vmatprep.subr.mxu0 0.0
    %1104 = vmatpush1.xpose.msra.mxu0 0.0
    %1105 = vmatprep.subr.mxu0 0.0
    %1106 = vmatpush1.xpose.msra.mxu0 0.0
    %1107 = vmatprep.subr.mxu0 0.0
    %1108 = vmatpush1.xpose.msra.mxu0 0.0
    %1109 = vmatprep.subr.mxu0 0.0
    %1110 = vmatpush1.xpose.msra.mxu0 0.0
    %1111 = vmatprep.subr.mxu0 0.0
    %1112 = vmatpush1.xpose.msra.mxu0 0.0
    %1113 = vmatprep.subr.mxu0 0.0
    %1114 = vmatpush1.xpose.msra.mxu0 0.0
    %1115 = vmatprep.subr.mxu0 0.0
    %1116 = vmatpush1.xpose.msra.mxu0 0.0
    %1117 = vmatprep.subr.mxu0 0.0
    %1118 = vmatpush1.xpose.msra.mxu0 0.0
    %1119 = vmatprep.subr.mxu0 0.0
    %1120 = vmatpush1.xpose.msra.mxu0 0.0
    %1121 = vmatprep.subr.mxu0 0.0
    %1122 = vmatpush1.xpose.msra.mxu0 0.0
    %1123 = vmatprep.subr.mxu0 0.0
    %1124 = vmatpush1.xpose.msra.mxu0 0.0
    %1125 = vmatprep.mubr.f32.mxu0 0.0
    %1126 = vmatmul.mubr.f32.gmra.mrb[0].mxu0 %v1057
    %v1127 = vpop.f32.mrb[0].mxu0
    %v1128 = vadd.f32 0.0, %v1127
    %v1129 = vpop.f32.mrb[0].mxu0
    %1130 = vdwg.mxu0
    %v1131 = vmul.f32 %v1050, 0.35355338
    %v1132 = vmul.f32 %v1128, 0.35355338
    %v1133 = vsel %vm150, %v1131, -inf
    %1134 = vmax.xlane.f32.xlu0 %v1133
    %v1135 = vpop.xlane.xlu0 %1134
    %v1136 = vsel %vm150, %v1132, -inf
    %1137 = vmax.xlane.f32.xlu0 %v1136
    %v1138 = vpop.xlane.xlu0 %1137
    %v1139 = vsub.f32 %v1131, %v1135
    %v1140 = vsub.f32 %v1132, %v1138
    %v1141 = vmul.f32 %v1139, 1.442695
    %v1142 = vpow.pop %v1141
    %v1143 = vmul.f32 %v1140, 1.442695
    %v1144 = vpow.pop %v1143
    %v1145 = vsel %vm150, %v1142, 0.0
    %1146 = vadd.xlane.f32.xlu0 %v1145
    %v1147 = vpop.xlane.xlu0 %1146
    %v1148 = vsel %vm150, %v1144, 0.0
    %1149 = vadd.xlane.f32.xlu0 %v1148
    %v1150 = vpop.xlane.xlu0 %1149
    %v1151 = vrcp.pop %v1147
    %v1152 = vrcp.pop %v1150
    %v1153 = vmul.f32 %v1142, %v1151
    %v1154 = vmul.f32 %v1144, %v1152
    %1155 = vrot.lane.b32.xlu0 %v139, 48
    %v1156 = vpop.permute.xlu0 %1155
    %v1159 = vsel %vm150, %v1153, 0
    %1161 = vmatprep.subr.mxu0 0.0
    %1162 = vmatpush1.msra.mxu0 %v1156
    %1163 = vmatprep.subr.mxu0 0.0
    %1164 = vmatpush1.msra.mxu0 0.0
    %1165 = vmatprep.subr.mxu0 0.0
    %1166 = vmatpush1.msra.mxu0 0.0
    %1167 = vmatprep.subr.mxu0 0.0
    %1168 = vmatpush1.msra.mxu0 0.0
    %1169 = vmatprep.subr.mxu0 0.0
    %1170 = vmatpush1.msra.mxu0 0.0
    %1171 = vmatprep.subr.mxu0 0.0
    %1172 = vmatpush1.msra.mxu0 0.0
    %1173 = vmatprep.subr.mxu0 0.0
    %1174 = vmatpush1.msra.mxu0 0.0
    %1175 = vmatprep.subr.mxu0 0.0
    %1176 = vmatpush1.msra.mxu0 0.0
    %1177 = vmatprep.subr.mxu0 0.0
    %1178 = vmatpush1.msra.mxu0 0.0
    %1179 = vmatprep.subr.mxu0 0.0
    %1180 = vmatpush1.msra.mxu0 0.0
    %1181 = vmatprep.subr.mxu0 0.0
    %1182 = vmatpush1.msra.mxu0 0.0
    %1183 = vmatprep.subr.mxu0 0.0
    %1184 = vmatpush1.msra.mxu0 0.0
    %1185 = vmatprep.subr.mxu0 0.0
    %1186 = vmatpush1.msra.mxu0 0.0
    %1187 = vmatprep.subr.mxu0 0.0
    %1188 = vmatpush1.msra.mxu0 0.0
    %1189 = vmatprep.subr.mxu0 0.0
    %1190 = vmatpush1.msra.mxu0 0.0
    %1191 = vmatprep.subr.mxu0 0.0
    %1192 = vmatpush1.msra.mxu0 0.0
    %1193 = vmatprep.subr.mxu0 0.0
    %1194 = vmatpush1.msra.mxu0 0.0
    %1195 = vmatprep.subr.mxu0 0.0
    %1196 = vmatpush1.msra.mxu0 0.0
    %1197 = vmatprep.subr.mxu0 0.0
    %1198 = vmatpush1.msra.mxu0 0.0
    %1199 = vmatprep.subr.mxu0 0.0
    %1200 = vmatpush1.msra.mxu0 0.0
    %1201 = vmatprep.subr.mxu0 0.0
    %1202 = vmatpush1.msra.mxu0 0.0
    %1203 = vmatprep.subr.mxu0 0.0
    %1204 = vmatpush1.msra.mxu0 0.0
    %1205 = vmatprep.subr.mxu0 0.0
    %1206 = vmatpush1.msra.mxu0 0.0
    %1207 = vmatprep.subr.mxu0 0.0
    %1208 = vmatpush1.msra.mxu0 0.0
    %1209 = vmatprep.subr.mxu0 0.0
    %1210 = vmatpush1.msra.mxu0 0.0
    %1211 = vmatprep.subr.mxu0 0.0
    %1212 = vmatpush1.msra.mxu0 0.0
    %1213 = vmatprep.subr.mxu0 0.0
    %1214 = vmatpush1.msra.mxu0 0.0
    %1215 = vmatprep.subr.mxu0 0.0
    %1216 = vmatpush1.msra.mxu0 0.0
    %1217 = vmatprep.subr.mxu0 0.0
    %1218 = vmatpush1.msra.mxu0 0.0
    %1219 = vmatprep.subr.mxu0 0.0
    %1220 = vmatpush1.msra.mxu0 0.0
    %1221 = vmatprep.subr.mxu0 0.0
    %1222 = vmatpush1.msra.mxu0 0.0
    %1223 = vmatprep.subr.mxu0 0.0
    %1224 = vmatpush1.msra.mxu0 0.0
    %1225 = vmatprep.mubr.f32.mxu0 0.0
    %1226 = vmatmul.mubr.f32.gmra.mrb[0].mxu0 %v1159
    %v1227 = vpop.f32.mrb[0].mxu0
    %v1228 = vadd.f32 0.0, %v1227
    %v1229 = vpop.f32.mrb[0].mxu0
    %1230 = vdwg.mxu0
    %1231 = vrot.lane.b32.xlu0 %v144, 48
    %v1232 = vpop.permute.xlu0 %1231
    %v1235 = vsel %vm150, %v1154, 0
    %1237 = vmatprep.subr.mxu0 0.0
    %1238 = vmatpush1.msra.mxu0 %v1232
    %1239 = vmatprep.subr.mxu0 0.0
    %1240 = vmatpush1.msra.mxu0 0.0
    %1241 = vmatprep.subr.mxu0 0.0
    %1242 = vmatpush1.msra.mxu0 0.0
    %1243 = vmatprep.subr.mxu0 0.0
    %1244 = vmatpush1.msra.mxu0 0.0
    %1245 = vmatprep.subr.mxu0 0.0
    %1246 = vmatpush1.msra.mxu0 0.0
    %1247 = vmatprep.subr.mxu0 0.0
    %1248 = vmatpush1.msra.mxu0 0.0
    %1249 = vmatprep.subr.mxu0 0.0
    %1250 = vmatpush1.msra.mxu0 0.0
    %1251 = vmatprep.subr.mxu0 0.0
    %1252 = vmatpush1.msra.mxu0 0.0
    %1253 = vmatprep.subr.mxu0 0.0
    %1254 = vmatpush1.msra.mxu0 0.0
    %1255 = vmatprep.subr.mxu0 0.0
    %1256 = vmatpush1.msra.mxu0 0.0
    %1257 = vmatprep.subr.mxu0 0.0
    %1258 = vmatpush1.msra.mxu0 0.0
    %1259 = vmatprep.subr.mxu0 0.0
    %1260 = vmatpush1.msra.mxu0 0.0
    %1261 = vmatprep.subr.mxu0 0.0
    %1262 = vmatpush1.msra.mxu0 0.0
    %1263 = vmatprep.subr.mxu0 0.0
    %1264 = vmatpush1.msra.mxu0 0.0
    %1265 = vmatprep.subr.mxu0 0.0
    %1266 = vmatpush1.msra.mxu0 0.0
    %1267 = vmatprep.subr.mxu0 0.0
    %1268 = vmatpush1.msra.mxu0 0.0
    %1269 = vmatprep.subr.mxu0 0.0
    %1270 = vmatpush1.msra.mxu0 0.0
    %1271 = vmatprep.subr.mxu0 0.0
    %1272 = vmatpush1.msra.mxu0 0.0
    %1273 = vmatprep.subr.mxu0 0.0
    %1274 = vmatpush1.msra.mxu0 0.0
    %1275 = vmatprep.subr.mxu0 0.0
    %1276 = vmatpush1.msra.mxu0 0.0
    %1277 = vmatprep.subr.mxu0 0.0
    %1278 = vmatpush1.msra.mxu0 0.0
    %1279 = vmatprep.subr.mxu0 0.0
    %1280 = vmatpush1.msra.mxu0 0.0
    %1281 = vmatprep.subr.mxu0 0.0
    %1282 = vmatpush1.msra.mxu0 0.0
    %1283 = vmatprep.subr.mxu0 0.0
    %1284 = vmatpush1.msra.mxu0 0.0
    %1285 = vmatprep.subr.mxu0 0.0
    %1286 = vmatpush1.msra.mxu0 0.0
    %1287 = vmatprep.subr.mxu0 0.0
    %1288 = vmatpush1.msra.mxu0 0.0
    %1289 = vmatprep.subr.mxu0 0.0
    %1290 = vmatpush1.msra.mxu0 0.0
    %1291 = vmatprep.subr.mxu0 0.0
    %1292 = vmatpush1.msra.mxu0 0.0
    %1293 = vmatprep.subr.mxu0 0.0
    %1294 = vmatpush1.msra.mxu0 0.0
    %1295 = vmatprep.subr.mxu0 0.0
    %1296 = vmatpush1.msra.mxu0 0.0
    %1297 = vmatprep.subr.mxu0 0.0
    %1298 = vmatpush1.msra.mxu0 0.0
    %1299 = vmatprep.subr.mxu0 0.0
    %1300 = vmatpush1.msra.mxu0 0.0
    %1301 = vmatprep.mubr.f32.mxu0 0.0
    %1302 = vmatmul.mubr.f32.gmra.mrb[0].mxu0 %v1235
    %v1303 = vpop.f32.mrb[0].mxu0
    %v1304 = vadd.f32 0.0, %v1303
    %v1305 = vpop.f32.mrb[0].mxu0
    %1306 = vdwg.mxu0
    %s1307 = scalar_lea.vmem %s3, 16
    %v1308 = vld [vmem:[%s1307] sm:$0xff]
    %v1310 = vsel %vm150, %v1228, 0
    %v1313 = vsel %vm150, %v1304, 0
    %1315 = vmatprep.subr.mxu0 0.0
    %1316 = vmatpush1.msra.mxu0 %v1308
    %1317 = vmatprep.subr.mxu0 0.0
    %1318 = vmatpush1.msra.mxu0 0.0
    %1319 = vmatprep.subr.mxu0 0.0
    %1320 = vmatpush1.msra.mxu0 0.0
    %1321 = vmatprep.subr.mxu0 0.0
    %1322 = vmatpush1.msra.mxu0 0.0
    %1323 = vmatprep.subr.mxu0 0.0
    %1324 = vmatpush1.msra.mxu0 0.0
    %1325 = vmatprep.subr.mxu0 0.0
    %1326 = vmatpush1.msra.mxu0 0.0
    %1327 = vmatprep.subr.mxu0 0.0
    %1328 = vmatpush1.msra.mxu0 0.0
    %1329 = vmatprep.subr.mxu0 0.0
    %1330 = vmatpush1.msra.mxu0 0.0
    %1331 = vmatprep.subr.mxu0 0.0
    %1332 = vmatpush1.msra.mxu0 0.0
    %1333 = vmatprep.subr.mxu0 0.0
    %1334 = vmatpush1.msra.mxu0 0.0
    %1335 = vmatprep.subr.mxu0 0.0
    %1336 = vmatpush1.msra.mxu0 0.0
    %1337 = vmatprep.subr.mxu0 0.0
    %1338 = vmatpush1.msra.mxu0 0.0
    %1339 = vmatprep.subr.mxu0 0.0
    %1340 = vmatpush1.msra.mxu0 0.0
    %1341 = vmatprep.subr.mxu0 0.0
    %1342 = vmatpush1.msra.mxu0 0.0
    %1343 = vmatprep.subr.mxu0 0.0
    %1344 = vmatpush1.msra.mxu0 0.0
    %1345 = vmatprep.subr.mxu0 0.0
    %1346 = vmatpush1.msra.mxu0 0.0
    %1347 = vmatprep.subr.mxu0 0.0
    %1348 = vmatpush1.msra.mxu0 0.0
    %1349 = vmatprep.subr.mxu0 0.0
    %1350 = vmatpush1.msra.mxu0 0.0
    %1351 = vmatprep.subr.mxu0 0.0
    %1352 = vmatpush1.msra.mxu0 0.0
    %1353 = vmatprep.subr.mxu0 0.0
    %1354 = vmatpush1.msra.mxu0 0.0
    %1355 = vmatprep.subr.mxu0 0.0
    %1356 = vmatpush1.msra.mxu0 0.0
    %1357 = vmatprep.subr.mxu0 0.0
    %1358 = vmatpush1.msra.mxu0 0.0
    %1359 = vmatprep.subr.mxu0 0.0
    %1360 = vmatpush1.msra.mxu0 0.0
    %1361 = vmatprep.subr.mxu0 0.0
    %1362 = vmatpush1.msra.mxu0 0.0
    %1363 = vmatprep.subr.mxu0 0.0
    %1364 = vmatpush1.msra.mxu0 0.0
    %1365 = vmatprep.subr.mxu0 0.0
    %1366 = vmatpush1.msra.mxu0 0.0
    %1367 = vmatprep.subr.mxu0 0.0
    %1368 = vmatpush1.msra.mxu0 0.0
    %1369 = vmatprep.subr.mxu0 0.0
    %1370 = vmatpush1.msra.mxu0 0.0
    %1371 = vmatprep.subr.mxu0 0.0
    %1372 = vmatpush1.msra.mxu0 0.0
    %1373 = vmatprep.subr.mxu0 0.0
    %1374 = vmatpush1.msra.mxu0 0.0
    %1375 = vmatprep.subr.mxu0 0.0
    %1376 = vmatpush1.msra.mxu0 0.0
    %1377 = vmatprep.subr.mxu0 0.0
    %1378 = vmatpush1.msra.mxu0 0.0
    %1379 = vmatprep.mubr.f32.mxu0 0.0
    %1380 = vmatmul.mubr.f32.gmra.mrb[0].mxu0 %v1310
    %v1381 = vpop.f32.mrb[0].mxu0
    %v1382 = vadd.f32 0.0, %v1381
    %v1383 = vpop.f32.mrb[0].mxu0
    %1384 = vmatprep.mubr.f32.mxu0 0.0
    %1385 = vmatmul.mubr.f32.gmra.mrb[0].mxu0 %v1313
    %v1386 = vpop.f32.mrb[0].mxu0
    %v1387 = vadd.f32 0.0, %v1386
    %v1388 = vpop.f32.mrb[0].mxu0
    %1389 = vdwg.mxu0
    %v1390 = vadd.f32 %v967, %v1382
    %v1391 = vadd.f32 %v972, %v1387
    %1392 = vrot.lane.b32.xlu0 %v139, 104
    %v1393 = vpop.permute.xlu0 %1392
    %1394 = vrot.lane.b32.xlu0 %v139, 72
    %v1395 = vpop.permute.xlu0 %1394
    %v1396 = vsel %vm150, %v1393, 0
    %v1398 = vsel %vm150, %v1395, 0
    %1400 = vmatprep.subr.mxu0 0.0
    %1401 = vmatpush1.xpose.msra.mxu0 %v1398
    %1402 = vmatprep.subr.mxu0 0.0
    %1403 = vmatpush1.xpose.msra.mxu0 0.0
    %1404 = vmatprep.subr.mxu0 0.0
    %1405 = vmatpush1.xpose.msra.mxu0 0.0
    %1406 = vmatprep.subr.mxu0 0.0
    %1407 = vmatpush1.xpose.msra.mxu0 0.0
    %1408 = vmatprep.subr.mxu0 0.0
    %1409 = vmatpush1.xpose.msra.mxu0 0.0
    %1410 = vmatprep.subr.mxu0 0.0
    %1411 = vmatpush1.xpose.msra.mxu0 0.0
    %1412 = vmatprep.subr.mxu0 0.0
    %1413 = vmatpush1.xpose.msra.mxu0 0.0
    %1414 = vmatprep.subr.mxu0 0.0
    %1415 = vmatpush1.xpose.msra.mxu0 0.0
    %1416 = vmatprep.subr.mxu0 0.0
    %1417 = vmatpush1.xpose.msra.mxu0 0.0
    %1418 = vmatprep.subr.mxu0 0.0
    %1419 = vmatpush1.xpose.msra.mxu0 0.0
    %1420 = vmatprep.subr.mxu0 0.0
    %1421 = vmatpush1.xpose.msra.mxu0 0.0
    %1422 = vmatprep.subr.mxu0 0.0
    %1423 = vmatpush1.xpose.msra.mxu0 0.0
    %1424 = vmatprep.subr.mxu0 0.0
    %1425 = vmatpush1.xpose.msra.mxu0 0.0
    %1426 = vmatprep.subr.mxu0 0.0
    %1427 = vmatpush1.xpose.msra.mxu0 0.0
    %1428 = vmatprep.subr.mxu0 0.0
    %1429 = vmatpush1.xpose.msra.mxu0 0.0
    %1430 = vmatprep.subr.mxu0 0.0
    %1431 = vmatpush1.xpose.msra.mxu0 0.0
    %1432 = vmatprep.subr.mxu0 0.0
    %1433 = vmatpush1.xpose.msra.mxu0 0.0
    %1434 = vmatprep.subr.mxu0 0.0
    %1435 = vmatpush1.xpose.msra.mxu0 0.0
    %1436 = vmatprep.subr.mxu0 0.0
    %1437 = vmatpush1.xpose.msra.mxu0 0.0
    %1438 = vmatprep.subr.mxu0 0.0
    %1439 = vmatpush1.xpose.msra.mxu0 0.0
    %1440 = vmatprep.subr.mxu0 0.0
    %1441 = vmatpush1.xpose.msra.mxu0 0.0
    %1442 = vmatprep.subr.mxu0 0.0
    %1443 = vmatpush1.xpose.msra.mxu0 0.0
    %1444 = vmatprep.subr.mxu0 0.0
    %1445 = vmatpush1.xpose.msra.mxu0 0.0
    %1446 = vmatprep.subr.mxu0 0.0
    %1447 = vmatpush1.xpose.msra.mxu0 0.0
    %1448 = vmatprep.subr.mxu0 0.0
    %1449 = vmatpush1.xpose.msra.mxu0 0.0
    %1450 = vmatprep.subr.mxu0 0.0
    %1451 = vmatpush1.xpose.msra.mxu0 0.0
    %1452 = vmatprep.subr.mxu0 0.0
    %1453 = vmatpush1.xpose.msra.mxu0 0.0
    %1454 = vmatprep.subr.mxu0 0.0
    %1455 = vmatpush1.xpose.msra.mxu0 0.0
    %1456 = vmatprep.subr.mxu0 0.0
    %1457 = vmatpush1.xpose.msra.mxu0 0.0
    %1458 = vmatprep.subr.mxu0 0.0
    %1459 = vmatpush1.xpose.msra.mxu0 0.0
    %1460 = vmatprep.subr.mxu0 0.0
    %1461 = vmatpush1.xpose.msra.mxu0 0.0
    %1462 = vmatprep.subr.mxu0 0.0
    %1463 = vmatpush1.xpose.msra.mxu0 0.0
    %1464 = vmatprep.mubr.f32.mxu0 0.0
    %1465 = vmatmul.mubr.f32.gmra.mrb[0].mxu0 %v1396
    %v1466 = vpop.f32.mrb[0].mxu0
    %v1467 = vadd.f32 0.0, %v1466
    %v1468 = vpop.f32.mrb[0].mxu0
    %1469 = vdwg.mxu0
    %1470 = vrot.lane.b32.xlu0 %v144, 104
    %v1471 = vpop.permute.xlu0 %1470
    %1472 = vrot.lane.b32.xlu0 %v144, 72
    %v1473 = vpop.permute.xlu0 %1472
    %v1474 = vsel %vm150, %v1471, 0
    %v1476 = vsel %vm150, %v1473, 0
    %1478 = vmatprep.subr.mxu0 0.0
    %1479 = vmatpush1.xpose.msra.mxu0 %v1476
    %1480 = vmatprep.subr.mxu0 0.0
    %1481 = vmatpush1.xpose.msra.mxu0 0.0
    %1482 = vmatprep.subr.mxu0 0.0
    %1483 = vmatpush1.xpose.msra.mxu0 0.0
    %1484 = vmatprep.subr.mxu0 0.0
    %1485 = vmatpush1.xpose.msra.mxu0 0.0
    %1486 = vmatprep.subr.mxu0 0.0
    %1487 = vmatpush1.xpose.msra.mxu0 0.0
    %1488 = vmatprep.subr.mxu0 0.0
    %1489 = vmatpush1.xpose.msra.mxu0 0.0
    %1490 = vmatprep.subr.mxu0 0.0
    %1491 = vmatpush1.xpose.msra.mxu0 0.0
    %1492 = vmatprep.subr.mxu0 0.0
    %1493 = vmatpush1.xpose.msra.mxu0 0.0
    %1494 = vmatprep.subr.mxu0 0.0
    %1495 = vmatpush1.xpose.msra.mxu0 0.0
    %1496 = vmatprep.subr.mxu0 0.0
    %1497 = vmatpush1.xpose.msra.mxu0 0.0
    %1498 = vmatprep.subr.mxu0 0.0
    %1499 = vmatpush1.xpose.msra.mxu0 0.0
    %1500 = vmatprep.subr.mxu0 0.0
    %1501 = vmatpush1.xpose.msra.mxu0 0.0
    %1502 = vmatprep.subr.mxu0 0.0
    %1503 = vmatpush1.xpose.msra.mxu0 0.0
    %1504 = vmatprep.subr.mxu0 0.0
    %1505 = vmatpush1.xpose.msra.mxu0 0.0
    %1506 = vmatprep.subr.mxu0 0.0
    %1507 = vmatpush1.xpose.msra.mxu0 0.0
    %1508 = vmatprep.subr.mxu0 0.0
    %1509 = vmatpush1.xpose.msra.mxu0 0.0
    %1510 = vmatprep.subr.mxu0 0.0
    %1511 = vmatpush1.xpose.msra.mxu0 0.0
    %1512 = vmatprep.subr.mxu0 0.0
    %1513 = vmatpush1.xpose.msra.mxu0 0.0
    %1514 = vmatprep.subr.mxu0 0.0
    %1515 = vmatpush1.xpose.msra.mxu0 0.0
    %1516 = vmatprep.subr.mxu0 0.0
    %1517 = vmatpush1.xpose.msra.mxu0 0.0
    %1518 = vmatprep.subr.mxu0 0.0
    %1519 = vmatpush1.xpose.msra.mxu0 0.0
    %1520 = vmatprep.subr.mxu0 0.0
    %1521 = vmatpush1.xpose.msra.mxu0 0.0
    %1522 = vmatprep.subr.mxu0 0.0
    %1523 = vmatpush1.xpose.msra.mxu0 0.0
    %1524 = vmatprep.subr.mxu0 0.0
    %1525 = vmatpush1.xpose.msra.mxu0 0.0
    %1526 = vmatprep.subr.mxu0 0.0
    %1527 = vmatpush1.xpose.msra.mxu0 0.0
    %1528 = vmatprep.subr.mxu0 0.0
    %1529 = vmatpush1.xpose.msra.mxu0 0.0
    %1530 = vmatprep.subr.mxu0 0.0
    %1531 = vmatpush1.xpose.msra.mxu0 0.0
    %1532 = vmatprep.subr.mxu0 0.0
    %1533 = vmatpush1.xpose.msra.mxu0 0.0
    %1534 = vmatprep.subr.mxu0 0.0
    %1535 = vmatpush1.xpose.msra.mxu0 0.0
    %1536 = vmatprep.subr.mxu0 0.0
    %1537 = vmatpush1.xpose.msra.mxu0 0.0
    %1538 = vmatprep.subr.mxu0 0.0
    %1539 = vmatpush1.xpose.msra.mxu0 0.0
    %1540 = vmatprep.subr.mxu0 0.0
    %1541 = vmatpush1.xpose.msra.mxu0 0.0
    %1542 = vmatprep.mubr.f32.mxu0 0.0
    %1543 = vmatmul.mubr.f32.gmra.mrb[0].mxu0 %v1474
    %v1544 = vpop.f32.mrb[0].mxu0
    %v1545 = vadd.f32 0.0, %v1544
    %v1546 = vpop.f32.mrb[0].mxu0
    %1547 = vdwg.mxu0
    %v1548 = vmul.f32 %v1467, 0.35355338
    %v1549 = vmul.f32 %v1545, 0.35355338
    %v1550 = vsel %vm150, %v1548, -inf
    %1551 = vmax.xlane.f32.xlu0 %v1550
    %v1552 = vpop.xlane.xlu0 %1551
    %v1553 = vsel %vm150, %v1549, -inf
    %1554 = vmax.xlane.f32.xlu0 %v1553
    %v1555 = vpop.xlane.xlu0 %1554
    %v1556 = vsub.f32 %v1548, %v1552
    %v1557 = vsub.f32 %v1549, %v1555
    %v1558 = vmul.f32 %v1556, 1.442695
    %v1559 = vpow.pop %v1558
    %v1560 = vmul.f32 %v1557, 1.442695
    %v1561 = vpow.pop %v1560
    %v1562 = vsel %vm150, %v1559, 0.0
    %1563 = vadd.xlane.f32.xlu0 %v1562
    %v1564 = vpop.xlane.xlu0 %1563
    %v1565 = vsel %vm150, %v1561, 0.0
    %1566 = vadd.xlane.f32.xlu0 %v1565
    %v1567 = vpop.xlane.xlu0 %1566
    %v1568 = vrcp.pop %v1564
    %v1569 = vrcp.pop %v1567
    %v1570 = vmul.f32 %v1559, %v1568
    %v1571 = vmul.f32 %v1561, %v1569
    %1572 = vrot.lane.b32.xlu0 %v139, 40
    %v1573 = vpop.permute.xlu0 %1572
    %v1576 = vsel %vm150, %v1570, 0
    %1578 = vmatprep.subr.mxu0 0.0
    %1579 = vmatpush1.msra.mxu0 %v1573
    %1580 = vmatprep.subr.mxu0 0.0
    %1581 = vmatpush1.msra.mxu0 0.0
    %1582 = vmatprep.subr.mxu0 0.0
    %1583 = vmatpush1.msra.mxu0 0.0
    %1584 = vmatprep.subr.mxu0 0.0
    %1585 = vmatpush1.msra.mxu0 0.0
    %1586 = vmatprep.subr.mxu0 0.0
    %1587 = vmatpush1.msra.mxu0 0.0
    %1588 = vmatprep.subr.mxu0 0.0
    %1589 = vmatpush1.msra.mxu0 0.0
    %1590 = vmatprep.subr.mxu0 0.0
    %1591 = vmatpush1.msra.mxu0 0.0
    %1592 = vmatprep.subr.mxu0 0.0
    %1593 = vmatpush1.msra.mxu0 0.0
    %1594 = vmatprep.subr.mxu0 0.0
    %1595 = vmatpush1.msra.mxu0 0.0
    %1596 = vmatprep.subr.mxu0 0.0
    %1597 = vmatpush1.msra.mxu0 0.0
    %1598 = vmatprep.subr.mxu0 0.0
    %1599 = vmatpush1.msra.mxu0 0.0
    %1600 = vmatprep.subr.mxu0 0.0
    %1601 = vmatpush1.msra.mxu0 0.0
    %1602 = vmatprep.subr.mxu0 0.0
    %1603 = vmatpush1.msra.mxu0 0.0
    %1604 = vmatprep.subr.mxu0 0.0
    %1605 = vmatpush1.msra.mxu0 0.0
    %1606 = vmatprep.subr.mxu0 0.0
    %1607 = vmatpush1.msra.mxu0 0.0
    %1608 = vmatprep.subr.mxu0 0.0
    %1609 = vmatpush1.msra.mxu0 0.0
    %1610 = vmatprep.subr.mxu0 0.0
    %1611 = vmatpush1.msra.mxu0 0.0
    %1612 = vmatprep.subr.mxu0 0.0
    %1613 = vmatpush1.msra.mxu0 0.0
    %1614 = vmatprep.subr.mxu0 0.0
    %1615 = vmatpush1.msra.mxu0 0.0
    %1616 = vmatprep.subr.mxu0 0.0
    %1617 = vmatpush1.msra.mxu0 0.0
    %1618 = vmatprep.subr.mxu0 0.0
    %1619 = vmatpush1.msra.mxu0 0.0
    %1620 = vmatprep.subr.mxu0 0.0
    %1621 = vmatpush1.msra.mxu0 0.0
    %1622 = vmatprep.subr.mxu0 0.0
    %1623 = vmatpush1.msra.mxu0 0.0
    %1624 = vmatprep.subr.mxu0 0.0
    %1625 = vmatpush1.msra.mxu0 0.0
    %1626 = vmatprep.subr.mxu0 0.0
    %1627 = vmatpush1.msra.mxu0 0.0
    %1628 = vmatprep.subr.mxu0 0.0
    %1629 = vmatpush1.msra.mxu0 0.0
    %1630 = vmatprep.subr.mxu0 0.0
    %1631 = vmatpush1.msra.mxu0 0.0
    %1632 = vmatprep.subr.mxu0 0.0
    %1633 = vmatpush1.msra.mxu0 0.0
    %1634 = vmatprep.subr.mxu0 0.0
    %1635 = vmatpush1.msra.mxu0 0.0
    %1636 = vmatprep.subr.mxu0 0.0
    %1637 = vmatpush1.msra.mxu0 0.0
    %1638 = vmatprep.subr.mxu0 0.0
    %1639 = vmatpush1.msra.mxu0 0.0
    %1640 = vmatprep.subr.mxu0 0.0
    %1641 = vmatpush1.msra.mxu0 0.0
    %1642 = vmatprep.mubr.f32.mxu0 0.0
    %1643 = vmatmul.mubr.f32.gmra.mrb[0].mxu0 %v1576
    %v1644 = vpop.f32.mrb[0].mxu0
    %v1645 = vadd.f32 0.0, %v1644
    %v1646 = vpop.f32.mrb[0].mxu0
    %1647 = vdwg.mxu0
    %1648 = vrot.lane.b32.xlu0 %v144, 40
    %v1649 = vpop.permute.xlu0 %1648
    %v1652 = vsel %vm150, %v1571, 0
    %1654 = vmatprep.subr.mxu0 0.0
    %1655 = vmatpush1.msra.mxu0 %v1649
    %1656 = vmatprep.subr.mxu0 0.0
    %1657 = vmatpush1.msra.mxu0 0.0
    %1658 = vmatprep.subr.mxu0 0.0
    %1659 = vmatpush1.msra.mxu0 0.0
    %1660 = vmatprep.subr.mxu0 0.0
    %1661 = vmatpush1.msra.mxu0 0.0
    %1662 = vmatprep.subr.mxu0 0.0
    %1663 = vmatpush1.msra.mxu0 0.0
    %1664 = vmatprep.subr.mxu0 0.0
    %1665 = vmatpush1.msra.mxu0 0.0
    %1666 = vmatprep.subr.mxu0 0.0
    %1667 = vmatpush1.msra.mxu0 0.0
    %1668 = vmatprep.subr.mxu0 0.0
    %1669 = vmatpush1.msra.mxu0 0.0
    %1670 = vmatprep.subr.mxu0 0.0
    %1671 = vmatpush1.msra.mxu0 0.0
    %1672 = vmatprep.subr.mxu0 0.0
    %1673 = vmatpush1.msra.mxu0 0.0
    %1674 = vmatprep.subr.mxu0 0.0
    %1675 = vmatpush1.msra.mxu0 0.0
    %1676 = vmatprep.subr.mxu0 0.0
    %1677 = vmatpush1.msra.mxu0 0.0
    %1678 = vmatprep.subr.mxu0 0.0
    %1679 = vmatpush1.msra.mxu0 0.0
    %1680 = vmatprep.subr.mxu0 0.0
    %1681 = vmatpush1.msra.mxu0 0.0
    %1682 = vmatprep.subr.mxu0 0.0
    %1683 = vmatpush1.msra.mxu0 0.0
    %1684 = vmatprep.subr.mxu0 0.0
    %1685 = vmatpush1.msra.mxu0 0.0
    %1686 = vmatprep.subr.mxu0 0.0
    %1687 = vmatpush1.msra.mxu0 0.0
    %1688 = vmatprep.subr.mxu0 0.0
    %1689 = vmatpush1.msra.mxu0 0.0
    %1690 = vmatprep.subr.mxu0 0.0
    %1691 = vmatpush1.msra.mxu0 0.0
    %1692 = vmatprep.subr.mxu0 0.0
    %1693 = vmatpush1.msra.mxu0 0.0
    %1694 = vmatprep.subr.mxu0 0.0
    %1695 = vmatpush1.msra.mxu0 0.0
    %1696 = vmatprep.subr.mxu0 0.0
    %1697 = vmatpush1.msra.mxu0 0.0
    %1698 = vmatprep.subr.mxu0 0.0
    %1699 = vmatpush1.msra.mxu0 0.0
    %1700 = vmatprep.subr.mxu0 0.0
    %1701 = vmatpush1.msra.mxu0 0.0
    %1702 = vmatprep.subr.mxu0 0.0
    %1703 = vmatpush1.msra.mxu0 0.0
    %1704 = vmatprep.subr.mxu0 0.0
    %1705 = vmatpush1.msra.mxu0 0.0
    %1706 = vmatprep.subr.mxu0 0.0
    %1707 = vmatpush1.msra.mxu0 0.0
    %1708 = vmatprep.subr.mxu0 0.0
    %1709 = vmatpush1.msra.mxu0 0.0
    %1710 = vmatprep.subr.mxu0 0.0
    %1711 = vmatpush1.msra.mxu0 0.0
    %1712 = vmatprep.subr.mxu0 0.0
    %1713 = vmatpush1.msra.mxu0 0.0
    %1714 = vmatprep.subr.mxu0 0.0
    %1715 = vmatpush1.msra.mxu0 0.0
    %1716 = vmatprep.subr.mxu0 0.0
    %1717 = vmatpush1.msra.mxu0 0.0
    %1718 = vmatprep.mubr.f32.mxu0 0.0
    %1719 = vmatmul.mubr.f32.gmra.mrb[0].mxu0 %v1652
    %v1720 = vpop.f32.mrb[0].mxu0
    %v1721 = vadd.f32 0.0, %v1720
    %v1722 = vpop.f32.mrb[0].mxu0
    %1723 = vdwg.mxu0
    %s1724 = scalar_lea.vmem %s3, 24
    %v1725 = vld [vmem:[%s1724] sm:$0xff]
    %v1727 = vsel %vm150, %v1645, 0
    %v1730 = vsel %vm150, %v1721, 0
    %1732 = vmatprep.subr.mxu0 0.0
    %1733 = vmatpush1.msra.mxu0 %v1725
    %1734 = vmatprep.subr.mxu0 0.0
    %1735 = vmatpush1.msra.mxu0 0.0
    %1736 = vmatprep.subr.mxu0 0.0
    %1737 = vmatpush1.msra.mxu0 0.0
    %1738 = vmatprep.subr.mxu0 0.0
    %1739 = vmatpush1.msra.mxu0 0.0
    %1740 = vmatprep.subr.mxu0 0.0
    %1741 = vmatpush1.msra.mxu0 0.0
    %1742 = vmatprep.subr.mxu0 0.0
    %1743 = vmatpush1.msra.mxu0 0.0
    %1744 = vmatprep.subr.mxu0 0.0
    %1745 = vmatpush1.msra.mxu0 0.0
    %1746 = vmatprep.subr.mxu0 0.0
    %1747 = vmatpush1.msra.mxu0 0.0
    %1748 = vmatprep.subr.mxu0 0.0
    %1749 = vmatpush1.msra.mxu0 0.0
    %1750 = vmatprep.subr.mxu0 0.0
    %1751 = vmatpush1.msra.mxu0 0.0
    %1752 = vmatprep.subr.mxu0 0.0
    %1753 = vmatpush1.msra.mxu0 0.0
    %1754 = vmatprep.subr.mxu0 0.0
    %1755 = vmatpush1.msra.mxu0 0.0
    %1756 = vmatprep.subr.mxu0 0.0
    %1757 = vmatpush1.msra.mxu0 0.0
    %1758 = vmatprep.subr.mxu0 0.0
    %1759 = vmatpush1.msra.mxu0 0.0
    %1760 = vmatprep.subr.mxu0 0.0
    %1761 = vmatpush1.msra.mxu0 0.0
    %1762 = vmatprep.subr.mxu0 0.0
    %1763 = vmatpush1.msra.mxu0 0.0
    %1764 = vmatprep.subr.mxu0 0.0
    %1765 = vmatpush1.msra.mxu0 0.0
    %1766 = vmatprep.subr.mxu0 0.0
    %1767 = vmatpush1.msra.mxu0 0.0
    %1768 = vmatprep.subr.mxu0 0.0
    %1769 = vmatpush1.msra.mxu0 0.0
    %1770 = vmatprep.subr.mxu0 0.0
    %1771 = vmatpush1.msra.mxu0 0.0
    %1772 = vmatprep.subr.mxu0 0.0
    %1773 = vmatpush1.msra.mxu0 0.0
    %1774 = vmatprep.subr.mxu0 0.0
    %1775 = vmatpush1.msra.mxu0 0.0
    %1776 = vmatprep.subr.mxu0 0.0
    %1777 = vmatpush1.msra.mxu0 0.0
    %1778 = vmatprep.subr.mxu0 0.0
    %1779 = vmatpush1.msra.mxu0 0.0
    %1780 = vmatprep.subr.mxu0 0.0
    %1781 = vmatpush1.msra.mxu0 0.0
    %1782 = vmatprep.subr.mxu0 0.0
    %1783 = vmatpush1.msra.mxu0 0.0
    %1784 = vmatprep.subr.mxu0 0.0
    %1785 = vmatpush1.msra.mxu0 0.0
    %1786 = vmatprep.subr.mxu0 0.0
    %1787 = vmatpush1.msra.mxu0 0.0
    %1788 = vmatprep.subr.mxu0 0.0
    %1789 = vmatpush1.msra.mxu0 0.0
    %1790 = vmatprep.subr.mxu0 0.0
    %1791 = vmatpush1.msra.mxu0 0.0
    %1792 = vmatprep.subr.mxu0 0.0
    %1793 = vmatpush1.msra.mxu0 0.0
    %1794 = vmatprep.subr.mxu0 0.0
    %1795 = vmatpush1.msra.mxu0 0.0
    %1796 = vmatprep.mubr.f32.mxu0 0.0
    %1797 = vmatmul.mubr.f32.gmra.mrb[0].mxu0 %v1727
    %v1798 = vpop.f32.mrb[0].mxu0
    %v1799 = vadd.f32 0.0, %v1798
    %v1800 = vpop.f32.mrb[0].mxu0
    %1801 = vmatprep.mubr.f32.mxu0 0.0
    %1802 = vmatmul.mubr.f32.gmra.mrb[0].mxu0 %v1730
    %v1803 = vpop.f32.mrb[0].mxu0
    %v1804 = vadd.f32 0.0, %v1803
    %v1805 = vpop.f32.mrb[0].mxu0
    %1806 = vdwg.mxu0
    %v1807 = vadd.f32 %v1390, %v1799
    %v1808 = vadd.f32 %v1391, %v1804
    %v1809 = vld [vmem:[%s4] sm:$0x1]
    %v1811 = vlaneseq
    %v1812 = vshrl.u32 %v1811, 7
    %v1813 = vsub.s32 0, %v1812
    %v1814 = vrot.slane %v1809, %v1813
    %v1816 = vadd.f32 %v1807, %v1814
    %v1817 = vadd.f32 %v1808, %v1814
    %v1818 = vadd.f32 %v52, %v1816
    %v1819 = vadd.f32 %v53, %v1817
    %v1820 = vld [vmem:[%s5] sm:$0x1]
    %v1821 = vld [vmem:[%s6] sm:$0x1]
    %v1822 = vsel %vm65, %v1818, 0.0
    %1823 = vadd.xlane.f32.xlu0 %v1822
    %v1824 = vpop.xlane.xlu0 %1823
    %v1825 = vsel %vm65, %v1819, 0.0
    %1826 = vadd.xlane.f32.xlu0 %v1825
    %v1827 = vpop.xlane.xlu0 %1826
    %v1828 = vrcp.pop 32.0
    %v1829 = vmul.f32 %v1824, %v1828
    %v1830 = vmul.f32 %v1827, %v1828
    %v1831 = vmul.f32 %v1818, %v1818
    %v1832 = vmul.f32 %v1819, %v1819
    %v1833 = vsel %vm65, %v1831, 0.0
    %1834 = vadd.xlane.f32.xlu0 %v1833
    %v1835 = vpop.xlane.xlu0 %1834
    %v1836 = vsel %vm65, %v1832, 0.0
    %1837 = vadd.xlane.f32.xlu0 %v1836
    %v1838 = vpop.xlane.xlu0 %1837
    %v1839 = vmul.f32 %v1835, %v1828
    %v1840 = vmul.f32 %v1838, %v1828
    %v1841 = vmul.f32 %v1829, %v1829
    %v1842 = vmul.f32 %v1830, %v1830
    %v1843 = vsub.f32 %v1839, %v1841
    %v1844 = vsub.f32 %v1840, %v1842
    %v1845 = vsub.f32 %v1818, %v1829
    %v1846 = vsub.f32 %v1819, %v1830
    %v1847 = vadd.f32 %v1843, 1e-05
    %v1848 = vadd.f32 %v1844, 1e-05
    %v1849 = vrsqrt.pop %v1847
    %v1850 = vrsqrt.pop %v1848
    %v1851 = vmul.f32 %v1845, %v1849
    %v1852 = vmul.f32 %v1846, %v1850
    %v1854 = vlaneseq
    %v1855 = vshrl.u32 %v1854, 7
    %v1856 = vsub.s32 0, %v1855
    %v1857 = vrot.slane %v1820, %v1856
    %v1859 = vmul.f32 %v1851, %v1857
    %v1860 = vmul.f32 %v1852, %v1857
    %v1862 = vlaneseq
    %v1863 = vshrl.u32 %v1862, 7
    %v1864 = vsub.s32 0, %v1863
    %v1865 = vrot.slane %v1821, %v1864
    %v1867 = vadd.f32 %v1859, %v1865
    %v1868 = vadd.f32 %v1860, %v1865
    %v1869 = vpack.c.bf16 %v1868, %v1867
    %v1870 = vld [vmem:[%s9] sm:$0xff]
    %v1871 = vld [vmem:[%s9 + $0x8] sm:$0xff]
    %v1872 = vld [vmem:[%s9 + $0x10] sm:$0xff]
    %v1873 = vld [vmem:[%s9 + $0x18] sm:$0xff]
    %v1874 = vld [vmem:[%s9 + $0x20] sm:$0xff]
    %v1875 = vld [vmem:[%s9 + $0x28] sm:$0xff]
    %v1876 = vld [vmem:[%s9 + $0x30] sm:$0xff]
    %v1877 = vld [vmem:[%s9 + $0x38] sm:$0xff]
    %v1878 = vld [vmem:[%s9 + $0x40] sm:$0xff]
    %v1879 = vld [vmem:[%s9 + $0x48] sm:$0xff]
    %v1880 = vld [vmem:[%s9 + $0x50] sm:$0xff]
    %v1881 = vld [vmem:[%s9 + $0x58] sm:$0xff]
    %v1882 = vld [vmem:[%s9 + $0x60] sm:$0xff]
    %v1883 = vld [vmem:[%s9 + $0x68] sm:$0xff]
    %v1884 = vld [vmem:[%s9 + $0x70] sm:$0xff]
    %v1885 = vld [vmem:[%s9 + $0x78] sm:$0xff]
    %v1886 = vld [vmem:[%s9 + $0x80] sm:$0xff]
    %v1887 = vld [vmem:[%s9 + $0x88] sm:$0xff]
    %v1888 = vld [vmem:[%s9 + $0x90] sm:$0xff]
    %v1889 = vld [vmem:[%s9 + $0x98] sm:$0xff]
    %v1890 = vld [vmem:[%s9 + $0xa0] sm:$0xff]
    %v1891 = vld [vmem:[%s9 + $0xa8] sm:$0xff]
    %v1892 = vld [vmem:[%s9 + $0xb0] sm:$0xff]
    %v1893 = vld [vmem:[%s9 + $0xb8] sm:$0xff]
    %v1894 = vld [vmem:[%s9 + $0xc0] sm:$0xff]
    %v1895 = vld [vmem:[%s9 + $0xc8] sm:$0xff]
    %v1896 = vld [vmem:[%s9 + $0xd0] sm:$0xff]
    %v1897 = vld [vmem:[%s9 + $0xd8] sm:$0xff]
    %v1898 = vld [vmem:[%s9 + $0xe0] sm:$0xff]
    %v1899 = vld [vmem:[%s9 + $0xe8] sm:$0xff]
    %v1900 = vld [vmem:[%s9 + $0xf0] sm:$0xff]
    %v1901 = vld [vmem:[%s9 + $0xf8] sm:$0xff]
    %v1902 = vld [vmem:[%s10] sm:$0xff]
    %v1903 = vld [vmem:[%s10 + $0x8] sm:$0xff]
    %v1906 = vlaneseq
    %v1907 = vshrl.u32 %v1906, 7
    %v1908 = vsub.s32 0, %v1907
    %v1909 = vrot.slane %v1902, %v1908
    %v1910 = vlaneseq
    %v1911 = vshrl.u32 %v1910, 7
    %v1912 = vsub.s32 1, %v1911
    %v1913 = vrot.slane %v1902, %v1912
    %v1914 = vlaneseq
    %v1915 = vshrl.u32 %v1914, 7
    %v1916 = vsub.s32 2, %v1915
    %v1917 = vrot.slane %v1902, %v1916
    %v1918 = vlaneseq
    %v1919 = vshrl.u32 %v1918, 7
    %v1920 = vsub.s32 3, %v1919
    %v1921 = vrot.slane %v1902, %v1920
    %v1922 = vlaneseq
    %v1923 = vshrl.u32 %v1922, 7
    %v1924 = vsub.s32 4, %v1923
    %v1925 = vrot.slane %v1902, %v1924
    %v1926 = vlaneseq
    %v1927 = vshrl.u32 %v1926, 7
    %v1928 = vsub.s32 5, %v1927
    %v1929 = vrot.slane %v1902, %v1928
    %v1930 = vlaneseq
    %v1931 = vshrl.u32 %v1930, 7
    %v1932 = vsub.s32 6, %v1931
    %v1933 = vrot.slane %v1902, %v1932
    %v1934 = vlaneseq
    %v1935 = vshrl.u32 %v1934, 7
    %v1936 = vsub.s32 7, %v1935
    %v1937 = vrot.slane %v1902, %v1936
    %v1938 = vlaneseq
    %v1939 = vshrl.u32 %v1938, 7
    %v1940 = vsub.s32 0, %v1939
    %v1941 = vrot.slane %v1903, %v1940
    %v1942 = vlaneseq
    %v1943 = vshrl.u32 %v1942, 7
    %v1944 = vsub.s32 1, %v1943
    %v1945 = vrot.slane %v1903, %v1944
    %v1946 = vlaneseq
    %v1947 = vshrl.u32 %v1946, 7
    %v1948 = vsub.s32 2, %v1947
    %v1949 = vrot.slane %v1903, %v1948
    %v1950 = vlaneseq
    %v1951 = vshrl.u32 %v1950, 7
    %v1952 = vsub.s32 3, %v1951
    %v1953 = vrot.slane %v1903, %v1952
    %v1954 = vlaneseq
    %v1955 = vshrl.u32 %v1954, 7
    %v1956 = vsub.s32 4, %v1955
    %v1957 = vrot.slane %v1903, %v1956
    %v1958 = vlaneseq
    %v1959 = vshrl.u32 %v1958, 7
    %v1960 = vsub.s32 5, %v1959
    %v1961 = vrot.slane %v1903, %v1960
    %v1962 = vlaneseq
    %v1963 = vshrl.u32 %v1962, 7
    %v1964 = vsub.s32 6, %v1963
    %v1965 = vrot.slane %v1903, %v1964
    %v1966 = vlaneseq
    %v1967 = vshrl.u32 %v1966, 7
    %v1968 = vsub.s32 7, %v1967
    %v1969 = vrot.slane %v1903, %v1968
    %v2018 = vunpack.c.l.b16 %v1870
    %v2019 = vunpack.c.h.b16 %v1870
    %v2020 = vunpack.c.l.b16 %v1871
    %v2021 = vunpack.c.h.b16 %v1871
    %v2022 = vunpack.c.l.b16 %v1872
    %v2023 = vunpack.c.h.b16 %v1872
    %v2024 = vunpack.c.l.b16 %v1873
    %v2025 = vunpack.c.h.b16 %v1873
    %v2026 = vunpack.c.l.b16 %v1874
    %v2027 = vunpack.c.h.b16 %v1874
    %v2028 = vunpack.c.l.b16 %v1875
    %v2029 = vunpack.c.h.b16 %v1875
    %v2030 = vunpack.c.l.b16 %v1876
    %v2031 = vunpack.c.h.b16 %v1876
    %v2032 = vunpack.c.l.b16 %v1877
    %v2033 = vunpack.c.h.b16 %v1877
    %v2034 = vunpack.c.l.b16 %v1878
    %v2035 = vunpack.c.h.b16 %v1878
    %v2036 = vunpack.c.l.b16 %v1879
    %v2037 = vunpack.c.h.b16 %v1879
    %v2038 = vunpack.c.l.b16 %v1880
    %v2039 = vunpack.c.h.b16 %v1880
    %v2040 = vunpack.c.l.b16 %v1881
    %v2041 = vunpack.c.h.b16 %v1881
    %v2042 = vunpack.c.l.b16 %v1882
    %v2043 = vunpack.c.h.b16 %v1882
    %v2044 = vunpack.c.l.b16 %v1883
    %v2045 = vunpack.c.h.b16 %v1883
    %v2046 = vunpack.c.l.b16 %v1884
    %v2047 = vunpack.c.h.b16 %v1884
    %v2048 = vunpack.c.l.b16 %v1885
    %v2049 = vunpack.c.h.b16 %v1885
    %v2050 = vunpack.c.l.b16 %v1886
    %v2051 = vunpack.c.h.b16 %v1886
    %v2052 = vunpack.c.l.b16 %v1887
    %v2053 = vunpack.c.h.b16 %v1887
    %v2054 = vunpack.c.l.b16 %v1888
    %v2055 = vunpack.c.h.b16 %v1888
    %v2056 = vunpack.c.l.b16 %v1889
    %v2057 = vunpack.c.h.b16 %v1889
    %v2058 = vunpack.c.l.b16 %v1890
    %v2059 = vunpack.c.h.b16 %v1890
    %v2060 = vunpack.c.l.b16 %v1891
    %v2061 = vunpack.c.h.b16 %v1891
    %v2062 = vunpack.c.l.b16 %v1892
    %v2063 = vunpack.c.h.b16 %v1892
    %v2064 = vunpack.c.l.b16 %v1893
    %v2065 = vunpack.c.h.b16 %v1893
    %v2066 = vunpack.c.l.b16 %v1894
    %v2067 = vunpack.c.h.b16 %v1894
    %v2068 = vunpack.c.l.b16 %v1895
    %v2069 = vunpack.c.h.b16 %v1895
    %v2070 = vunpack.c.l.b16 %v1896
    %v2071 = vunpack.c.h.b16 %v1896
    %v2072 = vunpack.c.l.b16 %v1897
    %v2073 = vunpack.c.h.b16 %v1897
    %v2074 = vunpack.c.l.b16 %v1898
    %v2075 = vunpack.c.h.b16 %v1898
    %v2076 = vunpack.c.l.b16 %v1899
    %v2077 = vunpack.c.h.b16 %v1899
    %v2078 = vunpack.c.l.b16 %v1900
    %v2079 = vunpack.c.h.b16 %v1900
    %v2080 = vunpack.c.l.b16 %v1901
    %v2081 = vunpack.c.h.b16 %v1901
    %v2082 = vpack.c.b16 %v2034, %v2018
    %v2083 = vpack.c.b16 %v2035, %v2019
    %v2084 = vpack.c.b16 %v2036, %v2020
    %v2085 = vpack.c.b16 %v2037, %v2021
    %v2086 = vpack.c.b16 %v2038, %v2022
    %v2087 = vpack.c.b16 %v2039, %v2023
    %v2088 = vpack.c.b16 %v2040, %v2024
    %v2089 = vpack.c.b16 %v2041, %v2025
    %v2090 = vpack.c.b16 %v2042, %v2026
    %v2091 = vpack.c.b16 %v2043, %v2027
    %v2092 = vpack.c.b16 %v2044, %v2028
    %v2093 = vpack.c.b16 %v2045, %v2029
    %v2094 = vpack.c.b16 %v2046, %v2030
    %v2095 = vpack.c.b16 %v2047, %v2031
    %v2096 = vpack.c.b16 %v2048, %v2032
    %v2097 = vpack.c.b16 %v2049, %v2033
    %v2098 = vpack.c.b16 %v2066, %v2050
    %v2099 = vpack.c.b16 %v2067, %v2051
    %v2100 = vpack.c.b16 %v2068, %v2052
    %v2101 = vpack.c.b16 %v2069, %v2053
    %v2102 = vpack.c.b16 %v2070, %v2054
    %v2103 = vpack.c.b16 %v2071, %v2055
    %v2104 = vpack.c.b16 %v2072, %v2056
    %v2105 = vpack.c.b16 %v2073, %v2057
    %v2106 = vpack.c.b16 %v2074, %v2058
    %v2107 = vpack.c.b16 %v2075, %v2059
    %v2108 = vpack.c.b16 %v2076, %v2060
    %v2109 = vpack.c.b16 %v2077, %v2061
    %v2110 = vpack.c.b16 %v2078, %v2062
    %v2111 = vpack.c.b16 %v2079, %v2063
    %v2112 = vpack.c.b16 %v2080, %v2064
    %v2113 = vpack.c.b16 %v2081, %v2065
    %v2147 = vsel %vm65, %v1869, 0
    %2149 = vmatprep.subr.bf16.mxu0 %v2083
    %2150 = vmatpush1.bf16.msra.mxu0 %v2082
    %2151 = vmatprep.subr.bf16.mxu0 %v2099
    %2152 = vmatpush1.bf16.msra.mxu0 %v2098
    %2153 = vmatprep.subr.bf16.mxu0 0
    %2154 = vmatpush1.bf16.msra.mxu0 0
    %2155 = vmatprep.subr.bf16.mxu0 0
    %2156 = vmatpush1.bf16.msra.mxu0 0
    %2157 = vmatprep.subr.bf16.mxu0 0
    %2158 = vmatpush1.bf16.msra.mxu0 0
    %2159 = vmatprep.subr.bf16.mxu0 0
    %2160 = vmatpush1.bf16.msra.mxu0 0
    %2161 = vmatprep.subr.bf16.mxu0 0
    %2162 = vmatpush1.bf16.msra.mxu0 0
    %2163 = vmatprep.subr.bf16.mxu0 0
    %2164 = vmatpush1.bf16.msra.mxu0 0
    %2165 = vmatprep.subr.bf16.mxu0 0
    %2166 = vmatpush1.bf16.msra.mxu0 0
    %2167 = vmatprep.subr.bf16.mxu0 0
    %2168 = vmatpush1.bf16.msra.mxu0 0
    %2169 = vmatprep.subr.bf16.mxu0 0
    %2170 = vmatpush1.bf16.msra.mxu0 0
    %2171 = vmatprep.subr.bf16.mxu0 0
    %2172 = vmatpush1.bf16.msra.mxu0 0
    %2173 = vmatprep.subr.bf16.mxu0 0
    %2174 = vmatpush1.bf16.msra.mxu0 0
    %2175 = vmatprep.subr.bf16.mxu0 0
    %2176 = vmatpush1.bf16.msra.mxu0 0
    %2177 = vmatprep.subr.bf16.mxu0 0
    %2178 = vmatpush1.bf16.msra.mxu0 0
    %2179 = vmatprep.subr.bf16.mxu0 0
    %2180 = vmatpush1.bf16.msra.mxu0 0
    %2181 = vmatprep.mubr.bf16.mxu0 0
    %2182 = vmatmul.mubr.bf16.gmra.mrb[0].mxu0 %v2147
    %v2183 = vpop.f32.mrb[0].mxu0
    %v2184 = vadd.f32 %v1909, %v2183
    %v2185 = vpop.f32.mrb[0].mxu0
    %v2186 = vadd.f32 %v1913, %v2185
    %v2187 = vpop.f32.mrb[0].mxu0
    %v2188 = vadd.f32 %v1909, %v2187
    %v2189 = vpop.f32.mrb[0].mxu0
    %v2190 = vadd.f32 %v1913, %v2189
    %2191 = vdwg.mxu0
    %2192 = vmatprep.subr.bf16.mxu0 %v2085
    %2193 = vmatpush1.bf16.msra.mxu0 %v2084
    %2194 = vmatprep.subr.bf16.mxu0 %v2101
    %2195 = vmatpush1.bf16.msra.mxu0 %v2100
    %2196 = vmatprep.subr.bf16.mxu0 0
    %2197 = vmatpush1.bf16.msra.mxu0 0
    %2198 = vmatprep.subr.bf16.mxu0 0
    %2199 = vmatpush1.bf16.msra.mxu0 0
    %2200 = vmatprep.subr.bf16.mxu0 0
    %2201 = vmatpush1.bf16.msra.mxu0 0
    %2202 = vmatprep.subr.bf16.mxu0 0
    %2203 = vmatpush1.bf16.msra.mxu0 0
    %2204 = vmatprep.subr.bf16.mxu0 0
    %2205 = vmatpush1.bf16.msra.mxu0 0
    %2206 = vmatprep.subr.bf16.mxu0 0
    %2207 = vmatpush1.bf16.msra.mxu0 0
    %2208 = vmatprep.subr.bf16.mxu0 0
    %2209 = vmatpush1.bf16.msra.mxu0 0
    %2210 = vmatprep.subr.bf16.mxu0 0
    %2211 = vmatpush1.bf16.msra.mxu0 0
    %2212 = vmatprep.subr.bf16.mxu0 0
    %2213 = vmatpush1.bf16.msra.mxu0 0
    %2214 = vmatprep.subr.bf16.mxu0 0
    %2215 = vmatpush1.bf16.msra.mxu0 0
    %2216 = vmatprep.subr.bf16.mxu0 0
    %2217 = vmatpush1.bf16.msra.mxu0 0
    %2218 = vmatprep.subr.bf16.mxu0 0
    %2219 = vmatpush1.bf16.msra.mxu0 0
    %2220 = vmatprep.subr.bf16.mxu0 0
    %2221 = vmatpush1.bf16.msra.mxu0 0
    %2222 = vmatprep.subr.bf16.mxu0 0
    %2223 = vmatpush1.bf16.msra.mxu0 0
    %2224 = vmatprep.mubr.bf16.mxu0 0
    %2225 = vmatmul.mubr.bf16.gmra.mrb[0].mxu0 %v2147
    %v2226 = vpop.f32.mrb[0].mxu0
    %v2227 = vadd.f32 %v1917, %v2226
    %v2228 = vpop.f32.mrb[0].mxu0
    %v2229 = vadd.f32 %v1921, %v2228
    %v2230 = vpop.f32.mrb[0].mxu0
    %v2231 = vadd.f32 %v1917, %v2230
    %v2232 = vpop.f32.mrb[0].mxu0
    %v2233 = vadd.f32 %v1921, %v2232
    %2234 = vdwg.mxu0
    %2235 = vmatprep.subr.bf16.mxu0 %v2087
    %2236 = vmatpush1.bf16.msra.mxu0 %v2086
    %2237 = vmatprep.subr.bf16.mxu0 %v2103
    %2238 = vmatpush1.bf16.msra.mxu0 %v2102
    %2239 = vmatprep.subr.bf16.mxu0 0
    %2240 = vmatpush1.bf16.msra.mxu0 0
    %2241 = vmatprep.subr.bf16.mxu0 0
    %2242 = vmatpush1.bf16.msra.mxu0 0
    %2243 = vmatprep.subr.bf16.mxu0 0
    %2244 = vmatpush1.bf16.msra.mxu0 0
    %2245 = vmatprep.subr.bf16.mxu0 0
    %2246 = vmatpush1.bf16.msra.mxu0 0
    %2247 = vmatprep.subr.bf16.mxu0 0
    %2248 = vmatpush1.bf16.msra.mxu0 0
    %2249 = vmatprep.subr.bf16.mxu0 0
    %2250 = vmatpush1.bf16.msra.mxu0 0
    %2251 = vmatprep.subr.bf16.mxu0 0
    %2252 = vmatpush1.bf16.msra.mxu0 0
    %2253 = vmatprep.subr.bf16.mxu0 0
    %2254 = vmatpush1.bf16.msra.mxu0 0
    %2255 = vmatprep.subr.bf16.mxu0 0
    %2256 = vmatpush1.bf16.msra.mxu0 0
    %2257 = vmatprep.subr.bf16.mxu0 0
    %2258 = vmatpush1.bf16.msra.mxu0 0
    %2259 = vmatprep.subr.bf16.mxu0 0
    %2260 = vmatpush1.bf16.msra.mxu0 0
    %2261 = vmatprep.subr.bf16.mxu0 0
    %2262 = vmatpush1.bf16.msra.mxu0 0
    %2263 = vmatprep.subr.bf16.mxu0 0
    %2264 = vmatpush1.bf16.msra.mxu0 0
    %2265 = vmatprep.subr.bf16.mxu0 0
    %2266 = vmatpush1.bf16.msra.mxu0 0
    %2267 = vmatprep.mubr.bf16.mxu0 0
    %2268 = vmatmul.mubr.bf16.gmra.mrb[0].mxu0 %v2147
    %v2269 = vpop.f32.mrb[0].mxu0
    %v2270 = vadd.f32 %v1925, %v2269
    %v2271 = vpop.f32.mrb[0].mxu0
    %v2272 = vadd.f32 %v1929, %v2271
    %v2273 = vpop.f32.mrb[0].mxu0
    %v2274 = vadd.f32 %v1925, %v2273
    %v2275 = vpop.f32.mrb[0].mxu0
    %v2276 = vadd.f32 %v1929, %v2275
    %2277 = vdwg.mxu0
    %2278 = vmatprep.subr.bf16.mxu0 %v2089
    %2279 = vmatpush1.bf16.msra.mxu0 %v2088
    %2280 = vmatprep.subr.bf16.mxu0 %v2105
    %2281 = vmatpush1.bf16.msra.mxu0 %v2104
    %2282 = vmatprep.subr.bf16.mxu0 0
    %2283 = vmatpush1.bf16.msra.mxu0 0
    %2284 = vmatprep.subr.bf16.mxu0 0
    %2285 = vmatpush1.bf16.msra.mxu0 0
    %2286 = vmatprep.subr.bf16.mxu0 0
    %2287 = vmatpush1.bf16.msra.mxu0 0
    %2288 = vmatprep.subr.bf16.mxu0 0
    %2289 = vmatpush1.bf16.msra.mxu0 0
    %2290 = vmatprep.subr.bf16.mxu0 0
    %2291 = vmatpush1.bf16.msra.mxu0 0
    %2292 = vmatprep.subr.bf16.mxu0 0
    %2293 = vmatpush1.bf16.msra.mxu0 0
    %2294 = vmatprep.subr.bf16.mxu0 0
    %2295 = vmatpush1.bf16.msra.mxu0 0
    %2296 = vmatprep.subr.bf16.mxu0 0
    %2297 = vmatpush1.bf16.msra.mxu0 0
    %2298 = vmatprep.subr.bf16.mxu0 0
    %2299 = vmatpush1.bf16.msra.mxu0 0
    %2300 = vmatprep.subr.bf16.mxu0 0
    %2301 = vmatpush1.bf16.msra.mxu0 0
    %2302 = vmatprep.subr.bf16.mxu0 0
    %2303 = vmatpush1.bf16.msra.mxu0 0
    %2304 = vmatprep.subr.bf16.mxu0 0
    %2305 = vmatpush1.bf16.msra.mxu0 0
    %2306 = vmatprep.subr.bf16.mxu0 0
    %2307 = vmatpush1.bf16.msra.mxu0 0
    %2308 = vmatprep.subr.bf16.mxu0 0
    %2309 = vmatpush1.bf16.msra.mxu0 0
    %2310 = vmatprep.mubr.bf16.mxu0 0
    %2311 = vmatmul.mubr.bf16.gmra.mrb[0].mxu0 %v2147
    %v2312 = vpop.f32.mrb[0].mxu0
    %v2313 = vadd.f32 %v1933, %v2312
    %v2314 = vpop.f32.mrb[0].mxu0
    %v2315 = vadd.f32 %v1937, %v2314
    %v2316 = vpop.f32.mrb[0].mxu0
    %v2317 = vadd.f32 %v1933, %v2316
    %v2318 = vpop.f32.mrb[0].mxu0
    %v2319 = vadd.f32 %v1937, %v2318
    %2320 = vdwg.mxu0
    %2321 = vmatprep.subr.bf16.mxu0 %v2091
    %2322 = vmatpush1.bf16.msra.mxu0 %v2090
    %2323 = vmatprep.subr.bf16.mxu0 %v2107
    %2324 = vmatpush1.bf16.msra.mxu0 %v2106
    %2325 = vmatprep.subr.bf16.mxu0 0
    %2326 = vmatpush1.bf16.msra.mxu0 0
    %2327 = vmatprep.subr.bf16.mxu0 0
    %2328 = vmatpush1.bf16.msra.mxu0 0
    %2329 = vmatprep.subr.bf16.mxu0 0
    %2330 = vmatpush1.bf16.msra.mxu0 0
    %2331 = vmatprep.subr.bf16.mxu0 0
    %2332 = vmatpush1.bf16.msra.mxu0 0
    %2333 = vmatprep.subr.bf16.mxu0 0
    %2334 = vmatpush1.bf16.msra.mxu0 0
    %2335 = vmatprep.subr.bf16.mxu0 0
    %2336 = vmatpush1.bf16.msra.mxu0 0
    %2337 = vmatprep.subr.bf16.mxu0 0
    %2338 = vmatpush1.bf16.msra.mxu0 0
    %2339 = vmatprep.subr.bf16.mxu0 0
    %2340 = vmatpush1.bf16.msra.mxu0 0
    %2341 = vmatprep.subr.bf16.mxu0 0
    %2342 = vmatpush1.bf16.msra.mxu0 0
    %2343 = vmatprep.subr.bf16.mxu0 0
    %2344 = vmatpush1.bf16.msra.mxu0 0
    %2345 = vmatprep.subr.bf16.mxu0 0
    %2346 = vmatpush1.bf16.msra.mxu0 0
    %2347 = vmatprep.subr.bf16.mxu0 0
    %2348 = vmatpush1.bf16.msra.mxu0 0
    %2349 = vmatprep.subr.bf16.mxu0 0
    %2350 = vmatpush1.bf16.msra.mxu0 0
    %2351 = vmatprep.subr.bf16.mxu0 0
    %2352 = vmatpush1.bf16.msra.mxu0 0
    %2353 = vmatprep.mubr.bf16.mxu0 0
    %2354 = vmatmul.mubr.bf16.gmra.mrb[0].mxu0 %v2147
    %v2355 = vpop.f32.mrb[0].mxu0
    %v2356 = vadd.f32 %v1941, %v2355
    %v2357 = vpop.f32.mrb[0].mxu0
    %v2358 = vadd.f32 %v1945, %v2357
    %v2359 = vpop.f32.mrb[0].mxu0
    %v2360 = vadd.f32 %v1941, %v2359
    %v2361 = vpop.f32.mrb[0].mxu0
    %v2362 = vadd.f32 %v1945, %v2361
    %2363 = vdwg.mxu0
    %2364 = vmatprep.subr.bf16.mxu0 %v2093
    %2365 = vmatpush1.bf16.msra.mxu0 %v2092
    %2366 = vmatprep.subr.bf16.mxu0 %v2109
    %2367 = vmatpush1.bf16.msra.mxu0 %v2108
    %2368 = vmatprep.subr.bf16.mxu0 0
    %2369 = vmatpush1.bf16.msra.mxu0 0
    %2370 = vmatprep.subr.bf16.mxu0 0
    %2371 = vmatpush1.bf16.msra.mxu0 0
    %2372 = vmatprep.subr.bf16.mxu0 0
    %2373 = vmatpush1.bf16.msra.mxu0 0
    %2374 = vmatprep.subr.bf16.mxu0 0
    %2375 = vmatpush1.bf16.msra.mxu0 0
    %2376 = vmatprep.subr.bf16.mxu0 0
    %2377 = vmatpush1.bf16.msra.mxu0 0
    %2378 = vmatprep.subr.bf16.mxu0 0
    %2379 = vmatpush1.bf16.msra.mxu0 0
    %2380 = vmatprep.subr.bf16.mxu0 0
    %2381 = vmatpush1.bf16.msra.mxu0 0
    %2382 = vmatprep.subr.bf16.mxu0 0
    %2383 = vmatpush1.bf16.msra.mxu0 0
    %2384 = vmatprep.subr.bf16.mxu0 0
    %2385 = vmatpush1.bf16.msra.mxu0 0
    %2386 = vmatprep.subr.bf16.mxu0 0
    %2387 = vmatpush1.bf16.msra.mxu0 0
    %2388 = vmatprep.subr.bf16.mxu0 0
    %2389 = vmatpush1.bf16.msra.mxu0 0
    %2390 = vmatprep.subr.bf16.mxu0 0
    %2391 = vmatpush1.bf16.msra.mxu0 0
    %2392 = vmatprep.subr.bf16.mxu0 0
    %2393 = vmatpush1.bf16.msra.mxu0 0
    %2394 = vmatprep.subr.bf16.mxu0 0
    %2395 = vmatpush1.bf16.msra.mxu0 0
    %2396 = vmatprep.mubr.bf16.mxu0 0
    %2397 = vmatmul.mubr.bf16.gmra.mrb[0].mxu0 %v2147
    %v2398 = vpop.f32.mrb[0].mxu0
    %v2399 = vadd.f32 %v1949, %v2398
    %v2400 = vpop.f32.mrb[0].mxu0
    %v2401 = vadd.f32 %v1953, %v2400
    %v2402 = vpop.f32.mrb[0].mxu0
    %v2403 = vadd.f32 %v1949, %v2402
    %v2404 = vpop.f32.mrb[0].mxu0
    %v2405 = vadd.f32 %v1953, %v2404
    %2406 = vdwg.mxu0
    %2407 = vmatprep.subr.bf16.mxu0 %v2095
    %2408 = vmatpush1.bf16.msra.mxu0 %v2094
    %2409 = vmatprep.subr.bf16.mxu0 %v2111
    %2410 = vmatpush1.bf16.msra.mxu0 %v2110
    %2411 = vmatprep.subr.bf16.mxu0 0
    %2412 = vmatpush1.bf16.msra.mxu0 0
    %2413 = vmatprep.subr.bf16.mxu0 0
    %2414 = vmatpush1.bf16.msra.mxu0 0
    %2415 = vmatprep.subr.bf16.mxu0 0
    %2416 = vmatpush1.bf16.msra.mxu0 0
    %2417 = vmatprep.subr.bf16.mxu0 0
    %2418 = vmatpush1.bf16.msra.mxu0 0
    %2419 = vmatprep.subr.bf16.mxu0 0
    %2420 = vmatpush1.bf16.msra.mxu0 0
    %2421 = vmatprep.subr.bf16.mxu0 0
    %2422 = vmatpush1.bf16.msra.mxu0 0
    %2423 = vmatprep.subr.bf16.mxu0 0
    %2424 = vmatpush1.bf16.msra.mxu0 0
    %2425 = vmatprep.subr.bf16.mxu0 0
    %2426 = vmatpush1.bf16.msra.mxu0 0
    %2427 = vmatprep.subr.bf16.mxu0 0
    %2428 = vmatpush1.bf16.msra.mxu0 0
    %2429 = vmatprep.subr.bf16.mxu0 0
    %2430 = vmatpush1.bf16.msra.mxu0 0
    %2431 = vmatprep.subr.bf16.mxu0 0
    %2432 = vmatpush1.bf16.msra.mxu0 0
    %2433 = vmatprep.subr.bf16.mxu0 0
    %2434 = vmatpush1.bf16.msra.mxu0 0
    %2435 = vmatprep.subr.bf16.mxu0 0
    %2436 = vmatpush1.bf16.msra.mxu0 0
    %2437 = vmatprep.subr.bf16.mxu0 0
    %2438 = vmatpush1.bf16.msra.mxu0 0
    %2439 = vmatprep.mubr.bf16.mxu0 0
    %2440 = vmatmul.mubr.bf16.gmra.mrb[0].mxu0 %v2147
    %v2441 = vpop.f32.mrb[0].mxu0
    %v2442 = vadd.f32 %v1957, %v2441
    %v2443 = vpop.f32.mrb[0].mxu0
    %v2444 = vadd.f32 %v1961, %v2443
    %v2445 = vpop.f32.mrb[0].mxu0
    %v2446 = vadd.f32 %v1957, %v2445
    %v2447 = vpop.f32.mrb[0].mxu0
    %v2448 = vadd.f32 %v1961, %v2447
    %2449 = vdwg.mxu0
    %2450 = vmatprep.subr.bf16.mxu0 %v2097
    %2451 = vmatpush1.bf16.msra.mxu0 %v2096
    %2452 = vmatprep.subr.bf16.mxu0 %v2113
    %2453 = vmatpush1.bf16.msra.mxu0 %v2112
    %2454 = vmatprep.subr.bf16.mxu0 0
    %2455 = vmatpush1.bf16.msra.mxu0 0
    %2456 = vmatprep.subr.bf16.mxu0 0
    %2457 = vmatpush1.bf16.msra.mxu0 0
    %2458 = vmatprep.subr.bf16.mxu0 0
    %2459 = vmatpush1.bf16.msra.mxu0 0
    %2460 = vmatprep.subr.bf16.mxu0 0
    %2461 = vmatpush1.bf16.msra.mxu0 0
    %2462 = vmatprep.subr.bf16.mxu0 0
    %2463 = vmatpush1.bf16.msra.mxu0 0
    %2464 = vmatprep.subr.bf16.mxu0 0
    %2465 = vmatpush1.bf16.msra.mxu0 0
    %2466 = vmatprep.subr.bf16.mxu0 0
    %2467 = vmatpush1.bf16.msra.mxu0 0
    %2468 = vmatprep.subr.bf16.mxu0 0
    %2469 = vmatpush1.bf16.msra.mxu0 0
    %2470 = vmatprep.subr.bf16.mxu0 0
    %2471 = vmatpush1.bf16.msra.mxu0 0
    %2472 = vmatprep.subr.bf16.mxu0 0
    %2473 = vmatpush1.bf16.msra.mxu0 0
    %2474 = vmatprep.subr.bf16.mxu0 0
    %2475 = vmatpush1.bf16.msra.mxu0 0
    %2476 = vmatprep.subr.bf16.mxu0 0
    %2477 = vmatpush1.bf16.msra.mxu0 0
    %2478 = vmatprep.subr.bf16.mxu0 0
    %2479 = vmatpush1.bf16.msra.mxu0 0
    %2480 = vmatprep.subr.bf16.mxu0 0
    %2481 = vmatpush1.bf16.msra.mxu0 0
    %2482 = vmatprep.mubr.bf16.mxu0 0
    %2483 = vmatmul.mubr.bf16.gmra.mrb[0].mxu0 %v2147
    %v2484 = vpop.f32.mrb[0].mxu0
    %v2485 = vadd.f32 %v1965, %v2484
    %v2486 = vpop.f32.mrb[0].mxu0
    %v2487 = vadd.f32 %v1969, %v2486
    %v2488 = vpop.f32.mrb[0].mxu0
    %v2489 = vadd.f32 %v1965, %v2488
    %v2490 = vpop.f32.mrb[0].mxu0
    %v2491 = vadd.f32 %v1969, %v2490
    %2492 = vdwg.mxu0
    %v2493 = vmax.f32 %v2184, 0.0
    %v2494 = vmax.f32 %v2186, 0.0
    %v2495 = vmax.f32 %v2227, 0.0
    %v2496 = vmax.f32 %v2229, 0.0
    %v2497 = vmax.f32 %v2270, 0.0
    %v2498 = vmax.f32 %v2272, 0.0
    %v2499 = vmax.f32 %v2313, 0.0
    %v2500 = vmax.f32 %v2315, 0.0
    %v2501 = vmax.f32 %v2356, 0.0
    %v2502 = vmax.f32 %v2358, 0.0
    %v2503 = vmax.f32 %v2399, 0.0
    %v2504 = vmax.f32 %v2401, 0.0
    %v2505 = vmax.f32 %v2442, 0.0
    %v2506 = vmax.f32 %v2444, 0.0
    %v2507 = vmax.f32 %v2485, 0.0
    %v2508 = vmax.f32 %v2487, 0.0
    %v2509 = vmax.f32 %v2188, 0.0
    %v2510 = vmax.f32 %v2190, 0.0
    %v2511 = vmax.f32 %v2231, 0.0
    %v2512 = vmax.f32 %v2233, 0.0
    %v2513 = vmax.f32 %v2274, 0.0
    %v2514 = vmax.f32 %v2276, 0.0
    %v2515 = vmax.f32 %v2317, 0.0
    %v2516 = vmax.f32 %v2319, 0.0
    %v2517 = vmax.f32 %v2360, 0.0
    %v2518 = vmax.f32 %v2362, 0.0
    %v2519 = vmax.f32 %v2403, 0.0
    %v2520 = vmax.f32 %v2405, 0.0
    %v2521 = vmax.f32 %v2446, 0.0
    %v2522 = vmax.f32 %v2448, 0.0
    %v2523 = vmax.f32 %v2489, 0.0
    %v2524 = vmax.f32 %v2491, 0.0
    %v2525 = vpack.c.bf16 %v2509, %v2493
    %v2526 = vpack.c.bf16 %v2510, %v2494
    %v2527 = vpack.c.bf16 %v2511, %v2495
    %v2528 = vpack.c.bf16 %v2512, %v2496
    %v2529 = vpack.c.bf16 %v2513, %v2497
    %v2530 = vpack.c.bf16 %v2514, %v2498
    %v2531 = vpack.c.bf16 %v2515, %v2499
    %v2532 = vpack.c.bf16 %v2516, %v2500
    %v2533 = vpack.c.bf16 %v2517, %v2501
    %v2534 = vpack.c.bf16 %v2518, %v2502
    %v2535 = vpack.c.bf16 %v2519, %v2503
    %v2536 = vpack.c.bf16 %v2520, %v2504
    %v2537 = vpack.c.bf16 %v2521, %v2505
    %v2538 = vpack.c.bf16 %v2522, %v2506
    %v2539 = vpack.c.bf16 %v2523, %v2507
    %v2540 = vpack.c.bf16 %v2524, %v2508
    %v2541 = vld [vmem:[%s11] sm:$0xf]
    %v2542 = vld [vmem:[%s11 + $0x4] sm:$0xf]
    %v2543 = vld [vmem:[%s11 + $0x8] sm:$0xf]
    %v2544 = vld [vmem:[%s11 + $0xc] sm:$0xf]
    %v2545 = vld [vmem:[%s11 + $0x10] sm:$0xf]
    %v2546 = vld [vmem:[%s11 + $0x14] sm:$0xf]
    %v2547 = vld [vmem:[%s11 + $0x18] sm:$0xf]
    %v2548 = vld [vmem:[%s11 + $0x1c] sm:$0xf]
    %v2549 = vld [vmem:[%s11 + $0x20] sm:$0xf]
    %v2550 = vld [vmem:[%s11 + $0x24] sm:$0xf]
    %v2551 = vld [vmem:[%s11 + $0x28] sm:$0xf]
    %v2552 = vld [vmem:[%s11 + $0x2c] sm:$0xf]
    %v2553 = vld [vmem:[%s11 + $0x30] sm:$0xf]
    %v2554 = vld [vmem:[%s11 + $0x34] sm:$0xf]
    %v2555 = vld [vmem:[%s11 + $0x38] sm:$0xf]
    %v2556 = vld [vmem:[%s11 + $0x3c] sm:$0xf]
    %v2557 = vld [vmem:[%s11 + $0x40] sm:$0xf]
    %v2558 = vld [vmem:[%s11 + $0x44] sm:$0xf]
    %v2559 = vld [vmem:[%s11 + $0x48] sm:$0xf]
    %v2560 = vld [vmem:[%s11 + $0x4c] sm:$0xf]
    %v2561 = vld [vmem:[%s11 + $0x50] sm:$0xf]
    %v2562 = vld [vmem:[%s11 + $0x54] sm:$0xf]
    %v2563 = vld [vmem:[%s11 + $0x58] sm:$0xf]
    %v2564 = vld [vmem:[%s11 + $0x5c] sm:$0xf]
    %v2565 = vld [vmem:[%s11 + $0x60] sm:$0xf]
    %v2566 = vld [vmem:[%s11 + $0x64] sm:$0xf]
    %v2567 = vld [vmem:[%s11 + $0x68] sm:$0xf]
    %v2568 = vld [vmem:[%s11 + $0x6c] sm:$0xf]
    %v2569 = vld [vmem:[%s11 + $0x70] sm:$0xf]
    %v2570 = vld [vmem:[%s11 + $0x74] sm:$0xf]
    %v2571 = vld [vmem:[%s11 + $0x78] sm:$0xf]
    %v2572 = vld [vmem:[%s11 + $0x7c] sm:$0xf]
    %v2573 = vld [vmem:[%s11 + $0x80] sm:$0xf]
    %v2574 = vld [vmem:[%s11 + $0x84] sm:$0xf]
    %v2575 = vld [vmem:[%s11 + $0x88] sm:$0xf]
    %v2576 = vld [vmem:[%s11 + $0x8c] sm:$0xf]
    %v2577 = vld [vmem:[%s11 + $0x90] sm:$0xf]
    %v2578 = vld [vmem:[%s11 + $0x94] sm:$0xf]
    %v2579 = vld [vmem:[%s11 + $0x98] sm:$0xf]
    %v2580 = vld [vmem:[%s11 + $0x9c] sm:$0xf]
    %v2581 = vld [vmem:[%s11 + $0xa0] sm:$0xf]
    %v2582 = vld [vmem:[%s11 + $0xa4] sm:$0xf]
    %v2583 = vld [vmem:[%s11 + $0xa8] sm:$0xf]
    %v2584 = vld [vmem:[%s11 + $0xac] sm:$0xf]
    %v2585 = vld [vmem:[%s11 + $0xb0] sm:$0xf]
    %v2586 = vld [vmem:[%s11 + $0xb4] sm:$0xf]
    %v2587 = vld [vmem:[%s11 + $0xb8] sm:$0xf]
    %v2588 = vld [vmem:[%s11 + $0xbc] sm:$0xf]
    %v2589 = vld [vmem:[%s11 + $0xc0] sm:$0xf]
    %v2590 = vld [vmem:[%s11 + $0xc4] sm:$0xf]
    %v2591 = vld [vmem:[%s11 + $0xc8] sm:$0xf]
    %v2592 = vld [vmem:[%s11 + $0xcc] sm:$0xf]
    %v2593 = vld [vmem:[%s11 + $0xd0] sm:$0xf]
    %v2594 = vld [vmem:[%s11 + $0xd4] sm:$0xf]
    %v2595 = vld [vmem:[%s11 + $0xd8] sm:$0xf]
    %v2596 = vld [vmem:[%s11 + $0xdc] sm:$0xf]
    %v2597 = vld [vmem:[%s11 + $0xe0] sm:$0xf]
    %v2598 = vld [vmem:[%s11 + $0xe4] sm:$0xf]
    %v2599 = vld [vmem:[%s11 + $0xe8] sm:$0xf]
    %v2600 = vld [vmem:[%s11 + $0xec] sm:$0xf]
    %v2601 = vld [vmem:[%s11 + $0xf0] sm:$0xf]
    %v2602 = vld [vmem:[%s11 + $0xf4] sm:$0xf]
    %v2603 = vld [vmem:[%s11 + $0xf8] sm:$0xf]
    %v2604 = vld [vmem:[%s11 + $0xfc] sm:$0xf]
    %v2605 = vld [vmem:[%s11 + $0x100] sm:$0xf]
    %v2606 = vld [vmem:[%s11 + $0x104] sm:$0xf]
    %v2607 = vld [vmem:[%s11 + $0x108] sm:$0xf]
    %v2608 = vld [vmem:[%s11 + $0x10c] sm:$0xf]
    %v2609 = vld [vmem:[%s11 + $0x110] sm:$0xf]
    %v2610 = vld [vmem:[%s11 + $0x114] sm:$0xf]
    %v2611 = vld [vmem:[%s11 + $0x118] sm:$0xf]
    %v2612 = vld [vmem:[%s11 + $0x11c] sm:$0xf]
    %v2613 = vld [vmem:[%s11 + $0x120] sm:$0xf]
    %v2614 = vld [vmem:[%s11 + $0x124] sm:$0xf]
    %v2615 = vld [vmem:[%s11 + $0x128] sm:$0xf]
    %v2616 = vld [vmem:[%s11 + $0x12c] sm:$0xf]
    %v2617 = vld [vmem:[%s11 + $0x130] sm:$0xf]
    %v2618 = vld [vmem:[%s11 + $0x134] sm:$0xf]
    %v2619 = vld [vmem:[%s11 + $0x138] sm:$0xf]
    %v2620 = vld [vmem:[%s11 + $0x13c] sm:$0xf]
    %v2621 = vld [vmem:[%s11 + $0x140] sm:$0xf]
    %v2622 = vld [vmem:[%s11 + $0x144] sm:$0xf]
    %v2623 = vld [vmem:[%s11 + $0x148] sm:$0xf]
    %v2624 = vld [vmem:[%s11 + $0x14c] sm:$0xf]
    %v2625 = vld [vmem:[%s11 + $0x150] sm:$0xf]
    %v2626 = vld [vmem:[%s11 + $0x154] sm:$0xf]
    %v2627 = vld [vmem:[%s11 + $0x158] sm:$0xf]
    %v2628 = vld [vmem:[%s11 + $0x15c] sm:$0xf]
    %v2629 = vld [vmem:[%s11 + $0x160] sm:$0xf]
    %v2630 = vld [vmem:[%s11 + $0x164] sm:$0xf]
    %v2631 = vld [vmem:[%s11 + $0x168] sm:$0xf]
    %v2632 = vld [vmem:[%s11 + $0x16c] sm:$0xf]
    %v2633 = vld [vmem:[%s11 + $0x170] sm:$0xf]
    %v2634 = vld [vmem:[%s11 + $0x174] sm:$0xf]
    %v2635 = vld [vmem:[%s11 + $0x178] sm:$0xf]
    %v2636 = vld [vmem:[%s11 + $0x17c] sm:$0xf]
    %v2637 = vld [vmem:[%s11 + $0x180] sm:$0xf]
    %v2638 = vld [vmem:[%s11 + $0x184] sm:$0xf]
    %v2639 = vld [vmem:[%s11 + $0x188] sm:$0xf]
    %v2640 = vld [vmem:[%s11 + $0x18c] sm:$0xf]
    %v2641 = vld [vmem:[%s11 + $0x190] sm:$0xf]
    %v2642 = vld [vmem:[%s11 + $0x194] sm:$0xf]
    %v2643 = vld [vmem:[%s11 + $0x198] sm:$0xf]
    %v2644 = vld [vmem:[%s11 + $0x19c] sm:$0xf]
    %v2645 = vld [vmem:[%s11 + $0x1a0] sm:$0xf]
    %v2646 = vld [vmem:[%s11 + $0x1a4] sm:$0xf]
    %v2647 = vld [vmem:[%s11 + $0x1a8] sm:$0xf]
    %v2648 = vld [vmem:[%s11 + $0x1ac] sm:$0xf]
    %v2649 = vld [vmem:[%s11 + $0x1b0] sm:$0xf]
    %v2650 = vld [vmem:[%s11 + $0x1b4] sm:$0xf]
    %v2651 = vld [vmem:[%s11 + $0x1b8] sm:$0xf]
    %v2652 = vld [vmem:[%s11 + $0x1bc] sm:$0xf]
    %v2653 = vld [vmem:[%s11 + $0x1c0] sm:$0xf]
    %v2654 = vld [vmem:[%s11 + $0x1c4] sm:$0xf]
    %v2655 = vld [vmem:[%s11 + $0x1c8] sm:$0xf]
    %v2656 = vld [vmem:[%s11 + $0x1cc] sm:$0xf]
    %v2657 = vld [vmem:[%s11 + $0x1d0] sm:$0xf]
    %v2658 = vld [vmem:[%s11 + $0x1d4] sm:$0xf]
    %v2659 = vld [vmem:[%s11 + $0x1d8] sm:$0xf]
    %v2660 = vld [vmem:[%s11 + $0x1dc] sm:$0xf]
    %v2661 = vld [vmem:[%s11 + $0x1e0] sm:$0xf]
    %v2662 = vld [vmem:[%s11 + $0x1e4] sm:$0xf]
    %v2663 = vld [vmem:[%s11 + $0x1e8] sm:$0xf]
    %v2664 = vld [vmem:[%s11 + $0x1ec] sm:$0xf]
    %v2665 = vld [vmem:[%s11 + $0x1f0] sm:$0xf]
    %v2666 = vld [vmem:[%s11 + $0x1f4] sm:$0xf]
    %v2667 = vld [vmem:[%s11 + $0x1f8] sm:$0xf]
    %v2668 = vld [vmem:[%s11 + $0x1fc] sm:$0xf]
    %v2669 = vld [vmem:[%s11 + $0x200] sm:$0xf]
    %v2670 = vld [vmem:[%s11 + $0x204] sm:$0xf]
    %v2671 = vld [vmem:[%s11 + $0x208] sm:$0xf]
    %v2672 = vld [vmem:[%s11 + $0x20c] sm:$0xf]
    %v2673 = vld [vmem:[%s11 + $0x210] sm:$0xf]
    %v2674 = vld [vmem:[%s11 + $0x214] sm:$0xf]
    %v2675 = vld [vmem:[%s11 + $0x218] sm:$0xf]
    %v2676 = vld [vmem:[%s11 + $0x21c] sm:$0xf]
    %v2677 = vld [vmem:[%s11 + $0x220] sm:$0xf]
    %v2678 = vld [vmem:[%s11 + $0x224] sm:$0xf]
    %v2679 = vld [vmem:[%s11 + $0x228] sm:$0xf]
    %v2680 = vld [vmem:[%s11 + $0x22c] sm:$0xf]
    %v2681 = vld [vmem:[%s11 + $0x230] sm:$0xf]
    %v2682 = vld [vmem:[%s11 + $0x234] sm:$0xf]
    %v2683 = vld [vmem:[%s11 + $0x238] sm:$0xf]
    %v2684 = vld [vmem:[%s11 + $0x23c] sm:$0xf]
    %v2685 = vld [vmem:[%s11 + $0x240] sm:$0xf]
    %v2686 = vld [vmem:[%s11 + $0x244] sm:$0xf]
    %v2687 = vld [vmem:[%s11 + $0x248] sm:$0xf]
    %v2688 = vld [vmem:[%s11 + $0x24c] sm:$0xf]
    %v2689 = vld [vmem:[%s11 + $0x250] sm:$0xf]
    %v2690 = vld [vmem:[%s11 + $0x254] sm:$0xf]
    %v2691 = vld [vmem:[%s11 + $0x258] sm:$0xf]
    %v2692 = vld [vmem:[%s11 + $0x25c] sm:$0xf]
    %v2693 = vld [vmem:[%s11 + $0x260] sm:$0xf]
    %v2694 = vld [vmem:[%s11 + $0x264] sm:$0xf]
    %v2695 = vld [vmem:[%s11 + $0x268] sm:$0xf]
    %v2696 = vld [vmem:[%s11 + $0x26c] sm:$0xf]
    %v2697 = vld [vmem:[%s11 + $0x270] sm:$0xf]
    %v2698 = vld [vmem:[%s11 + $0x274] sm:$0xf]
    %v2699 = vld [vmem:[%s11 + $0x278] sm:$0xf]
    %v2700 = vld [vmem:[%s11 + $0x27c] sm:$0xf]
    %v2701 = vld [vmem:[%s11 + $0x280] sm:$0xf]
    %v2702 = vld [vmem:[%s11 + $0x284] sm:$0xf]
    %v2703 = vld [vmem:[%s11 + $0x288] sm:$0xf]
    %v2704 = vld [vmem:[%s11 + $0x28c] sm:$0xf]
    %v2705 = vld [vmem:[%s11 + $0x290] sm:$0xf]
    %v2706 = vld [vmem:[%s11 + $0x294] sm:$0xf]
    %v2707 = vld [vmem:[%s11 + $0x298] sm:$0xf]
    %v2708 = vld [vmem:[%s11 + $0x29c] sm:$0xf]
    %v2709 = vld [vmem:[%s11 + $0x2a0] sm:$0xf]
    %v2710 = vld [vmem:[%s11 + $0x2a4] sm:$0xf]
    %v2711 = vld [vmem:[%s11 + $0x2a8] sm:$0xf]
    %v2712 = vld [vmem:[%s11 + $0x2ac] sm:$0xf]
    %v2713 = vld [vmem:[%s11 + $0x2b0] sm:$0xf]
    %v2714 = vld [vmem:[%s11 + $0x2b4] sm:$0xf]
    %v2715 = vld [vmem:[%s11 + $0x2b8] sm:$0xf]
    %v2716 = vld [vmem:[%s11 + $0x2bc] sm:$0xf]
    %v2717 = vld [vmem:[%s11 + $0x2c0] sm:$0xf]
    %v2718 = vld [vmem:[%s11 + $0x2c4] sm:$0xf]
    %v2719 = vld [vmem:[%s11 + $0x2c8] sm:$0xf]
    %v2720 = vld [vmem:[%s11 + $0x2cc] sm:$0xf]
    %v2721 = vld [vmem:[%s11 + $0x2d0] sm:$0xf]
    %v2722 = vld [vmem:[%s11 + $0x2d4] sm:$0xf]
    %v2723 = vld [vmem:[%s11 + $0x2d8] sm:$0xf]
    %v2724 = vld [vmem:[%s11 + $0x2dc] sm:$0xf]
    %v2725 = vld [vmem:[%s11 + $0x2e0] sm:$0xf]
    %v2726 = vld [vmem:[%s11 + $0x2e4] sm:$0xf]
    %v2727 = vld [vmem:[%s11 + $0x2e8] sm:$0xf]
    %v2728 = vld [vmem:[%s11 + $0x2ec] sm:$0xf]
    %v2729 = vld [vmem:[%s11 + $0x2f0] sm:$0xf]
    %v2730 = vld [vmem:[%s11 + $0x2f4] sm:$0xf]
    %v2731 = vld [vmem:[%s11 + $0x2f8] sm:$0xf]
    %v2732 = vld [vmem:[%s11 + $0x2fc] sm:$0xf]
    %v2733 = vld [vmem:[%s11 + $0x300] sm:$0xf]
    %v2734 = vld [vmem:[%s11 + $0x304] sm:$0xf]
    %v2735 = vld [vmem:[%s11 + $0x308] sm:$0xf]
    %v2736 = vld [vmem:[%s11 + $0x30c] sm:$0xf]
    %v2737 = vld [vmem:[%s11 + $0x310] sm:$0xf]
    %v2738 = vld [vmem:[%s11 + $0x314] sm:$0xf]
    %v2739 = vld [vmem:[%s11 + $0x318] sm:$0xf]
    %v2740 = vld [vmem:[%s11 + $0x31c] sm:$0xf]
    %v2741 = vld [vmem:[%s11 + $0x320] sm:$0xf]
    %v2742 = vld [vmem:[%s11 + $0x324] sm:$0xf]
    %v2743 = vld [vmem:[%s11 + $0x328] sm:$0xf]
    %v2744 = vld [vmem:[%s11 + $0x32c] sm:$0xf]
    %v2745 = vld [vmem:[%s11 + $0x330] sm:$0xf]
    %v2746 = vld [vmem:[%s11 + $0x334] sm:$0xf]
    %v2747 = vld [vmem:[%s11 + $0x338] sm:$0xf]
    %v2748 = vld [vmem:[%s11 + $0x33c] sm:$0xf]
    %v2749 = vld [vmem:[%s11 + $0x340] sm:$0xf]
    %v2750 = vld [vmem:[%s11 + $0x344] sm:$0xf]
    %v2751 = vld [vmem:[%s11 + $0x348] sm:$0xf]
    %v2752 = vld [vmem:[%s11 + $0x34c] sm:$0xf]
    %v2753 = vld [vmem:[%s11 + $0x350] sm:$0xf]
    %v2754 = vld [vmem:[%s11 + $0x354] sm:$0xf]
    %v2755 = vld [vmem:[%s11 + $0x358] sm:$0xf]
    %v2756 = vld [vmem:[%s11 + $0x35c] sm:$0xf]
    %v2757 = vld [vmem:[%s11 + $0x360] sm:$0xf]
    %v2758 = vld [vmem:[%s11 + $0x364] sm:$0xf]
    %v2759 = vld [vmem:[%s11 + $0x368] sm:$0xf]
    %v2760 = vld [vmem:[%s11 + $0x36c] sm:$0xf]
    %v2761 = vld [vmem:[%s11 + $0x370] sm:$0xf]
    %v2762 = vld [vmem:[%s11 + $0x374] sm:$0xf]
    %v2763 = vld [vmem:[%s11 + $0x378] sm:$0xf]
    %v2764 = vld [vmem:[%s11 + $0x37c] sm:$0xf]
    %v2765 = vld [vmem:[%s11 + $0x380] sm:$0xf]
    %v2766 = vld [vmem:[%s11 + $0x384] sm:$0xf]
    %v2767 = vld [vmem:[%s11 + $0x388] sm:$0xf]
    %v2768 = vld [vmem:[%s11 + $0x38c] sm:$0xf]
    %v2769 = vld [vmem:[%s11 + $0x390] sm:$0xf]
    %v2770 = vld [vmem:[%s11 + $0x394] sm:$0xf]
    %v2771 = vld [vmem:[%s11 + $0x398] sm:$0xf]
    %v2772 = vld [vmem:[%s11 + $0x39c] sm:$0xf]
    %v2773 = vld [vmem:[%s11 + $0x3a0] sm:$0xf]
    %v2774 = vld [vmem:[%s11 + $0x3a4] sm:$0xf]
    %v2775 = vld [vmem:[%s11 + $0x3a8] sm:$0xf]
    %v2776 = vld [vmem:[%s11 + $0x3ac] sm:$0xf]
    %v2777 = vld [vmem:[%s11 + $0x3b0] sm:$0xf]
    %v2778 = vld [vmem:[%s11 + $0x3b4] sm:$0xf]
    %v2779 = vld [vmem:[%s11 + $0x3b8] sm:$0xf]
    %v2780 = vld [vmem:[%s11 + $0x3bc] sm:$0xf]
    %v2781 = vld [vmem:[%s11 + $0x3c0] sm:$0xf]
    %v2782 = vld [vmem:[%s11 + $0x3c4] sm:$0xf]
    %v2783 = vld [vmem:[%s11 + $0x3c8] sm:$0xf]
    %v2784 = vld [vmem:[%s11 + $0x3cc] sm:$0xf]
    %v2785 = vld [vmem:[%s11 + $0x3d0] sm:$0xf]
    %v2786 = vld [vmem:[%s11 + $0x3d4] sm:$0xf]
    %v2787 = vld [vmem:[%s11 + $0x3d8] sm:$0xf]
    %v2788 = vld [vmem:[%s11 + $0x3dc] sm:$0xf]
    %v2789 = vld [vmem:[%s11 + $0x3e0] sm:$0xf]
    %v2790 = vld [vmem:[%s11 + $0x3e4] sm:$0xf]
    %v2791 = vld [vmem:[%s11 + $0x3e8] sm:$0xf]
    %v2792 = vld [vmem:[%s11 + $0x3ec] sm:$0xf]
    %v2793 = vld [vmem:[%s11 + $0x3f0] sm:$0xf]
    %v2794 = vld [vmem:[%s11 + $0x3f4] sm:$0xf]
    %v2795 = vld [vmem:[%s11 + $0x3f8] sm:$0xf]
    %v2796 = vld [vmem:[%s11 + $0x3fc] sm:$0xf]
    %v2797 = vld [vmem:[%s12] sm:$0x1]
    %v2799 = vlaneseq
    %v2800 = vshrl.u32 %v2799, 7
    %v2801 = vsub.s32 0, %v2800
    %v2802 = vrot.slane %v2797, %v2801
    %v3060 = vunpack.c.l.b16 %v2541
    %v3061 = vunpack.c.l.b16 %v2542
    %v3062 = vunpack.c.l.b16 %v2543
    %v3063 = vunpack.c.l.b16 %v2544
    %v3064 = vunpack.c.l.b16 %v2545
    %v3065 = vunpack.c.l.b16 %v2546
    %v3066 = vunpack.c.l.b16 %v2547
    %v3067 = vunpack.c.l.b16 %v2548
    %v3068 = vunpack.c.l.b16 %v2549
    %v3069 = vunpack.c.l.b16 %v2550
    %v3070 = vunpack.c.l.b16 %v2551
    %v3071 = vunpack.c.l.b16 %v2552
    %v3072 = vunpack.c.l.b16 %v2553
    %v3073 = vunpack.c.l.b16 %v2554
    %v3074 = vunpack.c.l.b16 %v2555
    %v3075 = vunpack.c.l.b16 %v2556
    %v3076 = vunpack.c.l.b16 %v2557
    %v3077 = vunpack.c.l.b16 %v2558
    %v3078 = vunpack.c.l.b16 %v2559
    %v3079 = vunpack.c.l.b16 %v2560
    %v3080 = vunpack.c.l.b16 %v2561
    %v3081 = vunpack.c.l.b16 %v2562
    %v3082 = vunpack.c.l.b16 %v2563
    %v3083 = vunpack.c.l.b16 %v2564
    %v3084 = vunpack.c.l.b16 %v2565
    %v3085 = vunpack.c.l.b16 %v2566
    %v3086 = vunpack.c.l.b16 %v2567
    %v3087 = vunpack.c.l.b16 %v2568
    %v3088 = vunpack.c.l.b16 %v2569
    %v3089 = vunpack.c.l.b16 %v2570
    %v3090 = vunpack.c.l.b16 %v2571
    %v3091 = vunpack.c.l.b16 %v2572
    %v3092 = vunpack.c.l.b16 %v2573
    %v3093 = vunpack.c.l.b16 %v2574
    %v3094 = vunpack.c.l.b16 %v2575
    %v3095 = vunpack.c.l.b16 %v2576
    %v3096 = vunpack.c.l.b16 %v2577
    %v3097 = vunpack.c.l.b16 %v2578
    %v3098 = vunpack.c.l.b16 %v2579
    %v3099 = vunpack.c.l.b16 %v2580
    %v3100 = vunpack.c.l.b16 %v2581
    %v3101 = vunpack.c.l.b16 %v2582
    %v3102 = vunpack.c.l.b16 %v2583
    %v3103 = vunpack.c.l.b16 %v2584
    %v3104 = vunpack.c.l.b16 %v2585
    %v3105 = vunpack.c.l.b16 %v2586
    %v3106 = vunpack.c.l.b16 %v2587
    %v3107 = vunpack.c.l.b16 %v2588
    %v3108 = vunpack.c.l.b16 %v2589
    %v3109 = vunpack.c.l.b16 %v2590
    %v3110 = vunpack.c.l.b16 %v2591
    %v3111 = vunpack.c.l.b16 %v2592
    %v3112 = vunpack.c.l.b16 %v2593
    %v3113 = vunpack.c.l.b16 %v2594
    %v3114 = vunpack.c.l.b16 %v2595
    %v3115 = vunpack.c.l.b16 %v2596
    %v3116 = vunpack.c.l.b16 %v2597
    %v3117 = vunpack.c.l.b16 %v2598
    %v3118 = vunpack.c.l.b16 %v2599
    %v3119 = vunpack.c.l.b16 %v2600
    %v3120 = vunpack.c.l.b16 %v2601
    %v3121 = vunpack.c.l.b16 %v2602
    %v3122 = vunpack.c.l.b16 %v2603
    %v3123 = vunpack.c.l.b16 %v2604
    %v3124 = vunpack.c.l.b16 %v2605
    %v3125 = vunpack.c.l.b16 %v2606
    %v3126 = vunpack.c.l.b16 %v2607
    %v3127 = vunpack.c.l.b16 %v2608
    %v3128 = vunpack.c.l.b16 %v2609
    %v3129 = vunpack.c.l.b16 %v2610
    %v3130 = vunpack.c.l.b16 %v2611
    %v3131 = vunpack.c.l.b16 %v2612
    %v3132 = vunpack.c.l.b16 %v2613
    %v3133 = vunpack.c.l.b16 %v2614
    %v3134 = vunpack.c.l.b16 %v2615
    %v3135 = vunpack.c.l.b16 %v2616
    %v3136 = vunpack.c.l.b16 %v2617
    %v3137 = vunpack.c.l.b16 %v2618
    %v3138 = vunpack.c.l.b16 %v2619
    %v3139 = vunpack.c.l.b16 %v2620
    %v3140 = vunpack.c.l.b16 %v2621
    %v3141 = vunpack.c.l.b16 %v2622
    %v3142 = vunpack.c.l.b16 %v2623
    %v3143 = vunpack.c.l.b16 %v2624
    %v3144 = vunpack.c.l.b16 %v2625
    %v3145 = vunpack.c.l.b16 %v2626
    %v3146 = vunpack.c.l.b16 %v2627
    %v3147 = vunpack.c.l.b16 %v2628
    %v3148 = vunpack.c.l.b16 %v2629
    %v3149 = vunpack.c.l.b16 %v2630
    %v3150 = vunpack.c.l.b16 %v2631
    %v3151 = vunpack.c.l.b16 %v2632
    %v3152 = vunpack.c.l.b16 %v2633
    %v3153 = vunpack.c.l.b16 %v2634
    %v3154 = vunpack.c.l.b16 %v2635
    %v3155 = vunpack.c.l.b16 %v2636
    %v3156 = vunpack.c.l.b16 %v2637
    %v3157 = vunpack.c.l.b16 %v2638
    %v3158 = vunpack.c.l.b16 %v2639
    %v3159 = vunpack.c.l.b16 %v2640
    %v3160 = vunpack.c.l.b16 %v2641
    %v3161 = vunpack.c.l.b16 %v2642
    %v3162 = vunpack.c.l.b16 %v2643
    %v3163 = vunpack.c.l.b16 %v2644
    %v3164 = vunpack.c.l.b16 %v2645
    %v3165 = vunpack.c.l.b16 %v2646
    %v3166 = vunpack.c.l.b16 %v2647
    %v3167 = vunpack.c.l.b16 %v2648
    %v3168 = vunpack.c.l.b16 %v2649
    %v3169 = vunpack.c.l.b16 %v2650
    %v3170 = vunpack.c.l.b16 %v2651
    %v3171 = vunpack.c.l.b16 %v2652
    %v3172 = vunpack.c.l.b16 %v2653
    %v3173 = vunpack.c.l.b16 %v2654
    %v3174 = vunpack.c.l.b16 %v2655
    %v3175 = vunpack.c.l.b16 %v2656
    %v3176 = vunpack.c.l.b16 %v2657
    %v3177 = vunpack.c.l.b16 %v2658
    %v3178 = vunpack.c.l.b16 %v2659
    %v3179 = vunpack.c.l.b16 %v2660
    %v3180 = vunpack.c.l.b16 %v2661
    %v3181 = vunpack.c.l.b16 %v2662
    %v3182 = vunpack.c.l.b16 %v2663
    %v3183 = vunpack.c.l.b16 %v2664
    %v3184 = vunpack.c.l.b16 %v2665
    %v3185 = vunpack.c.l.b16 %v2666
    %v3186 = vunpack.c.l.b16 %v2667
    %v3187 = vunpack.c.l.b16 %v2668
    %v3188 = vunpack.c.l.b16 %v2669
    %v3189 = vunpack.c.l.b16 %v2670
    %v3190 = vunpack.c.l.b16 %v2671
    %v3191 = vunpack.c.l.b16 %v2672
    %v3192 = vunpack.c.l.b16 %v2673
    %v3193 = vunpack.c.l.b16 %v2674
    %v3194 = vunpack.c.l.b16 %v2675
    %v3195 = vunpack.c.l.b16 %v2676
    %v3196 = vunpack.c.l.b16 %v2677
    %v3197 = vunpack.c.l.b16 %v2678
    %v3198 = vunpack.c.l.b16 %v2679
    %v3199 = vunpack.c.l.b16 %v2680
    %v3200 = vunpack.c.l.b16 %v2681
    %v3201 = vunpack.c.l.b16 %v2682
    %v3202 = vunpack.c.l.b16 %v2683
    %v3203 = vunpack.c.l.b16 %v2684
    %v3204 = vunpack.c.l.b16 %v2685
    %v3205 = vunpack.c.l.b16 %v2686
    %v3206 = vunpack.c.l.b16 %v2687
    %v3207 = vunpack.c.l.b16 %v2688
    %v3208 = vunpack.c.l.b16 %v2689
    %v3209 = vunpack.c.l.b16 %v2690
    %v3210 = vunpack.c.l.b16 %v2691
    %v3211 = vunpack.c.l.b16 %v2692
    %v3212 = vunpack.c.l.b16 %v2693
    %v3213 = vunpack.c.l.b16 %v2694
    %v3214 = vunpack.c.l.b16 %v2695
    %v3215 = vunpack.c.l.b16 %v2696
    %v3216 = vunpack.c.l.b16 %v2697
    %v3217 = vunpack.c.l.b16 %v2698
    %v3218 = vunpack.c.l.b16 %v2699
    %v3219 = vunpack.c.l.b16 %v2700
    %v3220 = vunpack.c.l.b16 %v2701
    %v3221 = vunpack.c.l.b16 %v2702
    %v3222 = vunpack.c.l.b16 %v2703
    %v3223 = vunpack.c.l.b16 %v2704
    %v3224 = vunpack.c.l.b16 %v2705
    %v3225 = vunpack.c.l.b16 %v2706
    %v3226 = vunpack.c.l.b16 %v2707
    %v3227 = vunpack.c.l.b16 %v2708
    %v3228 = vunpack.c.l.b16 %v2709
    %v3229 = vunpack.c.l.b16 %v2710
    %v3230 = vunpack.c.l.b16 %v2711
    %v3231 = vunpack.c.l.b16 %v2712
    %v3232 = vunpack.c.l.b16 %v2713
    %v3233 = vunpack.c.l.b16 %v2714
    %v3234 = vunpack.c.l.b16 %v2715
    %v3235 = vunpack.c.l.b16 %v2716
    %v3236 = vunpack.c.l.b16 %v2717
    %v3237 = vunpack.c.l.b16 %v2718
    %v3238 = vunpack.c.l.b16 %v2719
    %v3239 = vunpack.c.l.b16 %v2720
    %v3240 = vunpack.c.l.b16 %v2721
    %v3241 = vunpack.c.l.b16 %v2722
    %v3242 = vunpack.c.l.b16 %v2723
    %v3243 = vunpack.c.l.b16 %v2724
    %v3244 = vunpack.c.l.b16 %v2725
    %v3245 = vunpack.c.l.b16 %v2726
    %v3246 = vunpack.c.l.b16 %v2727
    %v3247 = vunpack.c.l.b16 %v2728
    %v3248 = vunpack.c.l.b16 %v2729
    %v3249 = vunpack.c.l.b16 %v2730
    %v3250 = vunpack.c.l.b16 %v2731
    %v3251 = vunpack.c.l.b16 %v2732
    %v3252 = vunpack.c.l.b16 %v2733
    %v3253 = vunpack.c.l.b16 %v2734
    %v3254 = vunpack.c.l.b16 %v2735
    %v3255 = vunpack.c.l.b16 %v2736
    %v3256 = vunpack.c.l.b16 %v2737
    %v3257 = vunpack.c.l.b16 %v2738
    %v3258 = vunpack.c.l.b16 %v2739
    %v3259 = vunpack.c.l.b16 %v2740
    %v3260 = vunpack.c.l.b16 %v2741
    %v3261 = vunpack.c.l.b16 %v2742
    %v3262 = vunpack.c.l.b16 %v2743
    %v3263 = vunpack.c.l.b16 %v2744
    %v3264 = vunpack.c.l.b16 %v2745
    %v3265 = vunpack.c.l.b16 %v2746
    %v3266 = vunpack.c.l.b16 %v2747
    %v3267 = vunpack.c.l.b16 %v2748
    %v3268 = vunpack.c.l.b16 %v2749
    %v3269 = vunpack.c.l.b16 %v2750
    %v3270 = vunpack.c.l.b16 %v2751
    %v3271 = vunpack.c.l.b16 %v2752
    %v3272 = vunpack.c.l.b16 %v2753
    %v3273 = vunpack.c.l.b16 %v2754
    %v3274 = vunpack.c.l.b16 %v2755
    %v3275 = vunpack.c.l.b16 %v2756
    %v3276 = vunpack.c.l.b16 %v2757
    %v3277 = vunpack.c.l.b16 %v2758
    %v3278 = vunpack.c.l.b16 %v2759
    %v3279 = vunpack.c.l.b16 %v2760
    %v3280 = vunpack.c.l.b16 %v2761
    %v3281 = vunpack.c.l.b16 %v2762
    %v3282 = vunpack.c.l.b16 %v2763
    %v3283 = vunpack.c.l.b16 %v2764
    %v3284 = vunpack.c.l.b16 %v2765
    %v3285 = vunpack.c.l.b16 %v2766
    %v3286 = vunpack.c.l.b16 %v2767
    %v3287 = vunpack.c.l.b16 %v2768
    %v3288 = vunpack.c.l.b16 %v2769
    %v3289 = vunpack.c.l.b16 %v2770
    %v3290 = vunpack.c.l.b16 %v2771
    %v3291 = vunpack.c.l.b16 %v2772
    %v3292 = vunpack.c.l.b16 %v2773
    %v3293 = vunpack.c.l.b16 %v2774
    %v3294 = vunpack.c.l.b16 %v2775
    %v3295 = vunpack.c.l.b16 %v2776
    %v3296 = vunpack.c.l.b16 %v2777
    %v3297 = vunpack.c.l.b16 %v2778
    %v3298 = vunpack.c.l.b16 %v2779
    %v3299 = vunpack.c.l.b16 %v2780
    %v3300 = vunpack.c.l.b16 %v2781
    %v3301 = vunpack.c.l.b16 %v2782
    %v3302 = vunpack.c.l.b16 %v2783
    %v3303 = vunpack.c.l.b16 %v2784
    %v3304 = vunpack.c.l.b16 %v2785
    %v3305 = vunpack.c.l.b16 %v2786
    %v3306 = vunpack.c.l.b16 %v2787
    %v3307 = vunpack.c.l.b16 %v2788
    %v3308 = vunpack.c.l.b16 %v2789
    %v3309 = vunpack.c.l.b16 %v2790
    %v3310 = vunpack.c.l.b16 %v2791
    %v3311 = vunpack.c.l.b16 %v2792
    %v3312 = vunpack.c.l.b16 %v2793
    %v3313 = vunpack.c.l.b16 %v2794
    %v3314 = vunpack.c.l.b16 %v2795
    %v3315 = vunpack.c.l.b16 %v2796
    %v3316 = vpack.c.b16 %v3061, %v3060
    %v3317 = vpack.c.b16 %v3063, %v3062
    %v3318 = vpack.c.b16 %v3065, %v3064
    %v3319 = vpack.c.b16 %v3067, %v3066
    %v3320 = vpack.c.b16 %v3069, %v3068
    %v3321 = vpack.c.b16 %v3071, %v3070
    %v3322 = vpack.c.b16 %v3073, %v3072
    %v3323 = vpack.c.b16 %v3075, %v3074
    %v3324 = vpack.c.b16 %v3077, %v3076
    %v3325 = vpack.c.b16 %v3079, %v3078
    %v3326 = vpack.c.b16 %v3081, %v3080
    %v3327 = vpack.c.b16 %v3083, %v3082
    %v3328 = vpack.c.b16 %v3085, %v3084
    %v3329 = vpack.c.b16 %v3087, %v3086
    %v3330 = vpack.c.b16 %v3089, %v3088
    %v3331 = vpack.c.b16 %v3091, %v3090
    %v3332 = vpack.c.b16 %v3093, %v3092
    %v3333 = vpack.c.b16 %v3095, %v3094
    %v3334 = vpack.c.b16 %v3097, %v3096
    %v3335 = vpack.c.b16 %v3099, %v3098
    %v3336 = vpack.c.b16 %v3101, %v3100
    %v3337 = vpack.c.b16 %v3103, %v3102
    %v3338 = vpack.c.b16 %v3105, %v3104
    %v3339 = vpack.c.b16 %v3107, %v3106
    %v3340 = vpack.c.b16 %v3109, %v3108
    %v3341 = vpack.c.b16 %v3111, %v3110
    %v3342 = vpack.c.b16 %v3113, %v3112
    %v3343 = vpack.c.b16 %v3115, %v3114
    %v3344 = vpack.c.b16 %v3117, %v3116
    %v3345 = vpack.c.b16 %v3119, %v3118
    %v3346 = vpack.c.b16 %v3121, %v3120
    %v3347 = vpack.c.b16 %v3123, %v3122
    %v3348 = vpack.c.b16 %v3125, %v3124
    %v3349 = vpack.c.b16 %v3127, %v3126
    %v3350 = vpack.c.b16 %v3129, %v3128
    %v3351 = vpack.c.b16 %v3131, %v3130
    %v3352 = vpack.c.b16 %v3133, %v3132
    %v3353 = vpack.c.b16 %v3135, %v3134
    %v3354 = vpack.c.b16 %v3137, %v3136
    %v3355 = vpack.c.b16 %v3139, %v3138
    %v3356 = vpack.c.b16 %v3141, %v3140
    %v3357 = vpack.c.b16 %v3143, %v3142
    %v3358 = vpack.c.b16 %v3145, %v3144
    %v3359 = vpack.c.b16 %v3147, %v3146
    %v3360 = vpack.c.b16 %v3149, %v3148
    %v3361 = vpack.c.b16 %v3151, %v3150
    %v3362 = vpack.c.b16 %v3153, %v3152
    %v3363 = vpack.c.b16 %v3155, %v3154
    %v3364 = vpack.c.b16 %v3157, %v3156
    %v3365 = vpack.c.b16 %v3159, %v3158
    %v3366 = vpack.c.b16 %v3161, %v3160
    %v3367 = vpack.c.b16 %v3163, %v3162
    %v3368 = vpack.c.b16 %v3165, %v3164
    %v3369 = vpack.c.b16 %v3167, %v3166
    %v3370 = vpack.c.b16 %v3169, %v3168
    %v3371 = vpack.c.b16 %v3171, %v3170
    %v3372 = vpack.c.b16 %v3173, %v3172
    %v3373 = vpack.c.b16 %v3175, %v3174
    %v3374 = vpack.c.b16 %v3177, %v3176
    %v3375 = vpack.c.b16 %v3179, %v3178
    %v3376 = vpack.c.b16 %v3181, %v3180
    %v3377 = vpack.c.b16 %v3183, %v3182
    %v3378 = vpack.c.b16 %v3185, %v3184
    %v3379 = vpack.c.b16 %v3187, %v3186
    %v3380 = vpack.c.b16 %v3189, %v3188
    %v3381 = vpack.c.b16 %v3191, %v3190
    %v3382 = vpack.c.b16 %v3193, %v3192
    %v3383 = vpack.c.b16 %v3195, %v3194
    %v3384 = vpack.c.b16 %v3197, %v3196
    %v3385 = vpack.c.b16 %v3199, %v3198
    %v3386 = vpack.c.b16 %v3201, %v3200
    %v3387 = vpack.c.b16 %v3203, %v3202
    %v3388 = vpack.c.b16 %v3205, %v3204
    %v3389 = vpack.c.b16 %v3207, %v3206
    %v3390 = vpack.c.b16 %v3209, %v3208
    %v3391 = vpack.c.b16 %v3211, %v3210
    %v3392 = vpack.c.b16 %v3213, %v3212
    %v3393 = vpack.c.b16 %v3215, %v3214
    %v3394 = vpack.c.b16 %v3217, %v3216
    %v3395 = vpack.c.b16 %v3219, %v3218
    %v3396 = vpack.c.b16 %v3221, %v3220
    %v3397 = vpack.c.b16 %v3223, %v3222
    %v3398 = vpack.c.b16 %v3225, %v3224
    %v3399 = vpack.c.b16 %v3227, %v3226
    %v3400 = vpack.c.b16 %v3229, %v3228
    %v3401 = vpack.c.b16 %v3231, %v3230
    %v3402 = vpack.c.b16 %v3233, %v3232
    %v3403 = vpack.c.b16 %v3235, %v3234
    %v3404 = vpack.c.b16 %v3237, %v3236
    %v3405 = vpack.c.b16 %v3239, %v3238
    %v3406 = vpack.c.b16 %v3241, %v3240
    %v3407 = vpack.c.b16 %v3243, %v3242
    %v3408 = vpack.c.b16 %v3245, %v3244
    %v3409 = vpack.c.b16 %v3247, %v3246
    %v3410 = vpack.c.b16 %v3249, %v3248
    %v3411 = vpack.c.b16 %v3251, %v3250
    %v3412 = vpack.c.b16 %v3253, %v3252
    %v3413 = vpack.c.b16 %v3255, %v3254
    %v3414 = vpack.c.b16 %v3257, %v3256
    %v3415 = vpack.c.b16 %v3259, %v3258
    %v3416 = vpack.c.b16 %v3261, %v3260
    %v3417 = vpack.c.b16 %v3263, %v3262
    %v3418 = vpack.c.b16 %v3265, %v3264
    %v3419 = vpack.c.b16 %v3267, %v3266
    %v3420 = vpack.c.b16 %v3269, %v3268
    %v3421 = vpack.c.b16 %v3271, %v3270
    %v3422 = vpack.c.b16 %v3273, %v3272
    %v3423 = vpack.c.b16 %v3275, %v3274
    %v3424 = vpack.c.b16 %v3277, %v3276
    %v3425 = vpack.c.b16 %v3279, %v3278
    %v3426 = vpack.c.b16 %v3281, %v3280
    %v3427 = vpack.c.b16 %v3283, %v3282
    %v3428 = vpack.c.b16 %v3285, %v3284
    %v3429 = vpack.c.b16 %v3287, %v3286
    %v3430 = vpack.c.b16 %v3289, %v3288
    %v3431 = vpack.c.b16 %v3291, %v3290
    %v3432 = vpack.c.b16 %v3293, %v3292
    %v3433 = vpack.c.b16 %v3295, %v3294
    %v3434 = vpack.c.b16 %v3297, %v3296
    %v3435 = vpack.c.b16 %v3299, %v3298
    %v3436 = vpack.c.b16 %v3301, %v3300
    %v3437 = vpack.c.b16 %v3303, %v3302
    %v3438 = vpack.c.b16 %v3305, %v3304
    %v3439 = vpack.c.b16 %v3307, %v3306
    %v3440 = vpack.c.b16 %v3309, %v3308
    %v3441 = vpack.c.b16 %v3311, %v3310
    %v3442 = vpack.c.b16 %v3313, %v3312
    %v3443 = vpack.c.b16 %v3315, %v3314
    %3572 = vmatprep.subr.bf16.mxu0 0
    %3573 = vmatpush1.bf16.msra.mxu0 %v3316
    %3574 = vmatprep.subr.bf16.mxu0 0
    %3575 = vmatpush1.bf16.msra.mxu0 %v3317
    %3576 = vmatprep.subr.bf16.mxu0 0
    %3577 = vmatpush1.bf16.msra.mxu0 %v3318
    %3578 = vmatprep.subr.bf16.mxu0 0
    %3579 = vmatpush1.bf16.msra.mxu0 %v3319
    %3580 = vmatprep.subr.bf16.mxu0 0
    %3581 = vmatpush1.bf16.msra.mxu0 %v3320
    %3582 = vmatprep.subr.bf16.mxu0 0
    %3583 = vmatpush1.bf16.msra.mxu0 %v3321
    %3584 = vmatprep.subr.bf16.mxu0 0
    %3585 = vmatpush1.bf16.msra.mxu0 %v3322
    %3586 = vmatprep.subr.bf16.mxu0 0
    %3587 = vmatpush1.bf16.msra.mxu0 %v3323
    %3588 = vmatprep.subr.bf16.mxu0 0
    %3589 = vmatpush1.bf16.msra.mxu0 %v3324
    %3590 = vmatprep.subr.bf16.mxu0 0
    %3591 = vmatpush1.bf16.msra.mxu0 %v3325
    %3592 = vmatprep.subr.bf16.mxu0 0
    %3593 = vmatpush1.bf16.msra.mxu0 %v3326
    %3594 = vmatprep.subr.bf16.mxu0 0
    %3595 = vmatpush1.bf16.msra.mxu0 %v3327
    %3596 = vmatprep.subr.bf16.mxu0 0
    %3597 = vmatpush1.bf16.msra.mxu0 %v3328
    %3598 = vmatprep.subr.bf16.mxu0 0
    %3599 = vmatpush1.bf16.msra.mxu0 %v3329
    %3600 = vmatprep.subr.bf16.mxu0 0
    %3601 = vmatpush1.bf16.msra.mxu0 %v3330
    %3602 = vmatprep.subr.bf16.mxu0 0
    %3603 = vmatpush1.bf16.msra.mxu0 %v3331
    %3604 = vmatprep.mubr.bf16.mxu0 %v2526
    %3605 = vmatmul.mubr.bf16.gmra.mrb[0].mxu0 %v2525
    %v3606 = vpop.f32.mrb[0].mxu0
    %v3607 = vadd.f32 %v2802, %v3606
    %v3608 = vpop.f32.mrb[0].mxu0
    %v3609 = vpop.f32.mrb[0].mxu0
    %v3610 = vadd.f32 %v2802, %v3609
    %v3611 = vpop.f32.mrb[0].mxu0
    %3612 = vdwg.mxu0
    %3613 = vmatprep.subr.bf16.mxu0 0
    %3614 = vmatpush1.bf16.msra.mxu0 %v3332
    %3615 = vmatprep.subr.bf16.mxu0 0
    %3616 = vmatpush1.bf16.msra.mxu0 %v3333
    %3617 = vmatprep.subr.bf16.mxu0 0
    %3618 = vmatpush1.bf16.msra.mxu0 %v3334
    %3619 = vmatprep.subr.bf16.mxu0 0
    %3620 = vmatpush1.bf16.msra.mxu0 %v3335
    %3621 = vmatprep.subr.bf16.mxu0 0
    %3622 = vmatpush1.bf16.msra.mxu0 %v3336
    %3623 = vmatprep.subr.bf16.mxu0 0
    %3624 = vmatpush1.bf16.msra.mxu0 %v3337
    %3625 = vmatprep.subr.bf16.mxu0 0
    %3626 = vmatpush1.bf16.msra.mxu0 %v3338
    %3627 = vmatprep.subr.bf16.mxu0 0
    %3628 = vmatpush1.bf16.msra.mxu0 %v3339
    %3629 = vmatprep.subr.bf16.mxu0 0
    %3630 = vmatpush1.bf16.msra.mxu0 %v3340
    %3631 = vmatprep.subr.bf16.mxu0 0
    %3632 = vmatpush1.bf16.msra.mxu0 %v3341
    %3633 = vmatprep.subr.bf16.mxu0 0
    %3634 = vmatpush1.bf16.msra.mxu0 %v3342
    %3635 = vmatprep.subr.bf16.mxu0 0
    %3636 = vmatpush1.bf16.msra.mxu0 %v3343
    %3637 = vmatprep.subr.bf16.mxu0 0
    %3638 = vmatpush1.bf16.msra.mxu0 %v3344
    %3639 = vmatprep.subr.bf16.mxu0 0
    %3640 = vmatpush1.bf16.msra.mxu0 %v3345
    %3641 = vmatprep.subr.bf16.mxu0 0
    %3642 = vmatpush1.bf16.msra.mxu0 %v3346
    %3643 = vmatprep.subr.bf16.mxu0 0
    %3644 = vmatpush1.bf16.msra.mxu0 %v3347
    %3645 = vmatprep.mubr.bf16.mxu0 %v2528
    %3646 = vmatmul.mubr.bf16.gmra.mrb[0].mxu0 %v2527
    %v3647 = vpop.f32.mrb[0].mxu0
    %v3648 = vadd.f32 %v3607, %v3647
    %v3649 = vpop.f32.mrb[0].mxu0
    %v3650 = vpop.f32.mrb[0].mxu0
    %v3651 = vadd.f32 %v3610, %v3650
    %v3652 = vpop.f32.mrb[0].mxu0
    %3653 = vdwg.mxu0
    %3654 = vmatprep.subr.bf16.mxu0 0
    %3655 = vmatpush1.bf16.msra.mxu0 %v3348
    %3656 = vmatprep.subr.bf16.mxu0 0
    %3657 = vmatpush1.bf16.msra.mxu0 %v3349
    %3658 = vmatprep.subr.bf16.mxu0 0
    %3659 = vmatpush1.bf16.msra.mxu0 %v3350
    %3660 = vmatprep.subr.bf16.mxu0 0
    %3661 = vmatpush1.bf16.msra.mxu0 %v3351
    %3662 = vmatprep.subr.bf16.mxu0 0
    %3663 = vmatpush1.bf16.msra.mxu0 %v3352
    %3664 = vmatprep.subr.bf16.mxu0 0
    %3665 = vmatpush1.bf16.msra.mxu0 %v3353
    %3666 = vmatprep.subr.bf16.mxu0 0
    %3667 = vmatpush1.bf16.msra.mxu0 %v3354
    %3668 = vmatprep.subr.bf16.mxu0 0
    %3669 = vmatpush1.bf16.msra.mxu0 %v3355
    %3670 = vmatprep.subr.bf16.mxu0 0
    %3671 = vmatpush1.bf16.msra.mxu0 %v3356
    %3672 = vmatprep.subr.bf16.mxu0 0
    %3673 = vmatpush1.bf16.msra.mxu0 %v3357
    %3674 = vmatprep.subr.bf16.mxu0 0
    %3675 = vmatpush1.bf16.msra.mxu0 %v3358
    %3676 = vmatprep.subr.bf16.mxu0 0
    %3677 = vmatpush1.bf16.msra.mxu0 %v3359
    %3678 = vmatprep.subr.bf16.mxu0 0
    %3679 = vmatpush1.bf16.msra.mxu0 %v3360
    %3680 = vmatprep.subr.bf16.mxu0 0
    %3681 = vmatpush1.bf16.msra.mxu0 %v3361
    %3682 = vmatprep.subr.bf16.mxu0 0
    %3683 = vmatpush1.bf16.msra.mxu0 %v3362
    %3684 = vmatprep.subr.bf16.mxu0 0
    %3685 = vmatpush1.bf16.msra.mxu0 %v3363
    %3686 = vmatprep.mubr.bf16.mxu0 %v2530
    %3687 = vmatmul.mubr.bf16.gmra.mrb[0].mxu0 %v2529
    %v3688 = vpop.f32.mrb[0].mxu0
    %v3689 = vadd.f32 %v3648, %v3688
    %v3690 = vpop.f32.mrb[0].mxu0
    %v3691 = vpop.f32.mrb[0].mxu0
    %v3692 = vadd.f32 %v3651, %v3691
    %v3693 = vpop.f32.mrb[0].mxu0
    %3694 = vdwg.mxu0
    %3695 = vmatprep.subr.bf16.mxu0 0
    %3696 = vmatpush1.bf16.msra.mxu0 %v3364
    %3697 = vmatprep.subr.bf16.mxu0 0
    %3698 = vmatpush1.bf16.msra.mxu0 %v3365
    %3699 = vmatprep.subr.bf16.mxu0 0
    %3700 = vmatpush1.bf16.msra.mxu0 %v3366
    %3701 = vmatprep.subr.bf16.mxu0 0
    %3702 = vmatpush1.bf16.msra.mxu0 %v3367
    %3703 = vmatprep.subr.bf16.mxu0 0
    %3704 = vmatpush1.bf16.msra.mxu0 %v3368
    %3705 = vmatprep.subr.bf16.mxu0 0
    %3706 = vmatpush1.bf16.msra.mxu0 %v3369
    %3707 = vmatprep.subr.bf16.mxu0 0
    %3708 = vmatpush1.bf16.msra.mxu0 %v3370
    %3709 = vmatprep.subr.bf16.mxu0 0
    %3710 = vmatpush1.bf16.msra.mxu0 %v3371
    %3711 = vmatprep.subr.bf16.mxu0 0
    %3712 = vmatpush1.bf16.msra.mxu0 %v3372
    %3713 = vmatprep.subr.bf16.mxu0 0
    %3714 = vmatpush1.bf16.msra.mxu0 %v3373
    %3715 = vmatprep.subr.bf16.mxu0 0
    %3716 = vmatpush1.bf16.msra.mxu0 %v3374
    %3717 = vmatprep.subr.bf16.mxu0 0
    %3718 = vmatpush1.bf16.msra.mxu0 %v3375
    %3719 = vmatprep.subr.bf16.mxu0 0
    %3720 = vmatpush1.bf16.msra.mxu0 %v3376
    %3721 = vmatprep.subr.bf16.mxu0 0
    %3722 = vmatpush1.bf16.msra.mxu0 %v3377
    %3723 = vmatprep.subr.bf16.mxu0 0
    %3724 = vmatpush1.bf16.msra.mxu0 %v3378
    %3725 = vmatprep.subr.bf16.mxu0 0
    %3726 = vmatpush1.bf16.msra.mxu0 %v3379
    %3727 = vmatprep.mubr.bf16.mxu0 %v2532
    %3728 = vmatmul.mubr.bf16.gmra.mrb[0].mxu0 %v2531
    %v3729 = vpop.f32.mrb[0].mxu0
    %v3730 = vadd.f32 %v3689, %v3729
    %v3731 = vpop.f32.mrb[0].mxu0
    %v3732 = vpop.f32.mrb[0].mxu0
    %v3733 = vadd.f32 %v3692, %v3732
    %v3734 = vpop.f32.mrb[0].mxu0
    %3735 = vdwg.mxu0
    %3736 = vmatprep.subr.bf16.mxu0 0
    %3737 = vmatpush1.bf16.msra.mxu0 %v3380
    %3738 = vmatprep.subr.bf16.mxu0 0
    %3739 = vmatpush1.bf16.msra.mxu0 %v3381
    %3740 = vmatprep.subr.bf16.mxu0 0
    %3741 = vmatpush1.bf16.msra.mxu0 %v3382
    %3742 = vmatprep.subr.bf16.mxu0 0
    %3743 = vmatpush1.bf16.msra.mxu0 %v3383
    %3744 = vmatprep.subr.bf16.mxu0 0
    %3745 = vmatpush1.bf16.msra.mxu0 %v3384
    %3746 = vmatprep.subr.bf16.mxu0 0
    %3747 = vmatpush1.bf16.msra.mxu0 %v3385
    %3748 = vmatprep.subr.bf16.mxu0 0
    %3749 = vmatpush1.bf16.msra.mxu0 %v3386
    %3750 = vmatprep.subr.bf16.mxu0 0
    %3751 = vmatpush1.bf16.msra.mxu0 %v3387
    %3752 = vmatprep.subr.bf16.mxu0 0
    %3753 = vmatpush1.bf16.msra.mxu0 %v3388
    %3754 = vmatprep.subr.bf16.mxu0 0
    %3755 = vmatpush1.bf16.msra.mxu0 %v3389
    %3756 = vmatprep.subr.bf16.mxu0 0
    %3757 = vmatpush1.bf16.msra.mxu0 %v3390
    %3758 = vmatprep.subr.bf16.mxu0 0
    %3759 = vmatpush1.bf16.msra.mxu0 %v3391
    %3760 = vmatprep.subr.bf16.mxu0 0
    %3761 = vmatpush1.bf16.msra.mxu0 %v3392
    %3762 = vmatprep.subr.bf16.mxu0 0
    %3763 = vmatpush1.bf16.msra.mxu0 %v3393
    %3764 = vmatprep.subr.bf16.mxu0 0
    %3765 = vmatpush1.bf16.msra.mxu0 %v3394
    %3766 = vmatprep.subr.bf16.mxu0 0
    %3767 = vmatpush1.bf16.msra.mxu0 %v3395
    %3768 = vmatprep.mubr.bf16.mxu0 %v2534
    %3769 = vmatmul.mubr.bf16.gmra.mrb[0].mxu0 %v2533
    %v3770 = vpop.f32.mrb[0].mxu0
    %v3771 = vadd.f32 %v3730, %v3770
    %v3772 = vpop.f32.mrb[0].mxu0
    %v3773 = vpop.f32.mrb[0].mxu0
    %v3774 = vadd.f32 %v3733, %v3773
    %v3775 = vpop.f32.mrb[0].mxu0
    %3776 = vdwg.mxu0
    %3777 = vmatprep.subr.bf16.mxu0 0
    %3778 = vmatpush1.bf16.msra.mxu0 %v3396
    %3779 = vmatprep.subr.bf16.mxu0 0
    %3780 = vmatpush1.bf16.msra.mxu0 %v3397
    %3781 = vmatprep.subr.bf16.mxu0 0
    %3782 = vmatpush1.bf16.msra.mxu0 %v3398
    %3783 = vmatprep.subr.bf16.mxu0 0
    %3784 = vmatpush1.bf16.msra.mxu0 %v3399
    %3785 = vmatprep.subr.bf16.mxu0 0
    %3786 = vmatpush1.bf16.msra.mxu0 %v3400
    %3787 = vmatprep.subr.bf16.mxu0 0
    %3788 = vmatpush1.bf16.msra.mxu0 %v3401
    %3789 = vmatprep.subr.bf16.mxu0 0
    %3790 = vmatpush1.bf16.msra.mxu0 %v3402
    %3791 = vmatprep.subr.bf16.mxu0 0
    %3792 = vmatpush1.bf16.msra.mxu0 %v3403
    %3793 = vmatprep.subr.bf16.mxu0 0
    %3794 = vmatpush1.bf16.msra.mxu0 %v3404
    %3795 = vmatprep.subr.bf16.mxu0 0
    %3796 = vmatpush1.bf16.msra.mxu0 %v3405
    %3797 = vmatprep.subr.bf16.mxu0 0
    %3798 = vmatpush1.bf16.msra.mxu0 %v3406
    %3799 = vmatprep.subr.bf16.mxu0 0
    %3800 = vmatpush1.bf16.msra.mxu0 %v3407
    %3801 = vmatprep.subr.bf16.mxu0 0
    %3802 = vmatpush1.bf16.msra.mxu0 %v3408
    %3803 = vmatprep.subr.bf16.mxu0 0
    %3804 = vmatpush1.bf16.msra.mxu0 %v3409
    %3805 = vmatprep.subr.bf16.mxu0 0
    %3806 = vmatpush1.bf16.msra.mxu0 %v3410
    %3807 = vmatprep.subr.bf16.mxu0 0
    %3808 = vmatpush1.bf16.msra.mxu0 %v3411
    %3809 = vmatprep.mubr.bf16.mxu0 %v2536
    %3810 = vmatmul.mubr.bf16.gmra.mrb[0].mxu0 %v2535
    %v3811 = vpop.f32.mrb[0].mxu0
    %v3812 = vadd.f32 %v3771, %v3811
    %v3813 = vpop.f32.mrb[0].mxu0
    %v3814 = vpop.f32.mrb[0].mxu0
    %v3815 = vadd.f32 %v3774, %v3814
    %v3816 = vpop.f32.mrb[0].mxu0
    %3817 = vdwg.mxu0
    %3818 = vmatprep.subr.bf16.mxu0 0
    %3819 = vmatpush1.bf16.msra.mxu0 %v3412
    %3820 = vmatprep.subr.bf16.mxu0 0
    %3821 = vmatpush1.bf16.msra.mxu0 %v3413
    %3822 = vmatprep.subr.bf16.mxu0 0
    %3823 = vmatpush1.bf16.msra.mxu0 %v3414
    %3824 = vmatprep.subr.bf16.mxu0 0
    %3825 = vmatpush1.bf16.msra.mxu0 %v3415
    %3826 = vmatprep.subr.bf16.mxu0 0
    %3827 = vmatpush1.bf16.msra.mxu0 %v3416
    %3828 = vmatprep.subr.bf16.mxu0 0
    %3829 = vmatpush1.bf16.msra.mxu0 %v3417
    %3830 = vmatprep.subr.bf16.mxu0 0
    %3831 = vmatpush1.bf16.msra.mxu0 %v3418
    %3832 = vmatprep.subr.bf16.mxu0 0
    %3833 = vmatpush1.bf16.msra.mxu0 %v3419
    %3834 = vmatprep.subr.bf16.mxu0 0
    %3835 = vmatpush1.bf16.msra.mxu0 %v3420
    %3836 = vmatprep.subr.bf16.mxu0 0
    %3837 = vmatpush1.bf16.msra.mxu0 %v3421
    %3838 = vmatprep.subr.bf16.mxu0 0
    %3839 = vmatpush1.bf16.msra.mxu0 %v3422
    %3840 = vmatprep.subr.bf16.mxu0 0
    %3841 = vmatpush1.bf16.msra.mxu0 %v3423
    %3842 = vmatprep.subr.bf16.mxu0 0
    %3843 = vmatpush1.bf16.msra.mxu0 %v3424
    %3844 = vmatprep.subr.bf16.mxu0 0
    %3845 = vmatpush1.bf16.msra.mxu0 %v3425
    %3846 = vmatprep.subr.bf16.mxu0 0
    %3847 = vmatpush1.bf16.msra.mxu0 %v3426
    %3848 = vmatprep.subr.bf16.mxu0 0
    %3849 = vmatpush1.bf16.msra.mxu0 %v3427
    %3850 = vmatprep.mubr.bf16.mxu0 %v2538
    %3851 = vmatmul.mubr.bf16.gmra.mrb[0].mxu0 %v2537
    %v3852 = vpop.f32.mrb[0].mxu0
    %v3853 = vadd.f32 %v3812, %v3852
    %v3854 = vpop.f32.mrb[0].mxu0
    %v3855 = vpop.f32.mrb[0].mxu0
    %v3856 = vadd.f32 %v3815, %v3855
    %v3857 = vpop.f32.mrb[0].mxu0
    %3858 = vdwg.mxu0
    %3859 = vmatprep.subr.bf16.mxu0 0
    %3860 = vmatpush1.bf16.msra.mxu0 %v3428
    %3861 = vmatprep.subr.bf16.mxu0 0
    %3862 = vmatpush1.bf16.msra.mxu0 %v3429
    %3863 = vmatprep.subr.bf16.mxu0 0
    %3864 = vmatpush1.bf16.msra.mxu0 %v3430
    %3865 = vmatprep.subr.bf16.mxu0 0
    %3866 = vmatpush1.bf16.msra.mxu0 %v3431
    %3867 = vmatprep.subr.bf16.mxu0 0
    %3868 = vmatpush1.bf16.msra.mxu0 %v3432
    %3869 = vmatprep.subr.bf16.mxu0 0
    %3870 = vmatpush1.bf16.msra.mxu0 %v3433
    %3871 = vmatprep.subr.bf16.mxu0 0
    %3872 = vmatpush1.bf16.msra.mxu0 %v3434
    %3873 = vmatprep.subr.bf16.mxu0 0
    %3874 = vmatpush1.bf16.msra.mxu0 %v3435
    %3875 = vmatprep.subr.bf16.mxu0 0
    %3876 = vmatpush1.bf16.msra.mxu0 %v3436
    %3877 = vmatprep.subr.bf16.mxu0 0
    %3878 = vmatpush1.bf16.msra.mxu0 %v3437
    %3879 = vmatprep.subr.bf16.mxu0 0
    %3880 = vmatpush1.bf16.msra.mxu0 %v3438
    %3881 = vmatprep.subr.bf16.mxu0 0
    %3882 = vmatpush1.bf16.msra.mxu0 %v3439
    %3883 = vmatprep.subr.bf16.mxu0 0
    %3884 = vmatpush1.bf16.msra.mxu0 %v3440
    %3885 = vmatprep.subr.bf16.mxu0 0
    %3886 = vmatpush1.bf16.msra.mxu0 %v3441
    %3887 = vmatprep.subr.bf16.mxu0 0
    %3888 = vmatpush1.bf16.msra.mxu0 %v3442
    %3889 = vmatprep.subr.bf16.mxu0 0
    %3890 = vmatpush1.bf16.msra.mxu0 %v3443
    %3891 = vmatprep.mubr.bf16.mxu0 %v2540
    %3892 = vmatmul.mubr.bf16.gmra.mrb[0].mxu0 %v2539
    %v3893 = vpop.f32.mrb[0].mxu0
    %v3894 = vadd.f32 %v3853, %v3893
    %v3895 = vpop.f32.mrb[0].mxu0
    %v3896 = vpop.f32.mrb[0].mxu0
    %v3897 = vadd.f32 %v3856, %v3896
    %v3898 = vpop.f32.mrb[0].mxu0
    %3899 = vdwg.mxu0
    %v3900 = vadd.f32 %v1867, %v3894
    %v3901 = vadd.f32 %v1868, %v3897
    %v3902 = vld [vmem:[%s7] sm:$0x1]
    %v3903 = vld [vmem:[%s8] sm:$0x1]
    %v3904 = vsel %vm65, %v3900, 0.0
    %3905 = vadd.xlane.f32.xlu0 %v3904
    %v3906 = vpop.xlane.xlu0 %3905
    %v3907 = vsel %vm65, %v3901, 0.0
    %3908 = vadd.xlane.f32.xlu0 %v3907
    %v3909 = vpop.xlane.xlu0 %3908
    %v3910 = vmul.f32 %v3906, %v1828
    %v3911 = vmul.f32 %v3909, %v1828
    %v3912 = vmul.f32 %v3900, %v3900
    %v3913 = vmul.f32 %v3901, %v3901
    %v3914 = vsel %vm65, %v3912, 0.0
    %3915 = vadd.xlane.f32.xlu0 %v3914
    %v3916 = vpop.xlane.xlu0 %3915
    %v3917 = vsel %vm65, %v3913, 0.0
    %3918 = vadd.xlane.f32.xlu0 %v3917
    %v3919 = vpop.xlane.xlu0 %3918
    %v3920 = vmul.f32 %v3916, %v1828
    %v3921 = vmul.f32 %v3919, %v1828
    %v3922 = vmul.f32 %v3910, %v3910
    %v3923 = vmul.f32 %v3911, %v3911
    %v3924 = vsub.f32 %v3920, %v3922
    %v3925 = vsub.f32 %v3921, %v3923
    %v3926 = vsub.f32 %v3900, %v3910
    %v3927 = vsub.f32 %v3901, %v3911
    %v3928 = vadd.f32 %v3924, 1e-05
    %v3929 = vadd.f32 %v3925, 1e-05
    %v3930 = vrsqrt.pop %v3928
    %v3931 = vrsqrt.pop %v3929
    %v3932 = vmul.f32 %v3926, %v3930
    %v3933 = vmul.f32 %v3927, %v3931
    %v3935 = vlaneseq
    %v3936 = vshrl.u32 %v3935, 7
    %v3937 = vsub.s32 0, %v3936
    %v3938 = vrot.slane %v3902, %v3937
    %v3940 = vmul.f32 %v3932, %v3938
    %v3941 = vmul.f32 %v3933, %v3938
    %v3943 = vlaneseq
    %v3944 = vshrl.u32 %v3943, 7
    %v3945 = vsub.s32 0, %v3944
    %v3946 = vrot.slane %v3903, %v3945
    %v3948 = vadd.f32 %v3940, %v3946
    %v3949 = vadd.f32 %v3941, %v3946
    %s3950 = scalar_lea.vmem %s1, 32
    %v3951 = vld [vmem:[%s3950] sm:$0xff]
    %v3952 = vld [vmem:[%s3950 + $0x8] sm:$0xff]
    %v3953 = vld [vmem:[%s3950 + $0x10] sm:$0xff]
    %v3954 = vld [vmem:[%s3950 + $0x18] sm:$0xff]
    %s3955 = scalar_lea.vmem %s2, 1
    %v3956 = vld [vmem:[%s3955] sm:$0x1]
    %v3958 = vlaneseq
    %v3959 = vshrl.u32 %v3958, 7
    %v3960 = vsub.s32 0, %v3959
    %v3961 = vrot.slane %v3956, %v3960
    %v3964 = vsel %vm65, %v3948, 0
    %v3967 = vsel %vm65, %v3949, 0
    %3969 = vmatprep.subr.mxu0 0.0
    %3970 = vmatpush1.msra.mxu0 %v3951
    %3971 = vmatprep.subr.mxu0 0.0
    %3972 = vmatpush1.msra.mxu0 %v3952
    %3973 = vmatprep.subr.mxu0 0.0
    %3974 = vmatpush1.msra.mxu0 %v3953
    %3975 = vmatprep.subr.mxu0 0.0
    %3976 = vmatpush1.msra.mxu0 %v3954
    %3977 = vmatprep.subr.mxu0 0.0
    %3978 = vmatpush1.msra.mxu0 0.0
    %3979 = vmatprep.subr.mxu0 0.0
    %3980 = vmatpush1.msra.mxu0 0.0
    %3981 = vmatprep.subr.mxu0 0.0
    %3982 = vmatpush1.msra.mxu0 0.0
    %3983 = vmatprep.subr.mxu0 0.0
    %3984 = vmatpush1.msra.mxu0 0.0
    %3985 = vmatprep.subr.mxu0 0.0
    %3986 = vmatpush1.msra.mxu0 0.0
    %3987 = vmatprep.subr.mxu0 0.0
    %3988 = vmatpush1.msra.mxu0 0.0
    %3989 = vmatprep.subr.mxu0 0.0
    %3990 = vmatpush1.msra.mxu0 0.0
    %3991 = vmatprep.subr.mxu0 0.0
    %3992 = vmatpush1.msra.mxu0 0.0
    %3993 = vmatprep.subr.mxu0 0.0
    %3994 = vmatpush1.msra.mxu0 0.0
    %3995 = vmatprep.subr.mxu0 0.0
    %3996 = vmatpush1.msra.mxu0 0.0
    %3997 = vmatprep.subr.mxu0 0.0
    %3998 = vmatpush1.msra.mxu0 0.0
    %3999 = vmatprep.subr.mxu0 0.0
    %4000 = vmatpush1.msra.mxu0 0.0
    %4001 = vmatprep.subr.mxu0 0.0
    %4002 = vmatpush1.msra.mxu0 0.0
    %4003 = vmatprep.subr.mxu0 0.0
    %4004 = vmatpush1.msra.mxu0 0.0
    %4005 = vmatprep.subr.mxu0 0.0
    %4006 = vmatpush1.msra.mxu0 0.0
    %4007 = vmatprep.subr.mxu0 0.0
    %4008 = vmatpush1.msra.mxu0 0.0
    %4009 = vmatprep.subr.mxu0 0.0
    %4010 = vmatpush1.msra.mxu0 0.0
    %4011 = vmatprep.subr.mxu0 0.0
    %4012 = vmatpush1.msra.mxu0 0.0
    %4013 = vmatprep.subr.mxu0 0.0
    %4014 = vmatpush1.msra.mxu0 0.0
    %4015 = vmatprep.subr.mxu0 0.0
    %4016 = vmatpush1.msra.mxu0 0.0
    %4017 = vmatprep.subr.mxu0 0.0
    %4018 = vmatpush1.msra.mxu0 0.0
    %4019 = vmatprep.subr.mxu0 0.0
    %4020 = vmatpush1.msra.mxu0 0.0
    %4021 = vmatprep.subr.mxu0 0.0
    %4022 = vmatpush1.msra.mxu0 0.0
    %4023 = vmatprep.subr.mxu0 0.0
    %4024 = vmatpush1.msra.mxu0 0.0
    %4025 = vmatprep.subr.mxu0 0.0
    %4026 = vmatpush1.msra.mxu0 0.0
    %4027 = vmatprep.subr.mxu0 0.0
    %4028 = vmatpush1.msra.mxu0 0.0
    %4029 = vmatprep.subr.mxu0 0.0
    %4030 = vmatpush1.msra.mxu0 0.0
    %4031 = vmatprep.subr.mxu0 0.0
    %4032 = vmatpush1.msra.mxu0 0.0
    %4033 = vmatprep.mubr.f32.mxu0 0.0
    %4034 = vmatmul.mubr.f32.gmra.mrb[0].mxu0 %v3964
    %v4035 = vpop.f32.mrb[0].mxu0
    %v4036 = vadd.f32 %v3961, %v4035
    %v4037 = vpop.f32.mrb[0].mxu0
    %4038 = vmatprep.mubr.f32.mxu0 0.0
    %4039 = vmatmul.mubr.f32.gmra.mrb[0].mxu0 %v3967
    %v4040 = vpop.f32.mrb[0].mxu0
    %v4041 = vadd.f32 %v3961, %v4040
    %v4042 = vpop.f32.mrb[0].mxu0
    %4043 = vdwg.mxu0
    %4045 = vrot.lane.b32.xlu0 %v4036, 96
    %v4046 = vpop.permute.xlu0 %4045
    %v4047 = vsel %vm150, %v4036, 0
    %v4049 = vsel %vm150, %v4046, 0
    %4051 = vmatprep.subr.mxu0 0.0
    %4052 = vmatpush1.xpose.msra.mxu0 %v4049
    %4053 = vmatprep.subr.mxu0 0.0
    %4054 = vmatpush1.xpose.msra.mxu0 0.0
    %4055 = vmatprep.subr.mxu0 0.0
    %4056 = vmatpush1.xpose.msra.mxu0 0.0
    %4057 = vmatprep.subr.mxu0 0.0
    %4058 = vmatpush1.xpose.msra.mxu0 0.0
    %4059 = vmatprep.subr.mxu0 0.0
    %4060 = vmatpush1.xpose.msra.mxu0 0.0
    %4061 = vmatprep.subr.mxu0 0.0
    %4062 = vmatpush1.xpose.msra.mxu0 0.0
    %4063 = vmatprep.subr.mxu0 0.0
    %4064 = vmatpush1.xpose.msra.mxu0 0.0
    %4065 = vmatprep.subr.mxu0 0.0
    %4066 = vmatpush1.xpose.msra.mxu0 0.0
    %4067 = vmatprep.subr.mxu0 0.0
    %4068 = vmatpush1.xpose.msra.mxu0 0.0
    %4069 = vmatprep.subr.mxu0 0.0
    %4070 = vmatpush1.xpose.msra.mxu0 0.0
    %4071 = vmatprep.subr.mxu0 0.0
    %4072 = vmatpush1.xpose.msra.mxu0 0.0
    %4073 = vmatprep.subr.mxu0 0.0
    %4074 = vmatpush1.xpose.msra.mxu0 0.0
    %4075 = vmatprep.subr.mxu0 0.0
    %4076 = vmatpush1.xpose.msra.mxu0 0.0
    %4077 = vmatprep.subr.mxu0 0.0
    %4078 = vmatpush1.xpose.msra.mxu0 0.0
    %4079 = vmatprep.subr.mxu0 0.0
    %4080 = vmatpush1.xpose.msra.mxu0 0.0
    %4081 = vmatprep.subr.mxu0 0.0
    %4082 = vmatpush1.xpose.msra.mxu0 0.0
    %4083 = vmatprep.subr.mxu0 0.0
    %4084 = vmatpush1.xpose.msra.mxu0 0.0
    %4085 = vmatprep.subr.mxu0 0.0
    %4086 = vmatpush1.xpose.msra.mxu0 0.0
    %4087 = vmatprep.subr.mxu0 0.0
    %4088 = vmatpush1.xpose.msra.mxu0 0.0
    %4089 = vmatprep.subr.mxu0 0.0
    %4090 = vmatpush1.xpose.msra.mxu0 0.0
    %4091 = vmatprep.subr.mxu0 0.0
    %4092 = vmatpush1.xpose.msra.mxu0 0.0
    %4093 = vmatprep.subr.mxu0 0.0
    %4094 = vmatpush1.xpose.msra.mxu0 0.0
    %4095 = vmatprep.subr.mxu0 0.0
    %4096 = vmatpush1.xpose.msra.mxu0 0.0
    %4097 = vmatprep.subr.mxu0 0.0
    %4098 = vmatpush1.xpose.msra.mxu0 0.0
    %4099 = vmatprep.subr.mxu0 0.0
    %4100 = vmatpush1.xpose.msra.mxu0 0.0
    %4101 = vmatprep.subr.mxu0 0.0
    %4102 = vmatpush1.xpose.msra.mxu0 0.0
    %4103 = vmatprep.subr.mxu0 0.0
    %4104 = vmatpush1.xpose.msra.mxu0 0.0
    %4105 = vmatprep.subr.mxu0 0.0
    %4106 = vmatpush1.xpose.msra.mxu0 0.0
    %4107 = vmatprep.subr.mxu0 0.0
    %4108 = vmatpush1.xpose.msra.mxu0 0.0
    %4109 = vmatprep.subr.mxu0 0.0
    %4110 = vmatpush1.xpose.msra.mxu0 0.0
    %4111 = vmatprep.subr.mxu0 0.0
    %4112 = vmatpush1.xpose.msra.mxu0 0.0
    %4113 = vmatprep.subr.mxu0 0.0
    %4114 = vmatpush1.xpose.msra.mxu0 0.0
    %4115 = vmatprep.mubr.f32.mxu0 0.0
    %4116 = vmatmul.mubr.f32.gmra.mrb[0].mxu0 %v4047
    %v4117 = vpop.f32.mrb[0].mxu0
    %v4118 = vadd.f32 0.0, %v4117
    %v4119 = vpop.f32.mrb[0].mxu0
    %4120 = vdwg.mxu0
    %4122 = vrot.lane.b32.xlu0 %v4041, 96
    %v4123 = vpop.permute.xlu0 %4122
    %v4124 = vsel %vm150, %v4041, 0
    %v4126 = vsel %vm150, %v4123, 0
    %4128 = vmatprep.subr.mxu0 0.0
    %4129 = vmatpush1.xpose.msra.mxu0 %v4126
    %4130 = vmatprep.subr.mxu0 0.0
    %4131 = vmatpush1.xpose.msra.mxu0 0.0
    %4132 = vmatprep.subr.mxu0 0.0
    %4133 = vmatpush1.xpose.msra.mxu0 0.0
    %4134 = vmatprep.subr.mxu0 0.0
    %4135 = vmatpush1.xpose.msra.mxu0 0.0
    %4136 = vmatprep.subr.mxu0 0.0
    %4137 = vmatpush1.xpose.msra.mxu0 0.0
    %4138 = vmatprep.subr.mxu0 0.0
    %4139 = vmatpush1.xpose.msra.mxu0 0.0
    %4140 = vmatprep.subr.mxu0 0.0
    %4141 = vmatpush1.xpose.msra.mxu0 0.0
    %4142 = vmatprep.subr.mxu0 0.0
    %4143 = vmatpush1.xpose.msra.mxu0 0.0
    %4144 = vmatprep.subr.mxu0 0.0
    %4145 = vmatpush1.xpose.msra.mxu0 0.0
    %4146 = vmatprep.subr.mxu0 0.0
    %4147 = vmatpush1.xpose.msra.mxu0 0.0
    %4148 = vmatprep.subr.mxu0 0.0
    %4149 = vmatpush1.xpose.msra.mxu0 0.0
    %4150 = vmatprep.subr.mxu0 0.0
    %4151 = vmatpush1.xpose.msra.mxu0 0.0
    %4152 = vmatprep.subr.mxu0 0.0
    %4153 = vmatpush1.xpose.msra.mxu0 0.0
    %4154 = vmatprep.subr.mxu0 0.0
    %4155 = vmatpush1.xpose.msra.mxu0 0.0
    %4156 = vmatprep.subr.mxu0 0.0
    %4157 = vmatpush1.xpose.msra.mxu0 0.0
    %4158 = vmatprep.subr.mxu0 0.0
    %4159 = vmatpush1.xpose.msra.mxu0 0.0
    %4160 = vmatprep.subr.mxu0 0.0
    %4161 = vmatpush1.xpose.msra.mxu0 0.0
    %4162 = vmatprep.subr.mxu0 0.0
    %4163 = vmatpush1.xpose.msra.mxu0 0.0
    %4164 = vmatprep.subr.mxu0 0.0
    %4165 = vmatpush1.xpose.msra.mxu0 0.0
    %4166 = vmatprep.subr.mxu0 0.0
    %4167 = vmatpush1.xpose.msra.mxu0 0.0
    %4168 = vmatprep.subr.mxu0 0.0
    %4169 = vmatpush1.xpose.msra.mxu0 0.0
    %4170 = vmatprep.subr.mxu0 0.0
    %4171 = vmatpush1.xpose.msra.mxu0 0.0
    %4172 = vmatprep.subr.mxu0 0.0
    %4173 = vmatpush1.xpose.msra.mxu0 0.0
    %4174 = vmatprep.subr.mxu0 0.0
    %4175 = vmatpush1.xpose.msra.mxu0 0.0
    %4176 = vmatprep.subr.mxu0 0.0
    %4177 = vmatpush1.xpose.msra.mxu0 0.0
    %4178 = vmatprep.subr.mxu0 0.0
    %4179 = vmatpush1.xpose.msra.mxu0 0.0
    %4180 = vmatprep.subr.mxu0 0.0
    %4181 = vmatpush1.xpose.msra.mxu0 0.0
    %4182 = vmatprep.subr.mxu0 0.0
    %4183 = vmatpush1.xpose.msra.mxu0 0.0
    %4184 = vmatprep.subr.mxu0 0.0
    %4185 = vmatpush1.xpose.msra.mxu0 0.0
    %4186 = vmatprep.subr.mxu0 0.0
    %4187 = vmatpush1.xpose.msra.mxu0 0.0
    %4188 = vmatprep.subr.mxu0 0.0
    %4189 = vmatpush1.xpose.msra.mxu0 0.0
    %4190 = vmatprep.subr.mxu0 0.0
    %4191 = vmatpush1.xpose.msra.mxu0 0.0
    %4192 = vmatprep.mubr.f32.mxu0 0.0
    %4193 = vmatmul.mubr.f32.gmra.mrb[0].mxu0 %v4124
    %v4194 = vpop.f32.mrb[0].mxu0
    %v4195 = vadd.f32 0.0, %v4194
    %v4196 = vpop.f32.mrb[0].mxu0
    %4197 = vdwg.mxu0
    %v4198 = vmul.f32 %v4118, 0.35355338
    %v4199 = vmul.f32 %v4195, 0.35355338
    %v4200 = vsel %vm150, %v4198, -inf
    %4201 = vmax.xlane.f32.xlu0 %v4200
    %v4202 = vpop.xlane.xlu0 %4201
    %v4203 = vsel %vm150, %v4199, -inf
    %4204 = vmax.xlane.f32.xlu0 %v4203
    %v4205 = vpop.xlane.xlu0 %4204
    %v4206 = vsub.f32 %v4198, %v4202
    %v4207 = vsub.f32 %v4199, %v4205
    %v4208 = vmul.f32 %v4206, 1.442695
    %v4209 = vpow.pop %v4208
    %v4210 = vmul.f32 %v4207, 1.442695
    %v4211 = vpow.pop %v4210
    %v4212 = vsel %vm150, %v4209, 0.0
    %4213 = vadd.xlane.f32.xlu0 %v4212
    %v4214 = vpop.xlane.xlu0 %4213
    %v4215 = vsel %vm150, %v4211, 0.0
    %4216 = vadd.xlane.f32.xlu0 %v4215
    %v4217 = vpop.xlane.xlu0 %4216
    %v4218 = vrcp.pop %v4214
    %v4219 = vrcp.pop %v4217
    %v4220 = vmul.f32 %v4209, %v4218
    %v4221 = vmul.f32 %v4211, %v4219
    %4222 = vrot.lane.b32.xlu0 %v4036, 64
    %v4223 = vpop.permute.xlu0 %4222
    %v4226 = vsel %vm150, %v4220, 0
    %4228 = vmatprep.subr.mxu0 0.0
    %4229 = vmatpush1.msra.mxu0 %v4223
    %4230 = vmatprep.subr.mxu0 0.0
    %4231 = vmatpush1.msra.mxu0 0.0
    %4232 = vmatprep.subr.mxu0 0.0
    %4233 = vmatpush1.msra.mxu0 0.0
    %4234 = vmatprep.subr.mxu0 0.0
    %4235 = vmatpush1.msra.mxu0 0.0
    %4236 = vmatprep.subr.mxu0 0.0
    %4237 = vmatpush1.msra.mxu0 0.0
    %4238 = vmatprep.subr.mxu0 0.0
    %4239 = vmatpush1.msra.mxu0 0.0
    %4240 = vmatprep.subr.mxu0 0.0
    %4241 = vmatpush1.msra.mxu0 0.0
    %4242 = vmatprep.subr.mxu0 0.0
    %4243 = vmatpush1.msra.mxu0 0.0
    %4244 = vmatprep.subr.mxu0 0.0
    %4245 = vmatpush1.msra.mxu0 0.0
    %4246 = vmatprep.subr.mxu0 0.0
    %4247 = vmatpush1.msra.mxu0 0.0
    %4248 = vmatprep.subr.mxu0 0.0
    %4249 = vmatpush1.msra.mxu0 0.0
    %4250 = vmatprep.subr.mxu0 0.0
    %4251 = vmatpush1.msra.mxu0 0.0
    %4252 = vmatprep.subr.mxu0 0.0
    %4253 = vmatpush1.msra.mxu0 0.0
    %4254 = vmatprep.subr.mxu0 0.0
    %4255 = vmatpush1.msra.mxu0 0.0
    %4256 = vmatprep.subr.mxu0 0.0
    %4257 = vmatpush1.msra.mxu0 0.0
    %4258 = vmatprep.subr.mxu0 0.0
    %4259 = vmatpush1.msra.mxu0 0.0
    %4260 = vmatprep.subr.mxu0 0.0
    %4261 = vmatpush1.msra.mxu0 0.0
    %4262 = vmatprep.subr.mxu0 0.0
    %4263 = vmatpush1.msra.mxu0 0.0
    %4264 = vmatprep.subr.mxu0 0.0
    %4265 = vmatpush1.msra.mxu0 0.0
    %4266 = vmatprep.subr.mxu0 0.0
    %4267 = vmatpush1.msra.mxu0 0.0
    %4268 = vmatprep.subr.mxu0 0.0
    %4269 = vmatpush1.msra.mxu0 0.0
    %4270 = vmatprep.subr.mxu0 0.0
    %4271 = vmatpush1.msra.mxu0 0.0
    %4272 = vmatprep.subr.mxu0 0.0
    %4273 = vmatpush1.msra.mxu0 0.0
    %4274 = vmatprep.subr.mxu0 0.0
    %4275 = vmatpush1.msra.mxu0 0.0
    %4276 = vmatprep.subr.mxu0 0.0
    %4277 = vmatpush1.msra.mxu0 0.0
    %4278 = vmatprep.subr.mxu0 0.0
    %4279 = vmatpush1.msra.mxu0 0.0
    %4280 = vmatprep.subr.mxu0 0.0
    %4281 = vmatpush1.msra.mxu0 0.0
    %4282 = vmatprep.subr.mxu0 0.0
    %4283 = vmatpush1.msra.mxu0 0.0
    %4284 = vmatprep.subr.mxu0 0.0
    %4285 = vmatpush1.msra.mxu0 0.0
    %4286 = vmatprep.subr.mxu0 0.0
    %4287 = vmatpush1.msra.mxu0 0.0
    %4288 = vmatprep.subr.mxu0 0.0
    %4289 = vmatpush1.msra.mxu0 0.0
    %4290 = vmatprep.subr.mxu0 0.0
    %4291 = vmatpush1.msra.mxu0 0.0
    %4292 = vmatprep.mubr.f32.mxu0 0.0
    %4293 = vmatmul.mubr.f32.gmra.mrb[0].mxu0 %v4226
    %v4294 = vpop.f32.mrb[0].mxu0
    %v4295 = vadd.f32 0.0, %v4294
    %v4296 = vpop.f32.mrb[0].mxu0
    %4297 = vdwg.mxu0
    %4298 = vrot.lane.b32.xlu0 %v4041, 64
    %v4299 = vpop.permute.xlu0 %4298
    %v4302 = vsel %vm150, %v4221, 0
    %4304 = vmatprep.subr.mxu0 0.0
    %4305 = vmatpush1.msra.mxu0 %v4299
    %4306 = vmatprep.subr.mxu0 0.0
    %4307 = vmatpush1.msra.mxu0 0.0
    %4308 = vmatprep.subr.mxu0 0.0
    %4309 = vmatpush1.msra.mxu0 0.0
    %4310 = vmatprep.subr.mxu0 0.0
    %4311 = vmatpush1.msra.mxu0 0.0
    %4312 = vmatprep.subr.mxu0 0.0
    %4313 = vmatpush1.msra.mxu0 0.0
    %4314 = vmatprep.subr.mxu0 0.0
    %4315 = vmatpush1.msra.mxu0 0.0
    %4316 = vmatprep.subr.mxu0 0.0
    %4317 = vmatpush1.msra.mxu0 0.0
    %4318 = vmatprep.subr.mxu0 0.0
    %4319 = vmatpush1.msra.mxu0 0.0
    %4320 = vmatprep.subr.mxu0 0.0
    %4321 = vmatpush1.msra.mxu0 0.0
    %4322 = vmatprep.subr.mxu0 0.0
    %4323 = vmatpush1.msra.mxu0 0.0
    %4324 = vmatprep.subr.mxu0 0.0
    %4325 = vmatpush1.msra.mxu0 0.0
    %4326 = vmatprep.subr.mxu0 0.0
    %4327 = vmatpush1.msra.mxu0 0.0
    %4328 = vmatprep.subr.mxu0 0.0
    %4329 = vmatpush1.msra.mxu0 0.0
    %4330 = vmatprep.subr.mxu0 0.0
    %4331 = vmatpush1.msra.mxu0 0.0
    %4332 = vmatprep.subr.mxu0 0.0
    %4333 = vmatpush1.msra.mxu0 0.0
    %4334 = vmatprep.subr.mxu0 0.0
    %4335 = vmatpush1.msra.mxu0 0.0
    %4336 = vmatprep.subr.mxu0 0.0
    %4337 = vmatpush1.msra.mxu0 0.0
    %4338 = vmatprep.subr.mxu0 0.0
    %4339 = vmatpush1.msra.mxu0 0.0
    %4340 = vmatprep.subr.mxu0 0.0
    %4341 = vmatpush1.msra.mxu0 0.0
    %4342 = vmatprep.subr.mxu0 0.0
    %4343 = vmatpush1.msra.mxu0 0.0
    %4344 = vmatprep.subr.mxu0 0.0
    %4345 = vmatpush1.msra.mxu0 0.0
    %4346 = vmatprep.subr.mxu0 0.0
    %4347 = vmatpush1.msra.mxu0 0.0
    %4348 = vmatprep.subr.mxu0 0.0
    %4349 = vmatpush1.msra.mxu0 0.0
    %4350 = vmatprep.subr.mxu0 0.0
    %4351 = vmatpush1.msra.mxu0 0.0
    %4352 = vmatprep.subr.mxu0 0.0
    %4353 = vmatpush1.msra.mxu0 0.0
    %4354 = vmatprep.subr.mxu0 0.0
    %4355 = vmatpush1.msra.mxu0 0.0
    %4356 = vmatprep.subr.mxu0 0.0
    %4357 = vmatpush1.msra.mxu0 0.0
    %4358 = vmatprep.subr.mxu0 0.0
    %4359 = vmatpush1.msra.mxu0 0.0
    %4360 = vmatprep.subr.mxu0 0.0
    %4361 = vmatpush1.msra.mxu0 0.0
    %4362 = vmatprep.subr.mxu0 0.0
    %4363 = vmatpush1.msra.mxu0 0.0
    %4364 = vmatprep.subr.mxu0 0.0
    %4365 = vmatpush1.msra.mxu0 0.0
    %4366 = vmatprep.subr.mxu0 0.0
    %4367 = vmatpush1.msra.mxu0 0.0
    %4368 = vmatprep.mubr.f32.mxu0 0.0
    %4369 = vmatmul.mubr.f32.gmra.mrb[0].mxu0 %v4302
    %v4370 = vpop.f32.mrb[0].mxu0
    %v4371 = vadd.f32 0.0, %v4370
    %v4372 = vpop.f32.mrb[0].mxu0
    %4373 = vdwg.mxu0
    %s4374 = scalar_lea.vmem %s3, 32
    %v4375 = vld [vmem:[%s4374] sm:$0xff]
    %4376 = vrot.lane.b32.xlu0 %v4036, 120
    %v4377 = vpop.permute.xlu0 %4376
    %4378 = vrot.lane.b32.xlu0 %v4036, 88
    %v4379 = vpop.permute.xlu0 %4378
    %v4380 = vsel %vm150, %v4377, 0
    %v4382 = vsel %vm150, %v4379, 0
    %4384 = vmatprep.subr.mxu0 0.0
    %4385 = vmatpush1.xpose.msra.mxu0 %v4382
    %4386 = vmatprep.subr.mxu0 0.0
    %4387 = vmatpush1.xpose.msra.mxu0 0.0
    %4388 = vmatprep.subr.mxu0 0.0
    %4389 = vmatpush1.xpose.msra.mxu0 0.0
    %4390 = vmatprep.subr.mxu0 0.0
    %4391 = vmatpush1.xpose.msra.mxu0 0.0
    %4392 = vmatprep.subr.mxu0 0.0
    %4393 = vmatpush1.xpose.msra.mxu0 0.0
    %4394 = vmatprep.subr.mxu0 0.0
    %4395 = vmatpush1.xpose.msra.mxu0 0.0
    %4396 = vmatprep.subr.mxu0 0.0
    %4397 = vmatpush1.xpose.msra.mxu0 0.0
    %4398 = vmatprep.subr.mxu0 0.0
    %4399 = vmatpush1.xpose.msra.mxu0 0.0
    %4400 = vmatprep.subr.mxu0 0.0
    %4401 = vmatpush1.xpose.msra.mxu0 0.0
    %4402 = vmatprep.subr.mxu0 0.0
    %4403 = vmatpush1.xpose.msra.mxu0 0.0
    %4404 = vmatprep.subr.mxu0 0.0
    %4405 = vmatpush1.xpose.msra.mxu0 0.0
    %4406 = vmatprep.subr.mxu0 0.0
    %4407 = vmatpush1.xpose.msra.mxu0 0.0
    %4408 = vmatprep.subr.mxu0 0.0
    %4409 = vmatpush1.xpose.msra.mxu0 0.0
    %4410 = vmatprep.subr.mxu0 0.0
    %4411 = vmatpush1.xpose.msra.mxu0 0.0
    %4412 = vmatprep.subr.mxu0 0.0
    %4413 = vmatpush1.xpose.msra.mxu0 0.0
    %4414 = vmatprep.subr.mxu0 0.0
    %4415 = vmatpush1.xpose.msra.mxu0 0.0
    %4416 = vmatprep.subr.mxu0 0.0
    %4417 = vmatpush1.xpose.msra.mxu0 0.0
    %4418 = vmatprep.subr.mxu0 0.0
    %4419 = vmatpush1.xpose.msra.mxu0 0.0
    %4420 = vmatprep.subr.mxu0 0.0
    %4421 = vmatpush1.xpose.msra.mxu0 0.0
    %4422 = vmatprep.subr.mxu0 0.0
    %4423 = vmatpush1.xpose.msra.mxu0 0.0
    %4424 = vmatprep.subr.mxu0 0.0
    %4425 = vmatpush1.xpose.msra.mxu0 0.0
    %4426 = vmatprep.subr.mxu0 0.0
    %4427 = vmatpush1.xpose.msra.mxu0 0.0
    %4428 = vmatprep.subr.mxu0 0.0
    %4429 = vmatpush1.xpose.msra.mxu0 0.0
    %4430 = vmatprep.subr.mxu0 0.0
    %4431 = vmatpush1.xpose.msra.mxu0 0.0
    %4432 = vmatprep.subr.mxu0 0.0
    %4433 = vmatpush1.xpose.msra.mxu0 0.0
    %4434 = vmatprep.subr.mxu0 0.0
    %4435 = vmatpush1.xpose.msra.mxu0 0.0
    %4436 = vmatprep.subr.mxu0 0.0
    %4437 = vmatpush1.xpose.msra.mxu0 0.0
    %4438 = vmatprep.subr.mxu0 0.0
    %4439 = vmatpush1.xpose.msra.mxu0 0.0
    %4440 = vmatprep.subr.mxu0 0.0
    %4441 = vmatpush1.xpose.msra.mxu0 0.0
    %4442 = vmatprep.subr.mxu0 0.0
    %4443 = vmatpush1.xpose.msra.mxu0 0.0
    %4444 = vmatprep.subr.mxu0 0.0
    %4445 = vmatpush1.xpose.msra.mxu0 0.0
    %4446 = vmatprep.subr.mxu0 0.0
    %4447 = vmatpush1.xpose.msra.mxu0 0.0
    %4448 = vmatprep.mubr.f32.mxu0 0.0
    %4449 = vmatmul.mubr.f32.gmra.mrb[0].mxu0 %v4380
    %v4450 = vpop.f32.mrb[0].mxu0
    %v4451 = vadd.f32 0.0, %v4450
    %v4452 = vpop.f32.mrb[0].mxu0
    %4453 = vdwg.mxu0
    %4454 = vrot.lane.b32.xlu0 %v4041, 120
    %v4455 = vpop.permute.xlu0 %4454
    %4456 = vrot.lane.b32.xlu0 %v4041, 88
    %v4457 = vpop.permute.xlu0 %4456
    %v4458 = vsel %vm150, %v4455, 0
    %v4460 = vsel %vm150, %v4457, 0
    %4462 = vmatprep.subr.mxu0 0.0
    %4463 = vmatpush1.xpose.msra.mxu0 %v4460
    %4464 = vmatprep.subr.mxu0 0.0
    %4465 = vmatpush1.xpose.msra.mxu0 0.0
    %4466 = vmatprep.subr.mxu0 0.0
    %4467 = vmatpush1.xpose.msra.mxu0 0.0
    %4468 = vmatprep.subr.mxu0 0.0
    %4469 = vmatpush1.xpose.msra.mxu0 0.0
    %4470 = vmatprep.subr.mxu0 0.0
    %4471 = vmatpush1.xpose.msra.mxu0 0.0
    %4472 = vmatprep.subr.mxu0 0.0
    %4473 = vmatpush1.xpose.msra.mxu0 0.0
    %4474 = vmatprep.subr.mxu0 0.0
    %4475 = vmatpush1.xpose.msra.mxu0 0.0
    %4476 = vmatprep.subr.mxu0 0.0
    %4477 = vmatpush1.xpose.msra.mxu0 0.0
    %4478 = vmatprep.subr.mxu0 0.0
    %4479 = vmatpush1.xpose.msra.mxu0 0.0
    %4480 = vmatprep.subr.mxu0 0.0
    %4481 = vmatpush1.xpose.msra.mxu0 0.0
    %4482 = vmatprep.subr.mxu0 0.0
    %4483 = vmatpush1.xpose.msra.mxu0 0.0
    %4484 = vmatprep.subr.mxu0 0.0
    %4485 = vmatpush1.xpose.msra.mxu0 0.0
    %4486 = vmatprep.subr.mxu0 0.0
    %4487 = vmatpush1.xpose.msra.mxu0 0.0
    %4488 = vmatprep.subr.mxu0 0.0
    %4489 = vmatpush1.xpose.msra.mxu0 0.0
    %4490 = vmatprep.subr.mxu0 0.0
    %4491 = vmatpush1.xpose.msra.mxu0 0.0
    %4492 = vmatprep.subr.mxu0 0.0
    %4493 = vmatpush1.xpose.msra.mxu0 0.0
    %4494 = vmatprep.subr.mxu0 0.0
    %4495 = vmatpush1.xpose.msra.mxu0 0.0
    %4496 = vmatprep.subr.mxu0 0.0
    %4497 = vmatpush1.xpose.msra.mxu0 0.0
    %4498 = vmatprep.subr.mxu0 0.0
    %4499 = vmatpush1.xpose.msra.mxu0 0.0
    %4500 = vmatprep.subr.mxu0 0.0
    %4501 = vmatpush1.xpose.msra.mxu0 0.0
    %4502 = vmatprep.subr.mxu0 0.0
    %4503 = vmatpush1.xpose.msra.mxu0 0.0
    %4504 = vmatprep.subr.mxu0 0.0
    %4505 = vmatpush1.xpose.msra.mxu0 0.0
    %4506 = vmatprep.subr.mxu0 0.0
    %4507 = vmatpush1.xpose.msra.mxu0 0.0
    %4508 = vmatprep.subr.mxu0 0.0
    %4509 = vmatpush1.xpose.msra.mxu0 0.0
    %4510 = vmatprep.subr.mxu0 0.0
    %4511 = vmatpush1.xpose.msra.mxu0 0.0
    %4512 = vmatprep.subr.mxu0 0.0
    %4513 = vmatpush1.xpose.msra.mxu0 0.0
    %4514 = vmatprep.subr.mxu0 0.0
    %4515 = vmatpush1.xpose.msra.mxu0 0.0
    %4516 = vmatprep.subr.mxu0 0.0
    %4517 = vmatpush1.xpose.msra.mxu0 0.0
    %4518 = vmatprep.subr.mxu0 0.0
    %4519 = vmatpush1.xpose.msra.mxu0 0.0
    %4520 = vmatprep.subr.mxu0 0.0
    %4521 = vmatpush1.xpose.msra.mxu0 0.0
    %4522 = vmatprep.subr.mxu0 0.0
    %4523 = vmatpush1.xpose.msra.mxu0 0.0
    %4524 = vmatprep.subr.mxu0 0.0
    %4525 = vmatpush1.xpose.msra.mxu0 0.0
    %4526 = vmatprep.mubr.f32.mxu0 0.0
    %4527 = vmatmul.mubr.f32.gmra.mrb[0].mxu0 %v4458
    %v4528 = vpop.f32.mrb[0].mxu0
    %v4529 = vadd.f32 0.0, %v4528
    %v4530 = vpop.f32.mrb[0].mxu0
    %4531 = vdwg.mxu0
    %v4532 = vmul.f32 %v4451, 0.35355338
    %v4533 = vmul.f32 %v4529, 0.35355338
    %v4534 = vsel %vm150, %v4532, -inf
    %4535 = vmax.xlane.f32.xlu0 %v4534
    %v4536 = vpop.xlane.xlu0 %4535
    %v4537 = vsel %vm150, %v4533, -inf
    %4538 = vmax.xlane.f32.xlu0 %v4537
    %v4539 = vpop.xlane.xlu0 %4538
    %v4540 = vsub.f32 %v4532, %v4536
    %v4541 = vsub.f32 %v4533, %v4539
    %v4542 = vmul.f32 %v4540, 1.442695
    %v4543 = vpow.pop %v4542
    %v4544 = vmul.f32 %v4541, 1.442695
    %v4545 = vpow.pop %v4544
    %v4546 = vsel %vm150, %v4543, 0.0
    %4547 = vadd.xlane.f32.xlu0 %v4546
    %v4548 = vpop.xlane.xlu0 %4547
    %v4549 = vsel %vm150, %v4545, 0.0
    %4550 = vadd.xlane.f32.xlu0 %v4549
    %v4551 = vpop.xlane.xlu0 %4550
    %v4552 = vrcp.pop %v4548
    %v4553 = vrcp.pop %v4551
    %v4554 = vmul.f32 %v4543, %v4552
    %v4555 = vmul.f32 %v4545, %v4553
    %4556 = vrot.lane.b32.xlu0 %v4036, 56
    %v4557 = vpop.permute.xlu0 %4556
    %v4560 = vsel %vm150, %v4554, 0
    %4562 = vmatprep.subr.mxu0 0.0
    %4563 = vmatpush1.msra.mxu0 %v4557
    %4564 = vmatprep.subr.mxu0 0.0
    %4565 = vmatpush1.msra.mxu0 0.0
    %4566 = vmatprep.subr.mxu0 0.0
    %4567 = vmatpush1.msra.mxu0 0.0
    %4568 = vmatprep.subr.mxu0 0.0
    %4569 = vmatpush1.msra.mxu0 0.0
    %4570 = vmatprep.subr.mxu0 0.0
    %4571 = vmatpush1.msra.mxu0 0.0
    %4572 = vmatprep.subr.mxu0 0.0
    %4573 = vmatpush1.msra.mxu0 0.0
    %4574 = vmatprep.subr.mxu0 0.0
    %4575 = vmatpush1.msra.mxu0 0.0
    %4576 = vmatprep.subr.mxu0 0.0
    %4577 = vmatpush1.msra.mxu0 0.0
    %4578 = vmatprep.subr.mxu0 0.0
    %4579 = vmatpush1.msra.mxu0 0.0
    %4580 = vmatprep.subr.mxu0 0.0
    %4581 = vmatpush1.msra.mxu0 0.0
    %4582 = vmatprep.subr.mxu0 0.0
    %4583 = vmatpush1.msra.mxu0 0.0
    %4584 = vmatprep.subr.mxu0 0.0
    %4585 = vmatpush1.msra.mxu0 0.0
    %4586 = vmatprep.subr.mxu0 0.0
    %4587 = vmatpush1.msra.mxu0 0.0
    %4588 = vmatprep.subr.mxu0 0.0
    %4589 = vmatpush1.msra.mxu0 0.0
    %4590 = vmatprep.subr.mxu0 0.0
    %4591 = vmatpush1.msra.mxu0 0.0
    %4592 = vmatprep.subr.mxu0 0.0
    %4593 = vmatpush1.msra.mxu0 0.0
    %4594 = vmatprep.subr.mxu0 0.0
    %4595 = vmatpush1.msra.mxu0 0.0
    %4596 = vmatprep.subr.mxu0 0.0
    %4597 = vmatpush1.msra.mxu0 0.0
    %4598 = vmatprep.subr.mxu0 0.0
    %4599 = vmatpush1.msra.mxu0 0.0
    %4600 = vmatprep.subr.mxu0 0.0
    %4601 = vmatpush1.msra.mxu0 0.0
    %4602 = vmatprep.subr.mxu0 0.0
    %4603 = vmatpush1.msra.mxu0 0.0
    %4604 = vmatprep.subr.mxu0 0.0
    %4605 = vmatpush1.msra.mxu0 0.0
    %4606 = vmatprep.subr.mxu0 0.0
    %4607 = vmatpush1.msra.mxu0 0.0
    %4608 = vmatprep.subr.mxu0 0.0
    %4609 = vmatpush1.msra.mxu0 0.0
    %4610 = vmatprep.subr.mxu0 0.0
    %4611 = vmatpush1.msra.mxu0 0.0
    %4612 = vmatprep.subr.mxu0 0.0
    %4613 = vmatpush1.msra.mxu0 0.0
    %4614 = vmatprep.subr.mxu0 0.0
    %4615 = vmatpush1.msra.mxu0 0.0
    %4616 = vmatprep.subr.mxu0 0.0
    %4617 = vmatpush1.msra.mxu0 0.0
    %4618 = vmatprep.subr.mxu0 0.0
    %4619 = vmatpush1.msra.mxu0 0.0
    %4620 = vmatprep.subr.mxu0 0.0
    %4621 = vmatpush1.msra.mxu0 0.0
    %4622 = vmatprep.subr.mxu0 0.0
    %4623 = vmatpush1.msra.mxu0 0.0
    %4624 = vmatprep.subr.mxu0 0.0
    %4625 = vmatpush1.msra.mxu0 0.0
    %4626 = vmatprep.mubr.f32.mxu0 0.0
    %4627 = vmatmul.mubr.f32.gmra.mrb[0].mxu0 %v4560
    %v4628 = vpop.f32.mrb[0].mxu0
    %v4629 = vadd.f32 0.0, %v4628
    %v4630 = vpop.f32.mrb[0].mxu0
    %4631 = vdwg.mxu0
    %4632 = vrot.lane.b32.xlu0 %v4041, 56
    %v4633 = vpop.permute.xlu0 %4632
    %v4636 = vsel %vm150, %v4555, 0
    %4638 = vmatprep.subr.mxu0 0.0
    %4639 = vmatpush1.msra.mxu0 %v4633
    %4640 = vmatprep.subr.mxu0 0.0
    %4641 = vmatpush1.msra.mxu0 0.0
    %4642 = vmatprep.subr.mxu0 0.0
    %4643 = vmatpush1.msra.mxu0 0.0
    %4644 = vmatprep.subr.mxu0 0.0
    %4645 = vmatpush1.msra.mxu0 0.0
    %4646 = vmatprep.subr.mxu0 0.0
    %4647 = vmatpush1.msra.mxu0 0.0
    %4648 = vmatprep.subr.mxu0 0.0
    %4649 = vmatpush1.msra.mxu0 0.0
    %4650 = vmatprep.subr.mxu0 0.0
    %4651 = vmatpush1.msra.mxu0 0.0
    %4652 = vmatprep.subr.mxu0 0.0
    %4653 = vmatpush1.msra.mxu0 0.0
    %4654 = vmatprep.subr.mxu0 0.0
    %4655 = vmatpush1.msra.mxu0 0.0
    %4656 = vmatprep.subr.mxu0 0.0
    %4657 = vmatpush1.msra.mxu0 0.0
    %4658 = vmatprep.subr.mxu0 0.0
    %4659 = vmatpush1.msra.mxu0 0.0
    %4660 = vmatprep.subr.mxu0 0.0
    %4661 = vmatpush1.msra.mxu0 0.0
    %4662 = vmatprep.subr.mxu0 0.0
    %4663 = vmatpush1.msra.mxu0 0.0
    %4664 = vmatprep.subr.mxu0 0.0
    %4665 = vmatpush1.msra.mxu0 0.0
    %4666 = vmatprep.subr.mxu0 0.0
    %4667 = vmatpush1.msra.mxu0 0.0
    %4668 = vmatprep.subr.mxu0 0.0
    %4669 = vmatpush1.msra.mxu0 0.0
    %4670 = vmatprep.subr.mxu0 0.0
    %4671 = vmatpush1.msra.mxu0 0.0
    %4672 = vmatprep.subr.mxu0 0.0
    %4673 = vmatpush1.msra.mxu0 0.0
    %4674 = vmatprep.subr.mxu0 0.0
    %4675 = vmatpush1.msra.mxu0 0.0
    %4676 = vmatprep.subr.mxu0 0.0
    %4677 = vmatpush1.msra.mxu0 0.0
    %4678 = vmatprep.subr.mxu0 0.0
    %4679 = vmatpush1.msra.mxu0 0.0
    %4680 = vmatprep.subr.mxu0 0.0
    %4681 = vmatpush1.msra.mxu0 0.0
    %4682 = vmatprep.subr.mxu0 0.0
    %4683 = vmatpush1.msra.mxu0 0.0
    %4684 = vmatprep.subr.mxu0 0.0
    %4685 = vmatpush1.msra.mxu0 0.0
    %4686 = vmatprep.subr.mxu0 0.0
    %4687 = vmatpush1.msra.mxu0 0.0
    %4688 = vmatprep.subr.mxu0 0.0
    %4689 = vmatpush1.msra.mxu0 0.0
    %4690 = vmatprep.subr.mxu0 0.0
    %4691 = vmatpush1.msra.mxu0 0.0
    %4692 = vmatprep.subr.mxu0 0.0
    %4693 = vmatpush1.msra.mxu0 0.0
    %4694 = vmatprep.subr.mxu0 0.0
    %4695 = vmatpush1.msra.mxu0 0.0
    %4696 = vmatprep.subr.mxu0 0.0
    %4697 = vmatpush1.msra.mxu0 0.0
    %4698 = vmatprep.subr.mxu0 0.0
    %4699 = vmatpush1.msra.mxu0 0.0
    %4700 = vmatprep.subr.mxu0 0.0
    %4701 = vmatpush1.msra.mxu0 0.0
    %4702 = vmatprep.mubr.f32.mxu0 0.0
    %4703 = vmatmul.mubr.f32.gmra.mrb[0].mxu0 %v4636
    %v4704 = vpop.f32.mrb[0].mxu0
    %v4705 = vadd.f32 0.0, %v4704
    %v4706 = vpop.f32.mrb[0].mxu0
    %4707 = vdwg.mxu0
    %s4708 = scalar_lea.vmem %s3, 40
    %v4709 = vld [vmem:[%s4708] sm:$0xff]
    %v4711 = vsel %vm150, %v4629, 0
    %v4714 = vsel %vm150, %v4705, 0
    %4716 = vmatprep.subr.mxu0 0.0
    %4717 = vmatpush1.msra.mxu0 %v4709
    %4718 = vmatprep.subr.mxu0 0.0
    %4719 = vmatpush1.msra.mxu0 0.0
    %4720 = vmatprep.subr.mxu0 0.0
    %4721 = vmatpush1.msra.mxu0 0.0
    %4722 = vmatprep.subr.mxu0 0.0
    %4723 = vmatpush1.msra.mxu0 0.0
    %4724 = vmatprep.subr.mxu0 0.0
    %4725 = vmatpush1.msra.mxu0 0.0
    %4726 = vmatprep.subr.mxu0 0.0
    %4727 = vmatpush1.msra.mxu0 0.0
    %4728 = vmatprep.subr.mxu0 0.0
    %4729 = vmatpush1.msra.mxu0 0.0
    %4730 = vmatprep.subr.mxu0 0.0
    %4731 = vmatpush1.msra.mxu0 0.0
    %4732 = vmatprep.subr.mxu0 0.0
    %4733 = vmatpush1.msra.mxu0 0.0
    %4734 = vmatprep.subr.mxu0 0.0
    %4735 = vmatpush1.msra.mxu0 0.0
    %4736 = vmatprep.subr.mxu0 0.0
    %4737 = vmatpush1.msra.mxu0 0.0
    %4738 = vmatprep.subr.mxu0 0.0
    %4739 = vmatpush1.msra.mxu0 0.0
    %4740 = vmatprep.subr.mxu0 0.0
    %4741 = vmatpush1.msra.mxu0 0.0
    %4742 = vmatprep.subr.mxu0 0.0
    %4743 = vmatpush1.msra.mxu0 0.0
    %4744 = vmatprep.subr.mxu0 0.0
    %4745 = vmatpush1.msra.mxu0 0.0
    %4746 = vmatprep.subr.mxu0 0.0
    %4747 = vmatpush1.msra.mxu0 0.0
    %4748 = vmatprep.subr.mxu0 0.0
    %4749 = vmatpush1.msra.mxu0 0.0
    %4750 = vmatprep.subr.mxu0 0.0
    %4751 = vmatpush1.msra.mxu0 0.0
    %4752 = vmatprep.subr.mxu0 0.0
    %4753 = vmatpush1.msra.mxu0 0.0
    %4754 = vmatprep.subr.mxu0 0.0
    %4755 = vmatpush1.msra.mxu0 0.0
    %4756 = vmatprep.subr.mxu0 0.0
    %4757 = vmatpush1.msra.mxu0 0.0
    %4758 = vmatprep.subr.mxu0 0.0
    %4759 = vmatpush1.msra.mxu0 0.0
    %4760 = vmatprep.subr.mxu0 0.0
    %4761 = vmatpush1.msra.mxu0 0.0
    %4762 = vmatprep.subr.mxu0 0.0
    %4763 = vmatpush1.msra.mxu0 0.0
    %4764 = vmatprep.subr.mxu0 0.0
    %4765 = vmatpush1.msra.mxu0 0.0
    %4766 = vmatprep.subr.mxu0 0.0
    %4767 = vmatpush1.msra.mxu0 0.0
    %4768 = vmatprep.subr.mxu0 0.0
    %4769 = vmatpush1.msra.mxu0 0.0
    %4770 = vmatprep.subr.mxu0 0.0
    %4771 = vmatpush1.msra.mxu0 0.0
    %4772 = vmatprep.subr.mxu0 0.0
    %4773 = vmatpush1.msra.mxu0 0.0
    %4774 = vmatprep.subr.mxu0 0.0
    %4775 = vmatpush1.msra.mxu0 0.0
    %4776 = vmatprep.subr.mxu0 0.0
    %4777 = vmatpush1.msra.mxu0 0.0
    %4778 = vmatprep.subr.mxu0 0.0
    %4779 = vmatpush1.msra.mxu0 0.0
    %4780 = vmatprep.mubr.f32.mxu0 0.0
    %4781 = vmatmul.mubr.f32.gmra.mrb[0].mxu0 %v4711
    %v4782 = vpop.f32.mrb[0].mxu0
    %v4783 = vadd.f32 0.0, %v4782
    %v4784 = vpop.f32.mrb[0].mxu0
    %4785 = vmatprep.mubr.f32.mxu0 0.0
    %4786 = vmatmul.mubr.f32.gmra.mrb[0].mxu0 %v4714
    %v4787 = vpop.f32.mrb[0].mxu0
    %v4788 = vadd.f32 0.0, %v4787
    %v4789 = vpop.f32.mrb[0].mxu0
    %4790 = vdwg.mxu0
    %v4792 = vsel %vm150, %v4295, 0
    %v4795 = vsel %vm150, %v4371, 0
    %4797 = vmatprep.subr.mxu0 0.0
    %4798 = vmatpush1.msra.mxu0 %v4375
    %4799 = vmatprep.subr.mxu0 0.0
    %4800 = vmatpush1.msra.mxu0 0.0
    %4801 = vmatprep.subr.mxu0 0.0
    %4802 = vmatpush1.msra.mxu0 0.0
    %4803 = vmatprep.subr.mxu0 0.0
    %4804 = vmatpush1.msra.mxu0 0.0
    %4805 = vmatprep.subr.mxu0 0.0
    %4806 = vmatpush1.msra.mxu0 0.0
    %4807 = vmatprep.subr.mxu0 0.0
    %4808 = vmatpush1.msra.mxu0 0.0
    %4809 = vmatprep.subr.mxu0 0.0
    %4810 = vmatpush1.msra.mxu0 0.0
    %4811 = vmatprep.subr.mxu0 0.0
    %4812 = vmatpush1.msra.mxu0 0.0
    %4813 = vmatprep.subr.mxu0 0.0
    %4814 = vmatpush1.msra.mxu0 0.0
    %4815 = vmatprep.subr.mxu0 0.0
    %4816 = vmatpush1.msra.mxu0 0.0
    %4817 = vmatprep.subr.mxu0 0.0
    %4818 = vmatpush1.msra.mxu0 0.0
    %4819 = vmatprep.subr.mxu0 0.0
    %4820 = vmatpush1.msra.mxu0 0.0
    %4821 = vmatprep.subr.mxu0 0.0
    %4822 = vmatpush1.msra.mxu0 0.0
    %4823 = vmatprep.subr.mxu0 0.0
    %4824 = vmatpush1.msra.mxu0 0.0
    %4825 = vmatprep.subr.mxu0 0.0
    %4826 = vmatpush1.msra.mxu0 0.0
    %4827 = vmatprep.subr.mxu0 0.0
    %4828 = vmatpush1.msra.mxu0 0.0
    %4829 = vmatprep.subr.mxu0 0.0
    %4830 = vmatpush1.msra.mxu0 0.0
    %4831 = vmatprep.subr.mxu0 0.0
    %4832 = vmatpush1.msra.mxu0 0.0
    %4833 = vmatprep.subr.mxu0 0.0
    %4834 = vmatpush1.msra.mxu0 0.0
    %4835 = vmatprep.subr.mxu0 0.0
    %4836 = vmatpush1.msra.mxu0 0.0
    %4837 = vmatprep.subr.mxu0 0.0
    %4838 = vmatpush1.msra.mxu0 0.0
    %4839 = vmatprep.subr.mxu0 0.0
    %4840 = vmatpush1.msra.mxu0 0.0
    %4841 = vmatprep.subr.mxu0 0.0
    %4842 = vmatpush1.msra.mxu0 0.0
    %4843 = vmatprep.subr.mxu0 0.0
    %4844 = vmatpush1.msra.mxu0 0.0
    %4845 = vmatprep.subr.mxu0 0.0
    %4846 = vmatpush1.msra.mxu0 0.0
    %4847 = vmatprep.subr.mxu0 0.0
    %4848 = vmatpush1.msra.mxu0 0.0
    %4849 = vmatprep.subr.mxu0 0.0
    %4850 = vmatpush1.msra.mxu0 0.0
    %4851 = vmatprep.subr.mxu0 0.0
    %4852 = vmatpush1.msra.mxu0 0.0
    %4853 = vmatprep.subr.mxu0 0.0
    %4854 = vmatpush1.msra.mxu0 0.0
    %4855 = vmatprep.subr.mxu0 0.0
    %4856 = vmatpush1.msra.mxu0 0.0
    %4857 = vmatprep.subr.mxu0 0.0
    %4858 = vmatpush1.msra.mxu0 0.0
    %4859 = vmatprep.subr.mxu0 0.0
    %4860 = vmatpush1.msra.mxu0 0.0
    %4861 = vmatprep.mubr.f32.mxu0 0.0
    %4862 = vmatmul.mubr.f32.gmra.mrb[0].mxu0 %v4792
    %v4863 = vpop.f32.mrb[0].mxu0
    %v4864 = vadd.f32 %v4783, %v4863
    %v4865 = vpop.f32.mrb[0].mxu0
    %4866 = vmatprep.mubr.f32.mxu0 0.0
    %4867 = vmatmul.mubr.f32.gmra.mrb[0].mxu0 %v4795
    %v4868 = vpop.f32.mrb[0].mxu0
    %v4869 = vadd.f32 %v4788, %v4868
    %v4870 = vpop.f32.mrb[0].mxu0
    %4871 = vdwg.mxu0
    %4872 = vrot.lane.b32.xlu0 %v4036, 112
    %v4873 = vpop.permute.xlu0 %4872
    %4874 = vrot.lane.b32.xlu0 %v4036, 80
    %v4875 = vpop.permute.xlu0 %4874
    %v4876 = vsel %vm150, %v4873, 0
    %v4878 = vsel %vm150, %v4875, 0
    %4880 = vmatprep.subr.mxu0 0.0
    %4881 = vmatpush1.xpose.msra.mxu0 %v4878
    %4882 = vmatprep.subr.mxu0 0.0
    %4883 = vmatpush1.xpose.msra.mxu0 0.0
    %4884 = vmatprep.subr.mxu0 0.0
    %4885 = vmatpush1.xpose.msra.mxu0 0.0
    %4886 = vmatprep.subr.mxu0 0.0
    %4887 = vmatpush1.xpose.msra.mxu0 0.0
    %4888 = vmatprep.subr.mxu0 0.0
    %4889 = vmatpush1.xpose.msra.mxu0 0.0
    %4890 = vmatprep.subr.mxu0 0.0
    %4891 = vmatpush1.xpose.msra.mxu0 0.0
    %4892 = vmatprep.subr.mxu0 0.0
    %4893 = vmatpush1.xpose.msra.mxu0 0.0
    %4894 = vmatprep.subr.mxu0 0.0
    %4895 = vmatpush1.xpose.msra.mxu0 0.0
    %4896 = vmatprep.subr.mxu0 0.0
    %4897 = vmatpush1.xpose.msra.mxu0 0.0
    %4898 = vmatprep.subr.mxu0 0.0
    %4899 = vmatpush1.xpose.msra.mxu0 0.0
    %4900 = vmatprep.subr.mxu0 0.0
    %4901 = vmatpush1.xpose.msra.mxu0 0.0
    %4902 = vmatprep.subr.mxu0 0.0
    %4903 = vmatpush1.xpose.msra.mxu0 0.0
    %4904 = vmatprep.subr.mxu0 0.0
    %4905 = vmatpush1.xpose.msra.mxu0 0.0
    %4906 = vmatprep.subr.mxu0 0.0
    %4907 = vmatpush1.xpose.msra.mxu0 0.0
    %4908 = vmatprep.subr.mxu0 0.0
    %4909 = vmatpush1.xpose.msra.mxu0 0.0
    %4910 = vmatprep.subr.mxu0 0.0
    %4911 = vmatpush1.xpose.msra.mxu0 0.0
    %4912 = vmatprep.subr.mxu0 0.0
    %4913 = vmatpush1.xpose.msra.mxu0 0.0
    %4914 = vmatprep.subr.mxu0 0.0
    %4915 = vmatpush1.xpose.msra.mxu0 0.0
    %4916 = vmatprep.subr.mxu0 0.0
    %4917 = vmatpush1.xpose.msra.mxu0 0.0
    %4918 = vmatprep.subr.mxu0 0.0
    %4919 = vmatpush1.xpose.msra.mxu0 0.0
    %4920 = vmatprep.subr.mxu0 0.0
    %4921 = vmatpush1.xpose.msra.mxu0 0.0
    %4922 = vmatprep.subr.mxu0 0.0
    %4923 = vmatpush1.xpose.msra.mxu0 0.0
    %4924 = vmatprep.subr.mxu0 0.0
    %4925 = vmatpush1.xpose.msra.mxu0 0.0
    %4926 = vmatprep.subr.mxu0 0.0
    %4927 = vmatpush1.xpose.msra.mxu0 0.0
    %4928 = vmatprep.subr.mxu0 0.0
    %4929 = vmatpush1.xpose.msra.mxu0 0.0
    %4930 = vmatprep.subr.mxu0 0.0
    %4931 = vmatpush1.xpose.msra.mxu0 0.0
    %4932 = vmatprep.subr.mxu0 0.0
    %4933 = vmatpush1.xpose.msra.mxu0 0.0
    %4934 = vmatprep.subr.mxu0 0.0
    %4935 = vmatpush1.xpose.msra.mxu0 0.0
    %4936 = vmatprep.subr.mxu0 0.0
    %4937 = vmatpush1.xpose.msra.mxu0 0.0
    %4938 = vmatprep.subr.mxu0 0.0
    %4939 = vmatpush1.xpose.msra.mxu0 0.0
    %4940 = vmatprep.subr.mxu0 0.0
    %4941 = vmatpush1.xpose.msra.mxu0 0.0
    %4942 = vmatprep.subr.mxu0 0.0
    %4943 = vmatpush1.xpose.msra.mxu0 0.0
    %4944 = vmatprep.mubr.f32.mxu0 0.0
    %4945 = vmatmul.mubr.f32.gmra.mrb[0].mxu0 %v4876
    %v4946 = vpop.f32.mrb[0].mxu0
    %v4947 = vadd.f32 0.0, %v4946
    %v4948 = vpop.f32.mrb[0].mxu0
    %4949 = vdwg.mxu0
    %4950 = vrot.lane.b32.xlu0 %v4041, 112
    %v4951 = vpop.permute.xlu0 %4950
    %4952 = vrot.lane.b32.xlu0 %v4041, 80
    %v4953 = vpop.permute.xlu0 %4952
    %v4954 = vsel %vm150, %v4951, 0
    %v4956 = vsel %vm150, %v4953, 0
    %4958 = vmatprep.subr.mxu0 0.0
    %4959 = vmatpush1.xpose.msra.mxu0 %v4956
    %4960 = vmatprep.subr.mxu0 0.0
    %4961 = vmatpush1.xpose.msra.mxu0 0.0
    %4962 = vmatprep.subr.mxu0 0.0
    %4963 = vmatpush1.xpose.msra.mxu0 0.0
    %4964 = vmatprep.subr.mxu0 0.0
    %4965 = vmatpush1.xpose.msra.mxu0 0.0
    %4966 = vmatprep.subr.mxu0 0.0
    %4967 = vmatpush1.xpose.msra.mxu0 0.0
    %4968 = vmatprep.subr.mxu0 0.0
    %4969 = vmatpush1.xpose.msra.mxu0 0.0
    %4970 = vmatprep.subr.mxu0 0.0
    %4971 = vmatpush1.xpose.msra.mxu0 0.0
    %4972 = vmatprep.subr.mxu0 0.0
    %4973 = vmatpush1.xpose.msra.mxu0 0.0
    %4974 = vmatprep.subr.mxu0 0.0
    %4975 = vmatpush1.xpose.msra.mxu0 0.0
    %4976 = vmatprep.subr.mxu0 0.0
    %4977 = vmatpush1.xpose.msra.mxu0 0.0
    %4978 = vmatprep.subr.mxu0 0.0
    %4979 = vmatpush1.xpose.msra.mxu0 0.0
    %4980 = vmatprep.subr.mxu0 0.0
    %4981 = vmatpush1.xpose.msra.mxu0 0.0
    %4982 = vmatprep.subr.mxu0 0.0
    %4983 = vmatpush1.xpose.msra.mxu0 0.0
    %4984 = vmatprep.subr.mxu0 0.0
    %4985 = vmatpush1.xpose.msra.mxu0 0.0
    %4986 = vmatprep.subr.mxu0 0.0
    %4987 = vmatpush1.xpose.msra.mxu0 0.0
    %4988 = vmatprep.subr.mxu0 0.0
    %4989 = vmatpush1.xpose.msra.mxu0 0.0
    %4990 = vmatprep.subr.mxu0 0.0
    %4991 = vmatpush1.xpose.msra.mxu0 0.0
    %4992 = vmatprep.subr.mxu0 0.0
    %4993 = vmatpush1.xpose.msra.mxu0 0.0
    %4994 = vmatprep.subr.mxu0 0.0
    %4995 = vmatpush1.xpose.msra.mxu0 0.0
    %4996 = vmatprep.subr.mxu0 0.0
    %4997 = vmatpush1.xpose.msra.mxu0 0.0
    %4998 = vmatprep.subr.mxu0 0.0
    %4999 = vmatpush1.xpose.msra.mxu0 0.0
    %5000 = vmatprep.subr.mxu0 0.0
    %5001 = vmatpush1.xpose.msra.mxu0 0.0
    %5002 = vmatprep.subr.mxu0 0.0
    %5003 = vmatpush1.xpose.msra.mxu0 0.0
    %5004 = vmatprep.subr.mxu0 0.0
    %5005 = vmatpush1.xpose.msra.mxu0 0.0
    %5006 = vmatprep.subr.mxu0 0.0
    %5007 = vmatpush1.xpose.msra.mxu0 0.0
    %5008 = vmatprep.subr.mxu0 0.0
    %5009 = vmatpush1.xpose.msra.mxu0 0.0
    %5010 = vmatprep.subr.mxu0 0.0
    %5011 = vmatpush1.xpose.msra.mxu0 0.0
    %5012 = vmatprep.subr.mxu0 0.0
    %5013 = vmatpush1.xpose.msra.mxu0 0.0
    %5014 = vmatprep.subr.mxu0 0.0
    %5015 = vmatpush1.xpose.msra.mxu0 0.0
    %5016 = vmatprep.subr.mxu0 0.0
    %5017 = vmatpush1.xpose.msra.mxu0 0.0
    %5018 = vmatprep.subr.mxu0 0.0
    %5019 = vmatpush1.xpose.msra.mxu0 0.0
    %5020 = vmatprep.subr.mxu0 0.0
    %5021 = vmatpush1.xpose.msra.mxu0 0.0
    %5022 = vmatprep.mubr.f32.mxu0 0.0
    %5023 = vmatmul.mubr.f32.gmra.mrb[0].mxu0 %v4954
    %v5024 = vpop.f32.mrb[0].mxu0
    %v5025 = vadd.f32 0.0, %v5024
    %v5026 = vpop.f32.mrb[0].mxu0
    %5027 = vdwg.mxu0
    %v5028 = vmul.f32 %v4947, 0.35355338
    %v5029 = vmul.f32 %v5025, 0.35355338
    %v5030 = vsel %vm150, %v5028, -inf
    %5031 = vmax.xlane.f32.xlu0 %v5030
    %v5032 = vpop.xlane.xlu0 %5031
    %v5033 = vsel %vm150, %v5029, -inf
    %5034 = vmax.xlane.f32.xlu0 %v5033
    %v5035 = vpop.xlane.xlu0 %5034
    %v5036 = vsub.f32 %v5028, %v5032
    %v5037 = vsub.f32 %v5029, %v5035
    %v5038 = vmul.f32 %v5036, 1.442695
    %v5039 = vpow.pop %v5038
    %v5040 = vmul.f32 %v5037, 1.442695
    %v5041 = vpow.pop %v5040
    %v5042 = vsel %vm150, %v5039, 0.0
    %5043 = vadd.xlane.f32.xlu0 %v5042
    %v5044 = vpop.xlane.xlu0 %5043
    %v5045 = vsel %vm150, %v5041, 0.0
    %5046 = vadd.xlane.f32.xlu0 %v5045
    %v5047 = vpop.xlane.xlu0 %5046
    %v5048 = vrcp.pop %v5044
    %v5049 = vrcp.pop %v5047
    %v5050 = vmul.f32 %v5039, %v5048
    %v5051 = vmul.f32 %v5041, %v5049
    %5052 = vrot.lane.b32.xlu0 %v4036, 48
    %v5053 = vpop.permute.xlu0 %5052
    %v5056 = vsel %vm150, %v5050, 0
    %5058 = vmatprep.subr.mxu0 0.0
    %5059 = vmatpush1.msra.mxu0 %v5053
    %5060 = vmatprep.subr.mxu0 0.0
    %5061 = vmatpush1.msra.mxu0 0.0
    %5062 = vmatprep.subr.mxu0 0.0
    %5063 = vmatpush1.msra.mxu0 0.0
    %5064 = vmatprep.subr.mxu0 0.0
    %5065 = vmatpush1.msra.mxu0 0.0
    %5066 = vmatprep.subr.mxu0 0.0
    %5067 = vmatpush1.msra.mxu0 0.0
    %5068 = vmatprep.subr.mxu0 0.0
    %5069 = vmatpush1.msra.mxu0 0.0
    %5070 = vmatprep.subr.mxu0 0.0
    %5071 = vmatpush1.msra.mxu0 0.0
    %5072 = vmatprep.subr.mxu0 0.0
    %5073 = vmatpush1.msra.mxu0 0.0
    %5074 = vmatprep.subr.mxu0 0.0
    %5075 = vmatpush1.msra.mxu0 0.0
    %5076 = vmatprep.subr.mxu0 0.0
    %5077 = vmatpush1.msra.mxu0 0.0
    %5078 = vmatprep.subr.mxu0 0.0
    %5079 = vmatpush1.msra.mxu0 0.0
    %5080 = vmatprep.subr.mxu0 0.0
    %5081 = vmatpush1.msra.mxu0 0.0
    %5082 = vmatprep.subr.mxu0 0.0
    %5083 = vmatpush1.msra.mxu0 0.0
    %5084 = vmatprep.subr.mxu0 0.0
    %5085 = vmatpush1.msra.mxu0 0.0
    %5086 = vmatprep.subr.mxu0 0.0
    %5087 = vmatpush1.msra.mxu0 0.0
    %5088 = vmatprep.subr.mxu0 0.0
    %5089 = vmatpush1.msra.mxu0 0.0
    %5090 = vmatprep.subr.mxu0 0.0
    %5091 = vmatpush1.msra.mxu0 0.0
    %5092 = vmatprep.subr.mxu0 0.0
    %5093 = vmatpush1.msra.mxu0 0.0
    %5094 = vmatprep.subr.mxu0 0.0
    %5095 = vmatpush1.msra.mxu0 0.0
    %5096 = vmatprep.subr.mxu0 0.0
    %5097 = vmatpush1.msra.mxu0 0.0
    %5098 = vmatprep.subr.mxu0 0.0
    %5099 = vmatpush1.msra.mxu0 0.0
    %5100 = vmatprep.subr.mxu0 0.0
    %5101 = vmatpush1.msra.mxu0 0.0
    %5102 = vmatprep.subr.mxu0 0.0
    %5103 = vmatpush1.msra.mxu0 0.0
    %5104 = vmatprep.subr.mxu0 0.0
    %5105 = vmatpush1.msra.mxu0 0.0
    %5106 = vmatprep.subr.mxu0 0.0
    %5107 = vmatpush1.msra.mxu0 0.0
    %5108 = vmatprep.subr.mxu0 0.0
    %5109 = vmatpush1.msra.mxu0 0.0
    %5110 = vmatprep.subr.mxu0 0.0
    %5111 = vmatpush1.msra.mxu0 0.0
    %5112 = vmatprep.subr.mxu0 0.0
    %5113 = vmatpush1.msra.mxu0 0.0
    %5114 = vmatprep.subr.mxu0 0.0
    %5115 = vmatpush1.msra.mxu0 0.0
    %5116 = vmatprep.subr.mxu0 0.0
    %5117 = vmatpush1.msra.mxu0 0.0
    %5118 = vmatprep.subr.mxu0 0.0
    %5119 = vmatpush1.msra.mxu0 0.0
    %5120 = vmatprep.subr.mxu0 0.0
    %5121 = vmatpush1.msra.mxu0 0.0
    %5122 = vmatprep.mubr.f32.mxu0 0.0
    %5123 = vmatmul.mubr.f32.gmra.mrb[0].mxu0 %v5056
    %v5124 = vpop.f32.mrb[0].mxu0
    %v5125 = vadd.f32 0.0, %v5124
    %v5126 = vpop.f32.mrb[0].mxu0
    %5127 = vdwg.mxu0
    %5128 = vrot.lane.b32.xlu0 %v4041, 48
    %v5129 = vpop.permute.xlu0 %5128
    %v5132 = vsel %vm150, %v5051, 0
    %5134 = vmatprep.subr.mxu0 0.0
    %5135 = vmatpush1.msra.mxu0 %v5129
    %5136 = vmatprep.subr.mxu0 0.0
    %5137 = vmatpush1.msra.mxu0 0.0
    %5138 = vmatprep.subr.mxu0 0.0
    %5139 = vmatpush1.msra.mxu0 0.0
    %5140 = vmatprep.subr.mxu0 0.0
    %5141 = vmatpush1.msra.mxu0 0.0
    %5142 = vmatprep.subr.mxu0 0.0
    %5143 = vmatpush1.msra.mxu0 0.0
    %5144 = vmatprep.subr.mxu0 0.0
    %5145 = vmatpush1.msra.mxu0 0.0
    %5146 = vmatprep.subr.mxu0 0.0
    %5147 = vmatpush1.msra.mxu0 0.0
    %5148 = vmatprep.subr.mxu0 0.0
    %5149 = vmatpush1.msra.mxu0 0.0
    %5150 = vmatprep.subr.mxu0 0.0
    %5151 = vmatpush1.msra.mxu0 0.0
    %5152 = vmatprep.subr.mxu0 0.0
    %5153 = vmatpush1.msra.mxu0 0.0
    %5154 = vmatprep.subr.mxu0 0.0
    %5155 = vmatpush1.msra.mxu0 0.0
    %5156 = vmatprep.subr.mxu0 0.0
    %5157 = vmatpush1.msra.mxu0 0.0
    %5158 = vmatprep.subr.mxu0 0.0
    %5159 = vmatpush1.msra.mxu0 0.0
    %5160 = vmatprep.subr.mxu0 0.0
    %5161 = vmatpush1.msra.mxu0 0.0
    %5162 = vmatprep.subr.mxu0 0.0
    %5163 = vmatpush1.msra.mxu0 0.0
    %5164 = vmatprep.subr.mxu0 0.0
    %5165 = vmatpush1.msra.mxu0 0.0
    %5166 = vmatprep.subr.mxu0 0.0
    %5167 = vmatpush1.msra.mxu0 0.0
    %5168 = vmatprep.subr.mxu0 0.0
    %5169 = vmatpush1.msra.mxu0 0.0
    %5170 = vmatprep.subr.mxu0 0.0
    %5171 = vmatpush1.msra.mxu0 0.0
    %5172 = vmatprep.subr.mxu0 0.0
    %5173 = vmatpush1.msra.mxu0 0.0
    %5174 = vmatprep.subr.mxu0 0.0
    %5175 = vmatpush1.msra.mxu0 0.0
    %5176 = vmatprep.subr.mxu0 0.0
    %5177 = vmatpush1.msra.mxu0 0.0
    %5178 = vmatprep.subr.mxu0 0.0
    %5179 = vmatpush1.msra.mxu0 0.0
    %5180 = vmatprep.subr.mxu0 0.0
    %5181 = vmatpush1.msra.mxu0 0.0
    %5182 = vmatprep.subr.mxu0 0.0
    %5183 = vmatpush1.msra.mxu0 0.0
    %5184 = vmatprep.subr.mxu0 0.0
    %5185 = vmatpush1.msra.mxu0 0.0
    %5186 = vmatprep.subr.mxu0 0.0
    %5187 = vmatpush1.msra.mxu0 0.0
    %5188 = vmatprep.subr.mxu0 0.0
    %5189 = vmatpush1.msra.mxu0 0.0
    %5190 = vmatprep.subr.mxu0 0.0
    %5191 = vmatpush1.msra.mxu0 0.0
    %5192 = vmatprep.subr.mxu0 0.0
    %5193 = vmatpush1.msra.mxu0 0.0
    %5194 = vmatprep.subr.mxu0 0.0
    %5195 = vmatpush1.msra.mxu0 0.0
    %5196 = vmatprep.subr.mxu0 0.0
    %5197 = vmatpush1.msra.mxu0 0.0
    %5198 = vmatprep.mubr.f32.mxu0 0.0
    %5199 = vmatmul.mubr.f32.gmra.mrb[0].mxu0 %v5132
    %v5200 = vpop.f32.mrb[0].mxu0
    %v5201 = vadd.f32 0.0, %v5200
    %v5202 = vpop.f32.mrb[0].mxu0
    %5203 = vdwg.mxu0
    %s5204 = scalar_lea.vmem %s3, 48
    %v5205 = vld [vmem:[%s5204] sm:$0xff]
    %v5207 = vsel %vm150, %v5125, 0
    %v5210 = vsel %vm150, %v5201, 0
    %5212 = vmatprep.subr.mxu0 0.0
    %5213 = vmatpush1.msra.mxu0 %v5205
    %5214 = vmatprep.subr.mxu0 0.0
    %5215 = vmatpush1.msra.mxu0 0.0
    %5216 = vmatprep.subr.mxu0 0.0
    %5217 = vmatpush1.msra.mxu0 0.0
    %5218 = vmatprep.subr.mxu0 0.0
    %5219 = vmatpush1.msra.mxu0 0.0
    %5220 = vmatprep.subr.mxu0 0.0
    %5221 = vmatpush1.msra.mxu0 0.0
    %5222 = vmatprep.subr.mxu0 0.0
    %5223 = vmatpush1.msra.mxu0 0.0
    %5224 = vmatprep.subr.mxu0 0.0
    %5225 = vmatpush1.msra.mxu0 0.0
    %5226 = vmatprep.subr.mxu0 0.0
    %5227 = vmatpush1.msra.mxu0 0.0
    %5228 = vmatprep.subr.mxu0 0.0
    %5229 = vmatpush1.msra.mxu0 0.0
    %5230 = vmatprep.subr.mxu0 0.0
    %5231 = vmatpush1.msra.mxu0 0.0
    %5232 = vmatprep.subr.mxu0 0.0
    %5233 = vmatpush1.msra.mxu0 0.0
    %5234 = vmatprep.subr.mxu0 0.0
    %5235 = vmatpush1.msra.mxu0 0.0
    %5236 = vmatprep.subr.mxu0 0.0
    %5237 = vmatpush1.msra.mxu0 0.0
    %5238 = vmatprep.subr.mxu0 0.0
    %5239 = vmatpush1.msra.mxu0 0.0
    %5240 = vmatprep.subr.mxu0 0.0
    %5241 = vmatpush1.msra.mxu0 0.0
    %5242 = vmatprep.subr.mxu0 0.0
    %5243 = vmatpush1.msra.mxu0 0.0
    %5244 = vmatprep.subr.mxu0 0.0
    %5245 = vmatpush1.msra.mxu0 0.0
    %5246 = vmatprep.subr.mxu0 0.0
    %5247 = vmatpush1.msra.mxu0 0.0
    %5248 = vmatprep.subr.mxu0 0.0
    %5249 = vmatpush1.msra.mxu0 0.0
    %5250 = vmatprep.subr.mxu0 0.0
    %5251 = vmatpush1.msra.mxu0 0.0
    %5252 = vmatprep.subr.mxu0 0.0
    %5253 = vmatpush1.msra.mxu0 0.0
    %5254 = vmatprep.subr.mxu0 0.0
    %5255 = vmatpush1.msra.mxu0 0.0
    %5256 = vmatprep.subr.mxu0 0.0
    %5257 = vmatpush1.msra.mxu0 0.0
    %5258 = vmatprep.subr.mxu0 0.0
    %5259 = vmatpush1.msra.mxu0 0.0
    %5260 = vmatprep.subr.mxu0 0.0
    %5261 = vmatpush1.msra.mxu0 0.0
    %5262 = vmatprep.subr.mxu0 0.0
    %5263 = vmatpush1.msra.mxu0 0.0
    %5264 = vmatprep.subr.mxu0 0.0
    %5265 = vmatpush1.msra.mxu0 0.0
    %5266 = vmatprep.subr.mxu0 0.0
    %5267 = vmatpush1.msra.mxu0 0.0
    %5268 = vmatprep.subr.mxu0 0.0
    %5269 = vmatpush1.msra.mxu0 0.0
    %5270 = vmatprep.subr.mxu0 0.0
    %5271 = vmatpush1.msra.mxu0 0.0
    %5272 = vmatprep.subr.mxu0 0.0
    %5273 = vmatpush1.msra.mxu0 0.0
    %5274 = vmatprep.subr.mxu0 0.0
    %5275 = vmatpush1.msra.mxu0 0.0
    %5276 = vmatprep.mubr.f32.mxu0 0.0
    %5277 = vmatmul.mubr.f32.gmra.mrb[0].mxu0 %v5207
    %v5278 = vpop.f32.mrb[0].mxu0
    %v5279 = vadd.f32 0.0, %v5278
    %v5280 = vpop.f32.mrb[0].mxu0
    %5281 = vmatprep.mubr.f32.mxu0 0.0
    %5282 = vmatmul.mubr.f32.gmra.mrb[0].mxu0 %v5210
    %v5283 = vpop.f32.mrb[0].mxu0
    %v5284 = vadd.f32 0.0, %v5283
    %v5285 = vpop.f32.mrb[0].mxu0
    %5286 = vdwg.mxu0
    %v5287 = vadd.f32 %v4864, %v5279
    %v5288 = vadd.f32 %v4869, %v5284
    %5289 = vrot.lane.b32.xlu0 %v4036, 104
    %v5290 = vpop.permute.xlu0 %5289
    %5291 = vrot.lane.b32.xlu0 %v4036, 72
    %v5292 = vpop.permute.xlu0 %5291
    %v5293 = vsel %vm150, %v5290, 0
    %v5295 = vsel %vm150, %v5292, 0
    %5297 = vmatprep.subr.mxu0 0.0
    %5298 = vmatpush1.xpose.msra.mxu0 %v5295
    %5299 = vmatprep.subr.mxu0 0.0
    %5300 = vmatpush1.xpose.msra.mxu0 0.0
    %5301 = vmatprep.subr.mxu0 0.0
    %5302 = vmatpush1.xpose.msra.mxu0 0.0
    %5303 = vmatprep.subr.mxu0 0.0
    %5304 = vmatpush1.xpose.msra.mxu0 0.0
    %5305 = vmatprep.subr.mxu0 0.0
    %5306 = vmatpush1.xpose.msra.mxu0 0.0
    %5307 = vmatprep.subr.mxu0 0.0
    %5308 = vmatpush1.xpose.msra.mxu0 0.0
    %5309 = vmatprep.subr.mxu0 0.0
    %5310 = vmatpush1.xpose.msra.mxu0 0.0
    %5311 = vmatprep.subr.mxu0 0.0
    %5312 = vmatpush1.xpose.msra.mxu0 0.0
    %5313 = vmatprep.subr.mxu0 0.0
    %5314 = vmatpush1.xpose.msra.mxu0 0.0
    %5315 = vmatprep.subr.mxu0 0.0
    %5316 = vmatpush1.xpose.msra.mxu0 0.0
    %5317 = vmatprep.subr.mxu0 0.0
    %5318 = vmatpush1.xpose.msra.mxu0 0.0
    %5319 = vmatprep.subr.mxu0 0.0
    %5320 = vmatpush1.xpose.msra.mxu0 0.0
    %5321 = vmatprep.subr.mxu0 0.0
    %5322 = vmatpush1.xpose.msra.mxu0 0.0
    %5323 = vmatprep.subr.mxu0 0.0
    %5324 = vmatpush1.xpose.msra.mxu0 0.0
    %5325 = vmatprep.subr.mxu0 0.0
    %5326 = vmatpush1.xpose.msra.mxu0 0.0
    %5327 = vmatprep.subr.mxu0 0.0
    %5328 = vmatpush1.xpose.msra.mxu0 0.0
    %5329 = vmatprep.subr.mxu0 0.0
    %5330 = vmatpush1.xpose.msra.mxu0 0.0
    %5331 = vmatprep.subr.mxu0 0.0
    %5332 = vmatpush1.xpose.msra.mxu0 0.0
    %5333 = vmatprep.subr.mxu0 0.0
    %5334 = vmatpush1.xpose.msra.mxu0 0.0
    %5335 = vmatprep.subr.mxu0 0.0
    %5336 = vmatpush1.xpose.msra.mxu0 0.0
    %5337 = vmatprep.subr.mxu0 0.0
    %5338 = vmatpush1.xpose.msra.mxu0 0.0
    %5339 = vmatprep.subr.mxu0 0.0
    %5340 = vmatpush1.xpose.msra.mxu0 0.0
    %5341 = vmatprep.subr.mxu0 0.0
    %5342 = vmatpush1.xpose.msra.mxu0 0.0
    %5343 = vmatprep.subr.mxu0 0.0
    %5344 = vmatpush1.xpose.msra.mxu0 0.0
    %5345 = vmatprep.subr.mxu0 0.0
    %5346 = vmatpush1.xpose.msra.mxu0 0.0
    %5347 = vmatprep.subr.mxu0 0.0
    %5348 = vmatpush1.xpose.msra.mxu0 0.0
    %5349 = vmatprep.subr.mxu0 0.0
    %5350 = vmatpush1.xpose.msra.mxu0 0.0
    %5351 = vmatprep.subr.mxu0 0.0
    %5352 = vmatpush1.xpose.msra.mxu0 0.0
    %5353 = vmatprep.subr.mxu0 0.0
    %5354 = vmatpush1.xpose.msra.mxu0 0.0
    %5355 = vmatprep.subr.mxu0 0.0
    %5356 = vmatpush1.xpose.msra.mxu0 0.0
    %5357 = vmatprep.subr.mxu0 0.0
    %5358 = vmatpush1.xpose.msra.mxu0 0.0
    %5359 = vmatprep.subr.mxu0 0.0
    %5360 = vmatpush1.xpose.msra.mxu0 0.0
    %5361 = vmatprep.mubr.f32.mxu0 0.0
    %5362 = vmatmul.mubr.f32.gmra.mrb[0].mxu0 %v5293
    %v5363 = vpop.f32.mrb[0].mxu0
    %v5364 = vadd.f32 0.0, %v5363
    %v5365 = vpop.f32.mrb[0].mxu0
    %5366 = vdwg.mxu0
    %5367 = vrot.lane.b32.xlu0 %v4041, 104
    %v5368 = vpop.permute.xlu0 %5367
    %5369 = vrot.lane.b32.xlu0 %v4041, 72
    %v5370 = vpop.permute.xlu0 %5369
    %v5371 = vsel %vm150, %v5368, 0
    %v5373 = vsel %vm150, %v5370, 0
    %5375 = vmatprep.subr.mxu0 0.0
    %5376 = vmatpush1.xpose.msra.mxu0 %v5373
    %5377 = vmatprep.subr.mxu0 0.0
    %5378 = vmatpush1.xpose.msra.mxu0 0.0
    %5379 = vmatprep.subr.mxu0 0.0
    %5380 = vmatpush1.xpose.msra.mxu0 0.0
    %5381 = vmatprep.subr.mxu0 0.0
    %5382 = vmatpush1.xpose.msra.mxu0 0.0
    %5383 = vmatprep.subr.mxu0 0.0
    %5384 = vmatpush1.xpose.msra.mxu0 0.0
    %5385 = vmatprep.subr.mxu0 0.0
    %5386 = vmatpush1.xpose.msra.mxu0 0.0
    %5387 = vmatprep.subr.mxu0 0.0
    %5388 = vmatpush1.xpose.msra.mxu0 0.0
    %5389 = vmatprep.subr.mxu0 0.0
    %5390 = vmatpush1.xpose.msra.mxu0 0.0
    %5391 = vmatprep.subr.mxu0 0.0
    %5392 = vmatpush1.xpose.msra.mxu0 0.0
    %5393 = vmatprep.subr.mxu0 0.0
    %5394 = vmatpush1.xpose.msra.mxu0 0.0
    %5395 = vmatprep.subr.mxu0 0.0
    %5396 = vmatpush1.xpose.msra.mxu0 0.0
    %5397 = vmatprep.subr.mxu0 0.0
    %5398 = vmatpush1.xpose.msra.mxu0 0.0
    %5399 = vmatprep.subr.mxu0 0.0
    %5400 = vmatpush1.xpose.msra.mxu0 0.0
    %5401 = vmatprep.subr.mxu0 0.0
    %5402 = vmatpush1.xpose.msra.mxu0 0.0
    %5403 = vmatprep.subr.mxu0 0.0
    %5404 = vmatpush1.xpose.msra.mxu0 0.0
    %5405 = vmatprep.subr.mxu0 0.0
    %5406 = vmatpush1.xpose.msra.mxu0 0.0
    %5407 = vmatprep.subr.mxu0 0.0
    %5408 = vmatpush1.xpose.msra.mxu0 0.0
    %5409 = vmatprep.subr.mxu0 0.0
    %5410 = vmatpush1.xpose.msra.mxu0 0.0
    %5411 = vmatprep.subr.mxu0 0.0
    %5412 = vmatpush1.xpose.msra.mxu0 0.0
    %5413 = vmatprep.subr.mxu0 0.0
    %5414 = vmatpush1.xpose.msra.mxu0 0.0
    %5415 = vmatprep.subr.mxu0 0.0
    %5416 = vmatpush1.xpose.msra.mxu0 0.0
    %5417 = vmatprep.subr.mxu0 0.0
    %5418 = vmatpush1.xpose.msra.mxu0 0.0
    %5419 = vmatprep.subr.mxu0 0.0
    %5420 = vmatpush1.xpose.msra.mxu0 0.0
    %5421 = vmatprep.subr.mxu0 0.0
    %5422 = vmatpush1.xpose.msra.mxu0 0.0
    %5423 = vmatprep.subr.mxu0 0.0
    %5424 = vmatpush1.xpose.msra.mxu0 0.0
    %5425 = vmatprep.subr.mxu0 0.0
    %5426 = vmatpush1.xpose.msra.mxu0 0.0
    %5427 = vmatprep.subr.mxu0 0.0
    %5428 = vmatpush1.xpose.msra.mxu0 0.0
    %5429 = vmatprep.subr.mxu0 0.0
    %5430 = vmatpush1.xpose.msra.mxu0 0.0
    %5431 = vmatprep.subr.mxu0 0.0
    %5432 = vmatpush1.xpose.msra.mxu0 0.0
    %5433 = vmatprep.subr.mxu0 0.0
    %5434 = vmatpush1.xpose.msra.mxu0 0.0
    %5435 = vmatprep.subr.mxu0 0.0
    %5436 = vmatpush1.xpose.msra.mxu0 0.0
    %5437 = vmatprep.subr.mxu0 0.0
    %5438 = vmatpush1.xpose.msra.mxu0 0.0
    %5439 = vmatprep.mubr.f32.mxu0 0.0
    %5440 = vmatmul.mubr.f32.gmra.mrb[0].mxu0 %v5371
    %v5441 = vpop.f32.mrb[0].mxu0
    %v5442 = vadd.f32 0.0, %v5441
    %v5443 = vpop.f32.mrb[0].mxu0
    %5444 = vdwg.mxu0
    %v5445 = vmul.f32 %v5364, 0.35355338
    %v5446 = vmul.f32 %v5442, 0.35355338
    %v5447 = vsel %vm150, %v5445, -inf
    %5448 = vmax.xlane.f32.xlu0 %v5447
    %v5449 = vpop.xlane.xlu0 %5448
    %v5450 = vsel %vm150, %v5446, -inf
    %5451 = vmax.xlane.f32.xlu0 %v5450
    %v5452 = vpop.xlane.xlu0 %5451
    %v5453 = vsub.f32 %v5445, %v5449
    %v5454 = vsub.f32 %v5446, %v5452
    %v5455 = vmul.f32 %v5453, 1.442695
    %v5456 = vpow.pop %v5455
    %v5457 = vmul.f32 %v5454, 1.442695
    %v5458 = vpow.pop %v5457
    %v5459 = vsel %vm150, %v5456, 0.0
    %5460 = vadd.xlane.f32.xlu0 %v5459
    %v5461 = vpop.xlane.xlu0 %5460
    %v5462 = vsel %vm150, %v5458, 0.0
    %5463 = vadd.xlane.f32.xlu0 %v5462
    %v5464 = vpop.xlane.xlu0 %5463
    %v5465 = vrcp.pop %v5461
    %v5466 = vrcp.pop %v5464
    %v5467 = vmul.f32 %v5456, %v5465
    %v5468 = vmul.f32 %v5458, %v5466
    %5469 = vrot.lane.b32.xlu0 %v4036, 40
    %v5470 = vpop.permute.xlu0 %5469
    %v5473 = vsel %vm150, %v5467, 0
    %5475 = vmatprep.subr.mxu0 0.0
    %5476 = vmatpush1.msra.mxu0 %v5470
    %5477 = vmatprep.subr.mxu0 0.0
    %5478 = vmatpush1.msra.mxu0 0.0
    %5479 = vmatprep.subr.mxu0 0.0
    %5480 = vmatpush1.msra.mxu0 0.0
    %5481 = vmatprep.subr.mxu0 0.0
    %5482 = vmatpush1.msra.mxu0 0.0
    %5483 = vmatprep.subr.mxu0 0.0
    %5484 = vmatpush1.msra.mxu0 0.0
    %5485 = vmatprep.subr.mxu0 0.0
    %5486 = vmatpush1.msra.mxu0 0.0
    %5487 = vmatprep.subr.mxu0 0.0
    %5488 = vmatpush1.msra.mxu0 0.0
    %5489 = vmatprep.subr.mxu0 0.0
    %5490 = vmatpush1.msra.mxu0 0.0
    %5491 = vmatprep.subr.mxu0 0.0
    %5492 = vmatpush1.msra.mxu0 0.0
    %5493 = vmatprep.subr.mxu0 0.0
    %5494 = vmatpush1.msra.mxu0 0.0
    %5495 = vmatprep.subr.mxu0 0.0
    %5496 = vmatpush1.msra.mxu0 0.0
    %5497 = vmatprep.subr.mxu0 0.0
    %5498 = vmatpush1.msra.mxu0 0.0
    %5499 = vmatprep.subr.mxu0 0.0
    %5500 = vmatpush1.msra.mxu0 0.0
    %5501 = vmatprep.subr.mxu0 0.0
    %5502 = vmatpush1.msra.mxu0 0.0
    %5503 = vmatprep.subr.mxu0 0.0
    %5504 = vmatpush1.msra.mxu0 0.0
    %5505 = vmatprep.subr.mxu0 0.0
    %5506 = vmatpush1.msra.mxu0 0.0
    %5507 = vmatprep.subr.mxu0 0.0
    %5508 = vmatpush1.msra.mxu0 0.0
    %5509 = vmatprep.subr.mxu0 0.0
    %5510 = vmatpush1.msra.mxu0 0.0
    %5511 = vmatprep.subr.mxu0 0.0
    %5512 = vmatpush1.msra.mxu0 0.0
    %5513 = vmatprep.subr.mxu0 0.0
    %5514 = vmatpush1.msra.mxu0 0.0
    %5515 = vmatprep.subr.mxu0 0.0
    %5516 = vmatpush1.msra.mxu0 0.0
    %5517 = vmatprep.subr.mxu0 0.0
    %5518 = vmatpush1.msra.mxu0 0.0
    %5519 = vmatprep.subr.mxu0 0.0
    %5520 = vmatpush1.msra.mxu0 0.0
    %5521 = vmatprep.subr.mxu0 0.0
    %5522 = vmatpush1.msra.mxu0 0.0
    %5523 = vmatprep.subr.mxu0 0.0
    %5524 = vmatpush1.msra.mxu0 0.0
    %5525 = vmatprep.subr.mxu0 0.0
    %5526 = vmatpush1.msra.mxu0 0.0
    %5527 = vmatprep.subr.mxu0 0.0
    %5528 = vmatpush1.msra.mxu0 0.0
    %5529 = vmatprep.subr.mxu0 0.0
    %5530 = vmatpush1.msra.mxu0 0.0
    %5531 = vmatprep.subr.mxu0 0.0
    %5532 = vmatpush1.msra.mxu0 0.0
    %5533 = vmatprep.subr.mxu0 0.0
    %5534 = vmatpush1.msra.mxu0 0.0
    %5535 = vmatprep.subr.mxu0 0.0
    %5536 = vmatpush1.msra.mxu0 0.0
    %5537 = vmatprep.subr.mxu0 0.0
    %5538 = vmatpush1.msra.mxu0 0.0
    %5539 = vmatprep.mubr.f32.mxu0 0.0
    %5540 = vmatmul.mubr.f32.gmra.mrb[0].mxu0 %v5473
    %v5541 = vpop.f32.mrb[0].mxu0
    %v5542 = vadd.f32 0.0, %v5541
    %v5543 = vpop.f32.mrb[0].mxu0
    %5544 = vdwg.mxu0
    %5545 = vrot.lane.b32.xlu0 %v4041, 40
    %v5546 = vpop.permute.xlu0 %5545
    %v5549 = vsel %vm150, %v5468, 0
    %5551 = vmatprep.subr.mxu0 0.0
    %5552 = vmatpush1.msra.mxu0 %v5546
    %5553 = vmatprep.subr.mxu0 0.0
    %5554 = vmatpush1.msra.mxu0 0.0
    %5555 = vmatprep.subr.mxu0 0.0
    %5556 = vmatpush1.msra.mxu0 0.0
    %5557 = vmatprep.subr.mxu0 0.0
    %5558 = vmatpush1.msra.mxu0 0.0
    %5559 = vmatprep.subr.mxu0 0.0
    %5560 = vmatpush1.msra.mxu0 0.0
    %5561 = vmatprep.subr.mxu0 0.0
    %5562 = vmatpush1.msra.mxu0 0.0
    %5563 = vmatprep.subr.mxu0 0.0
    %5564 = vmatpush1.msra.mxu0 0.0
    %5565 = vmatprep.subr.mxu0 0.0
    %5566 = vmatpush1.msra.mxu0 0.0
    %5567 = vmatprep.subr.mxu0 0.0
    %5568 = vmatpush1.msra.mxu0 0.0
    %5569 = vmatprep.subr.mxu0 0.0
    %5570 = vmatpush1.msra.mxu0 0.0
    %5571 = vmatprep.subr.mxu0 0.0
    %5572 = vmatpush1.msra.mxu0 0.0
    %5573 = vmatprep.subr.mxu0 0.0
    %5574 = vmatpush1.msra.mxu0 0.0
    %5575 = vmatprep.subr.mxu0 0.0
    %5576 = vmatpush1.msra.mxu0 0.0
    %5577 = vmatprep.subr.mxu0 0.0
    %5578 = vmatpush1.msra.mxu0 0.0
    %5579 = vmatprep.subr.mxu0 0.0
    %5580 = vmatpush1.msra.mxu0 0.0
    %5581 = vmatprep.subr.mxu0 0.0
    %5582 = vmatpush1.msra.mxu0 0.0
    %5583 = vmatprep.subr.mxu0 0.0
    %5584 = vmatpush1.msra.mxu0 0.0
    %5585 = vmatprep.subr.mxu0 0.0
    %5586 = vmatpush1.msra.mxu0 0.0
    %5587 = vmatprep.subr.mxu0 0.0
    %5588 = vmatpush1.msra.mxu0 0.0
    %5589 = vmatprep.subr.mxu0 0.0
    %5590 = vmatpush1.msra.mxu0 0.0
    %5591 = vmatprep.subr.mxu0 0.0
    %5592 = vmatpush1.msra.mxu0 0.0
    %5593 = vmatprep.subr.mxu0 0.0
    %5594 = vmatpush1.msra.mxu0 0.0
    %5595 = vmatprep.subr.mxu0 0.0
    %5596 = vmatpush1.msra.mxu0 0.0
    %5597 = vmatprep.subr.mxu0 0.0
    %5598 = vmatpush1.msra.mxu0 0.0
    %5599 = vmatprep.subr.mxu0 0.0
    %5600 = vmatpush1.msra.mxu0 0.0
    %5601 = vmatprep.subr.mxu0 0.0
    %5602 = vmatpush1.msra.mxu0 0.0
    %5603 = vmatprep.subr.mxu0 0.0
    %5604 = vmatpush1.msra.mxu0 0.0
    %5605 = vmatprep.subr.mxu0 0.0
    %5606 = vmatpush1.msra.mxu0 0.0
    %5607 = vmatprep.subr.mxu0 0.0
    %5608 = vmatpush1.msra.mxu0 0.0
    %5609 = vmatprep.subr.mxu0 0.0
    %5610 = vmatpush1.msra.mxu0 0.0
    %5611 = vmatprep.subr.mxu0 0.0
    %5612 = vmatpush1.msra.mxu0 0.0
    %5613 = vmatprep.subr.mxu0 0.0
    %5614 = vmatpush1.msra.mxu0 0.0
    %5615 = vmatprep.mubr.f32.mxu0 0.0
    %5616 = vmatmul.mubr.f32.gmra.mrb[0].mxu0 %v5549
    %v5617 = vpop.f32.mrb[0].mxu0
    %v5618 = vadd.f32 0.0, %v5617
    %v5619 = vpop.f32.mrb[0].mxu0
    %5620 = vdwg.mxu0
    %s5621 = scalar_lea.vmem %s3, 56
    %v5622 = vld [vmem:[%s5621] sm:$0xff]
    %v5624 = vsel %vm150, %v5542, 0
    %v5627 = vsel %vm150, %v5618, 0
    %5629 = vmatprep.subr.mxu0 0.0
    %5630 = vmatpush1.msra.mxu0 %v5622
    %5631 = vmatprep.subr.mxu0 0.0
    %5632 = vmatpush1.msra.mxu0 0.0
    %5633 = vmatprep.subr.mxu0 0.0
    %5634 = vmatpush1.msra.mxu0 0.0
    %5635 = vmatprep.subr.mxu0 0.0
    %5636 = vmatpush1.msra.mxu0 0.0
    %5637 = vmatprep.subr.mxu0 0.0
    %5638 = vmatpush1.msra.mxu0 0.0
    %5639 = vmatprep.subr.mxu0 0.0
    %5640 = vmatpush1.msra.mxu0 0.0
    %5641 = vmatprep.subr.mxu0 0.0
    %5642 = vmatpush1.msra.mxu0 0.0
    %5643 = vmatprep.subr.mxu0 0.0
    %5644 = vmatpush1.msra.mxu0 0.0
    %5645 = vmatprep.subr.mxu0 0.0
    %5646 = vmatpush1.msra.mxu0 0.0
    %5647 = vmatprep.subr.mxu0 0.0
    %5648 = vmatpush1.msra.mxu0 0.0
    %5649 = vmatprep.subr.mxu0 0.0
    %5650 = vmatpush1.msra.mxu0 0.0
    %5651 = vmatprep.subr.mxu0 0.0
    %5652 = vmatpush1.msra.mxu0 0.0
    %5653 = vmatprep.subr.mxu0 0.0
    %5654 = vmatpush1.msra.mxu0 0.0
    %5655 = vmatprep.subr.mxu0 0.0
    %5656 = vmatpush1.msra.mxu0 0.0
    %5657 = vmatprep.subr.mxu0 0.0
    %5658 = vmatpush1.msra.mxu0 0.0
    %5659 = vmatprep.subr.mxu0 0.0
    %5660 = vmatpush1.msra.mxu0 0.0
    %5661 = vmatprep.subr.mxu0 0.0
    %5662 = vmatpush1.msra.mxu0 0.0
    %5663 = vmatprep.subr.mxu0 0.0
    %5664 = vmatpush1.msra.mxu0 0.0
    %5665 = vmatprep.subr.mxu0 0.0
    %5666 = vmatpush1.msra.mxu0 0.0
    %5667 = vmatprep.subr.mxu0 0.0
    %5668 = vmatpush1.msra.mxu0 0.0
    %5669 = vmatprep.subr.mxu0 0.0
    %5670 = vmatpush1.msra.mxu0 0.0
    %5671 = vmatprep.subr.mxu0 0.0
    %5672 = vmatpush1.msra.mxu0 0.0
    %5673 = vmatprep.subr.mxu0 0.0
    %5674 = vmatpush1.msra.mxu0 0.0
    %5675 = vmatprep.subr.mxu0 0.0
    %5676 = vmatpush1.msra.mxu0 0.0
    %5677 = vmatprep.subr.mxu0 0.0
    %5678 = vmatpush1.msra.mxu0 0.0
    %5679 = vmatprep.subr.mxu0 0.0
    %5680 = vmatpush1.msra.mxu0 0.0
    %5681 = vmatprep.subr.mxu0 0.0
    %5682 = vmatpush1.msra.mxu0 0.0
    %5683 = vmatprep.subr.mxu0 0.0
    %5684 = vmatpush1.msra.mxu0 0.0
    %5685 = vmatprep.subr.mxu0 0.0
    %5686 = vmatpush1.msra.mxu0 0.0
    %5687 = vmatprep.subr.mxu0 0.0
    %5688 = vmatpush1.msra.mxu0 0.0
    %5689 = vmatprep.subr.mxu0 0.0
    %5690 = vmatpush1.msra.mxu0 0.0
    %5691 = vmatprep.subr.mxu0 0.0
    %5692 = vmatpush1.msra.mxu0 0.0
    %5693 = vmatprep.mubr.f32.mxu0 0.0
    %5694 = vmatmul.mubr.f32.gmra.mrb[0].mxu0 %v5624
    %v5695 = vpop.f32.mrb[0].mxu0
    %v5696 = vadd.f32 0.0, %v5695
    %v5697 = vpop.f32.mrb[0].mxu0
    %5698 = vmatprep.mubr.f32.mxu0 0.0
    %5699 = vmatmul.mubr.f32.gmra.mrb[0].mxu0 %v5627
    %v5700 = vpop.f32.mrb[0].mxu0
    %v5701 = vadd.f32 0.0, %v5700
    %v5702 = vpop.f32.mrb[0].mxu0
    %5703 = vdwg.mxu0
    %v5704 = vadd.f32 %v5287, %v5696
    %v5705 = vadd.f32 %v5288, %v5701
    %s5706 = scalar_lea.vmem %s4, 1
    %v5707 = vld [vmem:[%s5706] sm:$0x1]
    %v5709 = vlaneseq
    %v5710 = vshrl.u32 %v5709, 7
    %v5711 = vsub.s32 0, %v5710
    %v5712 = vrot.slane %v5707, %v5711
    %v5714 = vadd.f32 %v5704, %v5712
    %v5715 = vadd.f32 %v5705, %v5712
    %v5716 = vadd.f32 %v3948, %v5714
    %v5717 = vadd.f32 %v3949, %v5715
    %s5718 = scalar_lea.vmem %s5, 1
    %v5719 = vld [vmem:[%s5718] sm:$0x1]
    %s5720 = scalar_lea.vmem %s6, 1
    %v5721 = vld [vmem:[%s5720] sm:$0x1]
    %v5722 = vsel %vm65, %v5716, 0.0
    %5723 = vadd.xlane.f32.xlu0 %v5722
    %v5724 = vpop.xlane.xlu0 %5723
    %v5725 = vsel %vm65, %v5717, 0.0
    %5726 = vadd.xlane.f32.xlu0 %v5725
    %v5727 = vpop.xlane.xlu0 %5726
    %v5728 = vmul.f32 %v5724, %v1828
    %v5729 = vmul.f32 %v5727, %v1828
    %v5730 = vmul.f32 %v5716, %v5716
    %v5731 = vmul.f32 %v5717, %v5717
    %v5732 = vsel %vm65, %v5730, 0.0
    %5733 = vadd.xlane.f32.xlu0 %v5732
    %v5734 = vpop.xlane.xlu0 %5733
    %v5735 = vsel %vm65, %v5731, 0.0
    %5736 = vadd.xlane.f32.xlu0 %v5735
    %v5737 = vpop.xlane.xlu0 %5736
    %v5738 = vmul.f32 %v5734, %v1828
    %v5739 = vmul.f32 %v5737, %v1828
    %v5740 = vmul.f32 %v5728, %v5728
    %v5741 = vmul.f32 %v5729, %v5729
    %v5742 = vsub.f32 %v5738, %v5740
    %v5743 = vsub.f32 %v5739, %v5741
    %v5744 = vsub.f32 %v5716, %v5728
    %v5745 = vsub.f32 %v5717, %v5729
    %v5746 = vadd.f32 %v5742, 1e-05
    %v5747 = vadd.f32 %v5743, 1e-05
    %v5748 = vrsqrt.pop %v5746
    %v5749 = vrsqrt.pop %v5747
    %v5750 = vmul.f32 %v5744, %v5748
    %v5751 = vmul.f32 %v5745, %v5749
    %v5753 = vlaneseq
    %v5754 = vshrl.u32 %v5753, 7
    %v5755 = vsub.s32 0, %v5754
    %v5756 = vrot.slane %v5719, %v5755
    %v5758 = vmul.f32 %v5750, %v5756
    %v5759 = vmul.f32 %v5751, %v5756
    %v5761 = vlaneseq
    %v5762 = vshrl.u32 %v5761, 7
    %v5763 = vsub.s32 0, %v5762
    %v5764 = vrot.slane %v5721, %v5763
    %v5766 = vadd.f32 %v5758, %v5764
    %v5767 = vadd.f32 %v5759, %v5764
    %v5768 = vpack.c.bf16 %v5767, %v5766
    %s5769 = scalar_lea.vmem %s9, 256
    %v5770 = vld [vmem:[%s5769] sm:$0xff]
    %v5771 = vld [vmem:[%s5769 + $0x8] sm:$0xff]
    %v5772 = vld [vmem:[%s5769 + $0x10] sm:$0xff]
    %v5773 = vld [vmem:[%s5769 + $0x18] sm:$0xff]
    %v5774 = vld [vmem:[%s5769 + $0x20] sm:$0xff]
    %v5775 = vld [vmem:[%s5769 + $0x28] sm:$0xff]
    %v5776 = vld [vmem:[%s5769 + $0x30] sm:$0xff]
    %v5777 = vld [vmem:[%s5769 + $0x38] sm:$0xff]
    %v5778 = vld [vmem:[%s5769 + $0x40] sm:$0xff]
    %v5779 = vld [vmem:[%s5769 + $0x48] sm:$0xff]
    %v5780 = vld [vmem:[%s5769 + $0x50] sm:$0xff]
    %v5781 = vld [vmem:[%s5769 + $0x58] sm:$0xff]
    %v5782 = vld [vmem:[%s5769 + $0x60] sm:$0xff]
    %v5783 = vld [vmem:[%s5769 + $0x68] sm:$0xff]
    %v5784 = vld [vmem:[%s5769 + $0x70] sm:$0xff]
    %v5785 = vld [vmem:[%s5769 + $0x78] sm:$0xff]
    %v5786 = vld [vmem:[%s5769 + $0x80] sm:$0xff]
    %v5787 = vld [vmem:[%s5769 + $0x88] sm:$0xff]
    %v5788 = vld [vmem:[%s5769 + $0x90] sm:$0xff]
    %v5789 = vld [vmem:[%s5769 + $0x98] sm:$0xff]
    %v5790 = vld [vmem:[%s5769 + $0xa0] sm:$0xff]
    %v5791 = vld [vmem:[%s5769 + $0xa8] sm:$0xff]
    %v5792 = vld [vmem:[%s5769 + $0xb0] sm:$0xff]
    %v5793 = vld [vmem:[%s5769 + $0xb8] sm:$0xff]
    %v5794 = vld [vmem:[%s5769 + $0xc0] sm:$0xff]
    %v5795 = vld [vmem:[%s5769 + $0xc8] sm:$0xff]
    %v5796 = vld [vmem:[%s5769 + $0xd0] sm:$0xff]
    %v5797 = vld [vmem:[%s5769 + $0xd8] sm:$0xff]
    %v5798 = vld [vmem:[%s5769 + $0xe0] sm:$0xff]
    %v5799 = vld [vmem:[%s5769 + $0xe8] sm:$0xff]
    %v5800 = vld [vmem:[%s5769 + $0xf0] sm:$0xff]
    %v5801 = vld [vmem:[%s5769 + $0xf8] sm:$0xff]
    %s5802 = scalar_lea.vmem %s10, 16
    %v5803 = vld [vmem:[%s5802] sm:$0xff]
    %v5804 = vld [vmem:[%s5802 + $0x8] sm:$0xff]
    %v5807 = vlaneseq
    %v5808 = vshrl.u32 %v5807, 7
    %v5809 = vsub.s32 0, %v5808
    %v5810 = vrot.slane %v5803, %v5809
    %v5811 = vlaneseq
    %v5812 = vshrl.u32 %v5811, 7
    %v5813 = vsub.s32 1, %v5812
    %v5814 = vrot.slane %v5803, %v5813
    %v5815 = vlaneseq
    %v5816 = vshrl.u32 %v5815, 7
    %v5817 = vsub.s32 2, %v5816
    %v5818 = vrot.slane %v5803, %v5817
    %v5819 = vlaneseq
    %v5820 = vshrl.u32 %v5819, 7
    %v5821 = vsub.s32 3, %v5820
    %v5822 = vrot.slane %v5803, %v5821
    %v5823 = vlaneseq
    %v5824 = vshrl.u32 %v5823, 7
    %v5825 = vsub.s32 4, %v5824
    %v5826 = vrot.slane %v5803, %v5825
    %v5827 = vlaneseq
    %v5828 = vshrl.u32 %v5827, 7
    %v5829 = vsub.s32 5, %v5828
    %v5830 = vrot.slane %v5803, %v5829
    %v5831 = vlaneseq
    %v5832 = vshrl.u32 %v5831, 7
    %v5833 = vsub.s32 6, %v5832
    %v5834 = vrot.slane %v5803, %v5833
    %v5835 = vlaneseq
    %v5836 = vshrl.u32 %v5835, 7
    %v5837 = vsub.s32 7, %v5836
    %v5838 = vrot.slane %v5803, %v5837
    %v5839 = vlaneseq
    %v5840 = vshrl.u32 %v5839, 7
    %v5841 = vsub.s32 0, %v5840
    %v5842 = vrot.slane %v5804, %v5841
    %v5843 = vlaneseq
    %v5844 = vshrl.u32 %v5843, 7
    %v5845 = vsub.s32 1, %v5844
    %v5846 = vrot.slane %v5804, %v5845
    %v5847 = vlaneseq
    %v5848 = vshrl.u32 %v5847, 7
    %v5849 = vsub.s32 2, %v5848
    %v5850 = vrot.slane %v5804, %v5849
    %v5851 = vlaneseq
    %v5852 = vshrl.u32 %v5851, 7
    %v5853 = vsub.s32 3, %v5852
    %v5854 = vrot.slane %v5804, %v5853
    %v5855 = vlaneseq
    %v5856 = vshrl.u32 %v5855, 7
    %v5857 = vsub.s32 4, %v5856
    %v5858 = vrot.slane %v5804, %v5857
    %v5859 = vlaneseq
    %v5860 = vshrl.u32 %v5859, 7
    %v5861 = vsub.s32 5, %v5860
    %v5862 = vrot.slane %v5804, %v5861
    %v5863 = vlaneseq
    %v5864 = vshrl.u32 %v5863, 7
    %v5865 = vsub.s32 6, %v5864
    %v5866 = vrot.slane %v5804, %v5865
    %v5867 = vlaneseq
    %v5868 = vshrl.u32 %v5867, 7
    %v5869 = vsub.s32 7, %v5868
    %v5870 = vrot.slane %v5804, %v5869
    %v5919 = vunpack.c.l.b16 %v5770
    %v5920 = vunpack.c.h.b16 %v5770
    %v5921 = vunpack.c.l.b16 %v5771
    %v5922 = vunpack.c.h.b16 %v5771
    %v5923 = vunpack.c.l.b16 %v5772
    %v5924 = vunpack.c.h.b16 %v5772
    %v5925 = vunpack.c.l.b16 %v5773
    %v5926 = vunpack.c.h.b16 %v5773
    %v5927 = vunpack.c.l.b16 %v5774
    %v5928 = vunpack.c.h.b16 %v5774
    %v5929 = vunpack.c.l.b16 %v5775
    %v5930 = vunpack.c.h.b16 %v5775
    %v5931 = vunpack.c.l.b16 %v5776
    %v5932 = vunpack.c.h.b16 %v5776
    %v5933 = vunpack.c.l.b16 %v5777
    %v5934 = vunpack.c.h.b16 %v5777
    %v5935 = vunpack.c.l.b16 %v5778
    %v5936 = vunpack.c.h.b16 %v5778
    %v5937 = vunpack.c.l.b16 %v5779
    %v5938 = vunpack.c.h.b16 %v5779
    %v5939 = vunpack.c.l.b16 %v5780
    %v5940 = vunpack.c.h.b16 %v5780
    %v5941 = vunpack.c.l.b16 %v5781
    %v5942 = vunpack.c.h.b16 %v5781
    %v5943 = vunpack.c.l.b16 %v5782
    %v5944 = vunpack.c.h.b16 %v5782
    %v5945 = vunpack.c.l.b16 %v5783
    %v5946 = vunpack.c.h.b16 %v5783
    %v5947 = vunpack.c.l.b16 %v5784
    %v5948 = vunpack.c.h.b16 %v5784
    %v5949 = vunpack.c.l.b16 %v5785
    %v5950 = vunpack.c.h.b16 %v5785
    %v5951 = vunpack.c.l.b16 %v5786
    %v5952 = vunpack.c.h.b16 %v5786
    %v5953 = vunpack.c.l.b16 %v5787
    %v5954 = vunpack.c.h.b16 %v5787
    %v5955 = vunpack.c.l.b16 %v5788
    %v5956 = vunpack.c.h.b16 %v5788
    %v5957 = vunpack.c.l.b16 %v5789
    %v5958 = vunpack.c.h.b16 %v5789
    %v5959 = vunpack.c.l.b16 %v5790
    %v5960 = vunpack.c.h.b16 %v5790
    %v5961 = vunpack.c.l.b16 %v5791
    %v5962 = vunpack.c.h.b16 %v5791
    %v5963 = vunpack.c.l.b16 %v5792
    %v5964 = vunpack.c.h.b16 %v5792
    %v5965 = vunpack.c.l.b16 %v5793
    %v5966 = vunpack.c.h.b16 %v5793
    %v5967 = vunpack.c.l.b16 %v5794
    %v5968 = vunpack.c.h.b16 %v5794
    %v5969 = vunpack.c.l.b16 %v5795
    %v5970 = vunpack.c.h.b16 %v5795
    %v5971 = vunpack.c.l.b16 %v5796
    %v5972 = vunpack.c.h.b16 %v5796
    %v5973 = vunpack.c.l.b16 %v5797
    %v5974 = vunpack.c.h.b16 %v5797
    %v5975 = vunpack.c.l.b16 %v5798
    %v5976 = vunpack.c.h.b16 %v5798
    %v5977 = vunpack.c.l.b16 %v5799
    %v5978 = vunpack.c.h.b16 %v5799
    %v5979 = vunpack.c.l.b16 %v5800
    %v5980 = vunpack.c.h.b16 %v5800
    %v5981 = vunpack.c.l.b16 %v5801
    %v5982 = vunpack.c.h.b16 %v5801
    %v5983 = vpack.c.b16 %v5935, %v5919
    %v5984 = vpack.c.b16 %v5936, %v5920
    %v5985 = vpack.c.b16 %v5937, %v5921
    %v5986 = vpack.c.b16 %v5938, %v5922
    %v5987 = vpack.c.b16 %v5939, %v5923
    %v5988 = vpack.c.b16 %v5940, %v5924
    %v5989 = vpack.c.b16 %v5941, %v5925
    %v5990 = vpack.c.b16 %v5942, %v5926
    %v5991 = vpack.c.b16 %v5943, %v5927
    %v5992 = vpack.c.b16 %v5944, %v5928
    %v5993 = vpack.c.b16 %v5945, %v5929
    %v5994 = vpack.c.b16 %v5946, %v5930
    %v5995 = vpack.c.b16 %v5947, %v5931
    %v5996 = vpack.c.b16 %v5948, %v5932
    %v5997 = vpack.c.b16 %v5949, %v5933
    %v5998 = vpack.c.b16 %v5950, %v5934
    %v5999 = vpack.c.b16 %v5967, %v5951
    %v6000 = vpack.c.b16 %v5968, %v5952
    %v6001 = vpack.c.b16 %v5969, %v5953
    %v6002 = vpack.c.b16 %v5970, %v5954
    %v6003 = vpack.c.b16 %v5971, %v5955
    %v6004 = vpack.c.b16 %v5972, %v5956
    %v6005 = vpack.c.b16 %v5973, %v5957
    %v6006 = vpack.c.b16 %v5974, %v5958
    %v6007 = vpack.c.b16 %v5975, %v5959
    %v6008 = vpack.c.b16 %v5976, %v5960
    %v6009 = vpack.c.b16 %v5977, %v5961
    %v6010 = vpack.c.b16 %v5978, %v5962
    %v6011 = vpack.c.b16 %v5979, %v5963
    %v6012 = vpack.c.b16 %v5980, %v5964
    %v6013 = vpack.c.b16 %v5981, %v5965
    %v6014 = vpack.c.b16 %v5982, %v5966
    %v6048 = vsel %vm65, %v5768, 0
    %6050 = vmatprep.subr.bf16.mxu0 %v5984
    %6051 = vmatpush1.bf16.msra.mxu0 %v5983
    %6052 = vmatprep.subr.bf16.mxu0 %v6000
    %6053 = vmatpush1.bf16.msra.mxu0 %v5999
    %6054 = vmatprep.subr.bf16.mxu0 0
    %6055 = vmatpush1.bf16.msra.mxu0 0
    %6056 = vmatprep.subr.bf16.mxu0 0
    %6057 = vmatpush1.bf16.msra.mxu0 0
    %6058 = vmatprep.subr.bf16.mxu0 0
    %6059 = vmatpush1.bf16.msra.mxu0 0
    %6060 = vmatprep.subr.bf16.mxu0 0
    %6061 = vmatpush1.bf16.msra.mxu0 0
    %6062 = vmatprep.subr.bf16.mxu0 0
    %6063 = vmatpush1.bf16.msra.mxu0 0
    %6064 = vmatprep.subr.bf16.mxu0 0
    %6065 = vmatpush1.bf16.msra.mxu0 0
    %6066 = vmatprep.subr.bf16.mxu0 0
    %6067 = vmatpush1.bf16.msra.mxu0 0
    %6068 = vmatprep.subr.bf16.mxu0 0
    %6069 = vmatpush1.bf16.msra.mxu0 0
    %6070 = vmatprep.subr.bf16.mxu0 0
    %6071 = vmatpush1.bf16.msra.mxu0 0
    %6072 = vmatprep.subr.bf16.mxu0 0
    %6073 = vmatpush1.bf16.msra.mxu0 0
    %6074 = vmatprep.subr.bf16.mxu0 0
    %6075 = vmatpush1.bf16.msra.mxu0 0
    %6076 = vmatprep.subr.bf16.mxu0 0
    %6077 = vmatpush1.bf16.msra.mxu0 0
    %6078 = vmatprep.subr.bf16.mxu0 0
    %6079 = vmatpush1.bf16.msra.mxu0 0
    %6080 = vmatprep.subr.bf16.mxu0 0
    %6081 = vmatpush1.bf16.msra.mxu0 0
    %6082 = vmatprep.mubr.bf16.mxu0 0
    %6083 = vmatmul.mubr.bf16.gmra.mrb[0].mxu0 %v6048
    %v6084 = vpop.f32.mrb[0].mxu0
    %v6085 = vadd.f32 %v5810, %v6084
    %v6086 = vpop.f32.mrb[0].mxu0
    %v6087 = vadd.f32 %v5814, %v6086
    %v6088 = vpop.f32.mrb[0].mxu0
    %v6089 = vadd.f32 %v5810, %v6088
    %v6090 = vpop.f32.mrb[0].mxu0
    %v6091 = vadd.f32 %v5814, %v6090
    %6092 = vdwg.mxu0
    %6093 = vmatprep.subr.bf16.mxu0 %v5986
    %6094 = vmatpush1.bf16.msra.mxu0 %v5985
    %6095 = vmatprep.subr.bf16.mxu0 %v6002
    %6096 = vmatpush1.bf16.msra.mxu0 %v6001
    %6097 = vmatprep.subr.bf16.mxu0 0
    %6098 = vmatpush1.bf16.msra.mxu0 0
    %6099 = vmatprep.subr.bf16.mxu0 0
    %6100 = vmatpush1.bf16.msra.mxu0 0
    %6101 = vmatprep.subr.bf16.mxu0 0
    %6102 = vmatpush1.bf16.msra.mxu0 0
    %6103 = vmatprep.subr.bf16.mxu0 0
    %6104 = vmatpush1.bf16.msra.mxu0 0
    %6105 = vmatprep.subr.bf16.mxu0 0
    %6106 = vmatpush1.bf16.msra.mxu0 0
    %6107 = vmatprep.subr.bf16.mxu0 0
    %6108 = vmatpush1.bf16.msra.mxu0 0
    %6109 = vmatprep.subr.bf16.mxu0 0
    %6110 = vmatpush1.bf16.msra.mxu0 0
    %6111 = vmatprep.subr.bf16.mxu0 0
    %6112 = vmatpush1.bf16.msra.mxu0 0
    %6113 = vmatprep.subr.bf16.mxu0 0
    %6114 = vmatpush1.bf16.msra.mxu0 0
    %6115 = vmatprep.subr.bf16.mxu0 0
    %6116 = vmatpush1.bf16.msra.mxu0 0
    %6117 = vmatprep.subr.bf16.mxu0 0
    %6118 = vmatpush1.bf16.msra.mxu0 0
    %6119 = vmatprep.subr.bf16.mxu0 0
    %6120 = vmatpush1.bf16.msra.mxu0 0
    %6121 = vmatprep.subr.bf16.mxu0 0
    %6122 = vmatpush1.bf16.msra.mxu0 0
    %6123 = vmatprep.subr.bf16.mxu0 0
    %6124 = vmatpush1.bf16.msra.mxu0 0
    %6125 = vmatprep.mubr.bf16.mxu0 0
    %6126 = vmatmul.mubr.bf16.gmra.mrb[0].mxu0 %v6048
    %v6127 = vpop.f32.mrb[0].mxu0
    %v6128 = vadd.f32 %v5818, %v6127
    %v6129 = vpop.f32.mrb[0].mxu0
    %v6130 = vadd.f32 %v5822, %v6129
    %v6131 = vpop.f32.mrb[0].mxu0
    %v6132 = vadd.f32 %v5818, %v6131
    %v6133 = vpop.f32.mrb[0].mxu0
    %v6134 = vadd.f32 %v5822, %v6133
    %6135 = vdwg.mxu0
    %6136 = vmatprep.subr.bf16.mxu0 %v5988
    %6137 = vmatpush1.bf16.msra.mxu0 %v5987
    %6138 = vmatprep.subr.bf16.mxu0 %v6004
    %6139 = vmatpush1.bf16.msra.mxu0 %v6003
    %6140 = vmatprep.subr.bf16.mxu0 0
    %6141 = vmatpush1.bf16.msra.mxu0 0
    %6142 = vmatprep.subr.bf16.mxu0 0
    %6143 = vmatpush1.bf16.msra.mxu0 0
    %6144 = vmatprep.subr.bf16.mxu0 0
    %6145 = vmatpush1.bf16.msra.mxu0 0
    %6146 = vmatprep.subr.bf16.mxu0 0
    %6147 = vmatpush1.bf16.msra.mxu0 0
    %6148 = vmatprep.subr.bf16.mxu0 0
    %6149 = vmatpush1.bf16.msra.mxu0 0
    %6150 = vmatprep.subr.bf16.mxu0 0
    %6151 = vmatpush1.bf16.msra.mxu0 0
    %6152 = vmatprep.subr.bf16.mxu0 0
    %6153 = vmatpush1.bf16.msra.mxu0 0
    %6154 = vmatprep.subr.bf16.mxu0 0
    %6155 = vmatpush1.bf16.msra.mxu0 0
    %6156 = vmatprep.subr.bf16.mxu0 0
    %6157 = vmatpush1.bf16.msra.mxu0 0
    %6158 = vmatprep.subr.bf16.mxu0 0
    %6159 = vmatpush1.bf16.msra.mxu0 0
    %6160 = vmatprep.subr.bf16.mxu0 0
    %6161 = vmatpush1.bf16.msra.mxu0 0
    %6162 = vmatprep.subr.bf16.mxu0 0
    %6163 = vmatpush1.bf16.msra.mxu0 0
    %6164 = vmatprep.subr.bf16.mxu0 0
    %6165 = vmatpush1.bf16.msra.mxu0 0
    %6166 = vmatprep.subr.bf16.mxu0 0
    %6167 = vmatpush1.bf16.msra.mxu0 0
    %6168 = vmatprep.mubr.bf16.mxu0 0
    %6169 = vmatmul.mubr.bf16.gmra.mrb[0].mxu0 %v6048
    %v6170 = vpop.f32.mrb[0].mxu0
    %v6171 = vadd.f32 %v5826, %v6170
    %v6172 = vpop.f32.mrb[0].mxu0
    %v6173 = vadd.f32 %v5830, %v6172
    %v6174 = vpop.f32.mrb[0].mxu0
    %v6175 = vadd.f32 %v5826, %v6174
    %v6176 = vpop.f32.mrb[0].mxu0
    %v6177 = vadd.f32 %v5830, %v6176
    %6178 = vdwg.mxu0
    %6179 = vmatprep.subr.bf16.mxu0 %v5990
    %6180 = vmatpush1.bf16.msra.mxu0 %v5989
    %6181 = vmatprep.subr.bf16.mxu0 %v6006
    %6182 = vmatpush1.bf16.msra.mxu0 %v6005
    %6183 = vmatprep.subr.bf16.mxu0 0
    %6184 = vmatpush1.bf16.msra.mxu0 0
    %6185 = vmatprep.subr.bf16.mxu0 0
    %6186 = vmatpush1.bf16.msra.mxu0 0
    %6187 = vmatprep.subr.bf16.mxu0 0
    %6188 = vmatpush1.bf16.msra.mxu0 0
    %6189 = vmatprep.subr.bf16.mxu0 0
    %6190 = vmatpush1.bf16.msra.mxu0 0
    %6191 = vmatprep.subr.bf16.mxu0 0
    %6192 = vmatpush1.bf16.msra.mxu0 0
    %6193 = vmatprep.subr.bf16.mxu0 0
    %6194 = vmatpush1.bf16.msra.mxu0 0
    %6195 = vmatprep.subr.bf16.mxu0 0
    %6196 = vmatpush1.bf16.msra.mxu0 0
    %6197 = vmatprep.subr.bf16.mxu0 0
    %6198 = vmatpush1.bf16.msra.mxu0 0
    %6199 = vmatprep.subr.bf16.mxu0 0
    %6200 = vmatpush1.bf16.msra.mxu0 0
    %6201 = vmatprep.subr.bf16.mxu0 0
    %6202 = vmatpush1.bf16.msra.mxu0 0
    %6203 = vmatprep.subr.bf16.mxu0 0
    %6204 = vmatpush1.bf16.msra.mxu0 0
    %6205 = vmatprep.subr.bf16.mxu0 0
    %6206 = vmatpush1.bf16.msra.mxu0 0
    %6207 = vmatprep.subr.bf16.mxu0 0
    %6208 = vmatpush1.bf16.msra.mxu0 0
    %6209 = vmatprep.subr.bf16.mxu0 0
    %6210 = vmatpush1.bf16.msra.mxu0 0
    %6211 = vmatprep.mubr.bf16.mxu0 0
    %6212 = vmatmul.mubr.bf16.gmra.mrb[0].mxu0 %v6048
    %v6213 = vpop.f32.mrb[0].mxu0
    %v6214 = vadd.f32 %v5834, %v6213
    %v6215 = vpop.f32.mrb[0].mxu0
    %v6216 = vadd.f32 %v5838, %v6215
    %v6217 = vpop.f32.mrb[0].mxu0
    %v6218 = vadd.f32 %v5834, %v6217
    %v6219 = vpop.f32.mrb[0].mxu0
    %v6220 = vadd.f32 %v5838, %v6219
    %6221 = vdwg.mxu0
    %6222 = vmatprep.subr.bf16.mxu0 %v5992
    %6223 = vmatpush1.bf16.msra.mxu0 %v5991
    %6224 = vmatprep.subr.bf16.mxu0 %v6008
    %6225 = vmatpush1.bf16.msra.mxu0 %v6007
    %6226 = vmatprep.subr.bf16.mxu0 0
    %6227 = vmatpush1.bf16.msra.mxu0 0
    %6228 = vmatprep.subr.bf16.mxu0 0
    %6229 = vmatpush1.bf16.msra.mxu0 0
    %6230 = vmatprep.subr.bf16.mxu0 0
    %6231 = vmatpush1.bf16.msra.mxu0 0
    %6232 = vmatprep.subr.bf16.mxu0 0
    %6233 = vmatpush1.bf16.msra.mxu0 0
    %6234 = vmatprep.subr.bf16.mxu0 0
    %6235 = vmatpush1.bf16.msra.mxu0 0
    %6236 = vmatprep.subr.bf16.mxu0 0
    %6237 = vmatpush1.bf16.msra.mxu0 0
    %6238 = vmatprep.subr.bf16.mxu0 0
    %6239 = vmatpush1.bf16.msra.mxu0 0
    %6240 = vmatprep.subr.bf16.mxu0 0
    %6241 = vmatpush1.bf16.msra.mxu0 0
    %6242 = vmatprep.subr.bf16.mxu0 0
    %6243 = vmatpush1.bf16.msra.mxu0 0
    %6244 = vmatprep.subr.bf16.mxu0 0
    %6245 = vmatpush1.bf16.msra.mxu0 0
    %6246 = vmatprep.subr.bf16.mxu0 0
    %6247 = vmatpush1.bf16.msra.mxu0 0
    %6248 = vmatprep.subr.bf16.mxu0 0
    %6249 = vmatpush1.bf16.msra.mxu0 0
    %6250 = vmatprep.subr.bf16.mxu0 0
    %6251 = vmatpush1.bf16.msra.mxu0 0
    %6252 = vmatprep.subr.bf16.mxu0 0
    %6253 = vmatpush1.bf16.msra.mxu0 0
    %6254 = vmatprep.mubr.bf16.mxu0 0
    %6255 = vmatmul.mubr.bf16.gmra.mrb[0].mxu0 %v6048
    %v6256 = vpop.f32.mrb[0].mxu0
    %v6257 = vadd.f32 %v5842, %v6256
    %v6258 = vpop.f32.mrb[0].mxu0
    %v6259 = vadd.f32 %v5846, %v6258
    %v6260 = vpop.f32.mrb[0].mxu0
    %v6261 = vadd.f32 %v5842, %v6260
    %v6262 = vpop.f32.mrb[0].mxu0
    %v6263 = vadd.f32 %v5846, %v6262
    %6264 = vdwg.mxu0
    %6265 = vmatprep.subr.bf16.mxu0 %v5994
    %6266 = vmatpush1.bf16.msra.mxu0 %v5993
    %6267 = vmatprep.subr.bf16.mxu0 %v6010
    %6268 = vmatpush1.bf16.msra.mxu0 %v6009
    %6269 = vmatprep.subr.bf16.mxu0 0
    %6270 = vmatpush1.bf16.msra.mxu0 0
    %6271 = vmatprep.subr.bf16.mxu0 0
    %6272 = vmatpush1.bf16.msra.mxu0 0
    %6273 = vmatprep.subr.bf16.mxu0 0
    %6274 = vmatpush1.bf16.msra.mxu0 0
    %6275 = vmatprep.subr.bf16.mxu0 0
    %6276 = vmatpush1.bf16.msra.mxu0 0
    %6277 = vmatprep.subr.bf16.mxu0 0
    %6278 = vmatpush1.bf16.msra.mxu0 0
    %6279 = vmatprep.subr.bf16.mxu0 0
    %6280 = vmatpush1.bf16.msra.mxu0 0
    %6281 = vmatprep.subr.bf16.mxu0 0
    %6282 = vmatpush1.bf16.msra.mxu0 0
    %6283 = vmatprep.subr.bf16.mxu0 0
    %6284 = vmatpush1.bf16.msra.mxu0 0
    %6285 = vmatprep.subr.bf16.mxu0 0
    %6286 = vmatpush1.bf16.msra.mxu0 0
    %6287 = vmatprep.subr.bf16.mxu0 0
    %6288 = vmatpush1.bf16.msra.mxu0 0
    %6289 = vmatprep.subr.bf16.mxu0 0
    %6290 = vmatpush1.bf16.msra.mxu0 0
    %6291 = vmatprep.subr.bf16.mxu0 0
    %6292 = vmatpush1.bf16.msra.mxu0 0
    %6293 = vmatprep.subr.bf16.mxu0 0
    %6294 = vmatpush1.bf16.msra.mxu0 0
    %6295 = vmatprep.subr.bf16.mxu0 0
    %6296 = vmatpush1.bf16.msra.mxu0 0
    %6297 = vmatprep.mubr.bf16.mxu0 0
    %6298 = vmatmul.mubr.bf16.gmra.mrb[0].mxu0 %v6048
    %v6299 = vpop.f32.mrb[0].mxu0
    %v6300 = vadd.f32 %v5850, %v6299
    %v6301 = vpop.f32.mrb[0].mxu0
    %v6302 = vadd.f32 %v5854, %v6301
    %v6303 = vpop.f32.mrb[0].mxu0
    %v6304 = vadd.f32 %v5850, %v6303
    %v6305 = vpop.f32.mrb[0].mxu0
    %v6306 = vadd.f32 %v5854, %v6305
    %6307 = vdwg.mxu0
    %6308 = vmatprep.subr.bf16.mxu0 %v5996
    %6309 = vmatpush1.bf16.msra.mxu0 %v5995
    %6310 = vmatprep.subr.bf16.mxu0 %v6012
    %6311 = vmatpush1.bf16.msra.mxu0 %v6011
    %6312 = vmatprep.subr.bf16.mxu0 0
    %6313 = vmatpush1.bf16.msra.mxu0 0
    %6314 = vmatprep.subr.bf16.mxu0 0
    %6315 = vmatpush1.bf16.msra.mxu0 0
    %6316 = vmatprep.subr.bf16.mxu0 0
    %6317 = vmatpush1.bf16.msra.mxu0 0
    %6318 = vmatprep.subr.bf16.mxu0 0
    %6319 = vmatpush1.bf16.msra.mxu0 0
    %6320 = vmatprep.subr.bf16.mxu0 0
    %6321 = vmatpush1.bf16.msra.mxu0 0
    %6322 = vmatprep.subr.bf16.mxu0 0
    %6323 = vmatpush1.bf16.msra.mxu0 0
    %6324 = vmatprep.subr.bf16.mxu0 0
    %6325 = vmatpush1.bf16.msra.mxu0 0
    %6326 = vmatprep.subr.bf16.mxu0 0
    %6327 = vmatpush1.bf16.msra.mxu0 0
    %6328 = vmatprep.subr.bf16.mxu0 0
    %6329 = vmatpush1.bf16.msra.mxu0 0
    %6330 = vmatprep.subr.bf16.mxu0 0
    %6331 = vmatpush1.bf16.msra.mxu0 0
    %6332 = vmatprep.subr.bf16.mxu0 0
    %6333 = vmatpush1.bf16.msra.mxu0 0
    %6334 = vmatprep.subr.bf16.mxu0 0
    %6335 = vmatpush1.bf16.msra.mxu0 0
    %6336 = vmatprep.subr.bf16.mxu0 0
    %6337 = vmatpush1.bf16.msra.mxu0 0
    %6338 = vmatprep.subr.bf16.mxu0 0
    %6339 = vmatpush1.bf16.msra.mxu0 0
    %6340 = vmatprep.mubr.bf16.mxu0 0
    %6341 = vmatmul.mubr.bf16.gmra.mrb[0].mxu0 %v6048
    %v6342 = vpop.f32.mrb[0].mxu0
    %v6343 = vadd.f32 %v5858, %v6342
    %v6344 = vpop.f32.mrb[0].mxu0
    %v6345 = vadd.f32 %v5862, %v6344
    %v6346 = vpop.f32.mrb[0].mxu0
    %v6347 = vadd.f32 %v5858, %v6346
    %v6348 = vpop.f32.mrb[0].mxu0
    %v6349 = vadd.f32 %v5862, %v6348
    %6350 = vdwg.mxu0
    %6351 = vmatprep.subr.bf16.mxu0 %v5998
    %6352 = vmatpush1.bf16.msra.mxu0 %v5997
    %6353 = vmatprep.subr.bf16.mxu0 %v6014
    %6354 = vmatpush1.bf16.msra.mxu0 %v6013
    %6355 = vmatprep.subr.bf16.mxu0 0
    %6356 = vmatpush1.bf16.msra.mxu0 0
    %6357 = vmatprep.subr.bf16.mxu0 0
    %6358 = vmatpush1.bf16.msra.mxu0 0
    %6359 = vmatprep.subr.bf16.mxu0 0
    %6360 = vmatpush1.bf16.msra.mxu0 0
    %6361 = vmatprep.subr.bf16.mxu0 0
    %6362 = vmatpush1.bf16.msra.mxu0 0
    %6363 = vmatprep.subr.bf16.mxu0 0
    %6364 = vmatpush1.bf16.msra.mxu0 0
    %6365 = vmatprep.subr.bf16.mxu0 0
    %6366 = vmatpush1.bf16.msra.mxu0 0
    %6367 = vmatprep.subr.bf16.mxu0 0
    %6368 = vmatpush1.bf16.msra.mxu0 0
    %6369 = vmatprep.subr.bf16.mxu0 0
    %6370 = vmatpush1.bf16.msra.mxu0 0
    %6371 = vmatprep.subr.bf16.mxu0 0
    %6372 = vmatpush1.bf16.msra.mxu0 0
    %6373 = vmatprep.subr.bf16.mxu0 0
    %6374 = vmatpush1.bf16.msra.mxu0 0
    %6375 = vmatprep.subr.bf16.mxu0 0
    %6376 = vmatpush1.bf16.msra.mxu0 0
    %6377 = vmatprep.subr.bf16.mxu0 0
    %6378 = vmatpush1.bf16.msra.mxu0 0
    %6379 = vmatprep.subr.bf16.mxu0 0
    %6380 = vmatpush1.bf16.msra.mxu0 0
    %6381 = vmatprep.subr.bf16.mxu0 0
    %6382 = vmatpush1.bf16.msra.mxu0 0
    %6383 = vmatprep.mubr.bf16.mxu0 0
    %6384 = vmatmul.mubr.bf16.gmra.mrb[0].mxu0 %v6048
    %v6385 = vpop.f32.mrb[0].mxu0
    %v6386 = vadd.f32 %v5866, %v6385
    %v6387 = vpop.f32.mrb[0].mxu0
    %v6388 = vadd.f32 %v5870, %v6387
    %v6389 = vpop.f32.mrb[0].mxu0
    %v6390 = vadd.f32 %v5866, %v6389
    %v6391 = vpop.f32.mrb[0].mxu0
    %v6392 = vadd.f32 %v5870, %v6391
    %6393 = vdwg.mxu0
    %v6394 = vmax.f32 %v6085, 0.0
    %v6395 = vmax.f32 %v6087, 0.0
    %v6396 = vmax.f32 %v6128, 0.0
    %v6397 = vmax.f32 %v6130, 0.0
    %v6398 = vmax.f32 %v6171, 0.0
    %v6399 = vmax.f32 %v6173, 0.0
    %v6400 = vmax.f32 %v6214, 0.0
    %v6401 = vmax.f32 %v6216, 0.0
    %v6402 = vmax.f32 %v6257, 0.0
    %v6403 = vmax.f32 %v6259, 0.0
    %v6404 = vmax.f32 %v6300, 0.0
    %v6405 = vmax.f32 %v6302, 0.0
    %v6406 = vmax.f32 %v6343, 0.0
    %v6407 = vmax.f32 %v6345, 0.0
    %v6408 = vmax.f32 %v6386, 0.0
    %v6409 = vmax.f32 %v6388, 0.0
    %v6410 = vmax.f32 %v6089, 0.0
    %v6411 = vmax.f32 %v6091, 0.0
    %v6412 = vmax.f32 %v6132, 0.0
    %v6413 = vmax.f32 %v6134, 0.0
    %v6414 = vmax.f32 %v6175, 0.0
    %v6415 = vmax.f32 %v6177, 0.0
    %v6416 = vmax.f32 %v6218, 0.0
    %v6417 = vmax.f32 %v6220, 0.0
    %v6418 = vmax.f32 %v6261, 0.0
    %v6419 = vmax.f32 %v6263, 0.0
    %v6420 = vmax.f32 %v6304, 0.0
    %v6421 = vmax.f32 %v6306, 0.0
    %v6422 = vmax.f32 %v6347, 0.0
    %v6423 = vmax.f32 %v6349, 0.0
    %v6424 = vmax.f32 %v6390, 0.0
    %v6425 = vmax.f32 %v6392, 0.0
    %v6426 = vpack.c.bf16 %v6410, %v6394
    %v6427 = vpack.c.bf16 %v6411, %v6395
    %v6428 = vpack.c.bf16 %v6412, %v6396
    %v6429 = vpack.c.bf16 %v6413, %v6397
    %v6430 = vpack.c.bf16 %v6414, %v6398
    %v6431 = vpack.c.bf16 %v6415, %v6399
    %v6432 = vpack.c.bf16 %v6416, %v6400
    %v6433 = vpack.c.bf16 %v6417, %v6401
    %v6434 = vpack.c.bf16 %v6418, %v6402
    %v6435 = vpack.c.bf16 %v6419, %v6403
    %v6436 = vpack.c.bf16 %v6420, %v6404
    %v6437 = vpack.c.bf16 %v6421, %v6405
    %v6438 = vpack.c.bf16 %v6422, %v6406
    %v6439 = vpack.c.bf16 %v6423, %v6407
    %v6440 = vpack.c.bf16 %v6424, %v6408
    %v6441 = vpack.c.bf16 %v6425, %v6409
    %s6442 = scalar_lea.vmem %s11, 1024
    %v6443 = vld [vmem:[%s6442] sm:$0xf]
    %v6444 = vld [vmem:[%s6442 + $0x4] sm:$0xf]
    %v6445 = vld [vmem:[%s6442 + $0x8] sm:$0xf]
    %v6446 = vld [vmem:[%s6442 + $0xc] sm:$0xf]
    %v6447 = vld [vmem:[%s6442 + $0x10] sm:$0xf]
    %v6448 = vld [vmem:[%s6442 + $0x14] sm:$0xf]
    %v6449 = vld [vmem:[%s6442 + $0x18] sm:$0xf]
    %v6450 = vld [vmem:[%s6442 + $0x1c] sm:$0xf]
    %v6451 = vld [vmem:[%s6442 + $0x20] sm:$0xf]
    %v6452 = vld [vmem:[%s6442 + $0x24] sm:$0xf]
    %v6453 = vld [vmem:[%s6442 + $0x28] sm:$0xf]
    %v6454 = vld [vmem:[%s6442 + $0x2c] sm:$0xf]
    %v6455 = vld [vmem:[%s6442 + $0x30] sm:$0xf]
    %v6456 = vld [vmem:[%s6442 + $0x34] sm:$0xf]
    %v6457 = vld [vmem:[%s6442 + $0x38] sm:$0xf]
    %v6458 = vld [vmem:[%s6442 + $0x3c] sm:$0xf]
    %v6459 = vld [vmem:[%s6442 + $0x40] sm:$0xf]
    %v6460 = vld [vmem:[%s6442 + $0x44] sm:$0xf]
    %v6461 = vld [vmem:[%s6442 + $0x48] sm:$0xf]
    %v6462 = vld [vmem:[%s6442 + $0x4c] sm:$0xf]
    %v6463 = vld [vmem:[%s6442 + $0x50] sm:$0xf]
    %v6464 = vld [vmem:[%s6442 + $0x54] sm:$0xf]
    %v6465 = vld [vmem:[%s6442 + $0x58] sm:$0xf]
    %v6466 = vld [vmem:[%s6442 + $0x5c] sm:$0xf]
    %v6467 = vld [vmem:[%s6442 + $0x60] sm:$0xf]
    %v6468 = vld [vmem:[%s6442 + $0x64] sm:$0xf]
    %v6469 = vld [vmem:[%s6442 + $0x68] sm:$0xf]
    %v6470 = vld [vmem:[%s6442 + $0x6c] sm:$0xf]
    %v6471 = vld [vmem:[%s6442 + $0x70] sm:$0xf]
    %v6472 = vld [vmem:[%s6442 + $0x74] sm:$0xf]
    %v6473 = vld [vmem:[%s6442 + $0x78] sm:$0xf]
    %v6474 = vld [vmem:[%s6442 + $0x7c] sm:$0xf]
    %v6475 = vld [vmem:[%s6442 + $0x80] sm:$0xf]
    %v6476 = vld [vmem:[%s6442 + $0x84] sm:$0xf]
    %v6477 = vld [vmem:[%s6442 + $0x88] sm:$0xf]
    %v6478 = vld [vmem:[%s6442 + $0x8c] sm:$0xf]
    %v6479 = vld [vmem:[%s6442 + $0x90] sm:$0xf]
    %v6480 = vld [vmem:[%s6442 + $0x94] sm:$0xf]
    %v6481 = vld [vmem:[%s6442 + $0x98] sm:$0xf]
    %v6482 = vld [vmem:[%s6442 + $0x9c] sm:$0xf]
    %v6483 = vld [vmem:[%s6442 + $0xa0] sm:$0xf]
    %v6484 = vld [vmem:[%s6442 + $0xa4] sm:$0xf]
    %v6485 = vld [vmem:[%s6442 + $0xa8] sm:$0xf]
    %v6486 = vld [vmem:[%s6442 + $0xac] sm:$0xf]
    %v6487 = vld [vmem:[%s6442 + $0xb0] sm:$0xf]
    %v6488 = vld [vmem:[%s6442 + $0xb4] sm:$0xf]
    %v6489 = vld [vmem:[%s6442 + $0xb8] sm:$0xf]
    %v6490 = vld [vmem:[%s6442 + $0xbc] sm:$0xf]
    %v6491 = vld [vmem:[%s6442 + $0xc0] sm:$0xf]
    %v6492 = vld [vmem:[%s6442 + $0xc4] sm:$0xf]
    %v6493 = vld [vmem:[%s6442 + $0xc8] sm:$0xf]
    %v6494 = vld [vmem:[%s6442 + $0xcc] sm:$0xf]
    %v6495 = vld [vmem:[%s6442 + $0xd0] sm:$0xf]
    %v6496 = vld [vmem:[%s6442 + $0xd4] sm:$0xf]
    %v6497 = vld [vmem:[%s6442 + $0xd8] sm:$0xf]
    %v6498 = vld [vmem:[%s6442 + $0xdc] sm:$0xf]
    %v6499 = vld [vmem:[%s6442 + $0xe0] sm:$0xf]
    %v6500 = vld [vmem:[%s6442 + $0xe4] sm:$0xf]
    %v6501 = vld [vmem:[%s6442 + $0xe8] sm:$0xf]
    %v6502 = vld [vmem:[%s6442 + $0xec] sm:$0xf]
    %v6503 = vld [vmem:[%s6442 + $0xf0] sm:$0xf]
    %v6504 = vld [vmem:[%s6442 + $0xf4] sm:$0xf]
    %v6505 = vld [vmem:[%s6442 + $0xf8] sm:$0xf]
    %v6506 = vld [vmem:[%s6442 + $0xfc] sm:$0xf]
    %v6507 = vld [vmem:[%s6442 + $0x100] sm:$0xf]
    %v6508 = vld [vmem:[%s6442 + $0x104] sm:$0xf]
    %v6509 = vld [vmem:[%s6442 + $0x108] sm:$0xf]
    %v6510 = vld [vmem:[%s6442 + $0x10c] sm:$0xf]
    %v6511 = vld [vmem:[%s6442 + $0x110] sm:$0xf]
    %v6512 = vld [vmem:[%s6442 + $0x114] sm:$0xf]
    %v6513 = vld [vmem:[%s6442 + $0x118] sm:$0xf]
    %v6514 = vld [vmem:[%s6442 + $0x11c] sm:$0xf]
    %v6515 = vld [vmem:[%s6442 + $0x120] sm:$0xf]
    %v6516 = vld [vmem:[%s6442 + $0x124] sm:$0xf]
    %v6517 = vld [vmem:[%s6442 + $0x128] sm:$0xf]
    %v6518 = vld [vmem:[%s6442 + $0x12c] sm:$0xf]
    %v6519 = vld [vmem:[%s6442 + $0x130] sm:$0xf]
    %v6520 = vld [vmem:[%s6442 + $0x134] sm:$0xf]
    %v6521 = vld [vmem:[%s6442 + $0x138] sm:$0xf]
    %v6522 = vld [vmem:[%s6442 + $0x13c] sm:$0xf]
    %v6523 = vld [vmem:[%s6442 + $0x140] sm:$0xf]
    %v6524 = vld [vmem:[%s6442 + $0x144] sm:$0xf]
    %v6525 = vld [vmem:[%s6442 + $0x148] sm:$0xf]
    %v6526 = vld [vmem:[%s6442 + $0x14c] sm:$0xf]
    %v6527 = vld [vmem:[%s6442 + $0x150] sm:$0xf]
    %v6528 = vld [vmem:[%s6442 + $0x154] sm:$0xf]
    %v6529 = vld [vmem:[%s6442 + $0x158] sm:$0xf]
    %v6530 = vld [vmem:[%s6442 + $0x15c] sm:$0xf]
    %v6531 = vld [vmem:[%s6442 + $0x160] sm:$0xf]
    %v6532 = vld [vmem:[%s6442 + $0x164] sm:$0xf]
    %v6533 = vld [vmem:[%s6442 + $0x168] sm:$0xf]
    %v6534 = vld [vmem:[%s6442 + $0x16c] sm:$0xf]
    %v6535 = vld [vmem:[%s6442 + $0x170] sm:$0xf]
    %v6536 = vld [vmem:[%s6442 + $0x174] sm:$0xf]
    %v6537 = vld [vmem:[%s6442 + $0x178] sm:$0xf]
    %v6538 = vld [vmem:[%s6442 + $0x17c] sm:$0xf]
    %v6539 = vld [vmem:[%s6442 + $0x180] sm:$0xf]
    %v6540 = vld [vmem:[%s6442 + $0x184] sm:$0xf]
    %v6541 = vld [vmem:[%s6442 + $0x188] sm:$0xf]
    %v6542 = vld [vmem:[%s6442 + $0x18c] sm:$0xf]
    %v6543 = vld [vmem:[%s6442 + $0x190] sm:$0xf]
    %v6544 = vld [vmem:[%s6442 + $0x194] sm:$0xf]
    %v6545 = vld [vmem:[%s6442 + $0x198] sm:$0xf]
    %v6546 = vld [vmem:[%s6442 + $0x19c] sm:$0xf]
    %v6547 = vld [vmem:[%s6442 + $0x1a0] sm:$0xf]
    %v6548 = vld [vmem:[%s6442 + $0x1a4] sm:$0xf]
    %v6549 = vld [vmem:[%s6442 + $0x1a8] sm:$0xf]
    %v6550 = vld [vmem:[%s6442 + $0x1ac] sm:$0xf]
    %v6551 = vld [vmem:[%s6442 + $0x1b0] sm:$0xf]
    %v6552 = vld [vmem:[%s6442 + $0x1b4] sm:$0xf]
    %v6553 = vld [vmem:[%s6442 + $0x1b8] sm:$0xf]
    %v6554 = vld [vmem:[%s6442 + $0x1bc] sm:$0xf]
    %v6555 = vld [vmem:[%s6442 + $0x1c0] sm:$0xf]
    %v6556 = vld [vmem:[%s6442 + $0x1c4] sm:$0xf]
    %v6557 = vld [vmem:[%s6442 + $0x1c8] sm:$0xf]
    %v6558 = vld [vmem:[%s6442 + $0x1cc] sm:$0xf]
    %v6559 = vld [vmem:[%s6442 + $0x1d0] sm:$0xf]
    %v6560 = vld [vmem:[%s6442 + $0x1d4] sm:$0xf]
    %v6561 = vld [vmem:[%s6442 + $0x1d8] sm:$0xf]
    %v6562 = vld [vmem:[%s6442 + $0x1dc] sm:$0xf]
    %v6563 = vld [vmem:[%s6442 + $0x1e0] sm:$0xf]
    %v6564 = vld [vmem:[%s6442 + $0x1e4] sm:$0xf]
    %v6565 = vld [vmem:[%s6442 + $0x1e8] sm:$0xf]
    %v6566 = vld [vmem:[%s6442 + $0x1ec] sm:$0xf]
    %v6567 = vld [vmem:[%s6442 + $0x1f0] sm:$0xf]
    %v6568 = vld [vmem:[%s6442 + $0x1f4] sm:$0xf]
    %v6569 = vld [vmem:[%s6442 + $0x1f8] sm:$0xf]
    %v6570 = vld [vmem:[%s6442 + $0x1fc] sm:$0xf]
    %v6571 = vld [vmem:[%s6442 + $0x200] sm:$0xf]
    %v6572 = vld [vmem:[%s6442 + $0x204] sm:$0xf]
    %v6573 = vld [vmem:[%s6442 + $0x208] sm:$0xf]
    %v6574 = vld [vmem:[%s6442 + $0x20c] sm:$0xf]
    %v6575 = vld [vmem:[%s6442 + $0x210] sm:$0xf]
    %v6576 = vld [vmem:[%s6442 + $0x214] sm:$0xf]
    %v6577 = vld [vmem:[%s6442 + $0x218] sm:$0xf]
    %v6578 = vld [vmem:[%s6442 + $0x21c] sm:$0xf]
    %v6579 = vld [vmem:[%s6442 + $0x220] sm:$0xf]
    %v6580 = vld [vmem:[%s6442 + $0x224] sm:$0xf]
    %v6581 = vld [vmem:[%s6442 + $0x228] sm:$0xf]
    %v6582 = vld [vmem:[%s6442 + $0x22c] sm:$0xf]
    %v6583 = vld [vmem:[%s6442 + $0x230] sm:$0xf]
    %v6584 = vld [vmem:[%s6442 + $0x234] sm:$0xf]
    %v6585 = vld [vmem:[%s6442 + $0x238] sm:$0xf]
    %v6586 = vld [vmem:[%s6442 + $0x23c] sm:$0xf]
    %v6587 = vld [vmem:[%s6442 + $0x240] sm:$0xf]
    %v6588 = vld [vmem:[%s6442 + $0x244] sm:$0xf]
    %v6589 = vld [vmem:[%s6442 + $0x248] sm:$0xf]
    %v6590 = vld [vmem:[%s6442 + $0x24c] sm:$0xf]
    %v6591 = vld [vmem:[%s6442 + $0x250] sm:$0xf]
    %v6592 = vld [vmem:[%s6442 + $0x254] sm:$0xf]
    %v6593 = vld [vmem:[%s6442 + $0x258] sm:$0xf]
    %v6594 = vld [vmem:[%s6442 + $0x25c] sm:$0xf]
    %v6595 = vld [vmem:[%s6442 + $0x260] sm:$0xf]
    %v6596 = vld [vmem:[%s6442 + $0x264] sm:$0xf]
    %v6597 = vld [vmem:[%s6442 + $0x268] sm:$0xf]
    %v6598 = vld [vmem:[%s6442 + $0x26c] sm:$0xf]
    %v6599 = vld [vmem:[%s6442 + $0x270] sm:$0xf]
    %v6600 = vld [vmem:[%s6442 + $0x274] sm:$0xf]
    %v6601 = vld [vmem:[%s6442 + $0x278] sm:$0xf]
    %v6602 = vld [vmem:[%s6442 + $0x27c] sm:$0xf]
    %v6603 = vld [vmem:[%s6442 + $0x280] sm:$0xf]
    %v6604 = vld [vmem:[%s6442 + $0x284] sm:$0xf]
    %v6605 = vld [vmem:[%s6442 + $0x288] sm:$0xf]
    %v6606 = vld [vmem:[%s6442 + $0x28c] sm:$0xf]
    %v6607 = vld [vmem:[%s6442 + $0x290] sm:$0xf]
    %v6608 = vld [vmem:[%s6442 + $0x294] sm:$0xf]
    %v6609 = vld [vmem:[%s6442 + $0x298] sm:$0xf]
    %v6610 = vld [vmem:[%s6442 + $0x29c] sm:$0xf]
    %v6611 = vld [vmem:[%s6442 + $0x2a0] sm:$0xf]
    %v6612 = vld [vmem:[%s6442 + $0x2a4] sm:$0xf]
    %v6613 = vld [vmem:[%s6442 + $0x2a8] sm:$0xf]
    %v6614 = vld [vmem:[%s6442 + $0x2ac] sm:$0xf]
    %v6615 = vld [vmem:[%s6442 + $0x2b0] sm:$0xf]
    %v6616 = vld [vmem:[%s6442 + $0x2b4] sm:$0xf]
    %v6617 = vld [vmem:[%s6442 + $0x2b8] sm:$0xf]
    %v6618 = vld [vmem:[%s6442 + $0x2bc] sm:$0xf]
    %v6619 = vld [vmem:[%s6442 + $0x2c0] sm:$0xf]
    %v6620 = vld [vmem:[%s6442 + $0x2c4] sm:$0xf]
    %v6621 = vld [vmem:[%s6442 + $0x2c8] sm:$0xf]
    %v6622 = vld [vmem:[%s6442 + $0x2cc] sm:$0xf]
    %v6623 = vld [vmem:[%s6442 + $0x2d0] sm:$0xf]
    %v6624 = vld [vmem:[%s6442 + $0x2d4] sm:$0xf]
    %v6625 = vld [vmem:[%s6442 + $0x2d8] sm:$0xf]
    %v6626 = vld [vmem:[%s6442 + $0x2dc] sm:$0xf]
    %v6627 = vld [vmem:[%s6442 + $0x2e0] sm:$0xf]
    %v6628 = vld [vmem:[%s6442 + $0x2e4] sm:$0xf]
    %v6629 = vld [vmem:[%s6442 + $0x2e8] sm:$0xf]
    %v6630 = vld [vmem:[%s6442 + $0x2ec] sm:$0xf]
    %v6631 = vld [vmem:[%s6442 + $0x2f0] sm:$0xf]
    %v6632 = vld [vmem:[%s6442 + $0x2f4] sm:$0xf]
    %v6633 = vld [vmem:[%s6442 + $0x2f8] sm:$0xf]
    %v6634 = vld [vmem:[%s6442 + $0x2fc] sm:$0xf]
    %v6635 = vld [vmem:[%s6442 + $0x300] sm:$0xf]
    %v6636 = vld [vmem:[%s6442 + $0x304] sm:$0xf]
    %v6637 = vld [vmem:[%s6442 + $0x308] sm:$0xf]
    %v6638 = vld [vmem:[%s6442 + $0x30c] sm:$0xf]
    %v6639 = vld [vmem:[%s6442 + $0x310] sm:$0xf]
    %v6640 = vld [vmem:[%s6442 + $0x314] sm:$0xf]
    %v6641 = vld [vmem:[%s6442 + $0x318] sm:$0xf]
    %v6642 = vld [vmem:[%s6442 + $0x31c] sm:$0xf]
    %v6643 = vld [vmem:[%s6442 + $0x320] sm:$0xf]
    %v6644 = vld [vmem:[%s6442 + $0x324] sm:$0xf]
    %v6645 = vld [vmem:[%s6442 + $0x328] sm:$0xf]
    %v6646 = vld [vmem:[%s6442 + $0x32c] sm:$0xf]
    %v6647 = vld [vmem:[%s6442 + $0x330] sm:$0xf]
    %v6648 = vld [vmem:[%s6442 + $0x334] sm:$0xf]
    %v6649 = vld [vmem:[%s6442 + $0x338] sm:$0xf]
    %v6650 = vld [vmem:[%s6442 + $0x33c] sm:$0xf]
    %v6651 = vld [vmem:[%s6442 + $0x340] sm:$0xf]
    %v6652 = vld [vmem:[%s6442 + $0x344] sm:$0xf]
    %v6653 = vld [vmem:[%s6442 + $0x348] sm:$0xf]
    %v6654 = vld [vmem:[%s6442 + $0x34c] sm:$0xf]
    %v6655 = vld [vmem:[%s6442 + $0x350] sm:$0xf]
    %v6656 = vld [vmem:[%s6442 + $0x354] sm:$0xf]
    %v6657 = vld [vmem:[%s6442 + $0x358] sm:$0xf]
    %v6658 = vld [vmem:[%s6442 + $0x35c] sm:$0xf]
    %v6659 = vld [vmem:[%s6442 + $0x360] sm:$0xf]
    %v6660 = vld [vmem:[%s6442 + $0x364] sm:$0xf]
    %v6661 = vld [vmem:[%s6442 + $0x368] sm:$0xf]
    %v6662 = vld [vmem:[%s6442 + $0x36c] sm:$0xf]
    %v6663 = vld [vmem:[%s6442 + $0x370] sm:$0xf]
    %v6664 = vld [vmem:[%s6442 + $0x374] sm:$0xf]
    %v6665 = vld [vmem:[%s6442 + $0x378] sm:$0xf]
    %v6666 = vld [vmem:[%s6442 + $0x37c] sm:$0xf]
    %v6667 = vld [vmem:[%s6442 + $0x380] sm:$0xf]
    %v6668 = vld [vmem:[%s6442 + $0x384] sm:$0xf]
    %v6669 = vld [vmem:[%s6442 + $0x388] sm:$0xf]
    %v6670 = vld [vmem:[%s6442 + $0x38c] sm:$0xf]
    %v6671 = vld [vmem:[%s6442 + $0x390] sm:$0xf]
    %v6672 = vld [vmem:[%s6442 + $0x394] sm:$0xf]
    %v6673 = vld [vmem:[%s6442 + $0x398] sm:$0xf]
    %v6674 = vld [vmem:[%s6442 + $0x39c] sm:$0xf]
    %v6675 = vld [vmem:[%s6442 + $0x3a0] sm:$0xf]
    %v6676 = vld [vmem:[%s6442 + $0x3a4] sm:$0xf]
    %v6677 = vld [vmem:[%s6442 + $0x3a8] sm:$0xf]
    %v6678 = vld [vmem:[%s6442 + $0x3ac] sm:$0xf]
    %v6679 = vld [vmem:[%s6442 + $0x3b0] sm:$0xf]
    %v6680 = vld [vmem:[%s6442 + $0x3b4] sm:$0xf]
    %v6681 = vld [vmem:[%s6442 + $0x3b8] sm:$0xf]
    %v6682 = vld [vmem:[%s6442 + $0x3bc] sm:$0xf]
    %v6683 = vld [vmem:[%s6442 + $0x3c0] sm:$0xf]
    %v6684 = vld [vmem:[%s6442 + $0x3c4] sm:$0xf]
    %v6685 = vld [vmem:[%s6442 + $0x3c8] sm:$0xf]
    %v6686 = vld [vmem:[%s6442 + $0x3cc] sm:$0xf]
    %v6687 = vld [vmem:[%s6442 + $0x3d0] sm:$0xf]
    %v6688 = vld [vmem:[%s6442 + $0x3d4] sm:$0xf]
    %v6689 = vld [vmem:[%s6442 + $0x3d8] sm:$0xf]
    %v6690 = vld [vmem:[%s6442 + $0x3dc] sm:$0xf]
    %v6691 = vld [vmem:[%s6442 + $0x3e0] sm:$0xf]
    %v6692 = vld [vmem:[%s6442 + $0x3e4] sm:$0xf]
    %v6693 = vld [vmem:[%s6442 + $0x3e8] sm:$0xf]
    %v6694 = vld [vmem:[%s6442 + $0x3ec] sm:$0xf]
    %v6695 = vld [vmem:[%s6442 + $0x3f0] sm:$0xf]
    %v6696 = vld [vmem:[%s6442 + $0x3f4] sm:$0xf]
    %v6697 = vld [vmem:[%s6442 + $0x3f8] sm:$0xf]
    %v6698 = vld [vmem:[%s6442 + $0x3fc] sm:$0xf]
    %s6699 = scalar_lea.vmem %s12, 1
    %v6700 = vld [vmem:[%s6699] sm:$0x1]
    %v6702 = vlaneseq
    %v6703 = vshrl.u32 %v6702, 7
    %v6704 = vsub.s32 0, %v6703
    %v6705 = vrot.slane %v6700, %v6704
    %v6963 = vunpack.c.l.b16 %v6443
    %v6964 = vunpack.c.l.b16 %v6444
    %v6965 = vunpack.c.l.b16 %v6445
    %v6966 = vunpack.c.l.b16 %v6446
    %v6967 = vunpack.c.l.b16 %v6447
    %v6968 = vunpack.c.l.b16 %v6448
    %v6969 = vunpack.c.l.b16 %v6449
    %v6970 = vunpack.c.l.b16 %v6450
    %v6971 = vunpack.c.l.b16 %v6451
    %v6972 = vunpack.c.l.b16 %v6452
    %v6973 = vunpack.c.l.b16 %v6453
    %v6974 = vunpack.c.l.b16 %v6454
    %v6975 = vunpack.c.l.b16 %v6455
    %v6976 = vunpack.c.l.b16 %v6456
    %v6977 = vunpack.c.l.b16 %v6457
    %v6978 = vunpack.c.l.b16 %v6458
    %v6979 = vunpack.c.l.b16 %v6459
    %v6980 = vunpack.c.l.b16 %v6460
    %v6981 = vunpack.c.l.b16 %v6461
    %v6982 = vunpack.c.l.b16 %v6462
    %v6983 = vunpack.c.l.b16 %v6463
    %v6984 = vunpack.c.l.b16 %v6464
    %v6985 = vunpack.c.l.b16 %v6465
    %v6986 = vunpack.c.l.b16 %v6466
    %v6987 = vunpack.c.l.b16 %v6467
    %v6988 = vunpack.c.l.b16 %v6468
    %v6989 = vunpack.c.l.b16 %v6469
    %v6990 = vunpack.c.l.b16 %v6470
    %v6991 = vunpack.c.l.b16 %v6471
    %v6992 = vunpack.c.l.b16 %v6472
    %v6993 = vunpack.c.l.b16 %v6473
    %v6994 = vunpack.c.l.b16 %v6474
    %v6995 = vunpack.c.l.b16 %v6475
    %v6996 = vunpack.c.l.b16 %v6476
    %v6997 = vunpack.c.l.b16 %v6477
    %v6998 = vunpack.c.l.b16 %v6478
    %v6999 = vunpack.c.l.b16 %v6479
    %v7000 = vunpack.c.l.b16 %v6480
    %v7001 = vunpack.c.l.b16 %v6481
    %v7002 = vunpack.c.l.b16 %v6482
    %v7003 = vunpack.c.l.b16 %v6483
    %v7004 = vunpack.c.l.b16 %v6484
    %v7005 = vunpack.c.l.b16 %v6485
    %v7006 = vunpack.c.l.b16 %v6486
    %v7007 = vunpack.c.l.b16 %v6487
    %v7008 = vunpack.c.l.b16 %v6488
    %v7009 = vunpack.c.l.b16 %v6489
    %v7010 = vunpack.c.l.b16 %v6490
    %v7011 = vunpack.c.l.b16 %v6491
    %v7012 = vunpack.c.l.b16 %v6492
    %v7013 = vunpack.c.l.b16 %v6493
    %v7014 = vunpack.c.l.b16 %v6494
    %v7015 = vunpack.c.l.b16 %v6495
    %v7016 = vunpack.c.l.b16 %v6496
    %v7017 = vunpack.c.l.b16 %v6497
    %v7018 = vunpack.c.l.b16 %v6498
    %v7019 = vunpack.c.l.b16 %v6499
    %v7020 = vunpack.c.l.b16 %v6500
    %v7021 = vunpack.c.l.b16 %v6501
    %v7022 = vunpack.c.l.b16 %v6502
    %v7023 = vunpack.c.l.b16 %v6503
    %v7024 = vunpack.c.l.b16 %v6504
    %v7025 = vunpack.c.l.b16 %v6505
    %v7026 = vunpack.c.l.b16 %v6506
    %v7027 = vunpack.c.l.b16 %v6507
    %v7028 = vunpack.c.l.b16 %v6508
    %v7029 = vunpack.c.l.b16 %v6509
    %v7030 = vunpack.c.l.b16 %v6510
    %v7031 = vunpack.c.l.b16 %v6511
    %v7032 = vunpack.c.l.b16 %v6512
    %v7033 = vunpack.c.l.b16 %v6513
    %v7034 = vunpack.c.l.b16 %v6514
    %v7035 = vunpack.c.l.b16 %v6515
    %v7036 = vunpack.c.l.b16 %v6516
    %v7037 = vunpack.c.l.b16 %v6517
    %v7038 = vunpack.c.l.b16 %v6518
    %v7039 = vunpack.c.l.b16 %v6519
    %v7040 = vunpack.c.l.b16 %v6520
    %v7041 = vunpack.c.l.b16 %v6521
    %v7042 = vunpack.c.l.b16 %v6522
    %v7043 = vunpack.c.l.b16 %v6523
    %v7044 = vunpack.c.l.b16 %v6524
    %v7045 = vunpack.c.l.b16 %v6525
    %v7046 = vunpack.c.l.b16 %v6526
    %v7047 = vunpack.c.l.b16 %v6527
    %v7048 = vunpack.c.l.b16 %v6528
    %v7049 = vunpack.c.l.b16 %v6529
    %v7050 = vunpack.c.l.b16 %v6530
    %v7051 = vunpack.c.l.b16 %v6531
    %v7052 = vunpack.c.l.b16 %v6532
    %v7053 = vunpack.c.l.b16 %v6533
    %v7054 = vunpack.c.l.b16 %v6534
    %v7055 = vunpack.c.l.b16 %v6535
    %v7056 = vunpack.c.l.b16 %v6536
    %v7057 = vunpack.c.l.b16 %v6537
    %v7058 = vunpack.c.l.b16 %v6538
    %v7059 = vunpack.c.l.b16 %v6539
    %v7060 = vunpack.c.l.b16 %v6540
    %v7061 = vunpack.c.l.b16 %v6541
    %v7062 = vunpack.c.l.b16 %v6542
    %v7063 = vunpack.c.l.b16 %v6543
    %v7064 = vunpack.c.l.b16 %v6544
    %v7065 = vunpack.c.l.b16 %v6545
    %v7066 = vunpack.c.l.b16 %v6546
    %v7067 = vunpack.c.l.b16 %v6547
    %v7068 = vunpack.c.l.b16 %v6548
    %v7069 = vunpack.c.l.b16 %v6549
    %v7070 = vunpack.c.l.b16 %v6550
    %v7071 = vunpack.c.l.b16 %v6551
    %v7072 = vunpack.c.l.b16 %v6552
    %v7073 = vunpack.c.l.b16 %v6553
    %v7074 = vunpack.c.l.b16 %v6554
    %v7075 = vunpack.c.l.b16 %v6555
    %v7076 = vunpack.c.l.b16 %v6556
    %v7077 = vunpack.c.l.b16 %v6557
    %v7078 = vunpack.c.l.b16 %v6558
    %v7079 = vunpack.c.l.b16 %v6559
    %v7080 = vunpack.c.l.b16 %v6560
    %v7081 = vunpack.c.l.b16 %v6561
    %v7082 = vunpack.c.l.b16 %v6562
    %v7083 = vunpack.c.l.b16 %v6563
    %v7084 = vunpack.c.l.b16 %v6564
    %v7085 = vunpack.c.l.b16 %v6565
    %v7086 = vunpack.c.l.b16 %v6566
    %v7087 = vunpack.c.l.b16 %v6567
    %v7088 = vunpack.c.l.b16 %v6568
    %v7089 = vunpack.c.l.b16 %v6569
    %v7090 = vunpack.c.l.b16 %v6570
    %v7091 = vunpack.c.l.b16 %v6571
    %v7092 = vunpack.c.l.b16 %v6572
    %v7093 = vunpack.c.l.b16 %v6573
    %v7094 = vunpack.c.l.b16 %v6574
    %v7095 = vunpack.c.l.b16 %v6575
    %v7096 = vunpack.c.l.b16 %v6576
    %v7097 = vunpack.c.l.b16 %v6577
    %v7098 = vunpack.c.l.b16 %v6578
    %v7099 = vunpack.c.l.b16 %v6579
    %v7100 = vunpack.c.l.b16 %v6580
    %v7101 = vunpack.c.l.b16 %v6581
    %v7102 = vunpack.c.l.b16 %v6582
    %v7103 = vunpack.c.l.b16 %v6583
    %v7104 = vunpack.c.l.b16 %v6584
    %v7105 = vunpack.c.l.b16 %v6585
    %v7106 = vunpack.c.l.b16 %v6586
    %v7107 = vunpack.c.l.b16 %v6587
    %v7108 = vunpack.c.l.b16 %v6588
    %v7109 = vunpack.c.l.b16 %v6589
    %v7110 = vunpack.c.l.b16 %v6590
    %v7111 = vunpack.c.l.b16 %v6591
    %v7112 = vunpack.c.l.b16 %v6592
    %v7113 = vunpack.c.l.b16 %v6593
    %v7114 = vunpack.c.l.b16 %v6594
    %v7115 = vunpack.c.l.b16 %v6595
    %v7116 = vunpack.c.l.b16 %v6596
    %v7117 = vunpack.c.l.b16 %v6597
    %v7118 = vunpack.c.l.b16 %v6598
    %v7119 = vunpack.c.l.b16 %v6599
    %v7120 = vunpack.c.l.b16 %v6600
    %v7121 = vunpack.c.l.b16 %v6601
    %v7122 = vunpack.c.l.b16 %v6602
    %v7123 = vunpack.c.l.b16 %v6603
    %v7124 = vunpack.c.l.b16 %v6604
    %v7125 = vunpack.c.l.b16 %v6605
    %v7126 = vunpack.c.l.b16 %v6606
    %v7127 = vunpack.c.l.b16 %v6607
    %v7128 = vunpack.c.l.b16 %v6608
    %v7129 = vunpack.c.l.b16 %v6609
    %v7130 = vunpack.c.l.b16 %v6610
    %v7131 = vunpack.c.l.b16 %v6611
    %v7132 = vunpack.c.l.b16 %v6612
    %v7133 = vunpack.c.l.b16 %v6613
    %v7134 = vunpack.c.l.b16 %v6614
    %v7135 = vunpack.c.l.b16 %v6615
    %v7136 = vunpack.c.l.b16 %v6616
    %v7137 = vunpack.c.l.b16 %v6617
    %v7138 = vunpack.c.l.b16 %v6618
    %v7139 = vunpack.c.l.b16 %v6619
    %v7140 = vunpack.c.l.b16 %v6620
    %v7141 = vunpack.c.l.b16 %v6621
    %v7142 = vunpack.c.l.b16 %v6622
    %v7143 = vunpack.c.l.b16 %v6623
    %v7144 = vunpack.c.l.b16 %v6624
    %v7145 = vunpack.c.l.b16 %v6625
    %v7146 = vunpack.c.l.b16 %v6626
    %v7147 = vunpack.c.l.b16 %v6627
    %v7148 = vunpack.c.l.b16 %v6628
    %v7149 = vunpack.c.l.b16 %v6629
    %v7150 = vunpack.c.l.b16 %v6630
    %v7151 = vunpack.c.l.b16 %v6631
    %v7152 = vunpack.c.l.b16 %v6632
    %v7153 = vunpack.c.l.b16 %v6633
    %v7154 = vunpack.c.l.b16 %v6634
    %v7155 = vunpack.c.l.b16 %v6635
    %v7156 = vunpack.c.l.b16 %v6636
    %v7157 = vunpack.c.l.b16 %v6637
    %v7158 = vunpack.c.l.b16 %v6638
    %v7159 = vunpack.c.l.b16 %v6639
    %v7160 = vunpack.c.l.b16 %v6640
    %v7161 = vunpack.c.l.b16 %v6641
    %v7162 = vunpack.c.l.b16 %v6642
    %v7163 = vunpack.c.l.b16 %v6643
    %v7164 = vunpack.c.l.b16 %v6644
    %v7165 = vunpack.c.l.b16 %v6645
    %v7166 = vunpack.c.l.b16 %v6646
    %v7167 = vunpack.c.l.b16 %v6647
    %v7168 = vunpack.c.l.b16 %v6648
    %v7169 = vunpack.c.l.b16 %v6649
    %v7170 = vunpack.c.l.b16 %v6650
    %v7171 = vunpack.c.l.b16 %v6651
    %v7172 = vunpack.c.l.b16 %v6652
    %v7173 = vunpack.c.l.b16 %v6653
    %v7174 = vunpack.c.l.b16 %v6654
    %v7175 = vunpack.c.l.b16 %v6655
    %v7176 = vunpack.c.l.b16 %v6656
    %v7177 = vunpack.c.l.b16 %v6657
    %v7178 = vunpack.c.l.b16 %v6658
    %v7179 = vunpack.c.l.b16 %v6659
    %v7180 = vunpack.c.l.b16 %v6660
    %v7181 = vunpack.c.l.b16 %v6661
    %v7182 = vunpack.c.l.b16 %v6662
    %v7183 = vunpack.c.l.b16 %v6663
    %v7184 = vunpack.c.l.b16 %v6664
    %v7185 = vunpack.c.l.b16 %v6665
    %v7186 = vunpack.c.l.b16 %v6666
    %v7187 = vunpack.c.l.b16 %v6667
    %v7188 = vunpack.c.l.b16 %v6668
    %v7189 = vunpack.c.l.b16 %v6669
    %v7190 = vunpack.c.l.b16 %v6670
    %v7191 = vunpack.c.l.b16 %v6671
    %v7192 = vunpack.c.l.b16 %v6672
    %v7193 = vunpack.c.l.b16 %v6673
    %v7194 = vunpack.c.l.b16 %v6674
    %v7195 = vunpack.c.l.b16 %v6675
    %v7196 = vunpack.c.l.b16 %v6676
    %v7197 = vunpack.c.l.b16 %v6677
    %v7198 = vunpack.c.l.b16 %v6678
    %v7199 = vunpack.c.l.b16 %v6679
    %v7200 = vunpack.c.l.b16 %v6680
    %v7201 = vunpack.c.l.b16 %v6681
    %v7202 = vunpack.c.l.b16 %v6682
    %v7203 = vunpack.c.l.b16 %v6683
    %v7204 = vunpack.c.l.b16 %v6684
    %v7205 = vunpack.c.l.b16 %v6685
    %v7206 = vunpack.c.l.b16 %v6686
    %v7207 = vunpack.c.l.b16 %v6687
    %v7208 = vunpack.c.l.b16 %v6688
    %v7209 = vunpack.c.l.b16 %v6689
    %v7210 = vunpack.c.l.b16 %v6690
    %v7211 = vunpack.c.l.b16 %v6691
    %v7212 = vunpack.c.l.b16 %v6692
    %v7213 = vunpack.c.l.b16 %v6693
    %v7214 = vunpack.c.l.b16 %v6694
    %v7215 = vunpack.c.l.b16 %v6695
    %v7216 = vunpack.c.l.b16 %v6696
    %v7217 = vunpack.c.l.b16 %v6697
    %v7218 = vunpack.c.l.b16 %v6698
    %v7219 = vpack.c.b16 %v6964, %v6963
    %v7220 = vpack.c.b16 %v6966, %v6965
    %v7221 = vpack.c.b16 %v6968, %v6967
    %v7222 = vpack.c.b16 %v6970, %v6969
    %v7223 = vpack.c.b16 %v6972, %v6971
    %v7224 = vpack.c.b16 %v6974, %v6973
    %v7225 = vpack.c.b16 %v6976, %v6975
    %v7226 = vpack.c.b16 %v6978, %v6977
    %v7227 = vpack.c.b16 %v6980, %v6979
    %v7228 = vpack.c.b16 %v6982, %v6981
    %v7229 = vpack.c.b16 %v6984, %v6983
    %v7230 = vpack.c.b16 %v6986, %v6985
    %v7231 = vpack.c.b16 %v6988, %v6987
    %v7232 = vpack.c.b16 %v6990, %v6989
    %v7233 = vpack.c.b16 %v6992, %v6991
    %v7234 = vpack.c.b16 %v6994, %v6993
    %v7235 = vpack.c.b16 %v6996, %v6995
    %v7236 = vpack.c.b16 %v6998, %v6997
    %v7237 = vpack.c.b16 %v7000, %v6999
    %v7238 = vpack.c.b16 %v7002, %v7001
    %v7239 = vpack.c.b16 %v7004, %v7003
    %v7240 = vpack.c.b16 %v7006, %v7005
    %v7241 = vpack.c.b16 %v7008, %v7007
    %v7242 = vpack.c.b16 %v7010, %v7009
    %v7243 = vpack.c.b16 %v7012, %v7011
    %v7244 = vpack.c.b16 %v7014, %v7013
    %v7245 = vpack.c.b16 %v7016, %v7015
    %v7246 = vpack.c.b16 %v7018, %v7017
    %v7247 = vpack.c.b16 %v7020, %v7019
    %v7248 = vpack.c.b16 %v7022, %v7021
    %v7249 = vpack.c.b16 %v7024, %v7023
    %v7250 = vpack.c.b16 %v7026, %v7025
    %v7251 = vpack.c.b16 %v7028, %v7027
    %v7252 = vpack.c.b16 %v7030, %v7029
    %v7253 = vpack.c.b16 %v7032, %v7031
    %v7254 = vpack.c.b16 %v7034, %v7033
    %v7255 = vpack.c.b16 %v7036, %v7035
    %v7256 = vpack.c.b16 %v7038, %v7037
    %v7257 = vpack.c.b16 %v7040, %v7039
    %v7258 = vpack.c.b16 %v7042, %v7041
    %v7259 = vpack.c.b16 %v7044, %v7043
    %v7260 = vpack.c.b16 %v7046, %v7045
    %v7261 = vpack.c.b16 %v7048, %v7047
    %v7262 = vpack.c.b16 %v7050, %v7049
    %v7263 = vpack.c.b16 %v7052, %v7051
    %v7264 = vpack.c.b16 %v7054, %v7053
    %v7265 = vpack.c.b16 %v7056, %v7055
    %v7266 = vpack.c.b16 %v7058, %v7057
    %v7267 = vpack.c.b16 %v7060, %v7059
    %v7268 = vpack.c.b16 %v7062, %v7061
    %v7269 = vpack.c.b16 %v7064, %v7063
    %v7270 = vpack.c.b16 %v7066, %v7065
    %v7271 = vpack.c.b16 %v7068, %v7067
    %v7272 = vpack.c.b16 %v7070, %v7069
    %v7273 = vpack.c.b16 %v7072, %v7071
    %v7274 = vpack.c.b16 %v7074, %v7073
    %v7275 = vpack.c.b16 %v7076, %v7075
    %v7276 = vpack.c.b16 %v7078, %v7077
    %v7277 = vpack.c.b16 %v7080, %v7079
    %v7278 = vpack.c.b16 %v7082, %v7081
    %v7279 = vpack.c.b16 %v7084, %v7083
    %v7280 = vpack.c.b16 %v7086, %v7085
    %v7281 = vpack.c.b16 %v7088, %v7087
    %v7282 = vpack.c.b16 %v7090, %v7089
    %v7283 = vpack.c.b16 %v7092, %v7091
    %v7284 = vpack.c.b16 %v7094, %v7093
    %v7285 = vpack.c.b16 %v7096, %v7095
    %v7286 = vpack.c.b16 %v7098, %v7097
    %v7287 = vpack.c.b16 %v7100, %v7099
    %v7288 = vpack.c.b16 %v7102, %v7101
    %v7289 = vpack.c.b16 %v7104, %v7103
    %v7290 = vpack.c.b16 %v7106, %v7105
    %v7291 = vpack.c.b16 %v7108, %v7107
    %v7292 = vpack.c.b16 %v7110, %v7109
    %v7293 = vpack.c.b16 %v7112, %v7111
    %v7294 = vpack.c.b16 %v7114, %v7113
    %v7295 = vpack.c.b16 %v7116, %v7115
    %v7296 = vpack.c.b16 %v7118, %v7117
    %v7297 = vpack.c.b16 %v7120, %v7119
    %v7298 = vpack.c.b16 %v7122, %v7121
    %v7299 = vpack.c.b16 %v7124, %v7123
    %v7300 = vpack.c.b16 %v7126, %v7125
    %v7301 = vpack.c.b16 %v7128, %v7127
    %v7302 = vpack.c.b16 %v7130, %v7129
    %v7303 = vpack.c.b16 %v7132, %v7131
    %v7304 = vpack.c.b16 %v7134, %v7133
    %v7305 = vpack.c.b16 %v7136, %v7135
    %v7306 = vpack.c.b16 %v7138, %v7137
    %v7307 = vpack.c.b16 %v7140, %v7139
    %v7308 = vpack.c.b16 %v7142, %v7141
    %v7309 = vpack.c.b16 %v7144, %v7143
    %v7310 = vpack.c.b16 %v7146, %v7145
    %v7311 = vpack.c.b16 %v7148, %v7147
    %v7312 = vpack.c.b16 %v7150, %v7149
    %v7313 = vpack.c.b16 %v7152, %v7151
    %v7314 = vpack.c.b16 %v7154, %v7153
    %v7315 = vpack.c.b16 %v7156, %v7155
    %v7316 = vpack.c.b16 %v7158, %v7157
    %v7317 = vpack.c.b16 %v7160, %v7159
    %v7318 = vpack.c.b16 %v7162, %v7161
    %v7319 = vpack.c.b16 %v7164, %v7163
    %v7320 = vpack.c.b16 %v7166, %v7165
    %v7321 = vpack.c.b16 %v7168, %v7167
    %v7322 = vpack.c.b16 %v7170, %v7169
    %v7323 = vpack.c.b16 %v7172, %v7171
    %v7324 = vpack.c.b16 %v7174, %v7173
    %v7325 = vpack.c.b16 %v7176, %v7175
    %v7326 = vpack.c.b16 %v7178, %v7177
    %v7327 = vpack.c.b16 %v7180, %v7179
    %v7328 = vpack.c.b16 %v7182, %v7181
    %v7329 = vpack.c.b16 %v7184, %v7183
    %v7330 = vpack.c.b16 %v7186, %v7185
    %v7331 = vpack.c.b16 %v7188, %v7187
    %v7332 = vpack.c.b16 %v7190, %v7189
    %v7333 = vpack.c.b16 %v7192, %v7191
    %v7334 = vpack.c.b16 %v7194, %v7193
    %v7335 = vpack.c.b16 %v7196, %v7195
    %v7336 = vpack.c.b16 %v7198, %v7197
    %v7337 = vpack.c.b16 %v7200, %v7199
    %v7338 = vpack.c.b16 %v7202, %v7201
    %v7339 = vpack.c.b16 %v7204, %v7203
    %v7340 = vpack.c.b16 %v7206, %v7205
    %v7341 = vpack.c.b16 %v7208, %v7207
    %v7342 = vpack.c.b16 %v7210, %v7209
    %v7343 = vpack.c.b16 %v7212, %v7211
    %v7344 = vpack.c.b16 %v7214, %v7213
    %v7345 = vpack.c.b16 %v7216, %v7215
    %v7346 = vpack.c.b16 %v7218, %v7217
    %7475 = vmatprep.subr.bf16.mxu0 0
    %7476 = vmatpush1.bf16.msra.mxu0 %v7219
    %7477 = vmatprep.subr.bf16.mxu0 0
    %7478 = vmatpush1.bf16.msra.mxu0 %v7220
    %7479 = vmatprep.subr.bf16.mxu0 0
    %7480 = vmatpush1.bf16.msra.mxu0 %v7221
    %7481 = vmatprep.subr.bf16.mxu0 0
    %7482 = vmatpush1.bf16.msra.mxu0 %v7222
    %7483 = vmatprep.subr.bf16.mxu0 0
    %7484 = vmatpush1.bf16.msra.mxu0 %v7223
    %7485 = vmatprep.subr.bf16.mxu0 0
    %7486 = vmatpush1.bf16.msra.mxu0 %v7224
    %7487 = vmatprep.subr.bf16.mxu0 0
    %7488 = vmatpush1.bf16.msra.mxu0 %v7225
    %7489 = vmatprep.subr.bf16.mxu0 0
    %7490 = vmatpush1.bf16.msra.mxu0 %v7226
    %7491 = vmatprep.subr.bf16.mxu0 0
    %7492 = vmatpush1.bf16.msra.mxu0 %v7227
    %7493 = vmatprep.subr.bf16.mxu0 0
    %7494 = vmatpush1.bf16.msra.mxu0 %v7228
    %7495 = vmatprep.subr.bf16.mxu0 0
    %7496 = vmatpush1.bf16.msra.mxu0 %v7229
    %7497 = vmatprep.subr.bf16.mxu0 0
    %7498 = vmatpush1.bf16.msra.mxu0 %v7230
    %7499 = vmatprep.subr.bf16.mxu0 0
    %7500 = vmatpush1.bf16.msra.mxu0 %v7231
    %7501 = vmatprep.subr.bf16.mxu0 0
    %7502 = vmatpush1.bf16.msra.mxu0 %v7232
    %7503 = vmatprep.subr.bf16.mxu0 0
    %7504 = vmatpush1.bf16.msra.mxu0 %v7233
    %7505 = vmatprep.subr.bf16.mxu0 0
    %7506 = vmatpush1.bf16.msra.mxu0 %v7234
    %7507 = vmatprep.mubr.bf16.mxu0 %v6427
    %7508 = vmatmul.mubr.bf16.gmra.mrb[0].mxu0 %v6426
    %v7509 = vpop.f32.mrb[0].mxu0
    %v7510 = vadd.f32 %v6705, %v7509
    %v7511 = vpop.f32.mrb[0].mxu0
    %v7512 = vpop.f32.mrb[0].mxu0
    %v7513 = vadd.f32 %v6705, %v7512
    %v7514 = vpop.f32.mrb[0].mxu0
    %7515 = vdwg.mxu0
    %7516 = vmatprep.subr.bf16.mxu0 0
    %7517 = vmatpush1.bf16.msra.mxu0 %v7235
    %7518 = vmatprep.subr.bf16.mxu0 0
    %7519 = vmatpush1.bf16.msra.mxu0 %v7236
    %7520 = vmatprep.subr.bf16.mxu0 0
    %7521 = vmatpush1.bf16.msra.mxu0 %v7237
    %7522 = vmatprep.subr.bf16.mxu0 0
    %7523 = vmatpush1.bf16.msra.mxu0 %v7238
    %7524 = vmatprep.subr.bf16.mxu0 0
    %7525 = vmatpush1.bf16.msra.mxu0 %v7239
    %7526 = vmatprep.subr.bf16.mxu0 0
    %7527 = vmatpush1.bf16.msra.mxu0 %v7240
    %7528 = vmatprep.subr.bf16.mxu0 0
    %7529 = vmatpush1.bf16.msra.mxu0 %v7241
    %7530 = vmatprep.subr.bf16.mxu0 0
    %7531 = vmatpush1.bf16.msra.mxu0 %v7242
    %7532 = vmatprep.subr.bf16.mxu0 0
    %7533 = vmatpush1.bf16.msra.mxu0 %v7243
    %7534 = vmatprep.subr.bf16.mxu0 0
    %7535 = vmatpush1.bf16.msra.mxu0 %v7244
    %7536 = vmatprep.subr.bf16.mxu0 0
    %7537 = vmatpush1.bf16.msra.mxu0 %v7245
    %7538 = vmatprep.subr.bf16.mxu0 0
    %7539 = vmatpush1.bf16.msra.mxu0 %v7246
    %7540 = vmatprep.subr.bf16.mxu0 0
    %7541 = vmatpush1.bf16.msra.mxu0 %v7247
    %7542 = vmatprep.subr.bf16.mxu0 0
    %7543 = vmatpush1.bf16.msra.mxu0 %v7248
    %7544 = vmatprep.subr.bf16.mxu0 0
    %7545 = vmatpush1.bf16.msra.mxu0 %v7249
    %7546 = vmatprep.subr.bf16.mxu0 0
    %7547 = vmatpush1.bf16.msra.mxu0 %v7250
    %7548 = vmatprep.mubr.bf16.mxu0 %v6429
    %7549 = vmatmul.mubr.bf16.gmra.mrb[0].mxu0 %v6428
    %v7550 = vpop.f32.mrb[0].mxu0
    %v7551 = vadd.f32 %v7510, %v7550
    %v7552 = vpop.f32.mrb[0].mxu0
    %v7553 = vpop.f32.mrb[0].mxu0
    %v7554 = vadd.f32 %v7513, %v7553
    %v7555 = vpop.f32.mrb[0].mxu0
    %7556 = vdwg.mxu0
    %7557 = vmatprep.subr.bf16.mxu0 0
    %7558 = vmatpush1.bf16.msra.mxu0 %v7251
    %7559 = vmatprep.subr.bf16.mxu0 0
    %7560 = vmatpush1.bf16.msra.mxu0 %v7252
    %7561 = vmatprep.subr.bf16.mxu0 0
    %7562 = vmatpush1.bf16.msra.mxu0 %v7253
    %7563 = vmatprep.subr.bf16.mxu0 0
    %7564 = vmatpush1.bf16.msra.mxu0 %v7254
    %7565 = vmatprep.subr.bf16.mxu0 0
    %7566 = vmatpush1.bf16.msra.mxu0 %v7255
    %7567 = vmatprep.subr.bf16.mxu0 0
    %7568 = vmatpush1.bf16.msra.mxu0 %v7256
    %7569 = vmatprep.subr.bf16.mxu0 0
    %7570 = vmatpush1.bf16.msra.mxu0 %v7257
    %7571 = vmatprep.subr.bf16.mxu0 0
    %7572 = vmatpush1.bf16.msra.mxu0 %v7258
    %7573 = vmatprep.subr.bf16.mxu0 0
    %7574 = vmatpush1.bf16.msra.mxu0 %v7259
    %7575 = vmatprep.subr.bf16.mxu0 0
    %7576 = vmatpush1.bf16.msra.mxu0 %v7260
    %7577 = vmatprep.subr.bf16.mxu0 0
    %7578 = vmatpush1.bf16.msra.mxu0 %v7261
    %7579 = vmatprep.subr.bf16.mxu0 0
    %7580 = vmatpush1.bf16.msra.mxu0 %v7262
    %7581 = vmatprep.subr.bf16.mxu0 0
    %7582 = vmatpush1.bf16.msra.mxu0 %v7263
    %7583 = vmatprep.subr.bf16.mxu0 0
    %7584 = vmatpush1.bf16.msra.mxu0 %v7264
    %7585 = vmatprep.subr.bf16.mxu0 0
    %7586 = vmatpush1.bf16.msra.mxu0 %v7265
    %7587 = vmatprep.subr.bf16.mxu0 0
    %7588 = vmatpush1.bf16.msra.mxu0 %v7266
    %7589 = vmatprep.mubr.bf16.mxu0 %v6431
    %7590 = vmatmul.mubr.bf16.gmra.mrb[0].mxu0 %v6430
    %v7591 = vpop.f32.mrb[0].mxu0
    %v7592 = vadd.f32 %v7551, %v7591
    %v7593 = vpop.f32.mrb[0].mxu0
    %v7594 = vpop.f32.mrb[0].mxu0
    %v7595 = vadd.f32 %v7554, %v7594
    %v7596 = vpop.f32.mrb[0].mxu0
    %7597 = vdwg.mxu0
    %7598 = vmatprep.subr.bf16.mxu0 0
    %7599 = vmatpush1.bf16.msra.mxu0 %v7267
    %7600 = vmatprep.subr.bf16.mxu0 0
    %7601 = vmatpush1.bf16.msra.mxu0 %v7268
    %7602 = vmatprep.subr.bf16.mxu0 0
    %7603 = vmatpush1.bf16.msra.mxu0 %v7269
    %7604 = vmatprep.subr.bf16.mxu0 0
    %7605 = vmatpush1.bf16.msra.mxu0 %v7270
    %7606 = vmatprep.subr.bf16.mxu0 0
    %7607 = vmatpush1.bf16.msra.mxu0 %v7271
    %7608 = vmatprep.subr.bf16.mxu0 0
    %7609 = vmatpush1.bf16.msra.mxu0 %v7272
    %7610 = vmatprep.subr.bf16.mxu0 0
    %7611 = vmatpush1.bf16.msra.mxu0 %v7273
    %7612 = vmatprep.subr.bf16.mxu0 0
    %7613 = vmatpush1.bf16.msra.mxu0 %v7274
    %7614 = vmatprep.subr.bf16.mxu0 0
    %7615 = vmatpush1.bf16.msra.mxu0 %v7275
    %7616 = vmatprep.subr.bf16.mxu0 0
    %7617 = vmatpush1.bf16.msra.mxu0 %v7276
    %7618 = vmatprep.subr.bf16.mxu0 0
    %7619 = vmatpush1.bf16.msra.mxu0 %v7277
    %7620 = vmatprep.subr.bf16.mxu0 0
    %7621 = vmatpush1.bf16.msra.mxu0 %v7278
    %7622 = vmatprep.subr.bf16.mxu0 0
    %7623 = vmatpush1.bf16.msra.mxu0 %v7279
    %7624 = vmatprep.subr.bf16.mxu0 0
    %7625 = vmatpush1.bf16.msra.mxu0 %v7280
    %7626 = vmatprep.subr.bf16.mxu0 0
    %7627 = vmatpush1.bf16.msra.mxu0 %v7281
    %7628 = vmatprep.subr.bf16.mxu0 0
    %7629 = vmatpush1.bf16.msra.mxu0 %v7282
    %7630 = vmatprep.mubr.bf16.mxu0 %v6433
    %7631 = vmatmul.mubr.bf16.gmra.mrb[0].mxu0 %v6432
    %v7632 = vpop.f32.mrb[0].mxu0
    %v7633 = vadd.f32 %v7592, %v7632
    %v7634 = vpop.f32.mrb[0].mxu0
    %v7635 = vpop.f32.mrb[0].mxu0
    %v7636 = vadd.f32 %v7595, %v7635
    %v7637 = vpop.f32.mrb[0].mxu0
    %7638 = vdwg.mxu0
    %7639 = vmatprep.subr.bf16.mxu0 0
    %7640 = vmatpush1.bf16.msra.mxu0 %v7283
    %7641 = vmatprep.subr.bf16.mxu0 0
    %7642 = vmatpush1.bf16.msra.mxu0 %v7284
    %7643 = vmatprep.subr.bf16.mxu0 0
    %7644 = vmatpush1.bf16.msra.mxu0 %v7285
    %7645 = vmatprep.subr.bf16.mxu0 0
    %7646 = vmatpush1.bf16.msra.mxu0 %v7286
    %7647 = vmatprep.subr.bf16.mxu0 0
    %7648 = vmatpush1.bf16.msra.mxu0 %v7287
    %7649 = vmatprep.subr.bf16.mxu0 0
    %7650 = vmatpush1.bf16.msra.mxu0 %v7288
    %7651 = vmatprep.subr.bf16.mxu0 0
    %7652 = vmatpush1.bf16.msra.mxu0 %v7289
    %7653 = vmatprep.subr.bf16.mxu0 0
    %7654 = vmatpush1.bf16.msra.mxu0 %v7290
    %7655 = vmatprep.subr.bf16.mxu0 0
    %7656 = vmatpush1.bf16.msra.mxu0 %v7291
    %7657 = vmatprep.subr.bf16.mxu0 0
    %7658 = vmatpush1.bf16.msra.mxu0 %v7292
    %7659 = vmatprep.subr.bf16.mxu0 0
    %7660 = vmatpush1.bf16.msra.mxu0 %v7293
    %7661 = vmatprep.subr.bf16.mxu0 0
    %7662 = vmatpush1.bf16.msra.mxu0 %v7294
    %7663 = vmatprep.subr.bf16.mxu0 0
    %7664 = vmatpush1.bf16.msra.mxu0 %v7295
    %7665 = vmatprep.subr.bf16.mxu0 0
    %7666 = vmatpush1.bf16.msra.mxu0 %v7296
    %7667 = vmatprep.subr.bf16.mxu0 0
    %7668 = vmatpush1.bf16.msra.mxu0 %v7297
    %7669 = vmatprep.subr.bf16.mxu0 0
    %7670 = vmatpush1.bf16.msra.mxu0 %v7298
    %7671 = vmatprep.mubr.bf16.mxu0 %v6435
    %7672 = vmatmul.mubr.bf16.gmra.mrb[0].mxu0 %v6434
    %v7673 = vpop.f32.mrb[0].mxu0
    %v7674 = vadd.f32 %v7633, %v7673
    %v7675 = vpop.f32.mrb[0].mxu0
    %v7676 = vpop.f32.mrb[0].mxu0
    %v7677 = vadd.f32 %v7636, %v7676
    %v7678 = vpop.f32.mrb[0].mxu0
    %7679 = vdwg.mxu0
    %7680 = vmatprep.subr.bf16.mxu0 0
    %7681 = vmatpush1.bf16.msra.mxu0 %v7299
    %7682 = vmatprep.subr.bf16.mxu0 0
    %7683 = vmatpush1.bf16.msra.mxu0 %v7300
    %7684 = vmatprep.subr.bf16.mxu0 0
    %7685 = vmatpush1.bf16.msra.mxu0 %v7301
    %7686 = vmatprep.subr.bf16.mxu0 0
    %7687 = vmatpush1.bf16.msra.mxu0 %v7302
    %7688 = vmatprep.subr.bf16.mxu0 0
    %7689 = vmatpush1.bf16.msra.mxu0 %v7303
    %7690 = vmatprep.subr.bf16.mxu0 0
    %7691 = vmatpush1.bf16.msra.mxu0 %v7304
    %7692 = vmatprep.subr.bf16.mxu0 0
    %7693 = vmatpush1.bf16.msra.mxu0 %v7305
    %7694 = vmatprep.subr.bf16.mxu0 0
    %7695 = vmatpush1.bf16.msra.mxu0 %v7306
    %7696 = vmatprep.subr.bf16.mxu0 0
    %7697 = vmatpush1.bf16.msra.mxu0 %v7307
    %7698 = vmatprep.subr.bf16.mxu0 0
    %7699 = vmatpush1.bf16.msra.mxu0 %v7308
    %7700 = vmatprep.subr.bf16.mxu0 0
    %7701 = vmatpush1.bf16.msra.mxu0 %v7309
    %7702 = vmatprep.subr.bf16.mxu0 0
    %7703 = vmatpush1.bf16.msra.mxu0 %v7310
    %7704 = vmatprep.subr.bf16.mxu0 0
    %7705 = vmatpush1.bf16.msra.mxu0 %v7311
    %7706 = vmatprep.subr.bf16.mxu0 0
    %7707 = vmatpush1.bf16.msra.mxu0 %v7312
    %7708 = vmatprep.subr.bf16.mxu0 0
    %7709 = vmatpush1.bf16.msra.mxu0 %v7313
    %7710 = vmatprep.subr.bf16.mxu0 0
    %7711 = vmatpush1.bf16.msra.mxu0 %v7314
    %7712 = vmatprep.mubr.bf16.mxu0 %v6437
    %7713 = vmatmul.mubr.bf16.gmra.mrb[0].mxu0 %v6436
    %v7714 = vpop.f32.mrb[0].mxu0
    %v7715 = vadd.f32 %v7674, %v7714
    %v7716 = vpop.f32.mrb[0].mxu0
    %v7717 = vpop.f32.mrb[0].mxu0
    %v7718 = vadd.f32 %v7677, %v7717
    %v7719 = vpop.f32.mrb[0].mxu0
    %7720 = vdwg.mxu0
    %7721 = vmatprep.subr.bf16.mxu0 0
    %7722 = vmatpush1.bf16.msra.mxu0 %v7315
    %7723 = vmatprep.subr.bf16.mxu0 0
    %7724 = vmatpush1.bf16.msra.mxu0 %v7316
    %7725 = vmatprep.subr.bf16.mxu0 0
    %7726 = vmatpush1.bf16.msra.mxu0 %v7317
    %7727 = vmatprep.subr.bf16.mxu0 0
    %7728 = vmatpush1.bf16.msra.mxu0 %v7318
    %7729 = vmatprep.subr.bf16.mxu0 0
    %7730 = vmatpush1.bf16.msra.mxu0 %v7319
    %7731 = vmatprep.subr.bf16.mxu0 0
    %7732 = vmatpush1.bf16.msra.mxu0 %v7320
    %7733 = vmatprep.subr.bf16.mxu0 0
    %7734 = vmatpush1.bf16.msra.mxu0 %v7321
    %7735 = vmatprep.subr.bf16.mxu0 0
    %7736 = vmatpush1.bf16.msra.mxu0 %v7322
    %7737 = vmatprep.subr.bf16.mxu0 0
    %7738 = vmatpush1.bf16.msra.mxu0 %v7323
    %7739 = vmatprep.subr.bf16.mxu0 0
    %7740 = vmatpush1.bf16.msra.mxu0 %v7324
    %7741 = vmatprep.subr.bf16.mxu0 0
    %7742 = vmatpush1.bf16.msra.mxu0 %v7325
    %7743 = vmatprep.subr.bf16.mxu0 0
    %7744 = vmatpush1.bf16.msra.mxu0 %v7326
    %7745 = vmatprep.subr.bf16.mxu0 0
    %7746 = vmatpush1.bf16.msra.mxu0 %v7327
    %7747 = vmatprep.subr.bf16.mxu0 0
    %7748 = vmatpush1.bf16.msra.mxu0 %v7328
    %7749 = vmatprep.subr.bf16.mxu0 0
    %7750 = vmatpush1.bf16.msra.mxu0 %v7329
    %7751 = vmatprep.subr.bf16.mxu0 0
    %7752 = vmatpush1.bf16.msra.mxu0 %v7330
    %7753 = vmatprep.mubr.bf16.mxu0 %v6439
    %7754 = vmatmul.mubr.bf16.gmra.mrb[0].mxu0 %v6438
    %v7755 = vpop.f32.mrb[0].mxu0
    %v7756 = vadd.f32 %v7715, %v7755
    %v7757 = vpop.f32.mrb[0].mxu0
    %v7758 = vpop.f32.mrb[0].mxu0
    %v7759 = vadd.f32 %v7718, %v7758
    %v7760 = vpop.f32.mrb[0].mxu0
    %7761 = vdwg.mxu0
    %7762 = vmatprep.subr.bf16.mxu0 0
    %7763 = vmatpush1.bf16.msra.mxu0 %v7331
    %7764 = vmatprep.subr.bf16.mxu0 0
    %7765 = vmatpush1.bf16.msra.mxu0 %v7332
    %7766 = vmatprep.subr.bf16.mxu0 0
    %7767 = vmatpush1.bf16.msra.mxu0 %v7333
    %7768 = vmatprep.subr.bf16.mxu0 0
    %7769 = vmatpush1.bf16.msra.mxu0 %v7334
    %7770 = vmatprep.subr.bf16.mxu0 0
    %7771 = vmatpush1.bf16.msra.mxu0 %v7335
    %7772 = vmatprep.subr.bf16.mxu0 0
    %7773 = vmatpush1.bf16.msra.mxu0 %v7336
    %7774 = vmatprep.subr.bf16.mxu0 0
    %7775 = vmatpush1.bf16.msra.mxu0 %v7337
    %7776 = vmatprep.subr.bf16.mxu0 0
    %7777 = vmatpush1.bf16.msra.mxu0 %v7338
    %7778 = vmatprep.subr.bf16.mxu0 0
    %7779 = vmatpush1.bf16.msra.mxu0 %v7339
    %7780 = vmatprep.subr.bf16.mxu0 0
    %7781 = vmatpush1.bf16.msra.mxu0 %v7340
    %7782 = vmatprep.subr.bf16.mxu0 0
    %7783 = vmatpush1.bf16.msra.mxu0 %v7341
    %7784 = vmatprep.subr.bf16.mxu0 0
    %7785 = vmatpush1.bf16.msra.mxu0 %v7342
    %7786 = vmatprep.subr.bf16.mxu0 0
    %7787 = vmatpush1.bf16.msra.mxu0 %v7343
    %7788 = vmatprep.subr.bf16.mxu0 0
    %7789 = vmatpush1.bf16.msra.mxu0 %v7344
    %7790 = vmatprep.subr.bf16.mxu0 0
    %7791 = vmatpush1.bf16.msra.mxu0 %v7345
    %7792 = vmatprep.subr.bf16.mxu0 0
    %7793 = vmatpush1.bf16.msra.mxu0 %v7346
    %7794 = vmatprep.mubr.bf16.mxu0 %v6441
    %7795 = vmatmul.mubr.bf16.gmra.mrb[0].mxu0 %v6440
    %v7796 = vpop.f32.mrb[0].mxu0
    %v7797 = vadd.f32 %v7756, %v7796
    %v7798 = vpop.f32.mrb[0].mxu0
    %v7799 = vpop.f32.mrb[0].mxu0
    %v7800 = vadd.f32 %v7759, %v7799
    %v7801 = vpop.f32.mrb[0].mxu0
    %7802 = vdwg.mxu0
    %v7803 = vadd.f32 %v5766, %v7797
    %v7804 = vadd.f32 %v5767, %v7800
    %s7805 = scalar_lea.vmem %s7, 1
    %v7806 = vld [vmem:[%s7805] sm:$0x1]
    %s7807 = scalar_lea.vmem %s8, 1
    %v7808 = vld [vmem:[%s7807] sm:$0x1]
    %v7809 = vsel %vm65, %v7803, 0.0
    %7810 = vadd.xlane.f32.xlu0 %v7809
    %v7811 = vpop.xlane.xlu0 %7810
    %v7812 = vsel %vm65, %v7804, 0.0
    %7813 = vadd.xlane.f32.xlu0 %v7812
    %v7814 = vpop.xlane.xlu0 %7813
    %v7815 = vmul.f32 %v7811, %v1828
    %v7816 = vmul.f32 %v7814, %v1828
    %v7817 = vmul.f32 %v7803, %v7803
    %v7818 = vmul.f32 %v7804, %v7804
    %v7819 = vsel %vm65, %v7817, 0.0
    %7820 = vadd.xlane.f32.xlu0 %v7819
    %v7821 = vpop.xlane.xlu0 %7820
    %v7822 = vsel %vm65, %v7818, 0.0
    %7823 = vadd.xlane.f32.xlu0 %v7822
    %v7824 = vpop.xlane.xlu0 %7823
    %v7825 = vmul.f32 %v7821, %v1828
    %v7826 = vmul.f32 %v7824, %v1828
    %v7827 = vmul.f32 %v7815, %v7815
    %v7828 = vmul.f32 %v7816, %v7816
    %v7829 = vsub.f32 %v7825, %v7827
    %v7830 = vsub.f32 %v7826, %v7828
    %v7831 = vsub.f32 %v7803, %v7815
    %v7832 = vsub.f32 %v7804, %v7816
    %v7833 = vadd.f32 %v7829, 1e-05
    %v7834 = vadd.f32 %v7830, 1e-05
    %v7835 = vrsqrt.pop %v7833
    %v7836 = vrsqrt.pop %v7834
    %v7837 = vmul.f32 %v7831, %v7835
    %v7838 = vmul.f32 %v7832, %v7836
    %v7840 = vlaneseq
    %v7841 = vshrl.u32 %v7840, 7
    %v7842 = vsub.s32 0, %v7841
    %v7843 = vrot.slane %v7806, %v7842
    %v7845 = vmul.f32 %v7837, %v7843
    %v7846 = vmul.f32 %v7838, %v7843
    %v7848 = vlaneseq
    %v7849 = vshrl.u32 %v7848, 7
    %v7850 = vsub.s32 0, %v7849
    %v7851 = vrot.slane %v7808, %v7850
    %v7853 = vadd.f32 %v7845, %v7851
    %v7854 = vadd.f32 %v7846, %v7851
    %v7855 = vld [vmem:[%s13] sm:$0xff]
    %v7856 = vld [vmem:[%s13 + $0x8] sm:$0xff]
    %v7857 = vld [vmem:[%s13 + $0x10] sm:$0xff]
    %v7858 = vld [vmem:[%s13 + $0x18] sm:$0xff]
    %v7859 = vld [vmem:[%s14] sm:$0x1]
    %v7861 = vlaneseq
    %v7862 = vshrl.u32 %v7861, 7
    %v7863 = vsub.s32 0, %v7862
    %v7864 = vrot.slane %v7859, %v7863
    %v7868 = vrot.slane %v7854, 7
    %vm7869 = vcmask 1041409
    %v7870 = vsel %vm7869, %v7868, %v7853
    %v7871 = vsel %vm65, %v7870, 0
    %7873 = vmatprep.subr.mxu0 0.0
    %7874 = vmatpush1.msra.mxu0 %v7855
    %7875 = vmatprep.subr.mxu0 0.0
    %7876 = vmatpush1.msra.mxu0 %v7856
    %7877 = vmatprep.subr.mxu0 0.0
    %7878 = vmatpush1.msra.mxu0 %v7857
    %7879 = vmatprep.subr.mxu0 0.0
    %7880 = vmatpush1.msra.mxu0 %v7858
    %7881 = vmatprep.subr.mxu0 0.0
    %7882 = vmatpush1.msra.mxu0 0.0
    %7883 = vmatprep.subr.mxu0 0.0
    %7884 = vmatpush1.msra.mxu0 0.0
    %7885 = vmatprep.subr.mxu0 0.0
    %7886 = vmatpush1.msra.mxu0 0.0
    %7887 = vmatprep.subr.mxu0 0.0
    %7888 = vmatpush1.msra.mxu0 0.0
    %7889 = vmatprep.subr.mxu0 0.0
    %7890 = vmatpush1.msra.mxu0 0.0
    %7891 = vmatprep.subr.mxu0 0.0
    %7892 = vmatpush1.msra.mxu0 0.0
    %7893 = vmatprep.subr.mxu0 0.0
    %7894 = vmatpush1.msra.mxu0 0.0
    %7895 = vmatprep.subr.mxu0 0.0
    %7896 = vmatpush1.msra.mxu0 0.0
    %7897 = vmatprep.subr.mxu0 0.0
    %7898 = vmatpush1.msra.mxu0 0.0
    %7899 = vmatprep.subr.mxu0 0.0
    %7900 = vmatpush1.msra.mxu0 0.0
    %7901 = vmatprep.subr.mxu0 0.0
    %7902 = vmatpush1.msra.mxu0 0.0
    %7903 = vmatprep.subr.mxu0 0.0
    %7904 = vmatpush1.msra.mxu0 0.0
    %7905 = vmatprep.subr.mxu0 0.0
    %7906 = vmatpush1.msra.mxu0 0.0
    %7907 = vmatprep.subr.mxu0 0.0
    %7908 = vmatpush1.msra.mxu0 0.0
    %7909 = vmatprep.subr.mxu0 0.0
    %7910 = vmatpush1.msra.mxu0 0.0
    %7911 = vmatprep.subr.mxu0 0.0
    %7912 = vmatpush1.msra.mxu0 0.0
    %7913 = vmatprep.subr.mxu0 0.0
    %7914 = vmatpush1.msra.mxu0 0.0
    %7915 = vmatprep.subr.mxu0 0.0
    %7916 = vmatpush1.msra.mxu0 0.0
    %7917 = vmatprep.subr.mxu0 0.0
    %7918 = vmatpush1.msra.mxu0 0.0
    %7919 = vmatprep.subr.mxu0 0.0
    %7920 = vmatpush1.msra.mxu0 0.0
    %7921 = vmatprep.subr.mxu0 0.0
    %7922 = vmatpush1.msra.mxu0 0.0
    %7923 = vmatprep.subr.mxu0 0.0
    %7924 = vmatpush1.msra.mxu0 0.0
    %7925 = vmatprep.subr.mxu0 0.0
    %7926 = vmatpush1.msra.mxu0 0.0
    %7927 = vmatprep.subr.mxu0 0.0
    %7928 = vmatpush1.msra.mxu0 0.0
    %7929 = vmatprep.subr.mxu0 0.0
    %7930 = vmatpush1.msra.mxu0 0.0
    %7931 = vmatprep.subr.mxu0 0.0
    %7932 = vmatpush1.msra.mxu0 0.0
    %7933 = vmatprep.subr.mxu0 0.0
    %7934 = vmatpush1.msra.mxu0 0.0
    %7935 = vmatprep.subr.mxu0 0.0
    %7936 = vmatpush1.msra.mxu0 0.0
    %7937 = vmatprep.mubr.f32.mxu0 0.0
    %7938 = vmatmul.mubr.f32.gmra.mrb[0].mxu0 %v7871
    %v7939 = vpop.f32.mrb[0].mxu0
    %v7940 = vadd.f32 %v7864, %v7939
    %v7941 = vpop.f32.mrb[0].mxu0
    %7942 = vdwg.mxu0
    %vm7943 = vcmask 33792
    %7944 = vst.msk [vmem:[#allocation2] sm:$0x3] %vm7943, %v7940
    // Predicated region
    $region62: #{transformer_forward.1} parent=1 // pred_check
      _
    $region63: #{transformer_forward.1} parent=1 // pred_check_branch
      %7946 = sbr.rel (0) target = $region65
    $region64: #{transformer_forward.1} parent=1 // pred_region
      %s7948 = ssub.s32 32, 32
      %7949 = vsyncadd [#allocation3], %s7948
      %s7951 = sshll.u32 [#allocation2], 4
      %s7952 = int_to_ptr.vmem [resolvable:$true] %s7951
      %7954 = dma.vmem_to_hbm [thread:$0]  %s7952, 32, %s15, [#allocation3]
    $region65: #{transformer_forward.1} parent=1 // pred_fallthru
      _
    // Predicated region
    $region66: #{transformer_forward.1} parent=1 // pred_check
      _
    $region67: #{transformer_forward.1} parent=1 // pred_check_branch
      %7956 = sbr.rel (0) target = $region69
    $region68: #{transformer_forward.1} parent=1 // pred_region
      %7957 = dma.done [#allocation3], 32
    $region69: #{transformer_forward.1} parent=1 // pred_fallthru
      _
    %7958 = vsyncpa [#allocation3], 1

</llo_original>
